<compile_context>
chip_gen: v5e
topology: v5e:2x2
jax: 0.10.0
libtpu: 0.0.40
codegen_flags: <defaults>
</compile_context>

<pallas_src>
import jax
import jax.numpy as jnp
from jax.experimental import pallas as pl
from jax.experimental.pallas import tpu as pltpu

EPS = 1e-5
_VMEM_LIMIT = 48 * 1024 * 1024   # under v7x's 64 MiB physical VMEM, with headroom


def _elu(h):
    # F.elu default alpha=1; clamp exp arg so the unselected branch stays finite.
    return jnp.where(h > 0, h, jnp.exp(jnp.minimum(h, 0.0)) - 1.0)


# ---------------------------------------------------------------------------
# Pallas kernels
# ---------------------------------------------------------------------------
def _stage0_kernel(x_ref, wl_ref, bl_ref, o_ref):
    # LayerNorm(D) -> Linear(D, 4096) -> ELU -> LayerNorm(4096), whole batch.
    x = x_ref[...].astype(jnp.float32)                          # (B, D)
    mu = jnp.mean(x, axis=-1, keepdims=True)
    var = jnp.mean((x - mu) ** 2, axis=-1, keepdims=True)
    xn = (x - mu) * jax.lax.rsqrt(var + EPS)
    h = jnp.dot(xn.astype(jnp.bfloat16), wl_ref[...],
                preferred_element_type=jnp.float32) + bl_ref[...]
    h = _elu(h)
    mu2 = jnp.mean(h, axis=-1, keepdims=True)
    var2 = jnp.mean((h - mu2) ** 2, axis=-1, keepdims=True)
    o_ref[...] = ((h - mu2) * jax.lax.rsqrt(var2 + EPS)).astype(o_ref.dtype)


def _make_conv_kernel(H, W, K, final):
    """Same-padded KxK conv on one sample, activations in (Cin, H*W) layout.

    The input's flat spatial axis is zero-padded by margin = (K//2)*W + K//2 on
    both sides, so tap (kh, kw) is the static lane slice
    [kh*W + kw : kh*W + kw + H*W].  Rows that would read above/below the image
    land in the zero margin; left/right wrap is removed by a per-dx lane mask.
    ELU + per-sample LayerNorm (or sigmoid) are fused; they are applied before
    the PixelShuffle, with which they commute.
    """
    pad = K // 2
    HW = H * W

    def kernel(a_ref, w_ref, b_ref, o_ref):
        ap = a_ref[0].astype(jnp.float32)                       # (Cin, HW + 2m)
        cin = ap.shape[0]
        cout = o_ref.shape[1]

        # x-coordinate of every output column (W is a power of two).
        col = jax.lax.broadcasted_iota(jnp.int32, (cin, HW), 1)
        xcoord = col & (W - 1)
        masks = {}
        for kw in range(K):
            dx = kw - pad
            if dx > 0:
                masks[dx] = xcoord < (W - dx)
            elif dx < 0:
                masks[dx] = xcoord >= (-dx)

        acc = jnp.zeros((cout, HW), jnp.float32) + b_ref[...]   # bias (Cout, 1)
        for kh in range(K):
            for kw in range(K):
                dx = kw - pad
                start = kh * W + kw
                tap = ap[:, start:start + HW]                   # (Cin, HW)
                if dx != 0:
                    tap = jnp.where(masks[dx], tap, 0.0)
                acc = acc + jnp.dot(w_ref[kh * K + kw],
                                    tap.astype(jnp.bfloat16),
                                    preferred_element_type=jnp.float32)

        if final:
            # numerically stable sigmoid; reciprocal goes to the EUP.
            e = jnp.exp(-jnp.abs(acc))
            r = pl.reciprocal(1.0 + e, approx=True)
            sig = jnp.where(acc >= 0, r, e * r)
            o_ref[0] = jnp.clip(sig, 0.0, 1.0).astype(o_ref.dtype)
        else:
            h = _elu(acc)
            mu = jnp.mean(h, keepdims=True)
            var = jnp.mean((h - mu) ** 2, keepdims=True)
            o_ref[0] = ((h - mu) * jax.lax.rsqrt(var + EPS)).astype(o_ref.dtype)

    return kernel


# ---------------------------------------------------------------------------
# pallas_call wrappers
# ---------------------------------------------------------------------------
def _stage0(x, wl, bl):
    B, D = x.shape
    N = wl.shape[1]
    return pl.pallas_call(
        _stage0_kernel,
        out_shape=jax.ShapeDtypeStruct((B, N), jnp.bfloat16),
        grid=(1,),
        in_specs=[
            pl.BlockSpec((B, D), lambda i: (0, 0)),
            pl.BlockSpec((D, N), lambda i: (0, 0)),
            pl.BlockSpec((1, N), lambda i: (0, 0)),
        ],
        out_specs=pl.BlockSpec((B, N), lambda i: (0, 0)),
        compiler_params=pltpu.CompilerParams(
            dimension_semantics=("arbitrary",),
            vmem_limit_bytes=_VMEM_LIMIT),
    )(x, wl, bl)


def _conv(act, w, b, *, H, W, K, final):
    B, Cin, HWp = act.shape
    KK, Cout, Cin_w = w.shape
    assert Cin_w == Cin and KK == K * K
    assert HWp == H * W + 2 * ((K // 2) * W + K // 2)
    out_dtype = jnp.float32 if final else jnp.bfloat16
    return pl.pallas_call(
        _make_conv_kernel(H, W, K, final),
        out_shape=jax.ShapeDtypeStruct((B, Cout, H * W), out_dtype),
        grid=(B,),
        in_specs=[
            pl.BlockSpec((1, Cin, HWp), lambda i: (i, 0, 0)),
            pl.BlockSpec((KK, Cout, Cin), lambda i: (0, 0, 0)),
            pl.BlockSpec((Cout, 1), lambda i: (0, 0)),
        ],
        out_specs=pl.BlockSpec((1, Cout, H * W), lambda i: (i, 0, 0)),
        compiler_params=pltpu.CompilerParams(
            dimension_semantics=("parallel",),      # v7x: 2 TCs split the batch
            vmem_limit_bytes=_VMEM_LIMIT),
    )(act, w, b)


# ---------------------------------------------------------------------------
# wrapper glue: PixelShuffle (NCHW) + flat spatial padding
# ---------------------------------------------------------------------------
def _pixel_shuffle(x, r):
    """torch.nn.PixelShuffle: (B, C*r*r, H, W) -> (B, C, H*r, W*r)."""
    B, C, H, W = x.shape
    Co = C // (r * r)
    x = x.reshape(B, Co, r, r, H, W).transpose(0, 1, 4, 2, 5, 3)
    return x.reshape(B, Co, H * r, W * r)


def _flat_pad(a, W, K):
    m = (K // 2) * W + (K // 2)
    return jnp.pad(a, ((0, 0), (0, 0), (m, m)))


@jax.jit
def image_decoder(x, kp):
    B = x.shape[0]
    # stage 0: LN -> Linear(D,4096) -> ELU -> LN   (output is torch c-major,
    # so the reshape to (B, C=64, HW=64) is a free metadata reshape).
    h = _stage0(x, kp["wl"], kp["bl"])                                   # (B,4096) bf16
    a = _flat_pad(h.reshape(B, 64, 64), 8, 3)                            # (B,64,82)
    # stage 1: Conv3x3(64->128) [+ELU+LN fused, pre-PixelShuffle]
    o = _conv(a, kp["w1"], kp["b1"], H=8, W=8, K=3, final=False)         # (B,128,64)
    a = _pixel_shuffle(o.reshape(B, 128, 8, 8), 2).reshape(B, 32, 256)
    a = _flat_pad(a, 16, 3)                                              # (B,32,290)
    # stage 2: Conv3x3(32->64) [+ELU+LN fused]
    o = _conv(a, kp["w2"], kp["b2"], H=16, W=16, K=3, final=False)       # (B,64,256)
    a = _pixel_shuffle(o.reshape(B, 64, 16, 16), 2).reshape(B, 16, 1024)
    a = _flat_pad(a, 32, 5)                                              # (B,16,1156)
    # stage 3: Conv5x5(16->4) [+sigmoid fused]
    o = _conv(a, kp["w3"], kp["b3"], H=32, W=32, K=5, final=True)        # (B,4,1024)
    return _pixel_shuffle(o.reshape(B, 4, 32, 32), 2)                    # (B,1,64,64)


# ---------------------------------------------------------------------------
# parameters (PyTorch layout) and conversion to kernel layout
# ---------------------------------------------------------------------------
def init_torch_params(key, d):
    ks = jax.random.split(key, 8)
    s = 0.1
    return {
        "w_lin": s * jax.random.normal(ks[0], (4096, d), jnp.float32),
        "b_lin": s * jax.random.normal(ks[1], (4096,), jnp.float32),
        "w1": s * jax.random.normal(ks[2], (128, 64, 3, 3), jnp.float32),
        "b1": s * jax.random.normal(ks[3], (128,), jnp.float32),
        "w2": s * jax.random.normal(ks[4], (64, 32, 3, 3), jnp.float32),
        "b2": s * jax.random.normal(ks[5], (64,), jnp.float32),
        "w3": s * jax.random.normal(ks[6], (4, 16, 5, 5), jnp.float32),
        "b3": s * jax.random.normal(ks[7], (4,), jnp.float32),
    }


def prepare_params(tp):
    def conv_w(w):   # (Cout, Cin, K, K) -> (K*K, Cout, Cin), bf16
        co, ci, kh, kw = w.shape
        return jnp.transpose(w, (2, 3, 0, 1)).reshape(kh * kw, co, ci).astype(jnp.bfloat16)
    return {
        "wl": tp["w_lin"].T.astype(jnp.bfloat16),                  # (D, 4096)
        "bl": tp["b_lin"].reshape(1, -1).astype(jnp.float32),
        "w1": conv_w(tp["w1"]), "b1": tp["b1"].reshape(-1, 1).astype(jnp.float32),
        "w2": conv_w(tp["w2"]), "b2": tp["b2"].reshape(-1, 1).astype(jnp.float32),
        "w3": conv_w(tp["w3"]), "b3": tp["b3"].reshape(-1, 1).astype(jnp.float32),
    }


# ---------------------------------------------------------------------------
# pure-JAX reference (mirrors the PyTorch module; same bf16 cast points)
# ---------------------------------------------------------------------------
def reference_decoder(x, tp):
    def ln(h):
        ax = tuple(range(1, h.ndim))
        mu = jnp.mean(h, axis=ax, keepdims=True)
        var = jnp.mean((h - mu) ** 2, axis=ax, keepdims=True)
        return (h - mu) * jax.lax.rsqrt(var + EPS)

    def conv(z, w, b, pad):
        y = jax.lax.conv_general_dilated(
            z.astype(jnp.bfloat16), w.astype(jnp.bfloat16),
            window_strides=(1, 1), padding=((pad, pad), (pad, pad)),
            dimension_numbers=("NCHW", "OIHW", "NCHW"),
            preferred_element_type=jnp.float32)
        return y + b.reshape(1, -1, 1, 1)

    B = x.shape[0]
    h = ln(x)
    h = jnp.dot(h.astype(jnp.bfloat16), tp["w_lin"].T.astype(jnp.bfloat16),
                preferred_element_type=jnp.float32) + tp["b_lin"]
    h = ln(_elu(h))
    h = h.reshape(B, 64, 8, 8)
    h = ln(_elu(_pixel_shuffle(conv(h, tp["w1"], tp["b1"], 1), 2)))
    h = ln(_elu(_pixel_shuffle(conv(h, tp["w2"], tp["b2"], 1), 2)))
    return jax.nn.sigmoid(_pixel_shuffle(conv(h, tp["w3"], tp["b3"], 2), 2))


if __name__ == "__main__":
    dim_slot_embed = 32
    batch = 2
    key = jax.random.PRNGKey(0)
    k_param, k_x = jax.random.split(key)
    torch_params = init_torch_params(k_param, dim_slot_embed)
    kparams = prepare_params(torch_params)
    x = jax.random.normal(k_x, (batch, dim_slot_embed), jnp.float32)

    out = image_decoder(x, kparams)
    out = jax.block_until_ready(out)

    assert out.shape == (batch, 1, 64, 64), out.shape
    assert bool(jnp.all(jnp.isfinite(out)))
    assert bool(jnp.all((out >= 0.0) & (out <= 1.0)))        # sigmoid range

    ref = jax.jit(reference_decoder)(x, torch_params)
    ref = jax.block_until_ready(ref)
    max_err = float(jnp.max(jnp.abs(out - ref)))
    assert max_err < 3e-2, f"mismatch vs reference: {max_err}"

    print("KERNEL_OK")
</pallas_src>

<mosaic_0001>
module attributes {stable_mosaic.version = 11 : i64} {
  func.func @_stage0_kernel(%arg0: i32, %arg1: memref<2x32xf32, #tpu.memory_space<vmem>>, %arg2: memref<32x4096xbf16, #tpu.memory_space<vmem>>, %arg3: memref<1x4096xf32, #tpu.memory_space<vmem>>, %arg4: memref<2x4096xbf16, #tpu.memory_space<vmem>>) attributes {dimension_semantics = [#tpu.dimension_semantics<arbitrary>], iteration_bounds = array<i64: 1>, scalar_prefetch = 0 : i64, scratch_operands = 0 : i64, tpu.core_type = #tpu.core_type<tc>, window_params = [{pipeline_mode = #tpu.pipeline_mode<synchronous>, transform_indices = @transform_0, window_bounds = array<i64: 2, 32>}, {pipeline_mode = #tpu.pipeline_mode<synchronous>, transform_indices = @transform_1, window_bounds = array<i64: 32, 4096>}, {pipeline_mode = #tpu.pipeline_mode<synchronous>, transform_indices = @transform_2, window_bounds = array<i64: 1, 4096>}, {pipeline_mode = #tpu.pipeline_mode<synchronous>, transform_indices = @transform_3, window_bounds = array<i64: 2, 4096>}]} {
    %c0 = arith.constant 0 : index
    %c0_0 = arith.constant 0 : index
    %0 = vector.load %arg1[%c0, %c0_0] : memref<2x32xf32, #tpu.memory_space<vmem>>, vector<2x32xf32>
    %cst = arith.constant dense<0.000000e+00> : vector<2xf32>
    %1 = vector.multi_reduction <add>, %0, %cst [1] : vector<2x32xf32> to vector<2xf32>
    %2 = vector.shape_cast %1 : vector<2xf32> to vector<2x1xf32>
    %cst_1 = arith.constant 3.200000e+01 : f32
    %3 = vector.broadcast %cst_1 : f32 to vector<2x1xf32>
    %4 = arith.divf %2, %3 : vector<2x1xf32>
    %5 = vector.broadcast %4 : vector<2x1xf32> to vector<2x32xf32>
    %6 = arith.subf %0, %5 : vector<2x32xf32>
    %7 = arith.mulf %6, %6 : vector<2x32xf32>
    %cst_2 = arith.constant dense<0.000000e+00> : vector<2xf32>
    %8 = vector.multi_reduction <add>, %7, %cst_2 [1] : vector<2x32xf32> to vector<2xf32>
    %9 = vector.shape_cast %8 : vector<2xf32> to vector<2x1xf32>
    %cst_3 = arith.constant 3.200000e+01 : f32
    %10 = vector.broadcast %cst_3 : f32 to vector<2x1xf32>
    %11 = arith.divf %9, %10 : vector<2x1xf32>
    %12 = vector.broadcast %4 : vector<2x1xf32> to vector<2x32xf32>
    %13 = arith.subf %0, %12 : vector<2x32xf32>
    %cst_4 = arith.constant 9.99999974E-6 : f32
    %14 = vector.broadcast %cst_4 : f32 to vector<2x1xf32>
    %15 = arith.addf %11, %14 : vector<2x1xf32>
    %16 = math.rsqrt %15 : vector<2x1xf32>
    %17 = vector.broadcast %16 : vector<2x1xf32> to vector<2x32xf32>
    %18 = arith.mulf %13, %17 : vector<2x32xf32>
    %19 = arith.truncf %18 : vector<2x32xf32> to vector<2x32xbf16>
    %c0_5 = arith.constant 0 : index
    %c0_6 = arith.constant 0 : index
    %20 = vector.load %arg2[%c0_5, %c0_6] : memref<32x4096xbf16, #tpu.memory_space<vmem>>, vector<32x4096xbf16>
    %cst_7 = arith.constant dense<0.000000e+00> : vector<2x4096xf32>
    %21 = tpu.matmul %19, %20, %cst_7 {dimension_numbers = #tpu.dot_dimension_numbers<[1], [0], [0], [1], [0, 0, 1, 1], [], []>} : vector<2x32xbf16>, vector<32x4096xbf16>, vector<2x4096xf32> -> vector<2x4096xf32>
    %c0_8 = arith.constant 0 : index
    %c0_9 = arith.constant 0 : index
    %22 = vector.load %arg3[%c0_8, %c0_9] : memref<1x4096xf32, #tpu.memory_space<vmem>>, vector<1x4096xf32>
    %23 = vector.broadcast %22 : vector<1x4096xf32> to vector<2x4096xf32>
    %24 = arith.addf %21, %23 : vector<2x4096xf32>
    %cst_10 = arith.constant 0.000000e+00 : f32
    %25 = vector.broadcast %cst_10 : f32 to vector<2x4096xf32>
    %26 = arith.cmpf ogt, %24, %25 : vector<2x4096xf32>
    %cst_11 = arith.constant 0.000000e+00 : f32
    %27 = vector.broadcast %cst_11 : f32 to vector<2x4096xf32>
    %28 = arith.minimumf %24, %27 : vector<2x4096xf32>
    %29 = math.exp %28 : vector<2x4096xf32>
    %cst_12 = arith.constant 1.000000e+00 : f32
    %30 = vector.broadcast %cst_12 : f32 to vector<2x4096xf32>
    %31 = arith.subf %29, %30 : vector<2x4096xf32>
    %32 = arith.select %26, %24, %31 : vector<2x4096xi1>, vector<2x4096xf32>
    %cst_13 = arith.constant dense<0.000000e+00> : vector<2xf32>
    %33 = vector.multi_reduction <add>, %32, %cst_13 [1] : vector<2x4096xf32> to vector<2xf32>
    %34 = vector.shape_cast %33 : vector<2xf32> to vector<2x1xf32>
    %cst_14 = arith.constant 4.096000e+03 : f32
    %35 = vector.broadcast %cst_14 : f32 to vector<2x1xf32>
    %36 = arith.divf %34, %35 : vector<2x1xf32>
    %37 = vector.broadcast %36 : vector<2x1xf32> to vector<2x4096xf32>
    %38 = arith.subf %32, %37 : vector<2x4096xf32>
    %39 = arith.mulf %38, %38 : vector<2x4096xf32>
    %cst_15 = arith.constant dense<0.000000e+00> : vector<2xf32>
    %40 = vector.multi_reduction <add>, %39, %cst_15 [1] : vector<2x4096xf32> to vector<2xf32>
    %41 = vector.shape_cast %40 : vector<2xf32> to vector<2x1xf32>
    %cst_16 = arith.constant 4.096000e+03 : f32
    %42 = vector.broadcast %cst_16 : f32 to vector<2x1xf32>
    %43 = arith.divf %41, %42 : vector<2x1xf32>
    %44 = vector.broadcast %36 : vector<2x1xf32> to vector<2x4096xf32>
    %45 = arith.subf %32, %44 : vector<2x4096xf32>
    %cst_17 = arith.constant 9.99999974E-6 : f32
    %46 = vector.broadcast %cst_17 : f32 to vector<2x1xf32>
    %47 = arith.addf %43, %46 : vector<2x1xf32>
    %48 = math.rsqrt %47 : vector<2x1xf32>
    %49 = vector.broadcast %48 : vector<2x1xf32> to vector<2x4096xf32>
    %50 = arith.mulf %45, %49 : vector<2x4096xf32>
    %51 = arith.truncf %50 : vector<2x4096xf32> to vector<2x4096xbf16>
    %c0_18 = arith.constant 0 : index
    %c0_19 = arith.constant 0 : index
    %52 = vector.load %arg4[%c0_18, %c0_19] : memref<2x4096xbf16, #tpu.memory_space<vmem>>, vector<2x4096xbf16>
    tpu.vector_store %arg4[%c0_18, %c0_19], %51 {strides = array<i32>} : memref<2x4096xbf16, #tpu.memory_space<vmem>>, vector<2x4096xbf16>,
    return
  }
  func.func @transform_0(%arg0: i32) -> (i32, i32) {
    %c0_i32 = arith.constant 0 : i32
    %c0_i32_0 = arith.constant 0 : i32
    %c0_i32_1 = arith.constant 0 : i32
    return %c0_i32, %c0_i32_0 : i32, i32
  }
  func.func @transform_1(%arg0: i32) -> (i32, i32) {
    %c0_i32 = arith.constant 0 : i32
    %c0_i32_0 = arith.constant 0 : i32
    %c0_i32_1 = arith.constant 0 : i32
    return %c0_i32, %c0_i32_0 : i32, i32
  }
  func.func @transform_2(%arg0: i32) -> (i32, i32) {
    %c0_i32 = arith.constant 0 : i32
    %c0_i32_0 = arith.constant 0 : i32
    %c0_i32_1 = arith.constant 0 : i32
    return %c0_i32, %c0_i32_0 : i32, i32
  }
  func.func @transform_3(%arg0: i32) -> (i32, i32) {
    %c0_i32 = arith.constant 0 : i32
    %c0_i32_0 = arith.constant 0 : i32
    %c0_i32_1 = arith.constant 0 : i32
    return %c0_i32, %c0_i32_0 : i32, i32
  }
}

module attributes {stable_mosaic.version = 11 : i64} {
  func.func @kernel(%arg0: i32, %arg1: memref<1x64x82xbf16, #tpu.memory_space<vmem>>, %arg2: memref<9x128x64xbf16, #tpu.memory_space<vmem>>, %arg3: memref<128x1xf32, #tpu.memory_space<vmem>>, %arg4: memref<1x128x64xbf16, #tpu.memory_space<vmem>>) attributes {dimension_semantics = [#tpu.dimension_semantics<parallel>], iteration_bounds = array<i64: 2>, scalar_prefetch = 0 : i64, scratch_operands = 0 : i64, tpu.core_type = #tpu.core_type<tc>, window_params = [{transform_indices = @transform_0, window_bounds = array<i64: 1, 64, 82>}, {pipeline_mode = #tpu.pipeline_mode<synchronous>, transform_indices = @transform_1, window_bounds = array<i64: 9, 128, 64>}, {pipeline_mode = #tpu.pipeline_mode<synchronous>, transform_indices = @transform_2, window_bounds = array<i64: 128, 1>}, {transform_indices = @transform_3, window_bounds = array<i64: 1, 128, 64>}]} {
    %c0 = arith.constant 0 : index
    %c0_0 = arith.constant 0 : index
    %c0_1 = arith.constant 0 : index
    %0 = vector.load %arg1[%c0, %c0_0, %c0_1] : memref<1x64x82xbf16, #tpu.memory_space<vmem>>, vector<1x64x82xbf16>
    %1 = vector.shape_cast %0 : vector<1x64x82xbf16> to vector<64x82xbf16>
    %2 = arith.extf %1 : vector<64x82xbf16> to vector<64x82xf32>
    %3 = tpu.iota {dimensions = array<i32: 1>} : vector<64x64xi32>
    %c7_i32 = arith.constant 7 : i32
    %4 = vector.broadcast %c7_i32 : i32 to vector<64x64xi32>
    %5 = arith.andi %3, %4 : vector<64x64xi32>
    %c1_i32 = arith.constant 1 : i32
    %6 = vector.broadcast %c1_i32 : i32 to vector<64x64xi32>
    %7 = arith.cmpi sge, %5, %6 : vector<64x64xi32>
    %c7_i32_2 = arith.constant 7 : i32
    %8 = vector.broadcast %c7_i32_2 : i32 to vector<64x64xi32>
    %9 = arith.cmpi slt, %5, %8 : vector<64x64xi32>
    %cst = arith.constant 0.000000e+00 : f32
    %10 = vector.broadcast %cst : f32 to vector<128x64xf32>
    %c0_3 = arith.constant 0 : index
    %c0_4 = arith.constant 0 : index
    %11 = vector.load %arg3[%c0_3, %c0_4] : memref<128x1xf32, #tpu.memory_space<vmem>>, vector<128x1xf32>
    %12 = vector.broadcast %11 : vector<128x1xf32> to vector<128x64xf32>
    %13 = arith.addf %10, %12 : vector<128x64xf32>
    %14 = vector.extract_strided_slice %2 {offsets = [0, 0], sizes = [64, 64], strides = [1, 1]} : vector<64x82xf32> to vector<64x64xf32>
    %cst_5 = arith.constant 0.000000e+00 : f32
    %15 = vector.broadcast %cst_5 : f32 to vector<64x64xf32>
    %16 = arith.select %7, %14, %15 : vector<64x64xi1>, vector<64x64xf32>
    %c0_6 = arith.constant 0 : index
    %c0_7 = arith.constant 0 : index
    %c0_8 = arith.constant 0 : index
    %17 = vector.load %arg2[%c0_6, %c0_7, %c0_8] : memref<9x128x64xbf16, #tpu.memory_space<vmem>>, vector<1x128x64xbf16>
    %18 = vector.shape_cast %17 : vector<1x128x64xbf16> to vector<128x64xbf16>
    %19 = arith.truncf %16 : vector<64x64xf32> to vector<64x64xbf16>
    %cst_9 = arith.constant dense<0.000000e+00> : vector<128x64xf32>
    %20 = tpu.matmul %18, %19, %cst_9 {dimension_numbers = #tpu.dot_dimension_numbers<[1], [0], [0], [1], [0, 0, 1, 1], [], []>} : vector<128x64xbf16>, vector<64x64xbf16>, vector<128x64xf32> -> vector<128x64xf32>
    %21 = arith.addf %13, %20 : vector<128x64xf32>
    %22 = vector.extract_strided_slice %2 {offsets = [0, 1], sizes = [64, 64], strides = [1, 1]} : vector<64x82xf32> to vector<64x64xf32>
    %c1 = arith.constant 1 : index
    %c0_10 = arith.constant 0 : index
    %c0_11 = arith.constant 0 : index
    %23 = vector.load %arg2[%c1, %c0_10, %c0_11] : memref<9x128x64xbf16, #tpu.memory_space<vmem>>, vector<1x128x64xbf16>
    %24 = vector.shape_cast %23 : vector<1x128x64xbf16> to vector<128x64xbf16>
    %25 = arith.truncf %22 : vector<64x64xf32> to vector<64x64xbf16>
    %cst_12 = arith.constant dense<0.000000e+00> : vector<128x64xf32>
    %26 = tpu.matmul %24, %25, %cst_12 {dimension_numbers = #tpu.dot_dimension_numbers<[1], [0], [0], [1], [0, 0, 1, 1], [], []>} : vector<128x64xbf16>, vector<64x64xbf16>, vector<128x64xf32> -> vector<128x64xf32>
    %27 = arith.addf %21, %26 : vector<128x64xf32>
    %28 = vector.extract_strided_slice %2 {offsets = [0, 2], sizes = [64, 64], strides = [1, 1]} : vector<64x82xf32> to vector<64x64xf32>
    %cst_13 = arith.constant 0.000000e+00 : f32
    %29 = vector.broadcast %cst_13 : f32 to vector<64x64xf32>
    %30 = arith.select %9, %28, %29 : vector<64x64xi1>, vector<64x64xf32>
    %c2 = arith.constant 2 : index
    %c0_14 = arith.constant 0 : index
    %c0_15 = arith.constant 0 : index
    %31 = vector.load %arg2[%c2, %c0_14, %c0_15] : memref<9x128x64xbf16, #tpu.memory_space<vmem>>, vector<1x128x64xbf16>
    %32 = vector.shape_cast %31 : vector<1x128x64xbf16> to vector<128x64xbf16>
    %33 = arith.truncf %30 : vector<64x64xf32> to vector<64x64xbf16>
    %cst_16 = arith.constant dense<0.000000e+00> : vector<128x64xf32>
    %34 = tpu.matmul %32, %33, %cst_16 {dimension_numbers = #tpu.dot_dimension_numbers<[1], [0], [0], [1], [0, 0, 1, 1], [], []>} : vector<128x64xbf16>, vector<64x64xbf16>, vector<128x64xf32> -> vector<128x64xf32>
    %35 = arith.addf %27, %34 : vector<128x64xf32>
    %36 = vector.extract_strided_slice %2 {offsets = [0, 8], sizes = [64, 64], strides = [1, 1]} : vector<64x82xf32> to vector<64x64xf32>
    %cst_17 = arith.constant 0.000000e+00 : f32
    %37 = vector.broadcast %cst_17 : f32 to vector<64x64xf32>
    %38 = arith.select %7, %36, %37 : vector<64x64xi1>, vector<64x64xf32>
    %c3 = arith.constant 3 : index
    %c0_18 = arith.constant 0 : index
    %c0_19 = arith.constant 0 : index
    %39 = vector.load %arg2[%c3, %c0_18, %c0_19] : memref<9x128x64xbf16, #tpu.memory_space<vmem>>, vector<1x128x64xbf16>
    %40 = vector.shape_cast %39 : vector<1x128x64xbf16> to vector<128x64xbf16>
    %41 = arith.truncf %38 : vector<64x64xf32> to vector<64x64xbf16>
    %cst_20 = arith.constant dense<0.000000e+00> : vector<128x64xf32>
    %42 = tpu.matmul %40, %41, %cst_20 {dimension_numbers = #tpu.dot_dimension_numbers<[1], [0], [0], [1], [0, 0, 1, 1], [], []>} : vector<128x64xbf16>, vector<64x64xbf16>, vector<128x64xf32> -> vector<128x64xf32>
    %43 = arith.addf %35, %42 : vector<128x64xf32>
    %44 = vector.extract_strided_slice %2 {offsets = [0, 9], sizes = [64, 64], strides = [1, 1]} : vector<64x82xf32> to vector<64x64xf32>
    %c4 = arith.constant 4 : index
    %c0_21 = arith.constant 0 : index
    %c0_22 = arith.constant 0 : index
    %45 = vector.load %arg2[%c4, %c0_21, %c0_22] : memref<9x128x64xbf16, #tpu.memory_space<vmem>>, vector<1x128x64xbf16>
    %46 = vector.shape_cast %45 : vector<1x128x64xbf16> to vector<128x64xbf16>
    %47 = arith.truncf %44 : vector<64x64xf32> to vector<64x64xbf16>
    %cst_23 = arith.constant dense<0.000000e+00> : vector<128x64xf32>
    %48 = tpu.matmul %46, %47, %cst_23 {dimension_numbers = #tpu.dot_dimension_numbers<[1], [0], [0], [1], [0, 0, 1, 1], [], []>} : vector<128x64xbf16>, vector<64x64xbf16>, vector<128x64xf32> -> vector<128x64xf32>
    %49 = arith.addf %43, %48 : vector<128x64xf32>
    %50 = vector.extract_strided_slice %2 {offsets = [0, 10], sizes = [64, 64], strides = [1, 1]} : vector<64x82xf32> to vector<64x64xf32>
    %cst_24 = arith.constant 0.000000e+00 : f32
    %51 = vector.broadcast %cst_24 : f32 to vector<64x64xf32>
    %52 = arith.select %9, %50, %51 : vector<64x64xi1>, vector<64x64xf32>
    %c5 = arith.constant 5 : index
    %c0_25 = arith.constant 0 : index
    %c0_26 = arith.constant 0 : index
    %53 = vector.load %arg2[%c5, %c0_25, %c0_26] : memref<9x128x64xbf16, #tpu.memory_space<vmem>>, vector<1x128x64xbf16>
    %54 = vector.shape_cast %53 : vector<1x128x64xbf16> to vector<128x64xbf16>
    %55 = arith.truncf %52 : vector<64x64xf32> to vector<64x64xbf16>
    %cst_27 = arith.constant dense<0.000000e+00> : vector<128x64xf32>
    %56 = tpu.matmul %54, %55, %cst_27 {dimension_numbers = #tpu.dot_dimension_numbers<[1], [0], [0], [1], [0, 0, 1, 1], [], []>} : vector<128x64xbf16>, vector<64x64xbf16>, vector<128x64xf32> -> vector<128x64xf32>
    %57 = arith.addf %49, %56 : vector<128x64xf32>
    %58 = vector.extract_strided_slice %2 {offsets = [0, 16], sizes = [64, 64], strides = [1, 1]} : vector<64x82xf32> to vector<64x64xf32>
    %cst_28 = arith.constant 0.000000e+00 : f32
    %59 = vector.broadcast %cst_28 : f32 to vector<64x64xf32>
    %60 = arith.select %7, %58, %59 : vector<64x64xi1>, vector<64x64xf32>
    %c6 = arith.constant 6 : index
    %c0_29 = arith.constant 0 : index
    %c0_30 = arith.constant 0 : index
    %61 = vector.load %arg2[%c6, %c0_29, %c0_30] : memref<9x128x64xbf16, #tpu.memory_space<vmem>>, vector<1x128x64xbf16>
    %62 = vector.shape_cast %61 : vector<1x128x64xbf16> to vector<128x64xbf16>
    %63 = arith.truncf %60 : vector<64x64xf32> to vector<64x64xbf16>
    %cst_31 = arith.constant dense<0.000000e+00> : vector<128x64xf32>
    %64 = tpu.matmul %62, %63, %cst_31 {dimension_numbers = #tpu.dot_dimension_numbers<[1], [0], [0], [1], [0, 0, 1, 1], [], []>} : vector<128x64xbf16>, vector<64x64xbf16>, vector<128x64xf32> -> vector<128x64xf32>
    %65 = arith.addf %57, %64 : vector<128x64xf32>
    %66 = vector.extract_strided_slice %2 {offsets = [0, 17], sizes = [64, 64], strides = [1, 1]} : vector<64x82xf32> to vector<64x64xf32>
    %c7 = arith.constant 7 : index
    %c0_32 = arith.constant 0 : index
    %c0_33 = arith.constant 0 : index
    %67 = vector.load %arg2[%c7, %c0_32, %c0_33] : memref<9x128x64xbf16, #tpu.memory_space<vmem>>, vector<1x128x64xbf16>
    %68 = vector.shape_cast %67 : vector<1x128x64xbf16> to vector<128x64xbf16>
    %69 = arith.truncf %66 : vector<64x64xf32> to vector<64x64xbf16>
    %cst_34 = arith.constant dense<0.000000e+00> : vector<128x64xf32>
    %70 = tpu.matmul %68, %69, %cst_34 {dimension_numbers = #tpu.dot_dimension_numbers<[1], [0], [0], [1], [0, 0, 1, 1], [], []>} : vector<128x64xbf16>, vector<64x64xbf16>, vector<128x64xf32> -> vector<128x64xf32>
    %71 = arith.addf %65, %70 : vector<128x64xf32>
    %72 = vector.extract_strided_slice %2 {offsets = [0, 18], sizes = [64, 64], strides = [1, 1]} : vector<64x82xf32> to vector<64x64xf32>
    %cst_35 = arith.constant 0.000000e+00 : f32
    %73 = vector.broadcast %cst_35 : f32 to vector<64x64xf32>
    %74 = arith.select %9, %72, %73 : vector<64x64xi1>, vector<64x64xf32>
    %c8 = arith.constant 8 : index
    %c0_36 = arith.constant 0 : index
    %c0_37 = arith.constant 0 : index
    %75 = vector.load %arg2[%c8, %c0_36, %c0_37] : memref<9x128x64xbf16, #tpu.memory_space<vmem>>, vector<1x128x64xbf16>
    %76 = vector.shape_cast %75 : vector<1x128x64xbf16> to vector<128x64xbf16>
    %77 = arith.truncf %74 : vector<64x64xf32> to vector<64x64xbf16>
    %cst_38 = arith.constant dense<0.000000e+00> : vector<128x64xf32>
    %78 = tpu.matmul %76, %77, %cst_38 {dimension_numbers = #tpu.dot_dimension_numbers<[1], [0], [0], [1], [0, 0, 1, 1], [], []>} : vector<128x64xbf16>, vector<64x64xbf16>, vector<128x64xf32> -> vector<128x64xf32>
    %79 = arith.addf %71, %78 : vector<128x64xf32>
    %cst_39 = arith.constant 0.000000e+00 : f32
    %80 = vector.broadcast %cst_39 : f32 to vector<128x64xf32>
    %81 = arith.cmpf ogt, %79, %80 : vector<128x64xf32>
    %cst_40 = arith.constant 0.000000e+00 : f32
    %82 = vector.broadcast %cst_40 : f32 to vector<128x64xf32>
    %83 = arith.minimumf %79, %82 : vector<128x64xf32>
    %84 = math.exp %83 : vector<128x64xf32>
    %cst_41 = arith.constant 1.000000e+00 : f32
    %85 = vector.broadcast %cst_41 : f32 to vector<128x64xf32>
    %86 = arith.subf %84, %85 : vector<128x64xf32>
    %87 = arith.select %81, %79, %86 : vector<128x64xi1>, vector<128x64xf32>
    %88 = vector.shape_cast %87 : vector<128x64xf32> to vector<1x128x64xf32>
    %cst_42 = arith.constant dense<0.000000e+00> : vector<1xf32>
    %89 = vector.multi_reduction <add>, %88, %cst_42 [1, 2] : vector<1x128x64xf32> to vector<1xf32>
    %90 = vector.shape_cast %89 : vector<1xf32> to vector<1x1x1xf32>
    %91 = vector.extract %90[0, 0, 0] : f32 from vector<1x1x1xf32>
    %92 = vector.broadcast %91 : f32 to vector<1x1xf32>
    %cst_43 = arith.constant 8.192000e+03 : f32
    %93 = vector.broadcast %cst_43 : f32 to vector<1x1xf32>
    %94 = arith.divf %92, %93 : vector<1x1xf32>
    %95 = vector.broadcast %94 : vector<1x1xf32> to vector<128x64xf32>
    %96 = arith.subf %87, %95 : vector<128x64xf32>
    %97 = arith.mulf %96, %96 : vector<128x64xf32>
    %98 = vector.shape_cast %97 : vector<128x64xf32> to vector<1x128x64xf32>
    %cst_44 = arith.constant dense<0.000000e+00> : vector<1xf32>
    %99 = vector.multi_reduction <add>, %98, %cst_44 [1, 2] : vector<1x128x64xf32> to vector<1xf32>
    %100 = vector.shape_cast %99 : vector<1xf32> to vector<1x1x1xf32>
    %101 = vector.extract %100[0, 0, 0] : f32 from vector<1x1x1xf32>
    %102 = vector.broadcast %101 : f32 to vector<1x1xf32>
    %cst_45 = arith.constant 8.192000e+03 : f32
    %103 = vector.broadcast %cst_45 : f32 to vector<1x1xf32>
    %104 = arith.divf %102, %103 : vector<1x1xf32>
    %105 = vector.broadcast %94 : vector<1x1xf32> to vector<128x64xf32>
    %106 = arith.subf %87, %105 : vector<128x64xf32>
    %cst_46 = arith.constant 9.99999974E-6 : f32
    %107 = vector.broadcast %cst_46 : f32 to vector<1x1xf32>
    %108 = arith.addf %104, %107 : vector<1x1xf32>
    %109 = math.rsqrt %108 : vector<1x1xf32>
    %110 = vector.broadcast %109 : vector<1x1xf32> to vector<128x64xf32>
    %111 = arith.mulf %106, %110 : vector<128x64xf32>
    %112 = arith.truncf %111 : vector<128x64xf32> to vector<128x64xbf16>
    %c0_47 = arith.constant 0 : index
    %c0_48 = arith.constant 0 : index
    %c0_49 = arith.constant 0 : index
    %113 = vector.load %arg4[%c0_47, %c0_48, %c0_49] : memref<1x128x64xbf16, #tpu.memory_space<vmem>>, vector<1x128x64xbf16>
    %114 = vector.shape_cast %113 : vector<1x128x64xbf16> to vector<128x64xbf16>
    %115 = vector.shape_cast %112 : vector<128x64xbf16> to vector<1x128x64xbf16>
    tpu.vector_store %arg4[%c0_47, %c0_48, %c0_49], %115 {strides = array<i32>} : memref<1x128x64xbf16, #tpu.memory_space<vmem>>, vector<1x128x64xbf16>,
    return
  }
  func.func @transform_0(%arg0: i32) -> (i32, i32, i32) {
    %c0_i32 = arith.constant 0 : i32
    %c0_i32_0 = arith.constant 0 : i32
    %c0_i32_1 = arith.constant 0 : i32
    return %arg0, %c0_i32, %c0_i32_0 : i32, i32, i32
  }
  func.func @transform_1(%arg0: i32) -> (i32, i32, i32) {
    %c0_i32 = arith.constant 0 : i32
    %c0_i32_0 = arith.constant 0 : i32
    %c0_i32_1 = arith.constant 0 : i32
    %c0_i32_2 = arith.constant 0 : i32
    return %c0_i32, %c0_i32_0, %c0_i32_1 : i32, i32, i32
  }
  func.func @transform_2(%arg0: i32) -> (i32, i32) {
    %c0_i32 = arith.constant 0 : i32
    %c0_i32_0 = arith.constant 0 : i32
    %c0_i32_1 = arith.constant 0 : i32
    return %c0_i32, %c0_i32_0 : i32, i32
  }
  func.func @transform_3(%arg0: i32) -> (i32, i32, i32) {
    %c0_i32 = arith.constant 0 : i32
    %c0_i32_0 = arith.constant 0 : i32
    %c0_i32_1 = arith.constant 0 : i32
    return %arg0, %c0_i32, %c0_i32_0 : i32, i32, i32
  }
}

module attributes {stable_mosaic.version = 11 : i64} {
  func.func @kernel(%arg0: i32, %arg1: memref<1x32x290xbf16, #tpu.memory_space<vmem>>, %arg2: memref<9x64x32xbf16, #tpu.memory_space<vmem>>, %arg3: memref<64x1xf32, #tpu.memory_space<vmem>>, %arg4: memref<1x64x256xbf16, #tpu.memory_space<vmem>>) attributes {dimension_semantics = [#tpu.dimension_semantics<parallel>], iteration_bounds = array<i64: 2>, scalar_prefetch = 0 : i64, scratch_operands = 0 : i64, tpu.core_type = #tpu.core_type<tc>, window_params = [{transform_indices = @transform_0, window_bounds = array<i64: 1, 32, 290>}, {pipeline_mode = #tpu.pipeline_mode<synchronous>, transform_indices = @transform_1, window_bounds = array<i64: 9, 64, 32>}, {pipeline_mode = #tpu.pipeline_mode<synchronous>, transform_indices = @transform_2, window_bounds = array<i64: 64, 1>}, {transform_indices = @transform_3, window_bounds = array<i64: 1, 64, 256>}]} {
    %c0 = arith.constant 0 : index
    %c0_0 = arith.constant 0 : index
    %c0_1 = arith.constant 0 : index
    %0 = vector.load %arg1[%c0, %c0_0, %c0_1] : memref<1x32x290xbf16, #tpu.memory_space<vmem>>, vector<1x32x290xbf16>
    %1 = vector.shape_cast %0 : vector<1x32x290xbf16> to vector<32x290xbf16>
    %2 = arith.extf %1 : vector<32x290xbf16> to vector<32x290xf32>
    %3 = tpu.iota {dimensions = array<i32: 1>} : vector<32x256xi32>
    %c15_i32 = arith.constant 15 : i32
    %4 = vector.broadcast %c15_i32 : i32 to vector<32x256xi32>
    %5 = arith.andi %3, %4 : vector<32x256xi32>
    %c1_i32 = arith.constant 1 : i32
    %6 = vector.broadcast %c1_i32 : i32 to vector<32x256xi32>
    %7 = arith.cmpi sge, %5, %6 : vector<32x256xi32>
    %c15_i32_2 = arith.constant 15 : i32
    %8 = vector.broadcast %c15_i32_2 : i32 to vector<32x256xi32>
    %9 = arith.cmpi slt, %5, %8 : vector<32x256xi32>
    %cst = arith.constant 0.000000e+00 : f32
    %10 = vector.broadcast %cst : f32 to vector<64x256xf32>
    %c0_3 = arith.constant 0 : index
    %c0_4 = arith.constant 0 : index
    %11 = vector.load %arg3[%c0_3, %c0_4] : memref<64x1xf32, #tpu.memory_space<vmem>>, vector<64x1xf32>
    %12 = vector.broadcast %11 : vector<64x1xf32> to vector<64x256xf32>
    %13 = arith.addf %10, %12 : vector<64x256xf32>
    %14 = vector.extract_strided_slice %2 {offsets = [0, 0], sizes = [32, 256], strides = [1, 1]} : vector<32x290xf32> to vector<32x256xf32>
    %cst_5 = arith.constant 0.000000e+00 : f32
    %15 = vector.broadcast %cst_5 : f32 to vector<32x256xf32>
    %16 = arith.select %7, %14, %15 : vector<32x256xi1>, vector<32x256xf32>
    %c0_6 = arith.constant 0 : index
    %c0_7 = arith.constant 0 : index
    %c0_8 = arith.constant 0 : index
    %17 = vector.load %arg2[%c0_6, %c0_7, %c0_8] : memref<9x64x32xbf16, #tpu.memory_space<vmem>>, vector<1x64x32xbf16>
    %18 = vector.shape_cast %17 : vector<1x64x32xbf16> to vector<64x32xbf16>
    %19 = arith.truncf %16 : vector<32x256xf32> to vector<32x256xbf16>
    %cst_9 = arith.constant dense<0.000000e+00> : vector<64x256xf32>
    %20 = tpu.matmul %18, %19, %cst_9 {dimension_numbers = #tpu.dot_dimension_numbers<[1], [0], [0], [1], [0, 0, 1, 1], [], []>} : vector<64x32xbf16>, vector<32x256xbf16>, vector<64x256xf32> -> vector<64x256xf32>
    %21 = arith.addf %13, %20 : vector<64x256xf32>
    %22 = vector.extract_strided_slice %2 {offsets = [0, 1], sizes = [32, 256], strides = [1, 1]} : vector<32x290xf32> to vector<32x256xf32>
    %c1 = arith.constant 1 : index
    %c0_10 = arith.constant 0 : index
    %c0_11 = arith.constant 0 : index
    %23 = vector.load %arg2[%c1, %c0_10, %c0_11] : memref<9x64x32xbf16, #tpu.memory_space<vmem>>, vector<1x64x32xbf16>
    %24 = vector.shape_cast %23 : vector<1x64x32xbf16> to vector<64x32xbf16>
    %25 = arith.truncf %22 : vector<32x256xf32> to vector<32x256xbf16>
    %cst_12 = arith.constant dense<0.000000e+00> : vector<64x256xf32>
    %26 = tpu.matmul %24, %25, %cst_12 {dimension_numbers = #tpu.dot_dimension_numbers<[1], [0], [0], [1], [0, 0, 1, 1], [], []>} : vector<64x32xbf16>, vector<32x256xbf16>, vector<64x256xf32> -> vector<64x256xf32>
    %27 = arith.addf %21, %26 : vector<64x256xf32>
    %28 = vector.extract_strided_slice %2 {offsets = [0, 2], sizes = [32, 256], strides = [1, 1]} : vector<32x290xf32> to vector<32x256xf32>
    %cst_13 = arith.constant 0.000000e+00 : f32
    %29 = vector.broadcast %cst_13 : f32 to vector<32x256xf32>
    %30 = arith.select %9, %28, %29 : vector<32x256xi1>, vector<32x256xf32>
    %c2 = arith.constant 2 : index
    %c0_14 = arith.constant 0 : index
    %c0_15 = arith.constant 0 : index
    %31 = vector.load %arg2[%c2, %c0_14, %c0_15] : memref<9x64x32xbf16, #tpu.memory_space<vmem>>, vector<1x64x32xbf16>
    %32 = vector.shape_cast %31 : vector<1x64x32xbf16> to vector<64x32xbf16>
    %33 = arith.truncf %30 : vector<32x256xf32> to vector<32x256xbf16>
    %cst_16 = arith.constant dense<0.000000e+00> : vector<64x256xf32>
    %34 = tpu.matmul %32, %33, %cst_16 {dimension_numbers = #tpu.dot_dimension_numbers<[1], [0], [0], [1], [0, 0, 1, 1], [], []>} : vector<64x32xbf16>, vector<32x256xbf16>, vector<64x256xf32> -> vector<64x256xf32>
    %35 = arith.addf %27, %34 : vector<64x256xf32>
    %36 = vector.extract_strided_slice %2 {offsets = [0, 16], sizes = [32, 256], strides = [1, 1]} : vector<32x290xf32> to vector<32x256xf32>
    %cst_17 = arith.constant 0.000000e+00 : f32
    %37 = vector.broadcast %cst_17 : f32 to vector<32x256xf32>
    %38 = arith.select %7, %36, %37 : vector<32x256xi1>, vector<32x256xf32>
    %c3 = arith.constant 3 : index
    %c0_18 = arith.constant 0 : index
    %c0_19 = arith.constant 0 : index
    %39 = vector.load %arg2[%c3, %c0_18, %c0_19] : memref<9x64x32xbf16, #tpu.memory_space<vmem>>, vector<1x64x32xbf16>
    %40 = vector.shape_cast %39 : vector<1x64x32xbf16> to vector<64x32xbf16>
    %41 = arith.truncf %38 : vector<32x256xf32> to vector<32x256xbf16>
    %cst_20 = arith.constant dense<0.000000e+00> : vector<64x256xf32>
    %42 = tpu.matmul %40, %41, %cst_20 {dimension_numbers = #tpu.dot_dimension_numbers<[1], [0], [0], [1], [0, 0, 1, 1], [], []>} : vector<64x32xbf16>, vector<32x256xbf16>, vector<64x256xf32> -> vector<64x256xf32>
    %43 = arith.addf %35, %42 : vector<64x256xf32>
    %44 = vector.extract_strided_slice %2 {offsets = [0, 17], sizes = [32, 256], strides = [1, 1]} : vector<32x290xf32> to vector<32x256xf32>
    %c4 = arith.constant 4 : index
    %c0_21 = arith.constant 0 : index
    %c0_22 = arith.constant 0 : index
    %45 = vector.load %arg2[%c4, %c0_21, %c0_22] : memref<9x64x32xbf16, #tpu.memory_space<vmem>>, vector<1x64x32xbf16>
    %46 = vector.shape_cast %45 : vector<1x64x32xbf16> to vector<64x32xbf16>
    %47 = arith.truncf %44 : vector<32x256xf32> to vector<32x256xbf16>
    %cst_23 = arith.constant dense<0.000000e+00> : vector<64x256xf32>
    %48 = tpu.matmul %46, %47, %cst_23 {dimension_numbers = #tpu.dot_dimension_numbers<[1], [0], [0], [1], [0, 0, 1, 1], [], []>} : vector<64x32xbf16>, vector<32x256xbf16>, vector<64x256xf32> -> vector<64x256xf32>
    %49 = arith.addf %43, %48 : vector<64x256xf32>
    %50 = vector.extract_strided_slice %2 {offsets = [0, 18], sizes = [32, 256], strides = [1, 1]} : vector<32x290xf32> to vector<32x256xf32>
    %cst_24 = arith.constant 0.000000e+00 : f32
    %51 = vector.broadcast %cst_24 : f32 to vector<32x256xf32>
    %52 = arith.select %9, %50, %51 : vector<32x256xi1>, vector<32x256xf32>
    %c5 = arith.constant 5 : index
    %c0_25 = arith.constant 0 : index
    %c0_26 = arith.constant 0 : index
    %53 = vector.load %arg2[%c5, %c0_25, %c0_26] : memref<9x64x32xbf16, #tpu.memory_space<vmem>>, vector<1x64x32xbf16>
    %54 = vector.shape_cast %53 : vector<1x64x32xbf16> to vector<64x32xbf16>
    %55 = arith.truncf %52 : vector<32x256xf32> to vector<32x256xbf16>
    %cst_27 = arith.constant dense<0.000000e+00> : vector<64x256xf32>
    %56 = tpu.matmul %54, %55, %cst_27 {dimension_numbers = #tpu.dot_dimension_numbers<[1], [0], [0], [1], [0, 0, 1, 1], [], []>} : vector<64x32xbf16>, vector<32x256xbf16>, vector<64x256xf32> -> vector<64x256xf32>
    %57 = arith.addf %49, %56 : vector<64x256xf32>
    %58 = vector.extract_strided_slice %2 {offsets = [0, 32], sizes = [32, 256], strides = [1, 1]} : vector<32x290xf32> to vector<32x256xf32>
    %cst_28 = arith.constant 0.000000e+00 : f32
    %59 = vector.broadcast %cst_28 : f32 to vector<32x256xf32>
    %60 = arith.select %7, %58, %59 : vector<32x256xi1>, vector<32x256xf32>
    %c6 = arith.constant 6 : index
    %c0_29 = arith.constant 0 : index
    %c0_30 = arith.constant 0 : index
    %61 = vector.load %arg2[%c6, %c0_29, %c0_30] : memref<9x64x32xbf16, #tpu.memory_space<vmem>>, vector<1x64x32xbf16>
    %62 = vector.shape_cast %61 : vector<1x64x32xbf16> to vector<64x32xbf16>
    %63 = arith.truncf %60 : vector<32x256xf32> to vector<32x256xbf16>
    %cst_31 = arith.constant dense<0.000000e+00> : vector<64x256xf32>
    %64 = tpu.matmul %62, %63, %cst_31 {dimension_numbers = #tpu.dot_dimension_numbers<[1], [0], [0], [1], [0, 0, 1, 1], [], []>} : vector<64x32xbf16>, vector<32x256xbf16>, vector<64x256xf32> -> vector<64x256xf32>
    %65 = arith.addf %57, %64 : vector<64x256xf32>
    %66 = vector.extract_strided_slice %2 {offsets = [0, 33], sizes = [32, 256], strides = [1, 1]} : vector<32x290xf32> to vector<32x256xf32>
    %c7 = arith.constant 7 : index
    %c0_32 = arith.constant 0 : index
    %c0_33 = arith.constant 0 : index
    %67 = vector.load %arg2[%c7, %c0_32, %c0_33] : memref<9x64x32xbf16, #tpu.memory_space<vmem>>, vector<1x64x32xbf16>
    %68 = vector.shape_cast %67 : vector<1x64x32xbf16> to vector<64x32xbf16>
    %69 = arith.truncf %66 : vector<32x256xf32> to vector<32x256xbf16>
    %cst_34 = arith.constant dense<0.000000e+00> : vector<64x256xf32>
    %70 = tpu.matmul %68, %69, %cst_34 {dimension_numbers = #tpu.dot_dimension_numbers<[1], [0], [0], [1], [0, 0, 1, 1], [], []>} : vector<64x32xbf16>, vector<32x256xbf16>, vector<64x256xf32> -> vector<64x256xf32>
    %71 = arith.addf %65, %70 : vector<64x256xf32>
    %72 = vector.extract_strided_slice %2 {offsets = [0, 34], sizes = [32, 256], strides = [1, 1]} : vector<32x290xf32> to vector<32x256xf32>
    %cst_35 = arith.constant 0.000000e+00 : f32
    %73 = vector.broadcast %cst_35 : f32 to vector<32x256xf32>
    %74 = arith.select %9, %72, %73 : vector<32x256xi1>, vector<32x256xf32>
    %c8 = arith.constant 8 : index
    %c0_36 = arith.constant 0 : index
    %c0_37 = arith.constant 0 : index
    %75 = vector.load %arg2[%c8, %c0_36, %c0_37] : memref<9x64x32xbf16, #tpu.memory_space<vmem>>, vector<1x64x32xbf16>
    %76 = vector.shape_cast %75 : vector<1x64x32xbf16> to vector<64x32xbf16>
    %77 = arith.truncf %74 : vector<32x256xf32> to vector<32x256xbf16>
    %cst_38 = arith.constant dense<0.000000e+00> : vector<64x256xf32>
    %78 = tpu.matmul %76, %77, %cst_38 {dimension_numbers = #tpu.dot_dimension_numbers<[1], [0], [0], [1], [0, 0, 1, 1], [], []>} : vector<64x32xbf16>, vector<32x256xbf16>, vector<64x256xf32> -> vector<64x256xf32>
    %79 = arith.addf %71, %78 : vector<64x256xf32>
    %cst_39 = arith.constant 0.000000e+00 : f32
    %80 = vector.broadcast %cst_39 : f32 to vector<64x256xf32>
    %81 = arith.cmpf ogt, %79, %80 : vector<64x256xf32>
    %cst_40 = arith.constant 0.000000e+00 : f32
    %82 = vector.broadcast %cst_40 : f32 to vector<64x256xf32>
    %83 = arith.minimumf %79, %82 : vector<64x256xf32>
    %84 = math.exp %83 : vector<64x256xf32>
    %cst_41 = arith.constant 1.000000e+00 : f32
    %85 = vector.broadcast %cst_41 : f32 to vector<64x256xf32>
    %86 = arith.subf %84, %85 : vector<64x256xf32>
    %87 = arith.select %81, %79, %86 : vector<64x256xi1>, vector<64x256xf32>
    %88 = vector.shape_cast %87 : vector<64x256xf32> to vector<1x64x256xf32>
    %cst_42 = arith.constant dense<0.000000e+00> : vector<1xf32>
    %89 = vector.multi_reduction <add>, %88, %cst_42 [1, 2] : vector<1x64x256xf32> to vector<1xf32>
    %90 = vector.shape_cast %89 : vector<1xf32> to vector<1x1x1xf32>
    %91 = vector.extract %90[0, 0, 0] : f32 from vector<1x1x1xf32>
    %92 = vector.broadcast %91 : f32 to vector<1x1xf32>
    %cst_43 = arith.constant 1.638400e+04 : f32
    %93 = vector.broadcast %cst_43 : f32 to vector<1x1xf32>
    %94 = arith.divf %92, %93 : vector<1x1xf32>
    %95 = vector.broadcast %94 : vector<1x1xf32> to vector<64x256xf32>
    %96 = arith.subf %87, %95 : vector<64x256xf32>
    %97 = arith.mulf %96, %96 : vector<64x256xf32>
    %98 = vector.shape_cast %97 : vector<64x256xf32> to vector<1x64x256xf32>
    %cst_44 = arith.constant dense<0.000000e+00> : vector<1xf32>
    %99 = vector.multi_reduction <add>, %98, %cst_44 [1, 2] : vector<1x64x256xf32> to vector<1xf32>
    %100 = vector.shape_cast %99 : vector<1xf32> to vector<1x1x1xf32>
    %101 = vector.extract %100[0, 0, 0] : f32 from vector<1x1x1xf32>
    %102 = vector.broadcast %101 : f32 to vector<1x1xf32>
    %cst_45 = arith.constant 1.638400e+04 : f32
    %103 = vector.broadcast %cst_45 : f32 to vector<1x1xf32>
    %104 = arith.divf %102, %103 : vector<1x1xf32>
    %105 = vector.broadcast %94 : vector<1x1xf32> to vector<64x256xf32>
    %106 = arith.subf %87, %105 : vector<64x256xf32>
    %cst_46 = arith.constant 9.99999974E-6 : f32
    %107 = vector.broadcast %cst_46 : f32 to vector<1x1xf32>
    %108 = arith.addf %104, %107 : vector<1x1xf32>
    %109 = math.rsqrt %108 : vector<1x1xf32>
    %110 = vector.broadcast %109 : vector<1x1xf32> to vector<64x256xf32>
    %111 = arith.mulf %106, %110 : vector<64x256xf32>
    %112 = arith.truncf %111 : vector<64x256xf32> to vector<64x256xbf16>
    %c0_47 = arith.constant 0 : index
    %c0_48 = arith.constant 0 : index
    %c0_49 = arith.constant 0 : index
    %113 = vector.load %arg4[%c0_47, %c0_48, %c0_49] : memref<1x64x256xbf16, #tpu.memory_space<vmem>>, vector<1x64x256xbf16>
    %114 = vector.shape_cast %113 : vector<1x64x256xbf16> to vector<64x256xbf16>
    %115 = vector.shape_cast %112 : vector<64x256xbf16> to vector<1x64x256xbf16>
    tpu.vector_store %arg4[%c0_47, %c0_48, %c0_49], %115 {strides = array<i32>} : memref<1x64x256xbf16, #tpu.memory_space<vmem>>, vector<1x64x256xbf16>,
    return
  }
  func.func @transform_0(%arg0: i32) -> (i32, i32, i32) {
    %c0_i32 = arith.constant 0 : i32
    %c0_i32_0 = arith.constant 0 : i32
    %c0_i32_1 = arith.constant 0 : i32
    return %arg0, %c0_i32, %c0_i32_0 : i32, i32, i32
  }
  func.func @transform_1(%arg0: i32) -> (i32, i32, i32) {
    %c0_i32 = arith.constant 0 : i32
    %c0_i32_0 = arith.constant 0 : i32
    %c0_i32_1 = arith.constant 0 : i32
    %c0_i32_2 = arith.constant 0 : i32
    return %c0_i32, %c0_i32_0, %c0_i32_1 : i32, i32, i32
  }
  func.func @transform_2(%arg0: i32) -> (i32, i32) {
    %c0_i32 = arith.constant 0 : i32
    %c0_i32_0 = arith.constant 0 : i32
    %c0_i32_1 = arith.constant 0 : i32
    return %c0_i32, %c0_i32_0 : i32, i32
  }
  func.func @transform_3(%arg0: i32) -> (i32, i32, i32) {
    %c0_i32 = arith.constant 0 : i32
    %c0_i32_0 = arith.constant 0 : i32
    %c0_i32_1 = arith.constant 0 : i32
    return %arg0, %c0_i32, %c0_i32_0 : i32, i32, i32
  }
}

module attributes {stable_mosaic.version = 11 : i64} {
  func.func @kernel(%arg0: i32, %arg1: memref<1x16x1156xbf16, #tpu.memory_space<vmem>>, %arg2: memref<25x4x16xbf16, #tpu.memory_space<vmem>>, %arg3: memref<4x1xf32, #tpu.memory_space<vmem>>, %arg4: memref<1x4x1024xf32, #tpu.memory_space<vmem>>) attributes {dimension_semantics = [#tpu.dimension_semantics<parallel>], iteration_bounds = array<i64: 2>, scalar_prefetch = 0 : i64, scratch_operands = 0 : i64, tpu.core_type = #tpu.core_type<tc>, window_params = [{transform_indices = @transform_0, window_bounds = array<i64: 1, 16, 1156>}, {pipeline_mode = #tpu.pipeline_mode<synchronous>, transform_indices = @transform_1, window_bounds = array<i64: 25, 4, 16>}, {pipeline_mode = #tpu.pipeline_mode<synchronous>, transform_indices = @transform_2, window_bounds = array<i64: 4, 1>}, {transform_indices = @transform_3, window_bounds = array<i64: 1, 4, 1024>}]} {
    %c0 = arith.constant 0 : index
    %c0_0 = arith.constant 0 : index
    %c0_1 = arith.constant 0 : index
    %0 = vector.load %arg1[%c0, %c0_0, %c0_1] : memref<1x16x1156xbf16, #tpu.memory_space<vmem>>, vector<1x16x1156xbf16>
    %1 = vector.shape_cast %0 : vector<1x16x1156xbf16> to vector<16x1156xbf16>
    %2 = arith.extf %1 : vector<16x1156xbf16> to vector<16x1156xf32>
    %3 = tpu.iota {dimensions = array<i32: 1>} : vector<16x1024xi32>
    %c31_i32 = arith.constant 31 : i32
    %4 = vector.broadcast %c31_i32 : i32 to vector<16x1024xi32>
    %5 = arith.andi %3, %4 : vector<16x1024xi32>
    %c2_i32 = arith.constant 2 : i32
    %6 = vector.broadcast %c2_i32 : i32 to vector<16x1024xi32>
    %7 = arith.cmpi sge, %5, %6 : vector<16x1024xi32>
    %c1_i32 = arith.constant 1 : i32
    %8 = vector.broadcast %c1_i32 : i32 to vector<16x1024xi32>
    %9 = arith.cmpi sge, %5, %8 : vector<16x1024xi32>
    %c31_i32_2 = arith.constant 31 : i32
    %10 = vector.broadcast %c31_i32_2 : i32 to vector<16x1024xi32>
    %11 = arith.cmpi slt, %5, %10 : vector<16x1024xi32>
    %c30_i32 = arith.constant 30 : i32
    %12 = vector.broadcast %c30_i32 : i32 to vector<16x1024xi32>
    %13 = arith.cmpi slt, %5, %12 : vector<16x1024xi32>
    %cst = arith.constant 0.000000e+00 : f32
    %14 = vector.broadcast %cst : f32 to vector<4x1024xf32>
    %c0_3 = arith.constant 0 : index
    %c0_4 = arith.constant 0 : index
    %15 = vector.load %arg3[%c0_3, %c0_4] : memref<4x1xf32, #tpu.memory_space<vmem>>, vector<4x1xf32>
    %16 = vector.broadcast %15 : vector<4x1xf32> to vector<4x1024xf32>
    %17 = arith.addf %14, %16 : vector<4x1024xf32>
    %18 = vector.extract_strided_slice %2 {offsets = [0, 0], sizes = [16, 1024], strides = [1, 1]} : vector<16x1156xf32> to vector<16x1024xf32>
    %cst_5 = arith.constant 0.000000e+00 : f32
    %19 = vector.broadcast %cst_5 : f32 to vector<16x1024xf32>
    %20 = arith.select %7, %18, %19 : vector<16x1024xi1>, vector<16x1024xf32>
    %c0_6 = arith.constant 0 : index
    %c0_7 = arith.constant 0 : index
    %c0_8 = arith.constant 0 : index
    %21 = vector.load %arg2[%c0_6, %c0_7, %c0_8] : memref<25x4x16xbf16, #tpu.memory_space<vmem>>, vector<1x4x16xbf16>
    %22 = vector.shape_cast %21 : vector<1x4x16xbf16> to vector<4x16xbf16>
    %23 = arith.truncf %20 : vector<16x1024xf32> to vector<16x1024xbf16>
    %cst_9 = arith.constant dense<0.000000e+00> : vector<4x1024xf32>
    %24 = tpu.matmul %22, %23, %cst_9 {dimension_numbers = #tpu.dot_dimension_numbers<[1], [0], [0], [1], [0, 0, 1, 1], [], []>} : vector<4x16xbf16>, vector<16x1024xbf16>, vector<4x1024xf32> -> vector<4x1024xf32>
    %25 = arith.addf %17, %24 : vector<4x1024xf32>
    %26 = vector.extract_strided_slice %2 {offsets = [0, 1], sizes = [16, 1024], strides = [1, 1]} : vector<16x1156xf32> to vector<16x1024xf32>
    %cst_10 = arith.constant 0.000000e+00 : f32
    %27 = vector.broadcast %cst_10 : f32 to vector<16x1024xf32>
    %28 = arith.select %9, %26, %27 : vector<16x1024xi1>, vector<16x1024xf32>
    %c1 = arith.constant 1 : index
    %c0_11 = arith.constant 0 : index
    %c0_12 = arith.constant 0 : index
    %29 = vector.load %arg2[%c1, %c0_11, %c0_12] : memref<25x4x16xbf16, #tpu.memory_space<vmem>>, vector<1x4x16xbf16>
    %30 = vector.shape_cast %29 : vector<1x4x16xbf16> to vector<4x16xbf16>
    %31 = arith.truncf %28 : vector<16x1024xf32> to vector<16x1024xbf16>
    %cst_13 = arith.constant dense<0.000000e+00> : vector<4x1024xf32>
    %32 = tpu.matmul %30, %31, %cst_13 {dimension_numbers = #tpu.dot_dimension_numbers<[1], [0], [0], [1], [0, 0, 1, 1], [], []>} : vector<4x16xbf16>, vector<16x1024xbf16>, vector<4x1024xf32> -> vector<4x1024xf32>
    %33 = arith.addf %25, %32 : vector<4x1024xf32>
    %34 = vector.extract_strided_slice %2 {offsets = [0, 2], sizes = [16, 1024], strides = [1, 1]} : vector<16x1156xf32> to vector<16x1024xf32>
    %c2 = arith.constant 2 : index
    %c0_14 = arith.constant 0 : index
    %c0_15 = arith.constant 0 : index
    %35 = vector.load %arg2[%c2, %c0_14, %c0_15] : memref<25x4x16xbf16, #tpu.memory_space<vmem>>, vector<1x4x16xbf16>
    %36 = vector.shape_cast %35 : vector<1x4x16xbf16> to vector<4x16xbf16>
    %37 = arith.truncf %34 : vector<16x1024xf32> to vector<16x1024xbf16>
    %cst_16 = arith.constant dense<0.000000e+00> : vector<4x1024xf32>
    %38 = tpu.matmul %36, %37, %cst_16 {dimension_numbers = #tpu.dot_dimension_numbers<[1], [0], [0], [1], [0, 0, 1, 1], [], []>} : vector<4x16xbf16>, vector<16x1024xbf16>, vector<4x1024xf32> -> vector<4x1024xf32>
    %39 = arith.addf %33, %38 : vector<4x1024xf32>
    %40 = vector.extract_strided_slice %2 {offsets = [0, 3], sizes = [16, 1024], strides = [1, 1]} : vector<16x1156xf32> to vector<16x1024xf32>
    %cst_17 = arith.constant 0.000000e+00 : f32
    %41 = vector.broadcast %cst_17 : f32 to vector<16x1024xf32>
    %42 = arith.select %11, %40, %41 : vector<16x1024xi1>, vector<16x1024xf32>
    %c3 = arith.constant 3 : index
    %c0_18 = arith.constant 0 : index
    %c0_19 = arith.constant 0 : index
    %43 = vector.load %arg2[%c3, %c0_18, %c0_19] : memref<25x4x16xbf16, #tpu.memory_space<vmem>>, vector<1x4x16xbf16>
    %44 = vector.shape_cast %43 : vector<1x4x16xbf16> to vector<4x16xbf16>
    %45 = arith.truncf %42 : vector<16x1024xf32> to vector<16x1024xbf16>
    %cst_20 = arith.constant dense<0.000000e+00> : vector<4x1024xf32>
    %46 = tpu.matmul %44, %45, %cst_20 {dimension_numbers = #tpu.dot_dimension_numbers<[1], [0], [0], [1], [0, 0, 1, 1], [], []>} : vector<4x16xbf16>, vector<16x1024xbf16>, vector<4x1024xf32> -> vector<4x1024xf32>
    %47 = arith.addf %39, %46 : vector<4x1024xf32>
    %48 = vector.extract_strided_slice %2 {offsets = [0, 4], sizes = [16, 1024], strides = [1, 1]} : vector<16x1156xf32> to vector<16x1024xf32>
    %cst_21 = arith.constant 0.000000e+00 : f32
    %49 = vector.broadcast %cst_21 : f32 to vector<16x1024xf32>
    %50 = arith.select %13, %48, %49 : vector<16x1024xi1>, vector<16x1024xf32>
    %c4 = arith.constant 4 : index
    %c0_22 = arith.constant 0 : index
    %c0_23 = arith.constant 0 : index
    %51 = vector.load %arg2[%c4, %c0_22, %c0_23] : memref<25x4x16xbf16, #tpu.memory_space<vmem>>, vector<1x4x16xbf16>
    %52 = vector.shape_cast %51 : vector<1x4x16xbf16> to vector<4x16xbf16>
    %53 = arith.truncf %50 : vector<16x1024xf32> to vector<16x1024xbf16>
    %cst_24 = arith.constant dense<0.000000e+00> : vector<4x1024xf32>
    %54 = tpu.matmul %52, %53, %cst_24 {dimension_numbers = #tpu.dot_dimension_numbers<[1], [0], [0], [1], [0, 0, 1, 1], [], []>} : vector<4x16xbf16>, vector<16x1024xbf16>, vector<4x1024xf32> -> vector<4x1024xf32>
    %55 = arith.addf %47, %54 : vector<4x1024xf32>
    %56 = vector.extract_strided_slice %2 {offsets = [0, 32], sizes = [16, 1024], strides = [1, 1]} : vector<16x1156xf32> to vector<16x1024xf32>
    %cst_25 = arith.constant 0.000000e+00 : f32
    %57 = vector.broadcast %cst_25 : f32 to vector<16x1024xf32>
    %58 = arith.select %7, %56, %57 : vector<16x1024xi1>, vector<16x1024xf32>
    %c5 = arith.constant 5 : index
    %c0_26 = arith.constant 0 : index
    %c0_27 = arith.constant 0 : index
    %59 = vector.load %arg2[%c5, %c0_26, %c0_27] : memref<25x4x16xbf16, #tpu.memory_space<vmem>>, vector<1x4x16xbf16>
    %60 = vector.shape_cast %59 : vector<1x4x16xbf16> to vector<4x16xbf16>
    %61 = arith.truncf %58 : vector<16x1024xf32> to vector<16x1024xbf16>
    %cst_28 = arith.constant dense<0.000000e+00> : vector<4x1024xf32>
    %62 = tpu.matmul %60, %61, %cst_28 {dimension_numbers = #tpu.dot_dimension_numbers<[1], [0], [0], [1], [0, 0, 1, 1], [], []>} : vector<4x16xbf16>, vector<16x1024xbf16>, vector<4x1024xf32> -> vector<4x1024xf32>
    %63 = arith.addf %55, %62 : vector<4x1024xf32>
    %64 = vector.extract_strided_slice %2 {offsets = [0, 33], sizes = [16, 1024], strides = [1, 1]} : vector<16x1156xf32> to vector<16x1024xf32>
    %cst_29 = arith.constant 0.000000e+00 : f32
    %65 = vector.broadcast %cst_29 : f32 to vector<16x1024xf32>
    %66 = arith.select %9, %64, %65 : vector<16x1024xi1>, vector<16x1024xf32>
    %c6 = arith.constant 6 : index
    %c0_30 = arith.constant 0 : index
    %c0_31 = arith.constant 0 : index
    %67 = vector.load %arg2[%c6, %c0_30, %c0_31] : memref<25x4x16xbf16, #tpu.memory_space<vmem>>, vector<1x4x16xbf16>
    %68 = vector.shape_cast %67 : vector<1x4x16xbf16> to vector<4x16xbf16>
    %69 = arith.truncf %66 : vector<16x1024xf32> to vector<16x1024xbf16>
    %cst_32 = arith.constant dense<0.000000e+00> : vector<4x1024xf32>
    %70 = tpu.matmul %68, %69, %cst_32 {dimension_numbers = #tpu.dot_dimension_numbers<[1], [0], [0], [1], [0, 0, 1, 1], [], []>} : vector<4x16xbf16>, vector<16x1024xbf16>, vector<4x1024xf32> -> vector<4x1024xf32>
    %71 = arith.addf %63, %70 : vector<4x1024xf32>
    %72 = vector.extract_strided_slice %2 {offsets = [0, 34], sizes = [16, 1024], strides = [1, 1]} : vector<16x1156xf32> to vector<16x1024xf32>
    %c7 = arith.constant 7 : index
    %c0_33 = arith.constant 0 : index
    %c0_34 = arith.constant 0 : index
    %73 = vector.load %arg2[%c7, %c0_33, %c0_34] : memref<25x4x16xbf16, #tpu.memory_space<vmem>>, vector<1x4x16xbf16>
    %74 = vector.shape_cast %73 : vector<1x4x16xbf16> to vector<4x16xbf16>
    %75 = arith.truncf %72 : vector<16x1024xf32> to vector<16x1024xbf16>
    %cst_35 = arith.constant dense<0.000000e+00> : vector<4x1024xf32>
    %76 = tpu.matmul %74, %75, %cst_35 {dimension_numbers = #tpu.dot_dimension_numbers<[1], [0], [0], [1], [0, 0, 1, 1], [], []>} : vector<4x16xbf16>, vector<16x1024xbf16>, vector<4x1024xf32> -> vector<4x1024xf32>
    %77 = arith.addf %71, %76 : vector<4x1024xf32>
    %78 = vector.extract_strided_slice %2 {offsets = [0, 35], sizes = [16, 1024], strides = [1, 1]} : vector<16x1156xf32> to vector<16x1024xf32>
    %cst_36 = arith.constant 0.000000e+00 : f32
    %79 = vector.broadcast %cst_36 : f32 to vector<16x1024xf32>
    %80 = arith.select %11, %78, %79 : vector<16x1024xi1>, vector<16x1024xf32>
    %c8 = arith.constant 8 : index
    %c0_37 = arith.constant 0 : index
    %c0_38 = arith.constant 0 : index
    %81 = vector.load %arg2[%c8, %c0_37, %c0_38] : memref<25x4x16xbf16, #tpu.memory_space<vmem>>, vector<1x4x16xbf16>
    %82 = vector.shape_cast %81 : vector<1x4x16xbf16> to vector<4x16xbf16>
    %83 = arith.truncf %80 : vector<16x1024xf32> to vector<16x1024xbf16>
    %cst_39 = arith.constant dense<0.000000e+00> : vector<4x1024xf32>
    %84 = tpu.matmul %82, %83, %cst_39 {dimension_numbers = #tpu.dot_dimension_numbers<[1], [0], [0], [1], [0, 0, 1, 1], [], []>} : vector<4x16xbf16>, vector<16x1024xbf16>, vector<4x1024xf32> -> vector<4x1024xf32>
    %85 = arith.addf %77, %84 : vector<4x1024xf32>
    %86 = vector.extract_strided_slice %2 {offsets = [0, 36], sizes = [16, 1024], strides = [1, 1]} : vector<16x1156xf32> to vector<16x1024xf32>
    %cst_40 = arith.constant 0.000000e+00 : f32
    %87 = vector.broadcast %cst_40 : f32 to vector<16x1024xf32>
    %88 = arith.select %13, %86, %87 : vector<16x1024xi1>, vector<16x1024xf32>
    %c9 = arith.constant 9 : index
    %c0_41 = arith.constant 0 : index
    %c0_42 = arith.constant 0 : index
    %89 = vector.load %arg2[%c9, %c0_41, %c0_42] : memref<25x4x16xbf16, #tpu.memory_space<vmem>>, vector<1x4x16xbf16>
    %90 = vector.shape_cast %89 : vector<1x4x16xbf16> to vector<4x16xbf16>
    %91 = arith.truncf %88 : vector<16x1024xf32> to vector<16x1024xbf16>
    %cst_43 = arith.constant dense<0.000000e+00> : vector<4x1024xf32>
    %92 = tpu.matmul %90, %91, %cst_43 {dimension_numbers = #tpu.dot_dimension_numbers<[1], [0], [0], [1], [0, 0, 1, 1], [], []>} : vector<4x16xbf16>, vector<16x1024xbf16>, vector<4x1024xf32> -> vector<4x1024xf32>
    %93 = arith.addf %85, %92 : vector<4x1024xf32>
    %94 = vector.extract_strided_slice %2 {offsets = [0, 64], sizes = [16, 1024], strides = [1, 1]} : vector<16x1156xf32> to vector<16x1024xf32>
    %cst_44 = arith.constant 0.000000e+00 : f32
    %95 = vector.broadcast %cst_44 : f32 to vector<16x1024xf32>
    %96 = arith.select %7, %94, %95 : vector<16x1024xi1>, vector<16x1024xf32>
    %c10 = arith.constant 10 : index
    %c0_45 = arith.constant 0 : index
    %c0_46 = arith.constant 0 : index
    %97 = vector.load %arg2[%c10, %c0_45, %c0_46] : memref<25x4x16xbf16, #tpu.memory_space<vmem>>, vector<1x4x16xbf16>
    %98 = vector.shape_cast %97 : vector<1x4x16xbf16> to vector<4x16xbf16>
    %99 = arith.truncf %96 : vector<16x1024xf32> to vector<16x1024xbf16>
    %cst_47 = arith.constant dense<0.000000e+00> : vector<4x1024xf32>
    %100 = tpu.matmul %98, %99, %cst_47 {dimension_numbers = #tpu.dot_dimension_numbers<[1], [0], [0], [1], [0, 0, 1, 1], [], []>} : vector<4x16xbf16>, vector<16x1024xbf16>, vector<4x1024xf32> -> vector<4x1024xf32>
    %101 = arith.addf %93, %100 : vector<4x1024xf32>
    %102 = vector.extract_strided_slice %2 {offsets = [0, 65], sizes = [16, 1024], strides = [1, 1]} : vector<16x1156xf32> to vector<16x1024xf32>
    %cst_48 = arith.constant 0.000000e+00 : f32
    %103 = vector.broadcast %cst_48 : f32 to vector<16x1024xf32>
    %104 = arith.select %9, %102, %103 : vector<16x1024xi1>, vector<16x1024xf32>
    %c11 = arith.constant 11 : index
    %c0_49 = arith.constant 0 : index
    %c0_50 = arith.constant 0 : index
    %105 = vector.load %arg2[%c11, %c0_49, %c0_50] : memref<25x4x16xbf16, #tpu.memory_space<vmem>>, vector<1x4x16xbf16>
    %106 = vector.shape_cast %105 : vector<1x4x16xbf16> to vector<4x16xbf16>
    %107 = arith.truncf %104 : vector<16x1024xf32> to vector<16x1024xbf16>
    %cst_51 = arith.constant dense<0.000000e+00> : vector<4x1024xf32>
    %108 = tpu.matmul %106, %107, %cst_51 {dimension_numbers = #tpu.dot_dimension_numbers<[1], [0], [0], [1], [0, 0, 1, 1], [], []>} : vector<4x16xbf16>, vector<16x1024xbf16>, vector<4x1024xf32> -> vector<4x1024xf32>
    %109 = arith.addf %101, %108 : vector<4x1024xf32>
    %110 = vector.extract_strided_slice %2 {offsets = [0, 66], sizes = [16, 1024], strides = [1, 1]} : vector<16x1156xf32> to vector<16x1024xf32>
    %c12 = arith.constant 12 : index
    %c0_52 = arith.constant 0 : index
    %c0_53 = arith.constant 0 : index
    %111 = vector.load %arg2[%c12, %c0_52, %c0_53] : memref<25x4x16xbf16, #tpu.memory_space<vmem>>, vector<1x4x16xbf16>
    %112 = vector.shape_cast %111 : vector<1x4x16xbf16> to vector<4x16xbf16>
    %113 = arith.truncf %110 : vector<16x1024xf32> to vector<16x1024xbf16>
    %cst_54 = arith.constant dense<0.000000e+00> : vector<4x1024xf32>
    %114 = tpu.matmul %112, %113, %cst_54 {dimension_numbers = #tpu.dot_dimension_numbers<[1], [0], [0], [1], [0, 0, 1, 1], [], []>} : vector<4x16xbf16>, vector<16x1024xbf16>, vector<4x1024xf32> -> vector<4x1024xf32>
    %115 = arith.addf %109, %114 : vector<4x1024xf32>
    %116 = vector.extract_strided_slice %2 {offsets = [0, 67], sizes = [16, 1024], strides = [1, 1]} : vector<16x1156xf32> to vector<16x1024xf32>
    %cst_55 = arith.constant 0.000000e+00 : f32
    %117 = vector.broadcast %cst_55 : f32 to vector<16x1024xf32>
    %118 = arith.select %11, %116, %117 : vector<16x1024xi1>, vector<16x1024xf32>
    %c13 = arith.constant 13 : index
    %c0_56 = arith.constant 0 : index
    %c0_57 = arith.constant 0 : index
    %119 = vector.load %arg2[%c13, %c0_56, %c0_57] : memref<25x4x16xbf16, #tpu.memory_space<vmem>>, vector<1x4x16xbf16>
    %120 = vector.shape_cast %119 : vector<1x4x16xbf16> to vector<4x16xbf16>
    %121 = arith.truncf %118 : vector<16x1024xf32> to vector<16x1024xbf16>
    %cst_58 = arith.constant dense<0.000000e+00> : vector<4x1024xf32>
    %122 = tpu.matmul %120, %121, %cst_58 {dimension_numbers = #tpu.dot_dimension_numbers<[1], [0], [0], [1], [0, 0, 1, 1], [], []>} : vector<4x16xbf16>, vector<16x1024xbf16>, vector<4x1024xf32> -> vector<4x1024xf32>
    %123 = arith.addf %115, %122 : vector<4x1024xf32>
    %124 = vector.extract_strided_slice %2 {offsets = [0, 68], sizes = [16, 1024], strides = [1, 1]} : vector<16x1156xf32> to vector<16x1024xf32>
    %cst_59 = arith.constant 0.000000e+00 : f32
    %125 = vector.broadcast %cst_59 : f32 to vector<16x1024xf32>
    %126 = arith.select %13, %124, %125 : vector<16x1024xi1>, vector<16x1024xf32>
    %c14 = arith.constant 14 : index
    %c0_60 = arith.constant 0 : index
    %c0_61 = arith.constant 0 : index
    %127 = vector.load %arg2[%c14, %c0_60, %c0_61] : memref<25x4x16xbf16, #tpu.memory_space<vmem>>, vector<1x4x16xbf16>
    %128 = vector.shape_cast %127 : vector<1x4x16xbf16> to vector<4x16xbf16>
    %129 = arith.truncf %126 : vector<16x1024xf32> to vector<16x1024xbf16>
    %cst_62 = arith.constant dense<0.000000e+00> : vector<4x1024xf32>
    %130 = tpu.matmul %128, %129, %cst_62 {dimension_numbers = #tpu.dot_dimension_numbers<[1], [0], [0], [1], [0, 0, 1, 1], [], []>} : vector<4x16xbf16>, vector<16x1024xbf16>, vector<4x1024xf32> -> vector<4x1024xf32>
    %131 = arith.addf %123, %130 : vector<4x1024xf32>
    %132 = vector.extract_strided_slice %2 {offsets = [0, 96], sizes = [16, 1024], strides = [1, 1]} : vector<16x1156xf32> to vector<16x1024xf32>
    %cst_63 = arith.constant 0.000000e+00 : f32
    %133 = vector.broadcast %cst_63 : f32 to vector<16x1024xf32>
    %134 = arith.select %7, %132, %133 : vector<16x1024xi1>, vector<16x1024xf32>
    %c15 = arith.constant 15 : index
    %c0_64 = arith.constant 0 : index
    %c0_65 = arith.constant 0 : index
    %135 = vector.load %arg2[%c15, %c0_64, %c0_65] : memref<25x4x16xbf16, #tpu.memory_space<vmem>>, vector<1x4x16xbf16>
    %136 = vector.shape_cast %135 : vector<1x4x16xbf16> to vector<4x16xbf16>
    %137 = arith.truncf %134 : vector<16x1024xf32> to vector<16x1024xbf16>
    %cst_66 = arith.constant dense<0.000000e+00> : vector<4x1024xf32>
    %138 = tpu.matmul %136, %137, %cst_66 {dimension_numbers = #tpu.dot_dimension_numbers<[1], [0], [0], [1], [0, 0, 1, 1], [], []>} : vector<4x16xbf16>, vector<16x1024xbf16>, vector<4x1024xf32> -> vector<4x1024xf32>
    %139 = arith.addf %131, %138 : vector<4x1024xf32>
    %140 = vector.extract_strided_slice %2 {offsets = [0, 97], sizes = [16, 1024], strides = [1, 1]} : vector<16x1156xf32> to vector<16x1024xf32>
    %cst_67 = arith.constant 0.000000e+00 : f32
    %141 = vector.broadcast %cst_67 : f32 to vector<16x1024xf32>
    %142 = arith.select %9, %140, %141 : vector<16x1024xi1>, vector<16x1024xf32>
    %c16 = arith.constant 16 : index
    %c0_68 = arith.constant 0 : index
    %c0_69 = arith.constant 0 : index
    %143 = vector.load %arg2[%c16, %c0_68, %c0_69] : memref<25x4x16xbf16, #tpu.memory_space<vmem>>, vector<1x4x16xbf16>
    %144 = vector.shape_cast %143 : vector<1x4x16xbf16> to vector<4x16xbf16>
    %145 = arith.truncf %142 : vector<16x1024xf32> to vector<16x1024xbf16>
    %cst_70 = arith.constant dense<0.000000e+00> : vector<4x1024xf32>
    %146 = tpu.matmul %144, %145, %cst_70 {dimension_numbers = #tpu.dot_dimension_numbers<[1], [0], [0], [1], [0, 0, 1, 1], [], []>} : vector<4x16xbf16>, vector<16x1024xbf16>, vector<4x1024xf32> -> vector<4x1024xf32>
    %147 = arith.addf %139, %146 : vector<4x1024xf32>
    %148 = vector.extract_strided_slice %2 {offsets = [0, 98], sizes = [16, 1024], strides = [1, 1]} : vector<16x1156xf32> to vector<16x1024xf32>
    %c17 = arith.constant 17 : index
    %c0_71 = arith.constant 0 : index
    %c0_72 = arith.constant 0 : index
    %149 = vector.load %arg2[%c17, %c0_71, %c0_72] : memref<25x4x16xbf16, #tpu.memory_space<vmem>>, vector<1x4x16xbf16>
    %150 = vector.shape_cast %149 : vector<1x4x16xbf16> to vector<4x16xbf16>
    %151 = arith.truncf %148 : vector<16x1024xf32> to vector<16x1024xbf16>
    %cst_73 = arith.constant dense<0.000000e+00> : vector<4x1024xf32>
    %152 = tpu.matmul %150, %151, %cst_73 {dimension_numbers = #tpu.dot_dimension_numbers<[1], [0], [0], [1], [0, 0, 1, 1], [], []>} : vector<4x16xbf16>, vector<16x1024xbf16>, vector<4x1024xf32> -> vector<4x1024xf32>
    %153 = arith.addf %147, %152 : vector<4x1024xf32>
    %154 = vector.extract_strided_slice %2 {offsets = [0, 99], sizes = [16, 1024], strides = [1, 1]} : vector<16x1156xf32> to vector<16x1024xf32>
    %cst_74 = arith.constant 0.000000e+00 : f32
    %155 = vector.broadcast %cst_74 : f32 to vector<16x1024xf32>
    %156 = arith.select %11, %154, %155 : vector<16x1024xi1>, vector<16x1024xf32>
    %c18 = arith.constant 18 : index
    %c0_75 = arith.constant 0 : index
    %c0_76 = arith.constant 0 : index
    %157 = vector.load %arg2[%c18, %c0_75, %c0_76] : memref<25x4x16xbf16, #tpu.memory_space<vmem>>, vector<1x4x16xbf16>
    %158 = vector.shape_cast %157 : vector<1x4x16xbf16> to vector<4x16xbf16>
    %159 = arith.truncf %156 : vector<16x1024xf32> to vector<16x1024xbf16>
    %cst_77 = arith.constant dense<0.000000e+00> : vector<4x1024xf32>
    %160 = tpu.matmul %158, %159, %cst_77 {dimension_numbers = #tpu.dot_dimension_numbers<[1], [0], [0], [1], [0, 0, 1, 1], [], []>} : vector<4x16xbf16>, vector<16x1024xbf16>, vector<4x1024xf32> -> vector<4x1024xf32>
    %161 = arith.addf %153, %160 : vector<4x1024xf32>
    %162 = vector.extract_strided_slice %2 {offsets = [0, 100], sizes = [16, 1024], strides = [1, 1]} : vector<16x1156xf32> to vector<16x1024xf32>
    %cst_78 = arith.constant 0.000000e+00 : f32
    %163 = vector.broadcast %cst_78 : f32 to vector<16x1024xf32>
    %164 = arith.select %13, %162, %163 : vector<16x1024xi1>, vector<16x1024xf32>
    %c19 = arith.constant 19 : index
    %c0_79 = arith.constant 0 : index
    %c0_80 = arith.constant 0 : index
    %165 = vector.load %arg2[%c19, %c0_79, %c0_80] : memref<25x4x16xbf16, #tpu.memory_space<vmem>>, vector<1x4x16xbf16>
    %166 = vector.shape_cast %165 : vector<1x4x16xbf16> to vector<4x16xbf16>
    %167 = arith.truncf %164 : vector<16x1024xf32> to vector<16x1024xbf16>
    %cst_81 = arith.constant dense<0.000000e+00> : vector<4x1024xf32>
    %168 = tpu.matmul %166, %167, %cst_81 {dimension_numbers = #tpu.dot_dimension_numbers<[1], [0], [0], [1], [0, 0, 1, 1], [], []>} : vector<4x16xbf16>, vector<16x1024xbf16>, vector<4x1024xf32> -> vector<4x1024xf32>
    %169 = arith.addf %161, %168 : vector<4x1024xf32>
    %170 = vector.extract_strided_slice %2 {offsets = [0, 128], sizes = [16, 1024], strides = [1, 1]} : vector<16x1156xf32> to vector<16x1024xf32>
    %cst_82 = arith.constant 0.000000e+00 : f32
    %171 = vector.broadcast %cst_82 : f32 to vector<16x1024xf32>
    %172 = arith.select %7, %170, %171 : vector<16x1024xi1>, vector<16x1024xf32>
    %c20 = arith.constant 20 : index
    %c0_83 = arith.constant 0 : index
    %c0_84 = arith.constant 0 : index
    %173 = vector.load %arg2[%c20, %c0_83, %c0_84] : memref<25x4x16xbf16, #tpu.memory_space<vmem>>, vector<1x4x16xbf16>
    %174 = vector.shape_cast %173 : vector<1x4x16xbf16> to vector<4x16xbf16>
    %175 = arith.truncf %172 : vector<16x1024xf32> to vector<16x1024xbf16>
    %cst_85 = arith.constant dense<0.000000e+00> : vector<4x1024xf32>
    %176 = tpu.matmul %174, %175, %cst_85 {dimension_numbers = #tpu.dot_dimension_numbers<[1], [0], [0], [1], [0, 0, 1, 1], [], []>} : vector<4x16xbf16>, vector<16x1024xbf16>, vector<4x1024xf32> -> vector<4x1024xf32>
    %177 = arith.addf %169, %176 : vector<4x1024xf32>
    %178 = vector.extract_strided_slice %2 {offsets = [0, 129], sizes = [16, 1024], strides = [1, 1]} : vector<16x1156xf32> to vector<16x1024xf32>
    %cst_86 = arith.constant 0.000000e+00 : f32
    %179 = vector.broadcast %cst_86 : f32 to vector<16x1024xf32>
    %180 = arith.select %9, %178, %179 : vector<16x1024xi1>, vector<16x1024xf32>
    %c21 = arith.constant 21 : index
    %c0_87 = arith.constant 0 : index
    %c0_88 = arith.constant 0 : index
    %181 = vector.load %arg2[%c21, %c0_87, %c0_88] : memref<25x4x16xbf16, #tpu.memory_space<vmem>>, vector<1x4x16xbf16>
    %182 = vector.shape_cast %181 : vector<1x4x16xbf16> to vector<4x16xbf16>
    %183 = arith.truncf %180 : vector<16x1024xf32> to vector<16x1024xbf16>
    %cst_89 = arith.constant dense<0.000000e+00> : vector<4x1024xf32>
    %184 = tpu.matmul %182, %183, %cst_89 {dimension_numbers = #tpu.dot_dimension_numbers<[1], [0], [0], [1], [0, 0, 1, 1], [], []>} : vector<4x16xbf16>, vector<16x1024xbf16>, vector<4x1024xf32> -> vector<4x1024xf32>
    %185 = arith.addf %177, %184 : vector<4x1024xf32>
    %186 = vector.extract_strided_slice %2 {offsets = [0, 130], sizes = [16, 1024], strides = [1, 1]} : vector<16x1156xf32> to vector<16x1024xf32>
    %c22 = arith.constant 22 : index
    %c0_90 = arith.constant 0 : index
    %c0_91 = arith.constant 0 : index
    %187 = vector.load %arg2[%c22, %c0_90, %c0_91] : memref<25x4x16xbf16, #tpu.memory_space<vmem>>, vector<1x4x16xbf16>
    %188 = vector.shape_cast %187 : vector<1x4x16xbf16> to vector<4x16xbf16>
    %189 = arith.truncf %186 : vector<16x1024xf32> to vector<16x1024xbf16>
    %cst_92 = arith.constant dense<0.000000e+00> : vector<4x1024xf32>
    %190 = tpu.matmul %188, %189, %cst_92 {dimension_numbers = #tpu.dot_dimension_numbers<[1], [0], [0], [1], [0, 0, 1, 1], [], []>} : vector<4x16xbf16>, vector<16x1024xbf16>, vector<4x1024xf32> -> vector<4x1024xf32>
    %191 = arith.addf %185, %190 : vector<4x1024xf32>
    %192 = vector.extract_strided_slice %2 {offsets = [0, 131], sizes = [16, 1024], strides = [1, 1]} : vector<16x1156xf32> to vector<16x1024xf32>
    %cst_93 = arith.constant 0.000000e+00 : f32
    %193 = vector.broadcast %cst_93 : f32 to vector<16x1024xf32>
    %194 = arith.select %11, %192, %193 : vector<16x1024xi1>, vector<16x1024xf32>
    %c23 = arith.constant 23 : index
    %c0_94 = arith.constant 0 : index
    %c0_95 = arith.constant 0 : index
    %195 = vector.load %arg2[%c23, %c0_94, %c0_95] : memref<25x4x16xbf16, #tpu.memory_space<vmem>>, vector<1x4x16xbf16>
    %196 = vector.shape_cast %195 : vector<1x4x16xbf16> to vector<4x16xbf16>
    %197 = arith.truncf %194 : vector<16x1024xf32> to vector<16x1024xbf16>
    %cst_96 = arith.constant dense<0.000000e+00> : vector<4x1024xf32>
    %198 = tpu.matmul %196, %197, %cst_96 {dimension_numbers = #tpu.dot_dimension_numbers<[1], [0], [0], [1], [0, 0, 1, 1], [], []>} : vector<4x16xbf16>, vector<16x1024xbf16>, vector<4x1024xf32> -> vector<4x1024xf32>
    %199 = arith.addf %191, %198 : vector<4x1024xf32>
    %200 = vector.extract_strided_slice %2 {offsets = [0, 132], sizes = [16, 1024], strides = [1, 1]} : vector<16x1156xf32> to vector<16x1024xf32>
    %cst_97 = arith.constant 0.000000e+00 : f32
    %201 = vector.broadcast %cst_97 : f32 to vector<16x1024xf32>
    %202 = arith.select %13, %200, %201 : vector<16x1024xi1>, vector<16x1024xf32>
    %c24 = arith.constant 24 : index
    %c0_98 = arith.constant 0 : index
    %c0_99 = arith.constant 0 : index
    %203 = vector.load %arg2[%c24, %c0_98, %c0_99] : memref<25x4x16xbf16, #tpu.memory_space<vmem>>, vector<1x4x16xbf16>
    %204 = vector.shape_cast %203 : vector<1x4x16xbf16> to vector<4x16xbf16>
    %205 = arith.truncf %202 : vector<16x1024xf32> to vector<16x1024xbf16>
    %cst_100 = arith.constant dense<0.000000e+00> : vector<4x1024xf32>
    %206 = tpu.matmul %204, %205, %cst_100 {dimension_numbers = #tpu.dot_dimension_numbers<[1], [0], [0], [1], [0, 0, 1, 1], [], []>} : vector<4x16xbf16>, vector<16x1024xbf16>, vector<4x1024xf32> -> vector<4x1024xf32>
    %207 = arith.addf %199, %206 : vector<4x1024xf32>
    %208 = math.absf %207 : vector<4x1024xf32>
    %cst_101 = arith.constant 0.000000e+00 : f32
    %209 = vector.broadcast %cst_101 : f32 to vector<4x1024xf32>
    %210 = arith.subf %209, %208 : vector<4x1024xf32>
    %211 = math.exp %210 : vector<4x1024xf32>
    %cst_102 = arith.constant 1.000000e+00 : f32
    %212 = vector.broadcast %cst_102 : f32 to vector<4x1024xf32>
    %213 = arith.addf %212, %211 : vector<4x1024xf32>
    %214 = tpu.reciprocal %213 {approx = true} : vector<4x1024xf32> -> vector<4x1024xf32>
    %cst_103 = arith.constant 0.000000e+00 : f32
    %215 = vector.broadcast %cst_103 : f32 to vector<4x1024xf32>
    %216 = arith.cmpf oge, %207, %215 : vector<4x1024xf32>
    %217 = arith.mulf %211, %214 : vector<4x1024xf32>
    %218 = arith.select %216, %214, %217 : vector<4x1024xi1>, vector<4x1024xf32>
    %cst_104 = arith.constant 0.000000e+00 : f32
    %cst_105 = arith.constant 1.000000e+00 : f32
    %219 = vector.broadcast %cst_104 : f32 to vector<4x1024xf32>
    %220 = arith.maximumf %219, %218 : vector<4x1024xf32>
    %221 = vector.broadcast %cst_105 : f32 to vector<4x1024xf32>
    %222 = arith.minimumf %221, %220 : vector<4x1024xf32>
    %c0_106 = arith.constant 0 : index
    %c0_107 = arith.constant 0 : index
    %c0_108 = arith.constant 0 : index
    %223 = vector.load %arg4[%c0_106, %c0_107, %c0_108] : memref<1x4x1024xf32, #tpu.memory_space<vmem>>, vector<1x4x1024xf32>
    %224 = vector.shape_cast %223 : vector<1x4x1024xf32> to vector<4x1024xf32>
    %225 = vector.shape_cast %222 : vector<4x1024xf32> to vector<1x4x1024xf32>
    tpu.vector_store %arg4[%c0_106, %c0_107, %c0_108], %225 {strides = array<i32>} : memref<1x4x1024xf32, #tpu.memory_space<vmem>>, vector<1x4x1024xf32>,
    return
  }
  func.func @transform_0(%arg0: i32) -> (i32, i32, i32) {
    %c0_i32 = arith.constant 0 : i32
    %c0_i32_0 = arith.constant 0 : i32
    %c0_i32_1 = arith.constant 0 : i32
    return %arg0, %c0_i32, %c0_i32_0 : i32, i32, i32
  }
  func.func @transform_1(%arg0: i32) -> (i32, i32, i32) {
    %c0_i32 = arith.constant 0 : i32
    %c0_i32_0 = arith.constant 0 : i32
    %c0_i32_1 = arith.constant 0 : i32
    %c0_i32_2 = arith.constant 0 : i32
    return %c0_i32, %c0_i32_0, %c0_i32_1 : i32, i32, i32
  }
  func.func @transform_2(%arg0: i32) -> (i32, i32) {
    %c0_i32 = arith.constant 0 : i32
    %c0_i32_0 = arith.constant 0 : i32
    %c0_i32_1 = arith.constant 0 : i32
    return %c0_i32, %c0_i32_0 : i32, i32
  }
  func.func @transform_3(%arg0: i32) -> (i32, i32, i32) {
    %c0_i32 = arith.constant 0 : i32
    %c0_i32_0 = arith.constant 0 : i32
    %c0_i32_1 = arith.constant 0 : i32
    return %arg0, %c0_i32, %c0_i32_0 : i32, i32, i32
  }
}

</mosaic_0001>

<llo_original>
// kernel: image_decoder.4
$region0: #{image_decoder.4}
  #allocation0 [shape = 'u32[]', space=smem, size = 0x4, offset = 0x4, fixed_abs, tag = 'smem constant byte address 0x4 - core index']
  #allocation1 [shape = 'u32[72,128]{1,0:T(1,128)}', space=vmem, size = 0x9000, scoped, tag = 'internal scratch']
  %s0 = inlined_call_operand.hbm [shape: f32[2,32], index: 0, kind: input, shape index: {}]
  %s1 = inlined_call_operand.hbm [shape: bf16[32,4096], index: 1, kind: input, shape index: {}]
  %s2 = inlined_call_operand.hbm [shape: f32[1,4096], index: 2, kind: input, shape index: {}]
  %s3 = inlined_call_operand.vmem [shape: bf16[2,4096], index: 3, kind: output, shape index: {}]
  %s4 = sld [smem:[#allocation0]]
  $region34: #{image_decoder.4} parent=0
    _
  %s6 = ssub.s32 1, %s4
  %s7 = scalar_select 0, %s6, %s4
  $region1: #{image_decoder.4} parent=0
    #allocation2 [shape = 'u8[1024]{0}', space=vmem, size = 0x400, scoped, tag = 'input window, operand 0, single buffered']
    #allocation3 [shape = 's32[1]{0}', space=sflag, size = 0x4, scoped, tag = 'scoped memory for image_decoder.4']
    #allocation4 [shape = 'u8[262144]{0}', space=vmem, size = 0x40000, scoped, tag = 'input window, operand 1, single buffered']
    #allocation5 [shape = 's32[1]{0}', space=sflag, size = 0x4, scoped, tag = 'scoped memory for image_decoder.4']
    #allocation6 [shape = 'u8[16384]{0}', space=vmem, size = 0x4000, scoped, tag = 'input window, operand 2, single buffered']
    %8 = vsyncpa [#allocation3], 0
    %9 = vsyncpa [#allocation5], 0
    // Predicated region
    $region2: #{image_decoder.4} parent=1 // pred_check
      _
    $region3: #{image_decoder.4} parent=1 // pred_check_branch
      %11 = sbr.rel (0) target = $region5
    $region4: #{image_decoder.4} parent=1 // pred_region
      %13 = vsyncadd [#allocation3], 0
      %s15 = sshll.u32 %s0, 4
      %s16 = int_to_ptr.hbm [resolvable:$true] %s15
      %s17 = sshll.u32 [#allocation2], 4
      %s18 = int_to_ptr.vmem [resolvable:$true] %s17
      %20 = dma.hbm_to_vmem [thread:$0]  %s16, 32, %s18, [#allocation3]
    $region5: #{image_decoder.4} parent=1 // pred_fallthru
      _
    // Predicated region
    $region6: #{image_decoder.4} parent=1 // pred_check
      _
    $region7: #{image_decoder.4} parent=1 // pred_check_branch
      %22 = sbr.rel (0) target = $region9
    $region8: #{image_decoder.4} parent=1 // pred_region
      %24 = vsyncadd [#allocation5], 0
      %s25 = sshll.u32 %s1, 4
      %s26 = int_to_ptr.hbm [resolvable:$true] %s25
      %s27 = sshll.u32 [#allocation4], 4
      %s28 = int_to_ptr.vmem [resolvable:$true] %s27
      %33 = dma.hbm_to_vmem [thread:$0]  %s26, 8192, %s28, [#allocation5], 2048, 2048, 128
    $region9: #{image_decoder.4} parent=1 // pred_fallthru
      _
    // Predicated region
    $region10: #{image_decoder.4} parent=1 // pred_check
      _
    $region11: #{image_decoder.4} parent=1 // pred_check_branch
      %35 = sbr.rel (0) target = $region13
    $region12: #{image_decoder.4} parent=1 // pred_region
      %37 = vsyncadd [#allocation5], 0
      %s39 = sshll.u32 %s2, 4
      %s40 = int_to_ptr.hbm [resolvable:$true] %s39
      %s41 = sshll.u32 [#allocation6], 4
      %s42 = int_to_ptr.vmem [resolvable:$true] %s41
      %44 = dma.hbm_to_vmem [thread:$0]  %s40, 512, %s42, [#allocation5]
    $region13: #{image_decoder.4} parent=1 // pred_fallthru
      _
    // Predicated region
    $region14: #{image_decoder.4} parent=1 // pred_check
      _
    $region15: #{image_decoder.4} parent=1 // pred_check_branch
      %46 = sbr.rel (0) target = $region17
    $region16: #{image_decoder.4} parent=1 // pred_region
      %48 = dma.done [#allocation3], 32
    $region17: #{image_decoder.4} parent=1 // pred_fallthru
      _
    // Predicated region
    $region18: #{image_decoder.4} parent=1 // pred_check
      _
    $region19: #{image_decoder.4} parent=1 // pred_check_branch
      %50 = sbr.rel (0) target = $region21
    $region20: #{image_decoder.4} parent=1 // pred_region
      %52 = dma.done [#allocation5], 8192
    $region21: #{image_decoder.4} parent=1 // pred_fallthru
      _
    // Predicated region
    $region22: #{image_decoder.4} parent=1 // pred_check
      _
    $region23: #{image_decoder.4} parent=1 // pred_check_branch
      %54 = sbr.rel (0) target = $region25
    $region24: #{image_decoder.4} parent=1 // pred_region
      %56 = dma.done [#allocation5], 512
    $region25: #{image_decoder.4} parent=1 // pred_fallthru
      _
    %v58 = vld [vmem:[#allocation2] sm:$0x3]
    %vm59 = vcmask 254976
    %v60 = vsel %vm59, %v58, 0.0
    %61 = vadd.xlane.f32.xlu0 %v60
    %v62 = vpop.xlane.xlu0 %61
    %v63 = vrcp.pop 32.0
    %v64 = vmul.f32 32.0, %v63
    %v65 = vsub.f32 1.0, %v64
    %v66 = vmul.f32 %v63, %v65
    %v67 = vadd.f32 %v63, %v66
    %vm68 = vweird.f32 %v63
    %v69 = vsel %vm68, %v63, %v67
    %v70 = vmul.f32 %v62, %v69
    %v71 = vsub.f32 %v58, %v70
    %v72 = vmul.f32 %v71, %v71
    %v73 = vsel %vm59, %v72, 0.0
    %74 = vadd.xlane.f32.xlu0 %v73
    %v75 = vpop.xlane.xlu0 %74
    %v76 = vmul.f32 %v75, %v69
    %v77 = vadd.f32 %v76, 1e-05
    %v78 = vrsqrt.pop %v77
    %v79 = vmul.f32 %v78, %v77
    %v80 = vmul.f32 %v79, %v78
    %v81 = vmul.f32 0.5, %v80
    %v82 = vsub.f32 1.5, %v81
    %v83 = vmul.f32 %v78, %v82
    %vm84 = vweird.f32 %v77
    %vm85 = vweird.f32 %v78
    %vm86 = vmor %vm84, %vm85
    %v87 = vsel %vm86, %v78, %v83
    %v88 = vmul.f32 %v71, %v87
    %v89 = vpack.c.bf16 %v88, %v88
    %v90 = vld [vmem:[#allocation4] sm:$0xff]
    %v91 = vld [vmem:[#allocation4 + $0x8] sm:$0xff]
    %v92 = vld [vmem:[#allocation4 + $0x10] sm:$0xff]
    %v93 = vld [vmem:[#allocation4 + $0x18] sm:$0xff]
    %v94 = vld [vmem:[#allocation4 + $0x20] sm:$0xff]
    %v95 = vld [vmem:[#allocation4 + $0x28] sm:$0xff]
    %v96 = vld [vmem:[#allocation4 + $0x30] sm:$0xff]
    %v97 = vld [vmem:[#allocation4 + $0x38] sm:$0xff]
    %v98 = vld [vmem:[#allocation4 + $0x40] sm:$0xff]
    %v99 = vld [vmem:[#allocation4 + $0x48] sm:$0xff]
    %v100 = vld [vmem:[#allocation4 + $0x50] sm:$0xff]
    %v101 = vld [vmem:[#allocation4 + $0x58] sm:$0xff]
    %v102 = vld [vmem:[#allocation4 + $0x60] sm:$0xff]
    %v103 = vld [vmem:[#allocation4 + $0x68] sm:$0xff]
    %v104 = vld [vmem:[#allocation4 + $0x70] sm:$0xff]
    %v105 = vld [vmem:[#allocation4 + $0x78] sm:$0xff]
    %v106 = vld [vmem:[#allocation4 + $0x80] sm:$0xff]
    %v107 = vld [vmem:[#allocation4 + $0x88] sm:$0xff]
    %v108 = vld [vmem:[#allocation4 + $0x90] sm:$0xff]
    %v109 = vld [vmem:[#allocation4 + $0x98] sm:$0xff]
    %v110 = vld [vmem:[#allocation4 + $0xa0] sm:$0xff]
    %v111 = vld [vmem:[#allocation4 + $0xa8] sm:$0xff]
    %v112 = vld [vmem:[#allocation4 + $0xb0] sm:$0xff]
    %v113 = vld [vmem:[#allocation4 + $0xb8] sm:$0xff]
    %v114 = vld [vmem:[#allocation4 + $0xc0] sm:$0xff]
    %v115 = vld [vmem:[#allocation4 + $0xc8] sm:$0xff]
    %v116 = vld [vmem:[#allocation4 + $0xd0] sm:$0xff]
    %v117 = vld [vmem:[#allocation4 + $0xd8] sm:$0xff]
    %v118 = vld [vmem:[#allocation4 + $0xe0] sm:$0xff]
    %v119 = vld [vmem:[#allocation4 + $0xe8] sm:$0xff]
    %v120 = vld [vmem:[#allocation4 + $0xf0] sm:$0xff]
    %v121 = vld [vmem:[#allocation4 + $0xf8] sm:$0xff]
    %v122 = vld [vmem:[#allocation4 + $0x100] sm:$0xff]
    %v123 = vld [vmem:[#allocation4 + $0x108] sm:$0xff]
    %v124 = vld [vmem:[#allocation4 + $0x110] sm:$0xff]
    %v125 = vld [vmem:[#allocation4 + $0x118] sm:$0xff]
    %v126 = vld [vmem:[#allocation4 + $0x120] sm:$0xff]
    %v127 = vld [vmem:[#allocation4 + $0x128] sm:$0xff]
    %v128 = vld [vmem:[#allocation4 + $0x130] sm:$0xff]
    %v129 = vld [vmem:[#allocation4 + $0x138] sm:$0xff]
    %v130 = vld [vmem:[#allocation4 + $0x140] sm:$0xff]
    %v131 = vld [vmem:[#allocation4 + $0x148] sm:$0xff]
    %v132 = vld [vmem:[#allocation4 + $0x150] sm:$0xff]
    %v133 = vld [vmem:[#allocation4 + $0x158] sm:$0xff]
    %v134 = vld [vmem:[#allocation4 + $0x160] sm:$0xff]
    %v135 = vld [vmem:[#allocation4 + $0x168] sm:$0xff]
    %v136 = vld [vmem:[#allocation4 + $0x170] sm:$0xff]
    %v137 = vld [vmem:[#allocation4 + $0x178] sm:$0xff]
    %v138 = vld [vmem:[#allocation4 + $0x180] sm:$0xff]
    %v139 = vld [vmem:[#allocation4 + $0x188] sm:$0xff]
    %v140 = vld [vmem:[#allocation4 + $0x190] sm:$0xff]
    %v141 = vld [vmem:[#allocation4 + $0x198] sm:$0xff]
    %v142 = vld [vmem:[#allocation4 + $0x1a0] sm:$0xff]
    %v143 = vld [vmem:[#allocation4 + $0x1a8] sm:$0xff]
    %v144 = vld [vmem:[#allocation4 + $0x1b0] sm:$0xff]
    %v145 = vld [vmem:[#allocation4 + $0x1b8] sm:$0xff]
    %v146 = vld [vmem:[#allocation4 + $0x1c0] sm:$0xff]
    %v147 = vld [vmem:[#allocation4 + $0x1c8] sm:$0xff]
    %v148 = vld [vmem:[#allocation4 + $0x1d0] sm:$0xff]
    %v149 = vld [vmem:[#allocation4 + $0x1d8] sm:$0xff]
    %v150 = vld [vmem:[#allocation4 + $0x1e0] sm:$0xff]
    %v151 = vld [vmem:[#allocation4 + $0x1e8] sm:$0xff]
    %v152 = vld [vmem:[#allocation4 + $0x1f0] sm:$0xff]
    %v153 = vld [vmem:[#allocation4 + $0x1f8] sm:$0xff]
    %v154 = vld [vmem:[#allocation6] sm:$0xff]
    %v155 = vld [vmem:[#allocation6 + $0x8] sm:$0xff]
    %v156 = vld [vmem:[#allocation6 + $0x10] sm:$0xff]
    %v157 = vld [vmem:[#allocation6 + $0x18] sm:$0xff]
    %v162 = vperm.slane %v154, 0
    %v163 = vperm.slane %v154, 1
    %v164 = vperm.slane %v154, 2
    %v165 = vperm.slane %v154, 3
    %v166 = vperm.slane %v154, 4
    %v167 = vperm.slane %v154, 5
    %v168 = vperm.slane %v154, 6
    %v169 = vperm.slane %v154, 7
    %v170 = vperm.slane %v155, 0
    %v171 = vperm.slane %v155, 1
    %v172 = vperm.slane %v155, 2
    %v173 = vperm.slane %v155, 3
    %v174 = vperm.slane %v155, 4
    %v175 = vperm.slane %v155, 5
    %v176 = vperm.slane %v155, 6
    %v177 = vperm.slane %v155, 7
    %v178 = vperm.slane %v156, 0
    %v179 = vperm.slane %v156, 1
    %v180 = vperm.slane %v156, 2
    %v181 = vperm.slane %v156, 3
    %v182 = vperm.slane %v156, 4
    %v183 = vperm.slane %v156, 5
    %v184 = vperm.slane %v156, 6
    %v185 = vperm.slane %v156, 7
    %v186 = vperm.slane %v157, 0
    %v187 = vperm.slane %v157, 1
    %v188 = vperm.slane %v157, 2
    %v189 = vperm.slane %v157, 3
    %v190 = vperm.slane %v157, 4
    %v191 = vperm.slane %v157, 5
    %v192 = vperm.slane %v157, 6
    %v193 = vperm.slane %v157, 7
    %v290 = vunpack.c.l.b16 %v90
    %v291 = vunpack.c.h.b16 %v90
    %v292 = vunpack.c.l.b16 %v91
    %v293 = vunpack.c.h.b16 %v91
    %v294 = vunpack.c.l.b16 %v92
    %v295 = vunpack.c.h.b16 %v92
    %v296 = vunpack.c.l.b16 %v93
    %v297 = vunpack.c.h.b16 %v93
    %v298 = vunpack.c.l.b16 %v94
    %v299 = vunpack.c.h.b16 %v94
    %v300 = vunpack.c.l.b16 %v95
    %v301 = vunpack.c.h.b16 %v95
    %v302 = vunpack.c.l.b16 %v96
    %v303 = vunpack.c.h.b16 %v96
    %v304 = vunpack.c.l.b16 %v97
    %v305 = vunpack.c.h.b16 %v97
    %v306 = vunpack.c.l.b16 %v98
    %v307 = vunpack.c.h.b16 %v98
    %v308 = vunpack.c.l.b16 %v99
    %v309 = vunpack.c.h.b16 %v99
    %v310 = vunpack.c.l.b16 %v100
    %v311 = vunpack.c.h.b16 %v100
    %v312 = vunpack.c.l.b16 %v101
    %v313 = vunpack.c.h.b16 %v101
    %v314 = vunpack.c.l.b16 %v102
    %v315 = vunpack.c.h.b16 %v102
    %v316 = vunpack.c.l.b16 %v103
    %v317 = vunpack.c.h.b16 %v103
    %v318 = vunpack.c.l.b16 %v104
    %v319 = vunpack.c.h.b16 %v104
    %v320 = vunpack.c.l.b16 %v105
    %v321 = vunpack.c.h.b16 %v105
    %v322 = vunpack.c.l.b16 %v106
    %v323 = vunpack.c.h.b16 %v106
    %v324 = vunpack.c.l.b16 %v107
    %v325 = vunpack.c.h.b16 %v107
    %v326 = vunpack.c.l.b16 %v108
    %v327 = vunpack.c.h.b16 %v108
    %v328 = vunpack.c.l.b16 %v109
    %v329 = vunpack.c.h.b16 %v109
    %v330 = vunpack.c.l.b16 %v110
    %v331 = vunpack.c.h.b16 %v110
    %v332 = vunpack.c.l.b16 %v111
    %v333 = vunpack.c.h.b16 %v111
    %v334 = vunpack.c.l.b16 %v112
    %v335 = vunpack.c.h.b16 %v112
    %v336 = vunpack.c.l.b16 %v113
    %v337 = vunpack.c.h.b16 %v113
    %v338 = vunpack.c.l.b16 %v114
    %v339 = vunpack.c.h.b16 %v114
    %v340 = vunpack.c.l.b16 %v115
    %v341 = vunpack.c.h.b16 %v115
    %v342 = vunpack.c.l.b16 %v116
    %v343 = vunpack.c.h.b16 %v116
    %v344 = vunpack.c.l.b16 %v117
    %v345 = vunpack.c.h.b16 %v117
    %v346 = vunpack.c.l.b16 %v118
    %v347 = vunpack.c.h.b16 %v118
    %v348 = vunpack.c.l.b16 %v119
    %v349 = vunpack.c.h.b16 %v119
    %v350 = vunpack.c.l.b16 %v120
    %v351 = vunpack.c.h.b16 %v120
    %v352 = vunpack.c.l.b16 %v121
    %v353 = vunpack.c.h.b16 %v121
    %v354 = vunpack.c.l.b16 %v122
    %v355 = vunpack.c.h.b16 %v122
    %v356 = vunpack.c.l.b16 %v123
    %v357 = vunpack.c.h.b16 %v123
    %v358 = vunpack.c.l.b16 %v124
    %v359 = vunpack.c.h.b16 %v124
    %v360 = vunpack.c.l.b16 %v125
    %v361 = vunpack.c.h.b16 %v125
    %v362 = vunpack.c.l.b16 %v126
    %v363 = vunpack.c.h.b16 %v126
    %v364 = vunpack.c.l.b16 %v127
    %v365 = vunpack.c.h.b16 %v127
    %v366 = vunpack.c.l.b16 %v128
    %v367 = vunpack.c.h.b16 %v128
    %v368 = vunpack.c.l.b16 %v129
    %v369 = vunpack.c.h.b16 %v129
    %v370 = vunpack.c.l.b16 %v130
    %v371 = vunpack.c.h.b16 %v130
    %v372 = vunpack.c.l.b16 %v131
    %v373 = vunpack.c.h.b16 %v131
    %v374 = vunpack.c.l.b16 %v132
    %v375 = vunpack.c.h.b16 %v132
    %v376 = vunpack.c.l.b16 %v133
    %v377 = vunpack.c.h.b16 %v133
    %v378 = vunpack.c.l.b16 %v134
    %v379 = vunpack.c.h.b16 %v134
    %v380 = vunpack.c.l.b16 %v135
    %v381 = vunpack.c.h.b16 %v135
    %v382 = vunpack.c.l.b16 %v136
    %v383 = vunpack.c.h.b16 %v136
    %v384 = vunpack.c.l.b16 %v137
    %v385 = vunpack.c.h.b16 %v137
    %v386 = vunpack.c.l.b16 %v138
    %v387 = vunpack.c.h.b16 %v138
    %v388 = vunpack.c.l.b16 %v139
    %v389 = vunpack.c.h.b16 %v139
    %v390 = vunpack.c.l.b16 %v140
    %v391 = vunpack.c.h.b16 %v140
    %v392 = vunpack.c.l.b16 %v141
    %v393 = vunpack.c.h.b16 %v141
    %v394 = vunpack.c.l.b16 %v142
    %v395 = vunpack.c.h.b16 %v142
    %v396 = vunpack.c.l.b16 %v143
    %v397 = vunpack.c.h.b16 %v143
    %v398 = vunpack.c.l.b16 %v144
    %v399 = vunpack.c.h.b16 %v144
    %v400 = vunpack.c.l.b16 %v145
    %v401 = vunpack.c.h.b16 %v145
    %v402 = vunpack.c.l.b16 %v146
    %v403 = vunpack.c.h.b16 %v146
    %v404 = vunpack.c.l.b16 %v147
    %v405 = vunpack.c.h.b16 %v147
    %v406 = vunpack.c.l.b16 %v148
    %v407 = vunpack.c.h.b16 %v148
    %v408 = vunpack.c.l.b16 %v149
    %v409 = vunpack.c.h.b16 %v149
    %v410 = vunpack.c.l.b16 %v150
    %v411 = vunpack.c.h.b16 %v150
    %v412 = vunpack.c.l.b16 %v151
    %v413 = vunpack.c.h.b16 %v151
    %v414 = vunpack.c.l.b16 %v152
    %v415 = vunpack.c.h.b16 %v152
    %v416 = vunpack.c.l.b16 %v153
    %v417 = vunpack.c.h.b16 %v153
    %v418 = vpack.c.b16 %v322, %v290
    %v419 = vpack.c.b16 %v323, %v291
    %v420 = vpack.c.b16 %v324, %v292
    %v421 = vpack.c.b16 %v325, %v293
    %v422 = vpack.c.b16 %v326, %v294
    %v423 = vpack.c.b16 %v327, %v295
    %v424 = vpack.c.b16 %v328, %v296
    %v425 = vpack.c.b16 %v329, %v297
    %v426 = vpack.c.b16 %v330, %v298
    %v427 = vpack.c.b16 %v331, %v299
    %v428 = vpack.c.b16 %v332, %v300
    %v429 = vpack.c.b16 %v333, %v301
    %v430 = vpack.c.b16 %v334, %v302
    %v431 = vpack.c.b16 %v335, %v303
    %v432 = vpack.c.b16 %v336, %v304
    %v433 = vpack.c.b16 %v337, %v305
    %v434 = vpack.c.b16 %v338, %v306
    %v435 = vpack.c.b16 %v339, %v307
    %v436 = vpack.c.b16 %v340, %v308
    %v437 = vpack.c.b16 %v341, %v309
    %v438 = vpack.c.b16 %v342, %v310
    %v439 = vpack.c.b16 %v343, %v311
    %v440 = vpack.c.b16 %v344, %v312
    %v441 = vpack.c.b16 %v345, %v313
    %v442 = vpack.c.b16 %v346, %v314
    %v443 = vpack.c.b16 %v347, %v315
    %v444 = vpack.c.b16 %v348, %v316
    %v445 = vpack.c.b16 %v349, %v317
    %v446 = vpack.c.b16 %v350, %v318
    %v447 = vpack.c.b16 %v351, %v319
    %v448 = vpack.c.b16 %v352, %v320
    %v449 = vpack.c.b16 %v353, %v321
    %v450 = vpack.c.b16 %v386, %v354
    %v451 = vpack.c.b16 %v387, %v355
    %v452 = vpack.c.b16 %v388, %v356
    %v453 = vpack.c.b16 %v389, %v357
    %v454 = vpack.c.b16 %v390, %v358
    %v455 = vpack.c.b16 %v391, %v359
    %v456 = vpack.c.b16 %v392, %v360
    %v457 = vpack.c.b16 %v393, %v361
    %v458 = vpack.c.b16 %v394, %v362
    %v459 = vpack.c.b16 %v395, %v363
    %v460 = vpack.c.b16 %v396, %v364
    %v461 = vpack.c.b16 %v397, %v365
    %v462 = vpack.c.b16 %v398, %v366
    %v463 = vpack.c.b16 %v399, %v367
    %v464 = vpack.c.b16 %v400, %v368
    %v465 = vpack.c.b16 %v401, %v369
    %v466 = vpack.c.b16 %v402, %v370
    %v467 = vpack.c.b16 %v403, %v371
    %v468 = vpack.c.b16 %v404, %v372
    %v469 = vpack.c.b16 %v405, %v373
    %v470 = vpack.c.b16 %v406, %v374
    %v471 = vpack.c.b16 %v407, %v375
    %v472 = vpack.c.b16 %v408, %v376
    %v473 = vpack.c.b16 %v409, %v377
    %v474 = vpack.c.b16 %v410, %v378
    %v475 = vpack.c.b16 %v411, %v379
    %v476 = vpack.c.b16 %v412, %v380
    %v477 = vpack.c.b16 %v413, %v381
    %v478 = vpack.c.b16 %v414, %v382
    %v479 = vpack.c.b16 %v415, %v383
    %v480 = vpack.c.b16 %v416, %v384
    %v481 = vpack.c.b16 %v417, %v385
    %vm546 = vcmask 261120
    %v548 = vsel %vm546, %v89, 0
    %550 = vmatpush.bf16.msra.mxu0 0
    %551 = vmatpush.bf16.msra.mxu0 0
    %552 = vmatpush.bf16.msra.mxu0 0
    %553 = vmatpush.bf16.msra.mxu0 0
    %554 = vmatpush.bf16.msra.mxu0 0
    %555 = vmatpush.bf16.msra.mxu0 0
    %556 = vmatpush.bf16.msra.mxu0 %v450
    %557 = vmatpush.bf16.msra.mxu0 %v418
    %558 = vmatmul.bf16.gmra.mxu0 %v548
    %v559 = vpop.f32.mrf.mxu0
    %v560 = vadd.f32 %v162, %v559
    %v561 = vpop.f32.mrf.mxu0
    %562 = vdwg.mxu0
    %563 = vmatpush.bf16.msra.mxu0 0
    %564 = vmatpush.bf16.msra.mxu0 0
    %565 = vmatpush.bf16.msra.mxu0 0
    %566 = vmatpush.bf16.msra.mxu0 0
    %567 = vmatpush.bf16.msra.mxu0 0
    %568 = vmatpush.bf16.msra.mxu0 0
    %569 = vmatpush.bf16.msra.mxu0 %v451
    %570 = vmatpush.bf16.msra.mxu0 %v419
    %571 = vmatmul.bf16.gmra.mxu0 %v548
    %v572 = vpop.f32.mrf.mxu0
    %v573 = vadd.f32 %v163, %v572
    %v574 = vpop.f32.mrf.mxu0
    %575 = vdwg.mxu0
    %576 = vmatpush.bf16.msra.mxu0 0
    %577 = vmatpush.bf16.msra.mxu0 0
    %578 = vmatpush.bf16.msra.mxu0 0
    %579 = vmatpush.bf16.msra.mxu0 0
    %580 = vmatpush.bf16.msra.mxu0 0
    %581 = vmatpush.bf16.msra.mxu0 0
    %582 = vmatpush.bf16.msra.mxu0 %v452
    %583 = vmatpush.bf16.msra.mxu0 %v420
    %584 = vmatmul.bf16.gmra.mxu0 %v548
    %v585 = vpop.f32.mrf.mxu0
    %v586 = vadd.f32 %v164, %v585
    %v587 = vpop.f32.mrf.mxu0
    %588 = vdwg.mxu0
    %589 = vmatpush.bf16.msra.mxu0 0
    %590 = vmatpush.bf16.msra.mxu0 0
    %591 = vmatpush.bf16.msra.mxu0 0
    %592 = vmatpush.bf16.msra.mxu0 0
    %593 = vmatpush.bf16.msra.mxu0 0
    %594 = vmatpush.bf16.msra.mxu0 0
    %595 = vmatpush.bf16.msra.mxu0 %v453
    %596 = vmatpush.bf16.msra.mxu0 %v421
    %597 = vmatmul.bf16.gmra.mxu0 %v548
    %v598 = vpop.f32.mrf.mxu0
    %v599 = vadd.f32 %v165, %v598
    %v600 = vpop.f32.mrf.mxu0
    %601 = vdwg.mxu0
    %602 = vmatpush.bf16.msra.mxu0 0
    %603 = vmatpush.bf16.msra.mxu0 0
    %604 = vmatpush.bf16.msra.mxu0 0
    %605 = vmatpush.bf16.msra.mxu0 0
    %606 = vmatpush.bf16.msra.mxu0 0
    %607 = vmatpush.bf16.msra.mxu0 0
    %608 = vmatpush.bf16.msra.mxu0 %v454
    %609 = vmatpush.bf16.msra.mxu0 %v422
    %610 = vmatmul.bf16.gmra.mxu0 %v548
    %v611 = vpop.f32.mrf.mxu0
    %v612 = vadd.f32 %v166, %v611
    %v613 = vpop.f32.mrf.mxu0
    %614 = vdwg.mxu0
    %615 = vmatpush.bf16.msra.mxu0 0
    %616 = vmatpush.bf16.msra.mxu0 0
    %617 = vmatpush.bf16.msra.mxu0 0
    %618 = vmatpush.bf16.msra.mxu0 0
    %619 = vmatpush.bf16.msra.mxu0 0
    %620 = vmatpush.bf16.msra.mxu0 0
    %621 = vmatpush.bf16.msra.mxu0 %v455
    %622 = vmatpush.bf16.msra.mxu0 %v423
    %623 = vmatmul.bf16.gmra.mxu0 %v548
    %v624 = vpop.f32.mrf.mxu0
    %v625 = vadd.f32 %v167, %v624
    %v626 = vpop.f32.mrf.mxu0
    %627 = vdwg.mxu0
    %628 = vmatpush.bf16.msra.mxu0 0
    %629 = vmatpush.bf16.msra.mxu0 0
    %630 = vmatpush.bf16.msra.mxu0 0
    %631 = vmatpush.bf16.msra.mxu0 0
    %632 = vmatpush.bf16.msra.mxu0 0
    %633 = vmatpush.bf16.msra.mxu0 0
    %634 = vmatpush.bf16.msra.mxu0 %v456
    %635 = vmatpush.bf16.msra.mxu0 %v424
    %636 = vmatmul.bf16.gmra.mxu0 %v548
    %v637 = vpop.f32.mrf.mxu0
    %v638 = vadd.f32 %v168, %v637
    %v639 = vpop.f32.mrf.mxu0
    %640 = vdwg.mxu0
    %641 = vmatpush.bf16.msra.mxu0 0
    %642 = vmatpush.bf16.msra.mxu0 0
    %643 = vmatpush.bf16.msra.mxu0 0
    %644 = vmatpush.bf16.msra.mxu0 0
    %645 = vmatpush.bf16.msra.mxu0 0
    %646 = vmatpush.bf16.msra.mxu0 0
    %647 = vmatpush.bf16.msra.mxu0 %v457
    %648 = vmatpush.bf16.msra.mxu0 %v425
    %649 = vmatmul.bf16.gmra.mxu0 %v548
    %v650 = vpop.f32.mrf.mxu0
    %v651 = vadd.f32 %v169, %v650
    %v652 = vpop.f32.mrf.mxu0
    %653 = vdwg.mxu0
    %654 = vmatpush.bf16.msra.mxu0 0
    %655 = vmatpush.bf16.msra.mxu0 0
    %656 = vmatpush.bf16.msra.mxu0 0
    %657 = vmatpush.bf16.msra.mxu0 0
    %658 = vmatpush.bf16.msra.mxu0 0
    %659 = vmatpush.bf16.msra.mxu0 0
    %660 = vmatpush.bf16.msra.mxu0 %v458
    %661 = vmatpush.bf16.msra.mxu0 %v426
    %662 = vmatmul.bf16.gmra.mxu0 %v548
    %v663 = vpop.f32.mrf.mxu0
    %v664 = vadd.f32 %v170, %v663
    %v665 = vpop.f32.mrf.mxu0
    %666 = vdwg.mxu0
    %667 = vmatpush.bf16.msra.mxu0 0
    %668 = vmatpush.bf16.msra.mxu0 0
    %669 = vmatpush.bf16.msra.mxu0 0
    %670 = vmatpush.bf16.msra.mxu0 0
    %671 = vmatpush.bf16.msra.mxu0 0
    %672 = vmatpush.bf16.msra.mxu0 0
    %673 = vmatpush.bf16.msra.mxu0 %v459
    %674 = vmatpush.bf16.msra.mxu0 %v427
    %675 = vmatmul.bf16.gmra.mxu0 %v548
    %v676 = vpop.f32.mrf.mxu0
    %v677 = vadd.f32 %v171, %v676
    %v678 = vpop.f32.mrf.mxu0
    %679 = vdwg.mxu0
    %680 = vmatpush.bf16.msra.mxu0 0
    %681 = vmatpush.bf16.msra.mxu0 0
    %682 = vmatpush.bf16.msra.mxu0 0
    %683 = vmatpush.bf16.msra.mxu0 0
    %684 = vmatpush.bf16.msra.mxu0 0
    %685 = vmatpush.bf16.msra.mxu0 0
    %686 = vmatpush.bf16.msra.mxu0 %v460
    %687 = vmatpush.bf16.msra.mxu0 %v428
    %688 = vmatmul.bf16.gmra.mxu0 %v548
    %v689 = vpop.f32.mrf.mxu0
    %v690 = vadd.f32 %v172, %v689
    %v691 = vpop.f32.mrf.mxu0
    %692 = vdwg.mxu0
    %693 = vmatpush.bf16.msra.mxu0 0
    %694 = vmatpush.bf16.msra.mxu0 0
    %695 = vmatpush.bf16.msra.mxu0 0
    %696 = vmatpush.bf16.msra.mxu0 0
    %697 = vmatpush.bf16.msra.mxu0 0
    %698 = vmatpush.bf16.msra.mxu0 0
    %699 = vmatpush.bf16.msra.mxu0 %v461
    %700 = vmatpush.bf16.msra.mxu0 %v429
    %701 = vmatmul.bf16.gmra.mxu0 %v548
    %v702 = vpop.f32.mrf.mxu0
    %v703 = vadd.f32 %v173, %v702
    %v704 = vpop.f32.mrf.mxu0
    %705 = vdwg.mxu0
    %706 = vmatpush.bf16.msra.mxu0 0
    %707 = vmatpush.bf16.msra.mxu0 0
    %708 = vmatpush.bf16.msra.mxu0 0
    %709 = vmatpush.bf16.msra.mxu0 0
    %710 = vmatpush.bf16.msra.mxu0 0
    %711 = vmatpush.bf16.msra.mxu0 0
    %712 = vmatpush.bf16.msra.mxu0 %v462
    %713 = vmatpush.bf16.msra.mxu0 %v430
    %714 = vmatmul.bf16.gmra.mxu0 %v548
    %v715 = vpop.f32.mrf.mxu0
    %v716 = vadd.f32 %v174, %v715
    %v717 = vpop.f32.mrf.mxu0
    %718 = vdwg.mxu0
    %719 = vmatpush.bf16.msra.mxu0 0
    %720 = vmatpush.bf16.msra.mxu0 0
    %721 = vmatpush.bf16.msra.mxu0 0
    %722 = vmatpush.bf16.msra.mxu0 0
    %723 = vmatpush.bf16.msra.mxu0 0
    %724 = vmatpush.bf16.msra.mxu0 0
    %725 = vmatpush.bf16.msra.mxu0 %v463
    %726 = vmatpush.bf16.msra.mxu0 %v431
    %727 = vmatmul.bf16.gmra.mxu0 %v548
    %v728 = vpop.f32.mrf.mxu0
    %v729 = vadd.f32 %v175, %v728
    %v730 = vpop.f32.mrf.mxu0
    %731 = vdwg.mxu0
    %732 = vmatpush.bf16.msra.mxu0 0
    %733 = vmatpush.bf16.msra.mxu0 0
    %734 = vmatpush.bf16.msra.mxu0 0
    %735 = vmatpush.bf16.msra.mxu0 0
    %736 = vmatpush.bf16.msra.mxu0 0
    %737 = vmatpush.bf16.msra.mxu0 0
    %738 = vmatpush.bf16.msra.mxu0 %v464
    %739 = vmatpush.bf16.msra.mxu0 %v432
    %740 = vmatmul.bf16.gmra.mxu0 %v548
    %v741 = vpop.f32.mrf.mxu0
    %v742 = vadd.f32 %v176, %v741
    %v743 = vpop.f32.mrf.mxu0
    %744 = vdwg.mxu0
    %745 = vmatpush.bf16.msra.mxu0 0
    %746 = vmatpush.bf16.msra.mxu0 0
    %747 = vmatpush.bf16.msra.mxu0 0
    %748 = vmatpush.bf16.msra.mxu0 0
    %749 = vmatpush.bf16.msra.mxu0 0
    %750 = vmatpush.bf16.msra.mxu0 0
    %751 = vmatpush.bf16.msra.mxu0 %v465
    %752 = vmatpush.bf16.msra.mxu0 %v433
    %753 = vmatmul.bf16.gmra.mxu0 %v548
    %v754 = vpop.f32.mrf.mxu0
    %v755 = vadd.f32 %v177, %v754
    %v756 = vpop.f32.mrf.mxu0
    %757 = vdwg.mxu0
    %758 = vmatpush.bf16.msra.mxu0 0
    %759 = vmatpush.bf16.msra.mxu0 0
    %760 = vmatpush.bf16.msra.mxu0 0
    %761 = vmatpush.bf16.msra.mxu0 0
    %762 = vmatpush.bf16.msra.mxu0 0
    %763 = vmatpush.bf16.msra.mxu0 0
    %764 = vmatpush.bf16.msra.mxu0 %v466
    %765 = vmatpush.bf16.msra.mxu0 %v434
    %766 = vmatmul.bf16.gmra.mxu0 %v548
    %v767 = vpop.f32.mrf.mxu0
    %v768 = vadd.f32 %v178, %v767
    %v769 = vpop.f32.mrf.mxu0
    %770 = vdwg.mxu0
    %771 = vmatpush.bf16.msra.mxu0 0
    %772 = vmatpush.bf16.msra.mxu0 0
    %773 = vmatpush.bf16.msra.mxu0 0
    %774 = vmatpush.bf16.msra.mxu0 0
    %775 = vmatpush.bf16.msra.mxu0 0
    %776 = vmatpush.bf16.msra.mxu0 0
    %777 = vmatpush.bf16.msra.mxu0 %v467
    %778 = vmatpush.bf16.msra.mxu0 %v435
    %779 = vmatmul.bf16.gmra.mxu0 %v548
    %v780 = vpop.f32.mrf.mxu0
    %v781 = vadd.f32 %v179, %v780
    %v782 = vpop.f32.mrf.mxu0
    %783 = vdwg.mxu0
    %784 = vmatpush.bf16.msra.mxu0 0
    %785 = vmatpush.bf16.msra.mxu0 0
    %786 = vmatpush.bf16.msra.mxu0 0
    %787 = vmatpush.bf16.msra.mxu0 0
    %788 = vmatpush.bf16.msra.mxu0 0
    %789 = vmatpush.bf16.msra.mxu0 0
    %790 = vmatpush.bf16.msra.mxu0 %v468
    %791 = vmatpush.bf16.msra.mxu0 %v436
    %792 = vmatmul.bf16.gmra.mxu0 %v548
    %v793 = vpop.f32.mrf.mxu0
    %v794 = vadd.f32 %v180, %v793
    %v795 = vpop.f32.mrf.mxu0
    %796 = vdwg.mxu0
    %797 = vmatpush.bf16.msra.mxu0 0
    %798 = vmatpush.bf16.msra.mxu0 0
    %799 = vmatpush.bf16.msra.mxu0 0
    %800 = vmatpush.bf16.msra.mxu0 0
    %801 = vmatpush.bf16.msra.mxu0 0
    %802 = vmatpush.bf16.msra.mxu0 0
    %803 = vmatpush.bf16.msra.mxu0 %v469
    %804 = vmatpush.bf16.msra.mxu0 %v437
    %805 = vmatmul.bf16.gmra.mxu0 %v548
    %v806 = vpop.f32.mrf.mxu0
    %v807 = vadd.f32 %v181, %v806
    %v808 = vpop.f32.mrf.mxu0
    %809 = vdwg.mxu0
    %810 = vmatpush.bf16.msra.mxu0 0
    %811 = vmatpush.bf16.msra.mxu0 0
    %812 = vmatpush.bf16.msra.mxu0 0
    %813 = vmatpush.bf16.msra.mxu0 0
    %814 = vmatpush.bf16.msra.mxu0 0
    %815 = vmatpush.bf16.msra.mxu0 0
    %816 = vmatpush.bf16.msra.mxu0 %v470
    %817 = vmatpush.bf16.msra.mxu0 %v438
    %818 = vmatmul.bf16.gmra.mxu0 %v548
    %v819 = vpop.f32.mrf.mxu0
    %v820 = vadd.f32 %v182, %v819
    %v821 = vpop.f32.mrf.mxu0
    %822 = vdwg.mxu0
    %823 = vmatpush.bf16.msra.mxu0 0
    %824 = vmatpush.bf16.msra.mxu0 0
    %825 = vmatpush.bf16.msra.mxu0 0
    %826 = vmatpush.bf16.msra.mxu0 0
    %827 = vmatpush.bf16.msra.mxu0 0
    %828 = vmatpush.bf16.msra.mxu0 0
    %829 = vmatpush.bf16.msra.mxu0 %v471
    %830 = vmatpush.bf16.msra.mxu0 %v439
    %831 = vmatmul.bf16.gmra.mxu0 %v548
    %v832 = vpop.f32.mrf.mxu0
    %v833 = vadd.f32 %v183, %v832
    %v834 = vpop.f32.mrf.mxu0
    %835 = vdwg.mxu0
    %836 = vmatpush.bf16.msra.mxu0 0
    %837 = vmatpush.bf16.msra.mxu0 0
    %838 = vmatpush.bf16.msra.mxu0 0
    %839 = vmatpush.bf16.msra.mxu0 0
    %840 = vmatpush.bf16.msra.mxu0 0
    %841 = vmatpush.bf16.msra.mxu0 0
    %842 = vmatpush.bf16.msra.mxu0 %v472
    %843 = vmatpush.bf16.msra.mxu0 %v440
    %844 = vmatmul.bf16.gmra.mxu0 %v548
    %v845 = vpop.f32.mrf.mxu0
    %v846 = vadd.f32 %v184, %v845
    %v847 = vpop.f32.mrf.mxu0
    %848 = vdwg.mxu0
    %849 = vmatpush.bf16.msra.mxu0 0
    %850 = vmatpush.bf16.msra.mxu0 0
    %851 = vmatpush.bf16.msra.mxu0 0
    %852 = vmatpush.bf16.msra.mxu0 0
    %853 = vmatpush.bf16.msra.mxu0 0
    %854 = vmatpush.bf16.msra.mxu0 0
    %855 = vmatpush.bf16.msra.mxu0 %v473
    %856 = vmatpush.bf16.msra.mxu0 %v441
    %857 = vmatmul.bf16.gmra.mxu0 %v548
    %v858 = vpop.f32.mrf.mxu0
    %v859 = vadd.f32 %v185, %v858
    %v860 = vpop.f32.mrf.mxu0
    %861 = vdwg.mxu0
    %862 = vmatpush.bf16.msra.mxu0 0
    %863 = vmatpush.bf16.msra.mxu0 0
    %864 = vmatpush.bf16.msra.mxu0 0
    %865 = vmatpush.bf16.msra.mxu0 0
    %866 = vmatpush.bf16.msra.mxu0 0
    %867 = vmatpush.bf16.msra.mxu0 0
    %868 = vmatpush.bf16.msra.mxu0 %v474
    %869 = vmatpush.bf16.msra.mxu0 %v442
    %870 = vmatmul.bf16.gmra.mxu0 %v548
    %v871 = vpop.f32.mrf.mxu0
    %v872 = vadd.f32 %v186, %v871
    %v873 = vpop.f32.mrf.mxu0
    %874 = vdwg.mxu0
    %875 = vmatpush.bf16.msra.mxu0 0
    %876 = vmatpush.bf16.msra.mxu0 0
    %877 = vmatpush.bf16.msra.mxu0 0
    %878 = vmatpush.bf16.msra.mxu0 0
    %879 = vmatpush.bf16.msra.mxu0 0
    %880 = vmatpush.bf16.msra.mxu0 0
    %881 = vmatpush.bf16.msra.mxu0 %v475
    %882 = vmatpush.bf16.msra.mxu0 %v443
    %883 = vmatmul.bf16.gmra.mxu0 %v548
    %v884 = vpop.f32.mrf.mxu0
    %v885 = vadd.f32 %v187, %v884
    %v886 = vpop.f32.mrf.mxu0
    %887 = vdwg.mxu0
    %888 = vmatpush.bf16.msra.mxu0 0
    %889 = vmatpush.bf16.msra.mxu0 0
    %890 = vmatpush.bf16.msra.mxu0 0
    %891 = vmatpush.bf16.msra.mxu0 0
    %892 = vmatpush.bf16.msra.mxu0 0
    %893 = vmatpush.bf16.msra.mxu0 0
    %894 = vmatpush.bf16.msra.mxu0 %v476
    %895 = vmatpush.bf16.msra.mxu0 %v444
    %896 = vmatmul.bf16.gmra.mxu0 %v548
    %v897 = vpop.f32.mrf.mxu0
    %v898 = vadd.f32 %v188, %v897
    %v899 = vpop.f32.mrf.mxu0
    %900 = vdwg.mxu0
    %901 = vmatpush.bf16.msra.mxu0 0
    %902 = vmatpush.bf16.msra.mxu0 0
    %903 = vmatpush.bf16.msra.mxu0 0
    %904 = vmatpush.bf16.msra.mxu0 0
    %905 = vmatpush.bf16.msra.mxu0 0
    %906 = vmatpush.bf16.msra.mxu0 0
    %907 = vmatpush.bf16.msra.mxu0 %v477
    %908 = vmatpush.bf16.msra.mxu0 %v445
    %909 = vmatmul.bf16.gmra.mxu0 %v548
    %v910 = vpop.f32.mrf.mxu0
    %v911 = vadd.f32 %v189, %v910
    %v912 = vpop.f32.mrf.mxu0
    %913 = vdwg.mxu0
    %914 = vmatpush.bf16.msra.mxu0 0
    %915 = vmatpush.bf16.msra.mxu0 0
    %916 = vmatpush.bf16.msra.mxu0 0
    %917 = vmatpush.bf16.msra.mxu0 0
    %918 = vmatpush.bf16.msra.mxu0 0
    %919 = vmatpush.bf16.msra.mxu0 0
    %920 = vmatpush.bf16.msra.mxu0 %v478
    %921 = vmatpush.bf16.msra.mxu0 %v446
    %922 = vmatmul.bf16.gmra.mxu0 %v548
    %v923 = vpop.f32.mrf.mxu0
    %v924 = vadd.f32 %v190, %v923
    %v925 = vpop.f32.mrf.mxu0
    %926 = vdwg.mxu0
    %927 = vmatpush.bf16.msra.mxu0 0
    %928 = vmatpush.bf16.msra.mxu0 0
    %929 = vmatpush.bf16.msra.mxu0 0
    %930 = vmatpush.bf16.msra.mxu0 0
    %931 = vmatpush.bf16.msra.mxu0 0
    %932 = vmatpush.bf16.msra.mxu0 0
    %933 = vmatpush.bf16.msra.mxu0 %v479
    %934 = vmatpush.bf16.msra.mxu0 %v447
    %935 = vmatmul.bf16.gmra.mxu0 %v548
    %v936 = vpop.f32.mrf.mxu0
    %v937 = vadd.f32 %v191, %v936
    %v938 = vpop.f32.mrf.mxu0
    %939 = vdwg.mxu0
    %940 = vmatpush.bf16.msra.mxu0 0
    %941 = vmatpush.bf16.msra.mxu0 0
    %942 = vmatpush.bf16.msra.mxu0 0
    %943 = vmatpush.bf16.msra.mxu0 0
    %944 = vmatpush.bf16.msra.mxu0 0
    %945 = vmatpush.bf16.msra.mxu0 0
    %946 = vmatpush.bf16.msra.mxu0 %v480
    %947 = vmatpush.bf16.msra.mxu0 %v448
    %948 = vmatmul.bf16.gmra.mxu0 %v548
    %v949 = vpop.f32.mrf.mxu0
    %v950 = vadd.f32 %v192, %v949
    %v951 = vpop.f32.mrf.mxu0
    %952 = vdwg.mxu0
    %953 = vmatpush.bf16.msra.mxu0 0
    %954 = vmatpush.bf16.msra.mxu0 0
    %955 = vmatpush.bf16.msra.mxu0 0
    %956 = vmatpush.bf16.msra.mxu0 0
    %957 = vmatpush.bf16.msra.mxu0 0
    %958 = vmatpush.bf16.msra.mxu0 0
    %959 = vmatpush.bf16.msra.mxu0 %v481
    %960 = vmatpush.bf16.msra.mxu0 %v449
    %961 = vmatmul.bf16.gmra.mxu0 %v548
    %v962 = vpop.f32.mrf.mxu0
    %v963 = vadd.f32 %v193, %v962
    %v964 = vpop.f32.mrf.mxu0
    %965 = vdwg.mxu0
    %vm966 = vcmp.gt.f32.partialorder %v560, 0.0
    %vm967 = vcmp.gt.f32.partialorder %v573, 0.0
    %vm968 = vcmp.gt.f32.partialorder %v586, 0.0
    %vm969 = vcmp.gt.f32.partialorder %v599, 0.0
    %vm970 = vcmp.gt.f32.partialorder %v612, 0.0
    %vm971 = vcmp.gt.f32.partialorder %v625, 0.0
    %vm972 = vcmp.gt.f32.partialorder %v638, 0.0
    %vm973 = vcmp.gt.f32.partialorder %v651, 0.0
    %vm974 = vcmp.gt.f32.partialorder %v664, 0.0
    %vm975 = vcmp.gt.f32.partialorder %v677, 0.0
    %vm976 = vcmp.gt.f32.partialorder %v690, 0.0
    %vm977 = vcmp.gt.f32.partialorder %v703, 0.0
    %vm978 = vcmp.gt.f32.partialorder %v716, 0.0
    %vm979 = vcmp.gt.f32.partialorder %v729, 0.0
    %vm980 = vcmp.gt.f32.partialorder %v742, 0.0
    %vm981 = vcmp.gt.f32.partialorder %v755, 0.0
    %vm982 = vcmp.gt.f32.partialorder %v768, 0.0
    %vm983 = vcmp.gt.f32.partialorder %v781, 0.0
    %vm984 = vcmp.gt.f32.partialorder %v794, 0.0
    %vm985 = vcmp.gt.f32.partialorder %v807, 0.0
    %vm986 = vcmp.gt.f32.partialorder %v820, 0.0
    %vm987 = vcmp.gt.f32.partialorder %v833, 0.0
    %vm988 = vcmp.gt.f32.partialorder %v846, 0.0
    %vm989 = vcmp.gt.f32.partialorder %v859, 0.0
    %vm990 = vcmp.gt.f32.partialorder %v872, 0.0
    %vm991 = vcmp.gt.f32.partialorder %v885, 0.0
    %vm992 = vcmp.gt.f32.partialorder %v898, 0.0
    %vm993 = vcmp.gt.f32.partialorder %v911, 0.0
    %vm994 = vcmp.gt.f32.partialorder %v924, 0.0
    %vm995 = vcmp.gt.f32.partialorder %v937, 0.0
    %vm996 = vcmp.gt.f32.partialorder %v950, 0.0
    %vm997 = vcmp.gt.f32.partialorder %v963, 0.0
    %v998 = vmin.f32 %v560, 0.0
    %v999 = vmin.f32 %v573, 0.0
    %v1000 = vmin.f32 %v586, 0.0
    %v1001 = vmin.f32 %v599, 0.0
    %v1002 = vmin.f32 %v612, 0.0
    %v1003 = vmin.f32 %v625, 0.0
    %v1004 = vmin.f32 %v638, 0.0
    %v1005 = vmin.f32 %v651, 0.0
    %v1006 = vmin.f32 %v664, 0.0
    %v1007 = vmin.f32 %v677, 0.0
    %v1008 = vmin.f32 %v690, 0.0
    %v1009 = vmin.f32 %v703, 0.0
    %v1010 = vmin.f32 %v716, 0.0
    %v1011 = vmin.f32 %v729, 0.0
    %v1012 = vmin.f32 %v742, 0.0
    %v1013 = vmin.f32 %v755, 0.0
    %v1014 = vmin.f32 %v768, 0.0
    %v1015 = vmin.f32 %v781, 0.0
    %v1016 = vmin.f32 %v794, 0.0
    %v1017 = vmin.f32 %v807, 0.0
    %v1018 = vmin.f32 %v820, 0.0
    %v1019 = vmin.f32 %v833, 0.0
    %v1020 = vmin.f32 %v846, 0.0
    %v1021 = vmin.f32 %v859, 0.0
    %v1022 = vmin.f32 %v872, 0.0
    %v1023 = vmin.f32 %v885, 0.0
    %v1024 = vmin.f32 %v898, 0.0
    %v1025 = vmin.f32 %v911, 0.0
    %v1026 = vmin.f32 %v924, 0.0
    %v1027 = vmin.f32 %v937, 0.0
    %v1028 = vmin.f32 %v950, 0.0
    %v1029 = vmin.f32 %v963, 0.0
    %v1030 = vmul.f32 %v998, 1.442695
    %v1031 = vpow.pop %v1030
    %v1032 = vmul.f32 %v999, 1.442695
    %v1033 = vpow.pop %v1032
    %v1034 = vmul.f32 %v1000, 1.442695
    %v1035 = vpow.pop %v1034
    %v1036 = vmul.f32 %v1001, 1.442695
    %v1037 = vpow.pop %v1036
    %v1038 = vmul.f32 %v1002, 1.442695
    %v1039 = vpow.pop %v1038
    %v1040 = vmul.f32 %v1003, 1.442695
    %v1041 = vpow.pop %v1040
    %v1042 = vmul.f32 %v1004, 1.442695
    %v1043 = vpow.pop %v1042
    %v1044 = vmul.f32 %v1005, 1.442695
    %v1045 = vpow.pop %v1044
    %v1046 = vmul.f32 %v1006, 1.442695
    %v1047 = vpow.pop %v1046
    %v1048 = vmul.f32 %v1007, 1.442695
    %v1049 = vpow.pop %v1048
    %v1050 = vmul.f32 %v1008, 1.442695
    %v1051 = vpow.pop %v1050
    %v1052 = vmul.f32 %v1009, 1.442695
    %v1053 = vpow.pop %v1052
    %v1054 = vmul.f32 %v1010, 1.442695
    %v1055 = vpow.pop %v1054
    %v1056 = vmul.f32 %v1011, 1.442695
    %v1057 = vpow.pop %v1056
    %v1058 = vmul.f32 %v1012, 1.442695
    %v1059 = vpow.pop %v1058
    %v1060 = vmul.f32 %v1013, 1.442695
    %v1061 = vpow.pop %v1060
    %v1062 = vmul.f32 %v1014, 1.442695
    %v1063 = vpow.pop %v1062
    %v1064 = vmul.f32 %v1015, 1.442695
    %v1065 = vpow.pop %v1064
    %v1066 = vmul.f32 %v1016, 1.442695
    %v1067 = vpow.pop %v1066
    %v1068 = vmul.f32 %v1017, 1.442695
    %v1069 = vpow.pop %v1068
    %v1070 = vmul.f32 %v1018, 1.442695
    %v1071 = vpow.pop %v1070
    %v1072 = vmul.f32 %v1019, 1.442695
    %v1073 = vpow.pop %v1072
    %v1074 = vmul.f32 %v1020, 1.442695
    %v1075 = vpow.pop %v1074
    %v1076 = vmul.f32 %v1021, 1.442695
    %v1077 = vpow.pop %v1076
    %v1078 = vmul.f32 %v1022, 1.442695
    %v1079 = vpow.pop %v1078
    %v1080 = vmul.f32 %v1023, 1.442695
    %v1081 = vpow.pop %v1080
    %v1082 = vmul.f32 %v1024, 1.442695
    %v1083 = vpow.pop %v1082
    %v1084 = vmul.f32 %v1025, 1.442695
    %v1085 = vpow.pop %v1084
    %v1086 = vmul.f32 %v1026, 1.442695
    %v1087 = vpow.pop %v1086
    %v1088 = vmul.f32 %v1027, 1.442695
    %v1089 = vpow.pop %v1088
    %v1090 = vmul.f32 %v1028, 1.442695
    %v1091 = vpow.pop %v1090
    %v1092 = vmul.f32 %v1029, 1.442695
    %v1093 = vpow.pop %v1092
    %v1094 = vsub.f32 %v1031, 1.0
    %v1095 = vsub.f32 %v1033, 1.0
    %v1096 = vsub.f32 %v1035, 1.0
    %v1097 = vsub.f32 %v1037, 1.0
    %v1098 = vsub.f32 %v1039, 1.0
    %v1099 = vsub.f32 %v1041, 1.0
    %v1100 = vsub.f32 %v1043, 1.0
    %v1101 = vsub.f32 %v1045, 1.0
    %v1102 = vsub.f32 %v1047, 1.0
    %v1103 = vsub.f32 %v1049, 1.0
    %v1104 = vsub.f32 %v1051, 1.0
    %v1105 = vsub.f32 %v1053, 1.0
    %v1106 = vsub.f32 %v1055, 1.0
    %v1107 = vsub.f32 %v1057, 1.0
    %v1108 = vsub.f32 %v1059, 1.0
    %v1109 = vsub.f32 %v1061, 1.0
    %v1110 = vsub.f32 %v1063, 1.0
    %v1111 = vsub.f32 %v1065, 1.0
    %v1112 = vsub.f32 %v1067, 1.0
    %v1113 = vsub.f32 %v1069, 1.0
    %v1114 = vsub.f32 %v1071, 1.0
    %v1115 = vsub.f32 %v1073, 1.0
    %v1116 = vsub.f32 %v1075, 1.0
    %v1117 = vsub.f32 %v1077, 1.0
    %v1118 = vsub.f32 %v1079, 1.0
    %v1119 = vsub.f32 %v1081, 1.0
    %v1120 = vsub.f32 %v1083, 1.0
    %v1121 = vsub.f32 %v1085, 1.0
    %v1122 = vsub.f32 %v1087, 1.0
    %v1123 = vsub.f32 %v1089, 1.0
    %v1124 = vsub.f32 %v1091, 1.0
    %v1125 = vsub.f32 %v1093, 1.0
    %v1126 = vsel %vm966, %v560, %v1094
    %v1127 = vsel %vm967, %v573, %v1095
    %v1128 = vsel %vm968, %v586, %v1096
    %v1129 = vsel %vm969, %v599, %v1097
    %v1130 = vsel %vm970, %v612, %v1098
    %v1131 = vsel %vm971, %v625, %v1099
    %v1132 = vsel %vm972, %v638, %v1100
    %v1133 = vsel %vm973, %v651, %v1101
    %v1134 = vsel %vm974, %v664, %v1102
    %v1135 = vsel %vm975, %v677, %v1103
    %v1136 = vsel %vm976, %v690, %v1104
    %v1137 = vsel %vm977, %v703, %v1105
    %v1138 = vsel %vm978, %v716, %v1106
    %v1139 = vsel %vm979, %v729, %v1107
    %v1140 = vsel %vm980, %v742, %v1108
    %v1141 = vsel %vm981, %v755, %v1109
    %v1142 = vsel %vm982, %v768, %v1110
    %v1143 = vsel %vm983, %v781, %v1111
    %v1144 = vsel %vm984, %v794, %v1112
    %v1145 = vsel %vm985, %v807, %v1113
    %v1146 = vsel %vm986, %v820, %v1114
    %v1147 = vsel %vm987, %v833, %v1115
    %v1148 = vsel %vm988, %v846, %v1116
    %v1149 = vsel %vm989, %v859, %v1117
    %v1150 = vsel %vm990, %v872, %v1118
    %v1151 = vsel %vm991, %v885, %v1119
    %v1152 = vsel %vm992, %v898, %v1120
    %v1153 = vsel %vm993, %v911, %v1121
    %v1154 = vsel %vm994, %v924, %v1122
    %v1155 = vsel %vm995, %v937, %v1123
    %v1156 = vsel %vm996, %v950, %v1124
    %v1157 = vsel %vm997, %v963, %v1125
    %vm1158 = vcmask 1041408
    %v1159 = vsel %vm1158, %v1126, 0.0
    %v1160 = vsel %vm1158, %v1127, 0.0
    %v1161 = vadd.f32 %v1159, %v1160
    %v1162 = vsel %vm1158, %v1128, 0.0
    %v1163 = vadd.f32 %v1161, %v1162
    %v1164 = vsel %vm1158, %v1129, 0.0
    %v1165 = vadd.f32 %v1163, %v1164
    %v1166 = vsel %vm1158, %v1130, 0.0
    %v1167 = vadd.f32 %v1165, %v1166
    %v1168 = vsel %vm1158, %v1131, 0.0
    %v1169 = vadd.f32 %v1167, %v1168
    %v1170 = vsel %vm1158, %v1132, 0.0
    %v1171 = vadd.f32 %v1169, %v1170
    %v1172 = vsel %vm1158, %v1133, 0.0
    %v1173 = vadd.f32 %v1171, %v1172
    %v1174 = vsel %vm1158, %v1134, 0.0
    %v1175 = vadd.f32 %v1173, %v1174
    %v1176 = vsel %vm1158, %v1135, 0.0
    %v1177 = vadd.f32 %v1175, %v1176
    %v1178 = vsel %vm1158, %v1136, 0.0
    %v1179 = vadd.f32 %v1177, %v1178
    %v1180 = vsel %vm1158, %v1137, 0.0
    %v1181 = vadd.f32 %v1179, %v1180
    %v1182 = vsel %vm1158, %v1138, 0.0
    %v1183 = vadd.f32 %v1181, %v1182
    %v1184 = vsel %vm1158, %v1139, 0.0
    %v1185 = vadd.f32 %v1183, %v1184
    %v1186 = vsel %vm1158, %v1140, 0.0
    %v1187 = vadd.f32 %v1185, %v1186
    %v1188 = vsel %vm1158, %v1141, 0.0
    %v1189 = vadd.f32 %v1187, %v1188
    %v1190 = vsel %vm1158, %v1142, 0.0
    %v1191 = vadd.f32 %v1189, %v1190
    %v1192 = vsel %vm1158, %v1143, 0.0
    %v1193 = vadd.f32 %v1191, %v1192
    %v1194 = vsel %vm1158, %v1144, 0.0
    %v1195 = vadd.f32 %v1193, %v1194
    %v1196 = vsel %vm1158, %v1145, 0.0
    %v1197 = vadd.f32 %v1195, %v1196
    %v1198 = vsel %vm1158, %v1146, 0.0
    %v1199 = vadd.f32 %v1197, %v1198
    %v1200 = vsel %vm1158, %v1147, 0.0
    %v1201 = vadd.f32 %v1199, %v1200
    %v1202 = vsel %vm1158, %v1148, 0.0
    %v1203 = vadd.f32 %v1201, %v1202
    %v1204 = vsel %vm1158, %v1149, 0.0
    %v1205 = vadd.f32 %v1203, %v1204
    %v1206 = vsel %vm1158, %v1150, 0.0
    %v1207 = vadd.f32 %v1205, %v1206
    %v1208 = vsel %vm1158, %v1151, 0.0
    %v1209 = vadd.f32 %v1207, %v1208
    %v1210 = vsel %vm1158, %v1152, 0.0
    %v1211 = vadd.f32 %v1209, %v1210
    %v1212 = vsel %vm1158, %v1153, 0.0
    %v1213 = vadd.f32 %v1211, %v1212
    %v1214 = vsel %vm1158, %v1154, 0.0
    %v1215 = vadd.f32 %v1213, %v1214
    %v1216 = vsel %vm1158, %v1155, 0.0
    %v1217 = vadd.f32 %v1215, %v1216
    %v1218 = vsel %vm1158, %v1156, 0.0
    %v1219 = vadd.f32 %v1217, %v1218
    %v1220 = vsel %vm1158, %v1157, 0.0
    %v1221 = vadd.f32 %v1219, %v1220
    %1222 = vadd.xlane.f32.xlu0 %v1221
    %v1223 = vpop.xlane.xlu0 %1222
    %v1224 = vrcp.pop 4096.0
    %v1225 = vmul.f32 4096.0, %v1224
    %v1226 = vsub.f32 1.0, %v1225
    %v1227 = vmul.f32 %v1224, %v1226
    %v1228 = vadd.f32 %v1224, %v1227
    %vm1229 = vweird.f32 %v1224
    %v1230 = vsel %vm1229, %v1224, %v1228
    %v1231 = vmul.f32 %v1223, %v1230
    %v1232 = vsub.f32 %v1126, %v1231
    %v1233 = vsub.f32 %v1127, %v1231
    %v1234 = vsub.f32 %v1128, %v1231
    %v1235 = vsub.f32 %v1129, %v1231
    %v1236 = vsub.f32 %v1130, %v1231
    %v1237 = vsub.f32 %v1131, %v1231
    %v1238 = vsub.f32 %v1132, %v1231
    %v1239 = vsub.f32 %v1133, %v1231
    %v1240 = vsub.f32 %v1134, %v1231
    %v1241 = vsub.f32 %v1135, %v1231
    %v1242 = vsub.f32 %v1136, %v1231
    %v1243 = vsub.f32 %v1137, %v1231
    %v1244 = vsub.f32 %v1138, %v1231
    %v1245 = vsub.f32 %v1139, %v1231
    %v1246 = vsub.f32 %v1140, %v1231
    %v1247 = vsub.f32 %v1141, %v1231
    %v1248 = vsub.f32 %v1142, %v1231
    %v1249 = vsub.f32 %v1143, %v1231
    %v1250 = vsub.f32 %v1144, %v1231
    %v1251 = vsub.f32 %v1145, %v1231
    %v1252 = vsub.f32 %v1146, %v1231
    %v1253 = vsub.f32 %v1147, %v1231
    %v1254 = vsub.f32 %v1148, %v1231
    %v1255 = vsub.f32 %v1149, %v1231
    %v1256 = vsub.f32 %v1150, %v1231
    %v1257 = vsub.f32 %v1151, %v1231
    %v1258 = vsub.f32 %v1152, %v1231
    %v1259 = vsub.f32 %v1153, %v1231
    %v1260 = vsub.f32 %v1154, %v1231
    %v1261 = vsub.f32 %v1155, %v1231
    %v1262 = vsub.f32 %v1156, %v1231
    %v1263 = vsub.f32 %v1157, %v1231
    %v1264 = vmul.f32 %v1232, %v1232
    %v1265 = vmul.f32 %v1233, %v1233
    %v1266 = vmul.f32 %v1234, %v1234
    %v1267 = vmul.f32 %v1235, %v1235
    %v1268 = vmul.f32 %v1236, %v1236
    %v1269 = vmul.f32 %v1237, %v1237
    %v1270 = vmul.f32 %v1238, %v1238
    %v1271 = vmul.f32 %v1239, %v1239
    %v1272 = vmul.f32 %v1240, %v1240
    %v1273 = vmul.f32 %v1241, %v1241
    %v1274 = vmul.f32 %v1242, %v1242
    %v1275 = vmul.f32 %v1243, %v1243
    %v1276 = vmul.f32 %v1244, %v1244
    %v1277 = vmul.f32 %v1245, %v1245
    %v1278 = vmul.f32 %v1246, %v1246
    %v1279 = vmul.f32 %v1247, %v1247
    %v1280 = vmul.f32 %v1248, %v1248
    %v1281 = vmul.f32 %v1249, %v1249
    %v1282 = vmul.f32 %v1250, %v1250
    %v1283 = vmul.f32 %v1251, %v1251
    %v1284 = vmul.f32 %v1252, %v1252
    %v1285 = vmul.f32 %v1253, %v1253
    %v1286 = vmul.f32 %v1254, %v1254
    %v1287 = vmul.f32 %v1255, %v1255
    %v1288 = vmul.f32 %v1256, %v1256
    %v1289 = vmul.f32 %v1257, %v1257
    %v1290 = vmul.f32 %v1258, %v1258
    %v1291 = vmul.f32 %v1259, %v1259
    %v1292 = vmul.f32 %v1260, %v1260
    %v1293 = vmul.f32 %v1261, %v1261
    %v1294 = vmul.f32 %v1262, %v1262
    %v1295 = vmul.f32 %v1263, %v1263
    %v1296 = vsel %vm1158, %v1264, 0.0
    %v1297 = vsel %vm1158, %v1265, 0.0
    %v1298 = vadd.f32 %v1296, %v1297
    %v1299 = vsel %vm1158, %v1266, 0.0
    %v1300 = vadd.f32 %v1298, %v1299
    %v1301 = vsel %vm1158, %v1267, 0.0
    %v1302 = vadd.f32 %v1300, %v1301
    %v1303 = vsel %vm1158, %v1268, 0.0
    %v1304 = vadd.f32 %v1302, %v1303
    %v1305 = vsel %vm1158, %v1269, 0.0
    %v1306 = vadd.f32 %v1304, %v1305
    %v1307 = vsel %vm1158, %v1270, 0.0
    %v1308 = vadd.f32 %v1306, %v1307
    %v1309 = vsel %vm1158, %v1271, 0.0
    %v1310 = vadd.f32 %v1308, %v1309
    %v1311 = vsel %vm1158, %v1272, 0.0
    %v1312 = vadd.f32 %v1310, %v1311
    %v1313 = vsel %vm1158, %v1273, 0.0
    %v1314 = vadd.f32 %v1312, %v1313
    %v1315 = vsel %vm1158, %v1274, 0.0
    %v1316 = vadd.f32 %v1314, %v1315
    %v1317 = vsel %vm1158, %v1275, 0.0
    %v1318 = vadd.f32 %v1316, %v1317
    %v1319 = vsel %vm1158, %v1276, 0.0
    %v1320 = vadd.f32 %v1318, %v1319
    %v1321 = vsel %vm1158, %v1277, 0.0
    %v1322 = vadd.f32 %v1320, %v1321
    %v1323 = vsel %vm1158, %v1278, 0.0
    %v1324 = vadd.f32 %v1322, %v1323
    %v1325 = vsel %vm1158, %v1279, 0.0
    %v1326 = vadd.f32 %v1324, %v1325
    %v1327 = vsel %vm1158, %v1280, 0.0
    %v1328 = vadd.f32 %v1326, %v1327
    %v1329 = vsel %vm1158, %v1281, 0.0
    %v1330 = vadd.f32 %v1328, %v1329
    %v1331 = vsel %vm1158, %v1282, 0.0
    %v1332 = vadd.f32 %v1330, %v1331
    %v1333 = vsel %vm1158, %v1283, 0.0
    %v1334 = vadd.f32 %v1332, %v1333
    %v1335 = vsel %vm1158, %v1284, 0.0
    %v1336 = vadd.f32 %v1334, %v1335
    %v1337 = vsel %vm1158, %v1285, 0.0
    %v1338 = vadd.f32 %v1336, %v1337
    %v1339 = vsel %vm1158, %v1286, 0.0
    %v1340 = vadd.f32 %v1338, %v1339
    %v1341 = vsel %vm1158, %v1287, 0.0
    %v1342 = vadd.f32 %v1340, %v1341
    %v1343 = vsel %vm1158, %v1288, 0.0
    %v1344 = vadd.f32 %v1342, %v1343
    %v1345 = vsel %vm1158, %v1289, 0.0
    %v1346 = vadd.f32 %v1344, %v1345
    %v1347 = vsel %vm1158, %v1290, 0.0
    %v1348 = vadd.f32 %v1346, %v1347
    %v1349 = vsel %vm1158, %v1291, 0.0
    %v1350 = vadd.f32 %v1348, %v1349
    %v1351 = vsel %vm1158, %v1292, 0.0
    %v1352 = vadd.f32 %v1350, %v1351
    %v1353 = vsel %vm1158, %v1293, 0.0
    %v1354 = vadd.f32 %v1352, %v1353
    %v1355 = vsel %vm1158, %v1294, 0.0
    %v1356 = vadd.f32 %v1354, %v1355
    %v1357 = vsel %vm1158, %v1295, 0.0
    %v1358 = vadd.f32 %v1356, %v1357
    %1359 = vadd.xlane.f32.xlu0 %v1358
    %v1360 = vpop.xlane.xlu0 %1359
    %v1361 = vmul.f32 %v1360, %v1230
    %v1362 = vadd.f32 %v1361, 1e-05
    %v1363 = vrsqrt.pop %v1362
    %v1364 = vmul.f32 %v1363, %v1362
    %v1365 = vmul.f32 %v1364, %v1363
    %v1366 = vmul.f32 0.5, %v1365
    %v1367 = vsub.f32 1.5, %v1366
    %v1368 = vmul.f32 %v1363, %v1367
    %vm1369 = vweird.f32 %v1362
    %vm1370 = vweird.f32 %v1363
    %vm1371 = vmor %vm1369, %vm1370
    %v1372 = vsel %vm1371, %v1363, %v1368
    %v1373 = vmul.f32 %v1232, %v1372
    %v1374 = vmul.f32 %v1233, %v1372
    %v1375 = vmul.f32 %v1234, %v1372
    %v1376 = vmul.f32 %v1235, %v1372
    %v1377 = vmul.f32 %v1236, %v1372
    %v1378 = vmul.f32 %v1237, %v1372
    %v1379 = vmul.f32 %v1238, %v1372
    %v1380 = vmul.f32 %v1239, %v1372
    %v1381 = vmul.f32 %v1240, %v1372
    %v1382 = vmul.f32 %v1241, %v1372
    %v1383 = vmul.f32 %v1242, %v1372
    %v1384 = vmul.f32 %v1243, %v1372
    %v1385 = vmul.f32 %v1244, %v1372
    %v1386 = vmul.f32 %v1245, %v1372
    %v1387 = vmul.f32 %v1246, %v1372
    %v1388 = vmul.f32 %v1247, %v1372
    %v1389 = vmul.f32 %v1248, %v1372
    %v1390 = vmul.f32 %v1249, %v1372
    %v1391 = vmul.f32 %v1250, %v1372
    %v1392 = vmul.f32 %v1251, %v1372
    %v1393 = vmul.f32 %v1252, %v1372
    %v1394 = vmul.f32 %v1253, %v1372
    %v1395 = vmul.f32 %v1254, %v1372
    %v1396 = vmul.f32 %v1255, %v1372
    %v1397 = vmul.f32 %v1256, %v1372
    %v1398 = vmul.f32 %v1257, %v1372
    %v1399 = vmul.f32 %v1258, %v1372
    %v1400 = vmul.f32 %v1259, %v1372
    %v1401 = vmul.f32 %v1260, %v1372
    %v1402 = vmul.f32 %v1261, %v1372
    %v1403 = vmul.f32 %v1262, %v1372
    %v1404 = vmul.f32 %v1263, %v1372
    %v1405 = vpack.c.bf16 %v1374, %v1373
    %v1406 = vpack.c.bf16 %v1376, %v1375
    %v1407 = vpack.c.bf16 %v1378, %v1377
    %v1408 = vpack.c.bf16 %v1380, %v1379
    %v1409 = vpack.c.bf16 %v1382, %v1381
    %v1410 = vpack.c.bf16 %v1384, %v1383
    %v1411 = vpack.c.bf16 %v1386, %v1385
    %v1412 = vpack.c.bf16 %v1388, %v1387
    %v1413 = vpack.c.bf16 %v1390, %v1389
    %v1414 = vpack.c.bf16 %v1392, %v1391
    %v1415 = vpack.c.bf16 %v1394, %v1393
    %v1416 = vpack.c.bf16 %v1396, %v1395
    %v1417 = vpack.c.bf16 %v1398, %v1397
    %v1418 = vpack.c.bf16 %v1400, %v1399
    %v1419 = vpack.c.bf16 %v1402, %v1401
    %v1420 = vpack.c.bf16 %v1404, %v1403
    %v1437 = vrot.slane %v1405, 3
    %v1438 = vrot.slane %v1406, 6
    %v1439 = vrot.slane %v1406, 1
    %v1440 = vrot.slane %v1407, 4
    %v1441 = vrot.slane %v1407, 7
    %v1442 = vrot.slane %v1408, 2
    %v1443 = vrot.slane %v1408, 5
    %v1444 = vrot.slane %v1409, 3
    %v1445 = vrot.slane %v1410, 6
    %v1446 = vrot.slane %v1410, 1
    %v1447 = vrot.slane %v1411, 4
    %v1448 = vrot.slane %v1411, 7
    %v1449 = vrot.slane %v1412, 2
    %v1450 = vrot.slane %v1412, 5
    %v1451 = vrot.slane %v1413, 3
    %v1452 = vrot.slane %v1414, 6
    %v1453 = vrot.slane %v1414, 1
    %v1454 = vrot.slane %v1415, 4
    %v1455 = vrot.slane %v1415, 7
    %v1456 = vrot.slane %v1416, 2
    %v1457 = vrot.slane %v1416, 5
    %v1458 = vrot.slane %v1417, 3
    %v1459 = vrot.slane %v1418, 6
    %v1460 = vrot.slane %v1418, 1
    %v1461 = vrot.slane %v1419, 4
    %v1462 = vrot.slane %v1419, 7
    %v1463 = vrot.slane %v1420, 2
    %v1464 = vrot.slane %v1420, 5
    %vm1465 = vcmask 1040384
    %v1468 = vsel %vm1465, %v1405, %v1437
    %vm1469 = vcmask 1042434
    %v1472 = vsel %vm1469, %v1438, %v1439
    %v1473 = vsel %vm1158, %v1468, %v1472
    %vm1474 = vcmask 1044484
    %v1477 = vsel %vm1474, %v1440, %v1441
    %vm1478 = vcmask 1046534
    %v1481 = vsel %vm1478, %v1442, %v1443
    %vm1482 = vcmask 1045508
    %v1483 = vsel %vm1482, %v1477, %v1481
    %vm1484 = vcmask 1043456
    %v1485 = vsel %vm1484, %v1473, %v1483
    %v1488 = vsel %vm1465, %v1409, %v1444
    %v1491 = vsel %vm1469, %v1445, %v1446
    %v1492 = vsel %vm1158, %v1488, %v1491
    %v1495 = vsel %vm1474, %v1447, %v1448
    %v1498 = vsel %vm1478, %v1449, %v1450
    %v1499 = vsel %vm1482, %v1495, %v1498
    %v1500 = vsel %vm1484, %v1492, %v1499
    %v1503 = vsel %vm1465, %v1413, %v1451
    %v1506 = vsel %vm1469, %v1452, %v1453
    %v1507 = vsel %vm1158, %v1503, %v1506
    %v1510 = vsel %vm1474, %v1454, %v1455
    %v1513 = vsel %vm1478, %v1456, %v1457
    %v1514 = vsel %vm1482, %v1510, %v1513
    %v1515 = vsel %vm1484, %v1507, %v1514
    %v1518 = vsel %vm1465, %v1417, %v1458
    %v1521 = vsel %vm1469, %v1459, %v1460
    %v1522 = vsel %vm1158, %v1518, %v1521
    %v1525 = vsel %vm1474, %v1461, %v1462
    %v1528 = vsel %vm1478, %v1463, %v1464
    %v1529 = vsel %vm1482, %v1525, %v1528
    %v1530 = vsel %vm1484, %v1522, %v1529
    %1535 = vst [vmem:[%s3] sm:$0xff] %v1485
    %1536 = vst [vmem:[%s3 + $0x8] sm:$0xff] %v1500
    %1537 = vst [vmem:[%s3 + $0x10] sm:$0xff] %v1515
    %1538 = vst [vmem:[%s3 + $0x18] sm:$0xff] %v1530
    // Predicated region
    $region26: #{image_decoder.4} parent=1 // pred_check
      _
    $region27: #{image_decoder.4} parent=1 // pred_check_branch
      %1540 = sbr.rel (0) target = $region29
    $region28: #{image_decoder.4} parent=1 // pred_region
      _
    $region29: #{image_decoder.4} parent=1 // pred_fallthru
      _
    // Predicated region
    $region30: #{image_decoder.4} parent=1 // pred_check
      _
    $region31: #{image_decoder.4} parent=1 // pred_check_branch
      %1542 = sbr.rel (0) target = $region33
    $region32: #{image_decoder.4} parent=1 // pred_region
      _
    $region33: #{image_decoder.4} parent=1 // pred_fallthru
      _
    %1543 = vsyncpa [#allocation3], 1
    %1544 = vsyncpa [#allocation5], 1

// kernel: image_decoder.5
$region0: #{image_decoder.5}
  #allocation0 [shape = 'u32[]', space=smem, size = 0x4, offset = 0x4, fixed_abs, tag = 'smem constant byte address 0x4 - core index']
  #allocation1 [shape = 'u32[72,128]{1,0:T(1,128)}', space=vmem, size = 0x9000, scoped, tag = 'internal scratch']
  %s0 = inlined_call_operand.vmem [shape: bf16[2,64,82], index: 0, kind: input, shape index: {}]
  %s1 = inlined_call_operand.vmem [shape: bf16[9,128,64], index: 1, kind: input, shape index: {}]
  %s2 = inlined_call_operand.vmem [shape: f32[128,1], index: 2, kind: input, shape index: {}]
  %s3 = inlined_call_operand.vmem [shape: bf16[2,128,64], index: 3, kind: output, shape index: {}]
  %s4 = sld [smem:[#allocation0]]
  $region45: #{image_decoder.5} parent=0
    _
  %s6 = ssub.s32 1, %s4
  %s7 = scalar_select 0, %s6, %s4
  loop: start=0, step=1, limit=4
  $region2: #{image_decoder.5} parent=0 // loop_pre_header
    _
  $region3: #{image_decoder.5} parent=0 // loop_header
    %s9 = sphi 0, %s13
    %p10 = scmp.ge.s32.totalorder %s9, 4
    %s19 = sphi 0, %s21
    %s22 = sphi 0, %s19
    %s23 = sphi 0, %s22
    %s39 = sphi 0, %s23
    %s43 = sphi 0, %s43
    %s45 = sphi 0, %s43
    %s46 = sphi 0, %s45
    %s60 = sphi 0, %s46
    %s64 = sphi 0, %s64
    %s66 = sphi 0, %s64
    %s67 = sphi 0, %s66
    %s81 = sphi 0, %s67
    %s87 = sphi 0, %s89
    %s90 = sphi 0, %s87
    %s91 = sphi 0, %s90
    %s107 = sphi 0, %s91
  $region4: #{image_decoder.5} parent=0 // loop_header_branch
    %12 = sbr.rel (%p10) target = $region8
  $region5: #{image_decoder.5} parent=0 // loop_body
    %s14 = ssub.s32 %s9, 1
    %s15 = ssub.s32 %s9, 2
    %s16 = sadd.s32 %s9, 1
    %s17 = ssub.s32 %s9, %s16
    %p18 = scmp.eq.s32.totalorder %s17, 0
    %s20 = sadd.s32 %s19, 1
    %s21 = scalar_select %p18, %s19, %s20
    %p24 = pneg %p18
    %p25 = scmp.eq.s32.totalorder %s9, 1
    %p26 = por %p24, %p25
    %p27 = scmp.ne.s32.totalorder %s19, %s22
    %p28 = scmp.eq.s32.totalorder %s9, 0
    %p29 = por %p27, %p28
    %p30 = scmp.ne.s32.totalorder %s19, %s22
    %p31 = scmp.eq.s32.totalorder %s14, 1
    %p32 = por %p30, %p31
    %p33 = scmp.ne.s32.totalorder %s22, %s23
    %p34 = scmp.eq.s32.totalorder %s14, 0
    %p35 = por %p33, %p34
    %p36 = scmp.ne.s32.totalorder %s22, %s23
    %p37 = scmp.eq.s32.totalorder %s15, 1
    %p38 = por %p36, %p37
    %p40 = scmp.ne.s32.totalorder %s23, %s39
    %p41 = scmp.eq.s32.totalorder %s15, 0
    %p42 = por %p40, %p41
    %s44 = sadd.s32 %s43, 1
    %p47 = scmp.eq.s32.totalorder %s9, 1
    %p48 = scmp.ne.s32.totalorder %s43, %s45
    %p49 = scmp.eq.s32.totalorder %s9, 0
    %p50 = por %p48, %p49
    %p51 = scmp.ne.s32.totalorder %s43, %s45
    %p52 = scmp.eq.s32.totalorder %s14, 1
    %p53 = por %p51, %p52
    %p54 = scmp.ne.s32.totalorder %s45, %s46
    %p55 = scmp.eq.s32.totalorder %s14, 0
    %p56 = por %p54, %p55
    %p57 = scmp.ne.s32.totalorder %s45, %s46
    %p58 = scmp.eq.s32.totalorder %s15, 1
    %p59 = por %p57, %p58
    %p61 = scmp.ne.s32.totalorder %s46, %s60
    %p62 = scmp.eq.s32.totalorder %s15, 0
    %p63 = por %p61, %p62
    %s65 = sadd.s32 %s64, 1
    %p68 = scmp.eq.s32.totalorder %s9, 1
    %p69 = scmp.ne.s32.totalorder %s64, %s66
    %p70 = scmp.eq.s32.totalorder %s9, 0
    %p71 = por %p69, %p70
    %p72 = scmp.ne.s32.totalorder %s64, %s66
    %p73 = scmp.eq.s32.totalorder %s14, 1
    %p74 = por %p72, %p73
    %p75 = scmp.ne.s32.totalorder %s66, %s67
    %p76 = scmp.eq.s32.totalorder %s14, 0
    %p77 = por %p75, %p76
    %p78 = scmp.ne.s32.totalorder %s66, %s67
    %p79 = scmp.eq.s32.totalorder %s15, 1
    %p80 = por %p78, %p79
    %p82 = scmp.ne.s32.totalorder %s67, %s81
    %p83 = scmp.eq.s32.totalorder %s15, 0
    %p84 = por %p82, %p83
    %s85 = ssub.s32 %s9, %s16
    %p86 = scmp.eq.s32.totalorder %s85, 0
    %s88 = sadd.s32 %s87, 1
    %s89 = scalar_select %p86, %s87, %s88
    %p92 = pneg %p86
    %p93 = scmp.eq.s32.totalorder %s9, 1
    %p94 = por %p92, %p93
    %p95 = scmp.ne.s32.totalorder %s87, %s90
    %p96 = scmp.eq.s32.totalorder %s9, 0
    %p97 = por %p95, %p96
    %p98 = scmp.ne.s32.totalorder %s87, %s90
    %p99 = scmp.eq.s32.totalorder %s14, 1
    %p100 = por %p98, %p99
    %p101 = scmp.ne.s32.totalorder %s90, %s91
    %p102 = scmp.eq.s32.totalorder %s14, 0
    %p103 = por %p101, %p102
    %p104 = scmp.ne.s32.totalorder %s90, %s91
    %p105 = scmp.eq.s32.totalorder %s15, 1
    %p106 = por %p104, %p105
    %p108 = scmp.ne.s32.totalorder %s91, %s107
    %p109 = scmp.eq.s32.totalorder %s15, 0
    %p110 = por %p108, %p109
    %p111 = scmp.le.s32.totalorder 1, %s9
    %p112 = scmp.lt.s32.totalorder %s9, 3
    %p113 = pnand %p111, %p112
    %p114 = pneg %p113
    // Predicated region
    $region9: #{image_decoder.5} parent=5 // pred_check
      _
    $region10: #{image_decoder.5} parent=5 // pred_check_branch
      %116 = sbr.rel (%p113) target = $region12
    $region11: #{image_decoder.5} parent=5 // pred_region
      %s117 = ssub.s32 %s9, 1
      // Predicated region
      $region13: #{image_decoder.5} parent=11 // pred_check
        %p118 = pneg %p56
      $region14: #{image_decoder.5} parent=11 // pred_check_branch
        %120 = sbr.rel (%p118) target = $region16
      $region15: #{image_decoder.5} parent=11 // pred_region
        _
      $region16: #{image_decoder.5} parent=11 // pred_fallthru
        _
      // Predicated region
      $region17: #{image_decoder.5} parent=11 // pred_check
        %p121 = pneg %p77
      $region18: #{image_decoder.5} parent=11 // pred_check_branch
        %123 = sbr.rel (%p121) target = $region20
      $region19: #{image_decoder.5} parent=11 // pred_region
        _
      $region20: #{image_decoder.5} parent=11 // pred_fallthru
        _
    $region12: #{image_decoder.5} parent=5 // pred_fallthru
      _
    %p124 = scmp.lt.s32.totalorder %s9, 2
    // Predicated region
    $region21: #{image_decoder.5} parent=5 // pred_check
      %p125 = pneg %p124
    $region22: #{image_decoder.5} parent=5 // pred_check_branch
      %127 = sbr.rel (%p125) target = $region24
    $region23: #{image_decoder.5} parent=5 // pred_region
      // Predicated region
      $region25: #{image_decoder.5} parent=23 // pred_check
        %p128 = pneg %p29
      $region26: #{image_decoder.5} parent=23 // pred_check_branch
        %130 = sbr.rel (%p128) target = $region28
      $region27: #{image_decoder.5} parent=23 // pred_region
        %p131 = scmp.lt.s32.totalorder %s9, 1
        %s132 = scalar_select %p131, %s9, 1
        %s133 = smul.addr %s132, 8
        %s134 = smul.addr %s133, 4
        %s135 = scalar_lea.vmem %s0, %s134
      $region28: #{image_decoder.5} parent=23 // pred_fallthru
        _
    $region24: #{image_decoder.5} parent=5 // pred_fallthru
      _
    %p136 = scmp.le.s32.totalorder 1, %s9
    %p137 = scmp.lt.s32.totalorder %s9, 3
    %p138 = pnand %p136, %p137
    %p139 = pneg %p138
    // Predicated region
    $region29: #{image_decoder.5} parent=5 // pred_check
      _
    $region30: #{image_decoder.5} parent=5 // pred_check_branch
      %141 = sbr.rel (%p138) target = $region32
    $region31: #{image_decoder.5} parent=5 // pred_region
      %s142 = ssub.s32 %s9, 1
      %p143 = scmp.lt.s32.totalorder %s14, 1
      %s144 = scalar_select %p143, %s14, 1
      %s145 = smul.addr %s144, 8
      %s146 = smul.addr %s145, 4
      %s147 = scalar_lea.vmem %s0, %s146
      %p148 = pneg %p35
      %p149 = pneg %p32
      %p150 = pneg %p56
      %p151 = pneg %p53
      %p152 = pneg %p77
      %p153 = pneg %p74
      %p154 = pneg %p103
      %p155 = pneg %p100
      %p156 = scmp.lt.s32.totalorder %s14, 1
      %s157 = scalar_select %p156, %s14, 1
      %s158 = smul.addr %s157, 16
      %s159 = smul.addr %s158, 4
      %s160 = scalar_lea.vmem %s3, %s159
      %p161 = scmp.lt.s32.totalorder %s14, 1
      %s162 = scalar_select %p161, %s14, 1
      %s163 = smul.addr %s162, 8
      %s164 = smul.addr %s163, 4
      %s165 = scalar_lea.vmem %s0, %s164
      %p166 = scmp.lt.s32.totalorder %s14, 1
      %s167 = scalar_select %p166, %s14, 1
      %s168 = smul.addr %s167, 16
      %s169 = smul.addr %s168, 4
      %s170 = scalar_lea.vmem %s3, %s169
      %v172 = vld [vmem:[%s165] sm:$0xf]
      %v173 = vld [vmem:[%s165 + $0x4] sm:$0xf]
      %v174 = vld [vmem:[%s165 + $0x8] sm:$0xf]
      %v175 = vld [vmem:[%s165 + $0xc] sm:$0xf]
      %v176 = vld [vmem:[%s165 + $0x10] sm:$0xf]
      %v177 = vld [vmem:[%s165 + $0x14] sm:$0xf]
      %v178 = vld [vmem:[%s165 + $0x18] sm:$0xf]
      %v179 = vld [vmem:[%s165 + $0x1c] sm:$0xf]
      %v180 = vunpack.c.l.bf16 %v172
      %v181 = vunpack.c.l.bf16 %v173
      %v182 = vunpack.c.l.bf16 %v174
      %v183 = vunpack.c.l.bf16 %v175
      %v184 = vunpack.c.l.bf16 %v176
      %v185 = vunpack.c.l.bf16 %v177
      %v186 = vunpack.c.l.bf16 %v178
      %v187 = vunpack.c.l.bf16 %v179
      %v188 = vlaneseq
      %v189 = vand.u32 %v188, 127
      %v190 = vand.u32 %v189, 7
      %vm191 = vcmp.ge.s32.totalorder %v190, 1
      %vm192 = vcmp.lt.s32.totalorder %v190, 7
      %v193 = vld [vmem:[%s2] sm:$0xff]
      %v194 = vld [vmem:[%s2 + $0x8] sm:$0xff]
      %v195 = vld [vmem:[%s2 + $0x10] sm:$0xff]
      %v196 = vld [vmem:[%s2 + $0x18] sm:$0xff]
      %v197 = vld [vmem:[%s2 + $0x20] sm:$0xff]
      %v198 = vld [vmem:[%s2 + $0x28] sm:$0xff]
      %v199 = vld [vmem:[%s2 + $0x30] sm:$0xff]
      %v200 = vld [vmem:[%s2 + $0x38] sm:$0xff]
      %v201 = vld [vmem:[%s2 + $0x40] sm:$0xff]
      %v202 = vld [vmem:[%s2 + $0x48] sm:$0xff]
      %v203 = vld [vmem:[%s2 + $0x50] sm:$0xff]
      %v204 = vld [vmem:[%s2 + $0x58] sm:$0xff]
      %v205 = vld [vmem:[%s2 + $0x60] sm:$0xff]
      %v206 = vld [vmem:[%s2 + $0x68] sm:$0xff]
      %v207 = vld [vmem:[%s2 + $0x70] sm:$0xff]
      %v208 = vld [vmem:[%s2 + $0x78] sm:$0xff]
      %210 = vset.pattern.permute.xlu0 0
      %211 = vperm.xlu0 %210, %v193
      %v212 = vpop.permute.xlu0 %211
      %215 = vset.pattern.permute.xlu0 0
      %216 = vperm.xlu0 %215, %v194
      %v217 = vpop.permute.xlu0 %216
      %220 = vset.pattern.permute.xlu0 0
      %221 = vperm.xlu0 %220, %v195
      %v222 = vpop.permute.xlu0 %221
      %225 = vset.pattern.permute.xlu0 0
      %226 = vperm.xlu0 %225, %v196
      %v227 = vpop.permute.xlu0 %226
      %230 = vset.pattern.permute.xlu0 0
      %231 = vperm.xlu0 %230, %v197
      %v232 = vpop.permute.xlu0 %231
      %235 = vset.pattern.permute.xlu0 0
      %236 = vperm.xlu0 %235, %v198
      %v237 = vpop.permute.xlu0 %236
      %240 = vset.pattern.permute.xlu0 0
      %241 = vperm.xlu0 %240, %v199
      %v242 = vpop.permute.xlu0 %241
      %245 = vset.pattern.permute.xlu0 0
      %246 = vperm.xlu0 %245, %v200
      %v247 = vpop.permute.xlu0 %246
      %250 = vset.pattern.permute.xlu0 0
      %251 = vperm.xlu0 %250, %v201
      %v252 = vpop.permute.xlu0 %251
      %255 = vset.pattern.permute.xlu0 0
      %256 = vperm.xlu0 %255, %v202
      %v257 = vpop.permute.xlu0 %256
      %260 = vset.pattern.permute.xlu0 0
      %261 = vperm.xlu0 %260, %v203
      %v262 = vpop.permute.xlu0 %261
      %265 = vset.pattern.permute.xlu0 0
      %266 = vperm.xlu0 %265, %v204
      %v267 = vpop.permute.xlu0 %266
      %270 = vset.pattern.permute.xlu0 0
      %271 = vperm.xlu0 %270, %v205
      %v272 = vpop.permute.xlu0 %271
      %275 = vset.pattern.permute.xlu0 0
      %276 = vperm.xlu0 %275, %v206
      %v277 = vpop.permute.xlu0 %276
      %280 = vset.pattern.permute.xlu0 0
      %281 = vperm.xlu0 %280, %v207
      %v282 = vpop.permute.xlu0 %281
      %285 = vset.pattern.permute.xlu0 0
      %286 = vperm.xlu0 %285, %v208
      %v287 = vpop.permute.xlu0 %286
      %v289 = vadd.f32 %v212, 0.0
      %v290 = vadd.f32 %v217, 0.0
      %v291 = vadd.f32 %v222, 0.0
      %v292 = vadd.f32 %v227, 0.0
      %v293 = vadd.f32 %v232, 0.0
      %v294 = vadd.f32 %v237, 0.0
      %v295 = vadd.f32 %v242, 0.0
      %v296 = vadd.f32 %v247, 0.0
      %v297 = vadd.f32 %v252, 0.0
      %v298 = vadd.f32 %v257, 0.0
      %v299 = vadd.f32 %v262, 0.0
      %v300 = vadd.f32 %v267, 0.0
      %v301 = vadd.f32 %v272, 0.0
      %v302 = vadd.f32 %v277, 0.0
      %v303 = vadd.f32 %v282, 0.0
      %v304 = vadd.f32 %v287, 0.0
      %v305 = vsel %vm191, %v180, 0.0
      %v306 = vsel %vm191, %v181, 0.0
      %v307 = vsel %vm191, %v182, 0.0
      %v308 = vsel %vm191, %v183, 0.0
      %v309 = vsel %vm191, %v184, 0.0
      %v310 = vsel %vm191, %v185, 0.0
      %v311 = vsel %vm191, %v186, 0.0
      %v312 = vsel %vm191, %v187, 0.0
      %v313 = vld [vmem:[%s1] sm:$0xf]
      %v314 = vld [vmem:[%s1 + $0x4] sm:$0xf]
      %v315 = vld [vmem:[%s1 + $0x8] sm:$0xf]
      %v316 = vld [vmem:[%s1 + $0xc] sm:$0xf]
      %v317 = vld [vmem:[%s1 + $0x10] sm:$0xf]
      %v318 = vld [vmem:[%s1 + $0x14] sm:$0xf]
      %v319 = vld [vmem:[%s1 + $0x18] sm:$0xf]
      %v320 = vld [vmem:[%s1 + $0x1c] sm:$0xf]
      %v321 = vld [vmem:[%s1 + $0x20] sm:$0xf]
      %v322 = vld [vmem:[%s1 + $0x24] sm:$0xf]
      %v323 = vld [vmem:[%s1 + $0x28] sm:$0xf]
      %v324 = vld [vmem:[%s1 + $0x2c] sm:$0xf]
      %v325 = vld [vmem:[%s1 + $0x30] sm:$0xf]
      %v326 = vld [vmem:[%s1 + $0x34] sm:$0xf]
      %v327 = vld [vmem:[%s1 + $0x38] sm:$0xf]
      %v328 = vld [vmem:[%s1 + $0x3c] sm:$0xf]
      %v329 = vpack.c.bf16 %v306, %v305
      %v330 = vpack.c.bf16 %v308, %v307
      %v331 = vpack.c.bf16 %v310, %v309
      %v332 = vpack.c.bf16 %v312, %v311
      %v349 = vunpack.c.l.b16 %v313
      %v350 = vunpack.c.l.b16 %v314
      %v351 = vunpack.c.l.b16 %v315
      %v352 = vunpack.c.l.b16 %v316
      %v353 = vunpack.c.l.b16 %v317
      %v354 = vunpack.c.l.b16 %v318
      %v355 = vunpack.c.l.b16 %v319
      %v356 = vunpack.c.l.b16 %v320
      %v357 = vunpack.c.l.b16 %v321
      %v358 = vunpack.c.l.b16 %v322
      %v359 = vunpack.c.l.b16 %v323
      %v360 = vunpack.c.l.b16 %v324
      %v361 = vunpack.c.l.b16 %v325
      %v362 = vunpack.c.l.b16 %v326
      %v363 = vunpack.c.l.b16 %v327
      %v364 = vunpack.c.l.b16 %v328
      %v365 = vpack.c.b16 %v350, %v349
      %v366 = vpack.c.b16 %v352, %v351
      %v367 = vpack.c.b16 %v354, %v353
      %v368 = vpack.c.b16 %v356, %v355
      %v369 = vpack.c.b16 %v358, %v357
      %v370 = vpack.c.b16 %v360, %v359
      %v371 = vpack.c.b16 %v362, %v361
      %v372 = vpack.c.b16 %v364, %v363
      %vm373 = vcmask 523264
      %v375 = vsel %vm373, %v365, 0
      %v378 = vsel %vm373, %v366, 0
      %v381 = vsel %vm373, %v367, 0
      %v384 = vsel %vm373, %v368, 0
      %v387 = vsel %vm373, %v369, 0
      %v390 = vsel %vm373, %v370, 0
      %v393 = vsel %vm373, %v371, 0
      %v396 = vsel %vm373, %v372, 0
      %398 = vmatpush.bf16.msra.mxu0 0
      %399 = vmatpush.bf16.msra.mxu0 0
      %400 = vmatpush.bf16.msra.mxu0 0
      %401 = vmatpush.bf16.msra.mxu0 0
      %402 = vmatpush.bf16.msra.mxu0 %v332
      %403 = vmatpush.bf16.msra.mxu0 %v331
      %404 = vmatpush.bf16.msra.mxu0 %v330
      %405 = vmatpush.bf16.msra.mxu0 %v329
      %406 = vmatmul.bf16.gmra.mxu0 %v375
      %v407 = vpop.f32.mrf.mxu0
      %v408 = vadd.f32 0.0, %v407
      %v409 = vpop.f32.mrf.mxu0
      %v410 = vadd.f32 0.0, %v409
      %411 = vmatmul.bf16.gmra.mxu0 %v378
      %v412 = vpop.f32.mrf.mxu0
      %v413 = vadd.f32 0.0, %v412
      %v414 = vpop.f32.mrf.mxu0
      %v415 = vadd.f32 0.0, %v414
      %416 = vmatmul.bf16.gmra.mxu0 %v381
      %v417 = vpop.f32.mrf.mxu0
      %v418 = vadd.f32 0.0, %v417
      %v419 = vpop.f32.mrf.mxu0
      %v420 = vadd.f32 0.0, %v419
      %421 = vmatmul.bf16.gmra.mxu0 %v384
      %v422 = vpop.f32.mrf.mxu0
      %v423 = vadd.f32 0.0, %v422
      %v424 = vpop.f32.mrf.mxu0
      %v425 = vadd.f32 0.0, %v424
      %426 = vmatmul.bf16.gmra.mxu0 %v387
      %v427 = vpop.f32.mrf.mxu0
      %v428 = vadd.f32 0.0, %v427
      %v429 = vpop.f32.mrf.mxu0
      %v430 = vadd.f32 0.0, %v429
      %431 = vmatmul.bf16.gmra.mxu0 %v390
      %v432 = vpop.f32.mrf.mxu0
      %v433 = vadd.f32 0.0, %v432
      %v434 = vpop.f32.mrf.mxu0
      %v435 = vadd.f32 0.0, %v434
      %436 = vmatmul.bf16.gmra.mxu0 %v393
      %v437 = vpop.f32.mrf.mxu0
      %v438 = vadd.f32 0.0, %v437
      %v439 = vpop.f32.mrf.mxu0
      %v440 = vadd.f32 0.0, %v439
      %441 = vmatmul.bf16.gmra.mxu0 %v396
      %v442 = vpop.f32.mrf.mxu0
      %v443 = vadd.f32 0.0, %v442
      %v444 = vpop.f32.mrf.mxu0
      %v445 = vadd.f32 0.0, %v444
      %446 = vdwg.mxu0
      %v447 = vadd.f32 %v289, %v408
      %v448 = vadd.f32 %v290, %v410
      %v449 = vadd.f32 %v291, %v413
      %v450 = vadd.f32 %v292, %v415
      %v451 = vadd.f32 %v293, %v418
      %v452 = vadd.f32 %v294, %v420
      %v453 = vadd.f32 %v295, %v423
      %v454 = vadd.f32 %v296, %v425
      %v455 = vadd.f32 %v297, %v428
      %v456 = vadd.f32 %v298, %v430
      %v457 = vadd.f32 %v299, %v433
      %v458 = vadd.f32 %v300, %v435
      %v459 = vadd.f32 %v301, %v438
      %v460 = vadd.f32 %v302, %v440
      %v461 = vadd.f32 %v303, %v443
      %v462 = vadd.f32 %v304, %v445
      %s463 = scalar_lea.vmem %s1, 64
      %v464 = vld [vmem:[%s463] sm:$0xf]
      %v465 = vld [vmem:[%s463 + $0x4] sm:$0xf]
      %v466 = vld [vmem:[%s463 + $0x8] sm:$0xf]
      %v467 = vld [vmem:[%s463 + $0xc] sm:$0xf]
      %v468 = vld [vmem:[%s463 + $0x10] sm:$0xf]
      %v469 = vld [vmem:[%s463 + $0x14] sm:$0xf]
      %v470 = vld [vmem:[%s463 + $0x18] sm:$0xf]
      %v471 = vld [vmem:[%s463 + $0x1c] sm:$0xf]
      %v472 = vld [vmem:[%s463 + $0x20] sm:$0xf]
      %v473 = vld [vmem:[%s463 + $0x24] sm:$0xf]
      %v474 = vld [vmem:[%s463 + $0x28] sm:$0xf]
      %v475 = vld [vmem:[%s463 + $0x2c] sm:$0xf]
      %v476 = vld [vmem:[%s463 + $0x30] sm:$0xf]
      %v477 = vld [vmem:[%s463 + $0x34] sm:$0xf]
      %v478 = vld [vmem:[%s463 + $0x38] sm:$0xf]
      %v479 = vld [vmem:[%s463 + $0x3c] sm:$0xf]
      %v480 = vpack.c.bf16 %v181, %v180
      %v481 = vpack.c.bf16 %v183, %v182
      %v482 = vpack.c.bf16 %v185, %v184
      %v483 = vpack.c.bf16 %v187, %v186
      %v500 = vunpack.c.l.b16 %v464
      %v501 = vunpack.c.l.b16 %v465
      %v502 = vunpack.c.l.b16 %v466
      %v503 = vunpack.c.l.b16 %v467
      %v504 = vunpack.c.l.b16 %v468
      %v505 = vunpack.c.l.b16 %v469
      %v506 = vunpack.c.l.b16 %v470
      %v507 = vunpack.c.l.b16 %v471
      %v508 = vunpack.c.l.b16 %v472
      %v509 = vunpack.c.l.b16 %v473
      %v510 = vunpack.c.l.b16 %v474
      %v511 = vunpack.c.l.b16 %v475
      %v512 = vunpack.c.l.b16 %v476
      %v513 = vunpack.c.l.b16 %v477
      %v514 = vunpack.c.l.b16 %v478
      %v515 = vunpack.c.l.b16 %v479
      %v516 = vpack.c.b16 %v501, %v500
      %v517 = vpack.c.b16 %v503, %v502
      %v518 = vpack.c.b16 %v505, %v504
      %v519 = vpack.c.b16 %v507, %v506
      %v520 = vpack.c.b16 %v509, %v508
      %v521 = vpack.c.b16 %v511, %v510
      %v522 = vpack.c.b16 %v513, %v512
      %v523 = vpack.c.b16 %v515, %v514
      %528 = vrot.lane.b32.xlu0 %v480, 127
      %v529 = vpop.permute.xlu0 %528
      %530 = vrot.lane.b32.xlu0 %v481, 127
      %v531 = vpop.permute.xlu0 %530
      %532 = vrot.lane.b32.xlu0 %v482, 127
      %v533 = vpop.permute.xlu0 %532
      %534 = vrot.lane.b32.xlu0 %v483, 127
      %v535 = vpop.permute.xlu0 %534
      %v541 = vsel %vm373, %v516, 0
      %v544 = vsel %vm373, %v517, 0
      %v547 = vsel %vm373, %v518, 0
      %v550 = vsel %vm373, %v519, 0
      %v553 = vsel %vm373, %v520, 0
      %v556 = vsel %vm373, %v521, 0
      %v559 = vsel %vm373, %v522, 0
      %v562 = vsel %vm373, %v523, 0
      %564 = vmatpush.bf16.msra.mxu0 0
      %565 = vmatpush.bf16.msra.mxu0 0
      %566 = vmatpush.bf16.msra.mxu0 0
      %567 = vmatpush.bf16.msra.mxu0 0
      %568 = vmatpush.bf16.msra.mxu0 %v535
      %569 = vmatpush.bf16.msra.mxu0 %v533
      %570 = vmatpush.bf16.msra.mxu0 %v531
      %571 = vmatpush.bf16.msra.mxu0 %v529
      %572 = vmatmul.bf16.gmra.mxu0 %v541
      %v573 = vpop.f32.mrf.mxu0
      %v574 = vadd.f32 0.0, %v573
      %v575 = vpop.f32.mrf.mxu0
      %v576 = vadd.f32 0.0, %v575
      %577 = vmatmul.bf16.gmra.mxu0 %v544
      %v578 = vpop.f32.mrf.mxu0
      %v579 = vadd.f32 0.0, %v578
      %v580 = vpop.f32.mrf.mxu0
      %v581 = vadd.f32 0.0, %v580
      %582 = vmatmul.bf16.gmra.mxu0 %v547
      %v583 = vpop.f32.mrf.mxu0
      %v584 = vadd.f32 0.0, %v583
      %v585 = vpop.f32.mrf.mxu0
      %v586 = vadd.f32 0.0, %v585
      %587 = vmatmul.bf16.gmra.mxu0 %v550
      %v588 = vpop.f32.mrf.mxu0
      %v589 = vadd.f32 0.0, %v588
      %v590 = vpop.f32.mrf.mxu0
      %v591 = vadd.f32 0.0, %v590
      %592 = vmatmul.bf16.gmra.mxu0 %v553
      %v593 = vpop.f32.mrf.mxu0
      %v594 = vadd.f32 0.0, %v593
      %v595 = vpop.f32.mrf.mxu0
      %v596 = vadd.f32 0.0, %v595
      %597 = vmatmul.bf16.gmra.mxu0 %v556
      %v598 = vpop.f32.mrf.mxu0
      %v599 = vadd.f32 0.0, %v598
      %v600 = vpop.f32.mrf.mxu0
      %v601 = vadd.f32 0.0, %v600
      %602 = vmatmul.bf16.gmra.mxu0 %v559
      %v603 = vpop.f32.mrf.mxu0
      %v604 = vadd.f32 0.0, %v603
      %v605 = vpop.f32.mrf.mxu0
      %v606 = vadd.f32 0.0, %v605
      %607 = vmatmul.bf16.gmra.mxu0 %v562
      %v608 = vpop.f32.mrf.mxu0
      %v609 = vadd.f32 0.0, %v608
      %v610 = vpop.f32.mrf.mxu0
      %v611 = vadd.f32 0.0, %v610
      %612 = vdwg.mxu0
      %v613 = vadd.f32 %v447, %v574
      %v614 = vadd.f32 %v448, %v576
      %v615 = vadd.f32 %v449, %v579
      %v616 = vadd.f32 %v450, %v581
      %v617 = vadd.f32 %v451, %v584
      %v618 = vadd.f32 %v452, %v586
      %v619 = vadd.f32 %v453, %v589
      %v620 = vadd.f32 %v454, %v591
      %v621 = vadd.f32 %v455, %v594
      %v622 = vadd.f32 %v456, %v596
      %v623 = vadd.f32 %v457, %v599
      %v624 = vadd.f32 %v458, %v601
      %v625 = vadd.f32 %v459, %v604
      %v626 = vadd.f32 %v460, %v606
      %v627 = vadd.f32 %v461, %v609
      %v628 = vadd.f32 %v462, %v611
      %637 = vrot.lane.b32.xlu0 %v180, 126
      %v638 = vpop.permute.xlu0 %637
      %639 = vrot.lane.b32.xlu0 %v181, 126
      %v640 = vpop.permute.xlu0 %639
      %641 = vrot.lane.b32.xlu0 %v182, 126
      %v642 = vpop.permute.xlu0 %641
      %643 = vrot.lane.b32.xlu0 %v183, 126
      %v644 = vpop.permute.xlu0 %643
      %645 = vrot.lane.b32.xlu0 %v184, 126
      %v646 = vpop.permute.xlu0 %645
      %647 = vrot.lane.b32.xlu0 %v185, 126
      %v648 = vpop.permute.xlu0 %647
      %649 = vrot.lane.b32.xlu0 %v186, 126
      %v650 = vpop.permute.xlu0 %649
      %651 = vrot.lane.b32.xlu0 %v187, 126
      %v652 = vpop.permute.xlu0 %651
      %v661 = vsel %vm192, %v638, 0.0
      %v662 = vsel %vm192, %v640, 0.0
      %v663 = vsel %vm192, %v642, 0.0
      %v664 = vsel %vm192, %v644, 0.0
      %v665 = vsel %vm192, %v646, 0.0
      %v666 = vsel %vm192, %v648, 0.0
      %v667 = vsel %vm192, %v650, 0.0
      %v668 = vsel %vm192, %v652, 0.0
      %s669 = scalar_lea.vmem %s1, 128
      %v670 = vld [vmem:[%s669] sm:$0xf]
      %v671 = vld [vmem:[%s669 + $0x4] sm:$0xf]
      %v672 = vld [vmem:[%s669 + $0x8] sm:$0xf]
      %v673 = vld [vmem:[%s669 + $0xc] sm:$0xf]
      %v674 = vld [vmem:[%s669 + $0x10] sm:$0xf]
      %v675 = vld [vmem:[%s669 + $0x14] sm:$0xf]
      %v676 = vld [vmem:[%s669 + $0x18] sm:$0xf]
      %v677 = vld [vmem:[%s669 + $0x1c] sm:$0xf]
      %v678 = vld [vmem:[%s669 + $0x20] sm:$0xf]
      %v679 = vld [vmem:[%s669 + $0x24] sm:$0xf]
      %v680 = vld [vmem:[%s669 + $0x28] sm:$0xf]
      %v681 = vld [vmem:[%s669 + $0x2c] sm:$0xf]
      %v682 = vld [vmem:[%s669 + $0x30] sm:$0xf]
      %v683 = vld [vmem:[%s669 + $0x34] sm:$0xf]
      %v684 = vld [vmem:[%s669 + $0x38] sm:$0xf]
      %v685 = vld [vmem:[%s669 + $0x3c] sm:$0xf]
      %v686 = vpack.c.bf16 %v662, %v661
      %v687 = vpack.c.bf16 %v664, %v663
      %v688 = vpack.c.bf16 %v666, %v665
      %v689 = vpack.c.bf16 %v668, %v667
      %v706 = vunpack.c.l.b16 %v670
      %v707 = vunpack.c.l.b16 %v671
      %v708 = vunpack.c.l.b16 %v672
      %v709 = vunpack.c.l.b16 %v673
      %v710 = vunpack.c.l.b16 %v674
      %v711 = vunpack.c.l.b16 %v675
      %v712 = vunpack.c.l.b16 %v676
      %v713 = vunpack.c.l.b16 %v677
      %v714 = vunpack.c.l.b16 %v678
      %v715 = vunpack.c.l.b16 %v679
      %v716 = vunpack.c.l.b16 %v680
      %v717 = vunpack.c.l.b16 %v681
      %v718 = vunpack.c.l.b16 %v682
      %v719 = vunpack.c.l.b16 %v683
      %v720 = vunpack.c.l.b16 %v684
      %v721 = vunpack.c.l.b16 %v685
      %v722 = vpack.c.b16 %v707, %v706
      %v723 = vpack.c.b16 %v709, %v708
      %v724 = vpack.c.b16 %v711, %v710
      %v725 = vpack.c.b16 %v713, %v712
      %v726 = vpack.c.b16 %v715, %v714
      %v727 = vpack.c.b16 %v717, %v716
      %v728 = vpack.c.b16 %v719, %v718
      %v729 = vpack.c.b16 %v721, %v720
      %v731 = vsel %vm373, %v722, 0
      %v734 = vsel %vm373, %v723, 0
      %v737 = vsel %vm373, %v724, 0
      %v740 = vsel %vm373, %v725, 0
      %v743 = vsel %vm373, %v726, 0
      %v746 = vsel %vm373, %v727, 0
      %v749 = vsel %vm373, %v728, 0
      %v752 = vsel %vm373, %v729, 0
      %754 = vmatpush.bf16.msra.mxu0 0
      %755 = vmatpush.bf16.msra.mxu0 0
      %756 = vmatpush.bf16.msra.mxu0 0
      %757 = vmatpush.bf16.msra.mxu0 0
      %758 = vmatpush.bf16.msra.mxu0 %v689
      %759 = vmatpush.bf16.msra.mxu0 %v688
      %760 = vmatpush.bf16.msra.mxu0 %v687
      %761 = vmatpush.bf16.msra.mxu0 %v686
      %762 = vmatmul.bf16.gmra.mxu0 %v731
      %v763 = vpop.f32.mrf.mxu0
      %v764 = vadd.f32 0.0, %v763
      %v765 = vpop.f32.mrf.mxu0
      %v766 = vadd.f32 0.0, %v765
      %767 = vmatmul.bf16.gmra.mxu0 %v734
      %v768 = vpop.f32.mrf.mxu0
      %v769 = vadd.f32 0.0, %v768
      %v770 = vpop.f32.mrf.mxu0
      %v771 = vadd.f32 0.0, %v770
      %772 = vmatmul.bf16.gmra.mxu0 %v737
      %v773 = vpop.f32.mrf.mxu0
      %v774 = vadd.f32 0.0, %v773
      %v775 = vpop.f32.mrf.mxu0
      %v776 = vadd.f32 0.0, %v775
      %777 = vmatmul.bf16.gmra.mxu0 %v740
      %v778 = vpop.f32.mrf.mxu0
      %v779 = vadd.f32 0.0, %v778
      %v780 = vpop.f32.mrf.mxu0
      %v781 = vadd.f32 0.0, %v780
      %782 = vmatmul.bf16.gmra.mxu0 %v743
      %v783 = vpop.f32.mrf.mxu0
      %v784 = vadd.f32 0.0, %v783
      %v785 = vpop.f32.mrf.mxu0
      %v786 = vadd.f32 0.0, %v785
      %787 = vmatmul.bf16.gmra.mxu0 %v746
      %v788 = vpop.f32.mrf.mxu0
      %v789 = vadd.f32 0.0, %v788
      %v790 = vpop.f32.mrf.mxu0
      %v791 = vadd.f32 0.0, %v790
      %792 = vmatmul.bf16.gmra.mxu0 %v749
      %v793 = vpop.f32.mrf.mxu0
      %v794 = vadd.f32 0.0, %v793
      %v795 = vpop.f32.mrf.mxu0
      %v796 = vadd.f32 0.0, %v795
      %797 = vmatmul.bf16.gmra.mxu0 %v752
      %v798 = vpop.f32.mrf.mxu0
      %v799 = vadd.f32 0.0, %v798
      %v800 = vpop.f32.mrf.mxu0
      %v801 = vadd.f32 0.0, %v800
      %802 = vdwg.mxu0
      %v803 = vadd.f32 %v613, %v764
      %v804 = vadd.f32 %v614, %v766
      %v805 = vadd.f32 %v615, %v769
      %v806 = vadd.f32 %v616, %v771
      %v807 = vadd.f32 %v617, %v774
      %v808 = vadd.f32 %v618, %v776
      %v809 = vadd.f32 %v619, %v779
      %v810 = vadd.f32 %v620, %v781
      %v811 = vadd.f32 %v621, %v784
      %v812 = vadd.f32 %v622, %v786
      %v813 = vadd.f32 %v623, %v789
      %v814 = vadd.f32 %v624, %v791
      %v815 = vadd.f32 %v625, %v794
      %v816 = vadd.f32 %v626, %v796
      %v817 = vadd.f32 %v627, %v799
      %v818 = vadd.f32 %v628, %v801
      %819 = vrot.lane.b32.xlu0 %v180, 120
      %v820 = vpop.permute.xlu0 %819
      %821 = vrot.lane.b32.xlu0 %v181, 120
      %v822 = vpop.permute.xlu0 %821
      %823 = vrot.lane.b32.xlu0 %v182, 120
      %v824 = vpop.permute.xlu0 %823
      %825 = vrot.lane.b32.xlu0 %v183, 120
      %v826 = vpop.permute.xlu0 %825
      %827 = vrot.lane.b32.xlu0 %v184, 120
      %v828 = vpop.permute.xlu0 %827
      %829 = vrot.lane.b32.xlu0 %v185, 120
      %v830 = vpop.permute.xlu0 %829
      %831 = vrot.lane.b32.xlu0 %v186, 120
      %v832 = vpop.permute.xlu0 %831
      %833 = vrot.lane.b32.xlu0 %v187, 120
      %v834 = vpop.permute.xlu0 %833
      %v843 = vsel %vm191, %v820, 0.0
      %v844 = vsel %vm191, %v822, 0.0
      %v845 = vsel %vm191, %v824, 0.0
      %v846 = vsel %vm191, %v826, 0.0
      %v847 = vsel %vm191, %v828, 0.0
      %v848 = vsel %vm191, %v830, 0.0
      %v849 = vsel %vm191, %v832, 0.0
      %v850 = vsel %vm191, %v834, 0.0
      %s851 = scalar_lea.vmem %s1, 192
      %v852 = vld [vmem:[%s851] sm:$0xf]
      %v853 = vld [vmem:[%s851 + $0x4] sm:$0xf]
      %v854 = vld [vmem:[%s851 + $0x8] sm:$0xf]
      %v855 = vld [vmem:[%s851 + $0xc] sm:$0xf]
      %v856 = vld [vmem:[%s851 + $0x10] sm:$0xf]
      %v857 = vld [vmem:[%s851 + $0x14] sm:$0xf]
      %v858 = vld [vmem:[%s851 + $0x18] sm:$0xf]
      %v859 = vld [vmem:[%s851 + $0x1c] sm:$0xf]
      %v860 = vld [vmem:[%s851 + $0x20] sm:$0xf]
      %v861 = vld [vmem:[%s851 + $0x24] sm:$0xf]
      %v862 = vld [vmem:[%s851 + $0x28] sm:$0xf]
      %v863 = vld [vmem:[%s851 + $0x2c] sm:$0xf]
      %v864 = vld [vmem:[%s851 + $0x30] sm:$0xf]
      %v865 = vld [vmem:[%s851 + $0x34] sm:$0xf]
      %v866 = vld [vmem:[%s851 + $0x38] sm:$0xf]
      %v867 = vld [vmem:[%s851 + $0x3c] sm:$0xf]
      %v868 = vpack.c.bf16 %v844, %v843
      %v869 = vpack.c.bf16 %v846, %v845
      %v870 = vpack.c.bf16 %v848, %v847
      %v871 = vpack.c.bf16 %v850, %v849
      %v888 = vunpack.c.l.b16 %v852
      %v889 = vunpack.c.l.b16 %v853
      %v890 = vunpack.c.l.b16 %v854
      %v891 = vunpack.c.l.b16 %v855
      %v892 = vunpack.c.l.b16 %v856
      %v893 = vunpack.c.l.b16 %v857
      %v894 = vunpack.c.l.b16 %v858
      %v895 = vunpack.c.l.b16 %v859
      %v896 = vunpack.c.l.b16 %v860
      %v897 = vunpack.c.l.b16 %v861
      %v898 = vunpack.c.l.b16 %v862
      %v899 = vunpack.c.l.b16 %v863
      %v900 = vunpack.c.l.b16 %v864
      %v901 = vunpack.c.l.b16 %v865
      %v902 = vunpack.c.l.b16 %v866
      %v903 = vunpack.c.l.b16 %v867
      %v904 = vpack.c.b16 %v889, %v888
      %v905 = vpack.c.b16 %v891, %v890
      %v906 = vpack.c.b16 %v893, %v892
      %v907 = vpack.c.b16 %v895, %v894
      %v908 = vpack.c.b16 %v897, %v896
      %v909 = vpack.c.b16 %v899, %v898
      %v910 = vpack.c.b16 %v901, %v900
      %v911 = vpack.c.b16 %v903, %v902
      %v913 = vsel %vm373, %v904, 0
      %v916 = vsel %vm373, %v905, 0
      %v919 = vsel %vm373, %v906, 0
      %v922 = vsel %vm373, %v907, 0
      %v925 = vsel %vm373, %v908, 0
      %v928 = vsel %vm373, %v909, 0
      %v931 = vsel %vm373, %v910, 0
      %v934 = vsel %vm373, %v911, 0
      %936 = vmatpush.bf16.msra.mxu0 0
      %937 = vmatpush.bf16.msra.mxu0 0
      %938 = vmatpush.bf16.msra.mxu0 0
      %939 = vmatpush.bf16.msra.mxu0 0
      %940 = vmatpush.bf16.msra.mxu0 %v871
      %941 = vmatpush.bf16.msra.mxu0 %v870
      %942 = vmatpush.bf16.msra.mxu0 %v869
      %943 = vmatpush.bf16.msra.mxu0 %v868
      %944 = vmatmul.bf16.gmra.mxu0 %v913
      %v945 = vpop.f32.mrf.mxu0
      %v946 = vadd.f32 0.0, %v945
      %v947 = vpop.f32.mrf.mxu0
      %v948 = vadd.f32 0.0, %v947
      %949 = vmatmul.bf16.gmra.mxu0 %v916
      %v950 = vpop.f32.mrf.mxu0
      %v951 = vadd.f32 0.0, %v950
      %v952 = vpop.f32.mrf.mxu0
      %v953 = vadd.f32 0.0, %v952
      %954 = vmatmul.bf16.gmra.mxu0 %v919
      %v955 = vpop.f32.mrf.mxu0
      %v956 = vadd.f32 0.0, %v955
      %v957 = vpop.f32.mrf.mxu0
      %v958 = vadd.f32 0.0, %v957
      %959 = vmatmul.bf16.gmra.mxu0 %v922
      %v960 = vpop.f32.mrf.mxu0
      %v961 = vadd.f32 0.0, %v960
      %v962 = vpop.f32.mrf.mxu0
      %v963 = vadd.f32 0.0, %v962
      %964 = vmatmul.bf16.gmra.mxu0 %v925
      %v965 = vpop.f32.mrf.mxu0
      %v966 = vadd.f32 0.0, %v965
      %v967 = vpop.f32.mrf.mxu0
      %v968 = vadd.f32 0.0, %v967
      %969 = vmatmul.bf16.gmra.mxu0 %v928
      %v970 = vpop.f32.mrf.mxu0
      %v971 = vadd.f32 0.0, %v970
      %v972 = vpop.f32.mrf.mxu0
      %v973 = vadd.f32 0.0, %v972
      %974 = vmatmul.bf16.gmra.mxu0 %v931
      %v975 = vpop.f32.mrf.mxu0
      %v976 = vadd.f32 0.0, %v975
      %v977 = vpop.f32.mrf.mxu0
      %v978 = vadd.f32 0.0, %v977
      %979 = vmatmul.bf16.gmra.mxu0 %v934
      %v980 = vpop.f32.mrf.mxu0
      %v981 = vadd.f32 0.0, %v980
      %v982 = vpop.f32.mrf.mxu0
      %v983 = vadd.f32 0.0, %v982
      %984 = vdwg.mxu0
      %v985 = vadd.f32 %v803, %v946
      %v986 = vadd.f32 %v804, %v948
      %v987 = vadd.f32 %v805, %v951
      %v988 = vadd.f32 %v806, %v953
      %v989 = vadd.f32 %v807, %v956
      %v990 = vadd.f32 %v808, %v958
      %v991 = vadd.f32 %v809, %v961
      %v992 = vadd.f32 %v810, %v963
      %v993 = vadd.f32 %v811, %v966
      %v994 = vadd.f32 %v812, %v968
      %v995 = vadd.f32 %v813, %v971
      %v996 = vadd.f32 %v814, %v973
      %v997 = vadd.f32 %v815, %v976
      %v998 = vadd.f32 %v816, %v978
      %v999 = vadd.f32 %v817, %v981
      %v1000 = vadd.f32 %v818, %v983
      %s1001 = scalar_lea.vmem %s1, 256
      %v1002 = vld [vmem:[%s1001] sm:$0xf]
      %v1003 = vld [vmem:[%s1001 + $0x4] sm:$0xf]
      %v1004 = vld [vmem:[%s1001 + $0x8] sm:$0xf]
      %v1005 = vld [vmem:[%s1001 + $0xc] sm:$0xf]
      %v1006 = vld [vmem:[%s1001 + $0x10] sm:$0xf]
      %v1007 = vld [vmem:[%s1001 + $0x14] sm:$0xf]
      %v1008 = vld [vmem:[%s1001 + $0x18] sm:$0xf]
      %v1009 = vld [vmem:[%s1001 + $0x1c] sm:$0xf]
      %v1010 = vld [vmem:[%s1001 + $0x20] sm:$0xf]
      %v1011 = vld [vmem:[%s1001 + $0x24] sm:$0xf]
      %v1012 = vld [vmem:[%s1001 + $0x28] sm:$0xf]
      %v1013 = vld [vmem:[%s1001 + $0x2c] sm:$0xf]
      %v1014 = vld [vmem:[%s1001 + $0x30] sm:$0xf]
      %v1015 = vld [vmem:[%s1001 + $0x34] sm:$0xf]
      %v1016 = vld [vmem:[%s1001 + $0x38] sm:$0xf]
      %v1017 = vld [vmem:[%s1001 + $0x3c] sm:$0xf]
      %v1034 = vunpack.c.l.b16 %v1002
      %v1035 = vunpack.c.l.b16 %v1003
      %v1036 = vunpack.c.l.b16 %v1004
      %v1037 = vunpack.c.l.b16 %v1005
      %v1038 = vunpack.c.l.b16 %v1006
      %v1039 = vunpack.c.l.b16 %v1007
      %v1040 = vunpack.c.l.b16 %v1008
      %v1041 = vunpack.c.l.b16 %v1009
      %v1042 = vunpack.c.l.b16 %v1010
      %v1043 = vunpack.c.l.b16 %v1011
      %v1044 = vunpack.c.l.b16 %v1012
      %v1045 = vunpack.c.l.b16 %v1013
      %v1046 = vunpack.c.l.b16 %v1014
      %v1047 = vunpack.c.l.b16 %v1015
      %v1048 = vunpack.c.l.b16 %v1016
      %v1049 = vunpack.c.l.b16 %v1017
      %v1050 = vpack.c.b16 %v1035, %v1034
      %v1051 = vpack.c.b16 %v1037, %v1036
      %v1052 = vpack.c.b16 %v1039, %v1038
      %v1053 = vpack.c.b16 %v1041, %v1040
      %v1054 = vpack.c.b16 %v1043, %v1042
      %v1055 = vpack.c.b16 %v1045, %v1044
      %v1056 = vpack.c.b16 %v1047, %v1046
      %v1057 = vpack.c.b16 %v1049, %v1048
      %1058 = vrot.lane.b32.xlu0 %v480, 119
      %v1059 = vpop.permute.xlu0 %1058
      %1060 = vrot.lane.b32.xlu0 %v481, 119
      %v1061 = vpop.permute.xlu0 %1060
      %1062 = vrot.lane.b32.xlu0 %v482, 119
      %v1063 = vpop.permute.xlu0 %1062
      %1064 = vrot.lane.b32.xlu0 %v483, 119
      %v1065 = vpop.permute.xlu0 %1064
      %v1071 = vsel %vm373, %v1050, 0
      %v1074 = vsel %vm373, %v1051, 0
      %v1077 = vsel %vm373, %v1052, 0
      %v1080 = vsel %vm373, %v1053, 0
      %v1083 = vsel %vm373, %v1054, 0
      %v1086 = vsel %vm373, %v1055, 0
      %v1089 = vsel %vm373, %v1056, 0
      %v1092 = vsel %vm373, %v1057, 0
      %1094 = vmatpush.bf16.msra.mxu0 0
      %1095 = vmatpush.bf16.msra.mxu0 0
      %1096 = vmatpush.bf16.msra.mxu0 0
      %1097 = vmatpush.bf16.msra.mxu0 0
      %1098 = vmatpush.bf16.msra.mxu0 %v1065
      %1099 = vmatpush.bf16.msra.mxu0 %v1063
      %1100 = vmatpush.bf16.msra.mxu0 %v1061
      %1101 = vmatpush.bf16.msra.mxu0 %v1059
      %1102 = vmatmul.bf16.gmra.mxu0 %v1071
      %v1103 = vpop.f32.mrf.mxu0
      %v1104 = vadd.f32 0.0, %v1103
      %v1105 = vpop.f32.mrf.mxu0
      %v1106 = vadd.f32 0.0, %v1105
      %1107 = vmatmul.bf16.gmra.mxu0 %v1074
      %v1108 = vpop.f32.mrf.mxu0
      %v1109 = vadd.f32 0.0, %v1108
      %v1110 = vpop.f32.mrf.mxu0
      %v1111 = vadd.f32 0.0, %v1110
      %1112 = vmatmul.bf16.gmra.mxu0 %v1077
      %v1113 = vpop.f32.mrf.mxu0
      %v1114 = vadd.f32 0.0, %v1113
      %v1115 = vpop.f32.mrf.mxu0
      %v1116 = vadd.f32 0.0, %v1115
      %1117 = vmatmul.bf16.gmra.mxu0 %v1080
      %v1118 = vpop.f32.mrf.mxu0
      %v1119 = vadd.f32 0.0, %v1118
      %v1120 = vpop.f32.mrf.mxu0
      %v1121 = vadd.f32 0.0, %v1120
      %1122 = vmatmul.bf16.gmra.mxu0 %v1083
      %v1123 = vpop.f32.mrf.mxu0
      %v1124 = vadd.f32 0.0, %v1123
      %v1125 = vpop.f32.mrf.mxu0
      %v1126 = vadd.f32 0.0, %v1125
      %1127 = vmatmul.bf16.gmra.mxu0 %v1086
      %v1128 = vpop.f32.mrf.mxu0
      %v1129 = vadd.f32 0.0, %v1128
      %v1130 = vpop.f32.mrf.mxu0
      %v1131 = vadd.f32 0.0, %v1130
      %1132 = vmatmul.bf16.gmra.mxu0 %v1089
      %v1133 = vpop.f32.mrf.mxu0
      %v1134 = vadd.f32 0.0, %v1133
      %v1135 = vpop.f32.mrf.mxu0
      %v1136 = vadd.f32 0.0, %v1135
      %1137 = vmatmul.bf16.gmra.mxu0 %v1092
      %v1138 = vpop.f32.mrf.mxu0
      %v1139 = vadd.f32 0.0, %v1138
      %v1140 = vpop.f32.mrf.mxu0
      %v1141 = vadd.f32 0.0, %v1140
      %1142 = vdwg.mxu0
      %v1143 = vadd.f32 %v985, %v1104
      %v1144 = vadd.f32 %v986, %v1106
      %v1145 = vadd.f32 %v987, %v1109
      %v1146 = vadd.f32 %v988, %v1111
      %v1147 = vadd.f32 %v989, %v1114
      %v1148 = vadd.f32 %v990, %v1116
      %v1149 = vadd.f32 %v991, %v1119
      %v1150 = vadd.f32 %v992, %v1121
      %v1151 = vadd.f32 %v993, %v1124
      %v1152 = vadd.f32 %v994, %v1126
      %v1153 = vadd.f32 %v995, %v1129
      %v1154 = vadd.f32 %v996, %v1131
      %v1155 = vadd.f32 %v997, %v1134
      %v1156 = vadd.f32 %v998, %v1136
      %v1157 = vadd.f32 %v999, %v1139
      %v1158 = vadd.f32 %v1000, %v1141
      %1159 = vrot.lane.b32.xlu0 %v180, 118
      %v1160 = vpop.permute.xlu0 %1159
      %1161 = vrot.lane.b32.xlu0 %v181, 118
      %v1162 = vpop.permute.xlu0 %1161
      %1163 = vrot.lane.b32.xlu0 %v182, 118
      %v1164 = vpop.permute.xlu0 %1163
      %1165 = vrot.lane.b32.xlu0 %v183, 118
      %v1166 = vpop.permute.xlu0 %1165
      %1167 = vrot.lane.b32.xlu0 %v184, 118
      %v1168 = vpop.permute.xlu0 %1167
      %1169 = vrot.lane.b32.xlu0 %v185, 118
      %v1170 = vpop.permute.xlu0 %1169
      %1171 = vrot.lane.b32.xlu0 %v186, 118
      %v1172 = vpop.permute.xlu0 %1171
      %1173 = vrot.lane.b32.xlu0 %v187, 118
      %v1174 = vpop.permute.xlu0 %1173
      %v1183 = vsel %vm192, %v1160, 0.0
      %v1184 = vsel %vm192, %v1162, 0.0
      %v1185 = vsel %vm192, %v1164, 0.0
      %v1186 = vsel %vm192, %v1166, 0.0
      %v1187 = vsel %vm192, %v1168, 0.0
      %v1188 = vsel %vm192, %v1170, 0.0
      %v1189 = vsel %vm192, %v1172, 0.0
      %v1190 = vsel %vm192, %v1174, 0.0
      %s1191 = scalar_lea.vmem %s1, 320
      %v1192 = vld [vmem:[%s1191] sm:$0xf]
      %v1193 = vld [vmem:[%s1191 + $0x4] sm:$0xf]
      %v1194 = vld [vmem:[%s1191 + $0x8] sm:$0xf]
      %v1195 = vld [vmem:[%s1191 + $0xc] sm:$0xf]
      %v1196 = vld [vmem:[%s1191 + $0x10] sm:$0xf]
      %v1197 = vld [vmem:[%s1191 + $0x14] sm:$0xf]
      %v1198 = vld [vmem:[%s1191 + $0x18] sm:$0xf]
      %v1199 = vld [vmem:[%s1191 + $0x1c] sm:$0xf]
      %v1200 = vld [vmem:[%s1191 + $0x20] sm:$0xf]
      %v1201 = vld [vmem:[%s1191 + $0x24] sm:$0xf]
      %v1202 = vld [vmem:[%s1191 + $0x28] sm:$0xf]
      %v1203 = vld [vmem:[%s1191 + $0x2c] sm:$0xf]
      %v1204 = vld [vmem:[%s1191 + $0x30] sm:$0xf]
      %v1205 = vld [vmem:[%s1191 + $0x34] sm:$0xf]
      %v1206 = vld [vmem:[%s1191 + $0x38] sm:$0xf]
      %v1207 = vld [vmem:[%s1191 + $0x3c] sm:$0xf]
      %v1208 = vpack.c.bf16 %v1184, %v1183
      %v1209 = vpack.c.bf16 %v1186, %v1185
      %v1210 = vpack.c.bf16 %v1188, %v1187
      %v1211 = vpack.c.bf16 %v1190, %v1189
      %v1228 = vunpack.c.l.b16 %v1192
      %v1229 = vunpack.c.l.b16 %v1193
      %v1230 = vunpack.c.l.b16 %v1194
      %v1231 = vunpack.c.l.b16 %v1195
      %v1232 = vunpack.c.l.b16 %v1196
      %v1233 = vunpack.c.l.b16 %v1197
      %v1234 = vunpack.c.l.b16 %v1198
      %v1235 = vunpack.c.l.b16 %v1199
      %v1236 = vunpack.c.l.b16 %v1200
      %v1237 = vunpack.c.l.b16 %v1201
      %v1238 = vunpack.c.l.b16 %v1202
      %v1239 = vunpack.c.l.b16 %v1203
      %v1240 = vunpack.c.l.b16 %v1204
      %v1241 = vunpack.c.l.b16 %v1205
      %v1242 = vunpack.c.l.b16 %v1206
      %v1243 = vunpack.c.l.b16 %v1207
      %v1244 = vpack.c.b16 %v1229, %v1228
      %v1245 = vpack.c.b16 %v1231, %v1230
      %v1246 = vpack.c.b16 %v1233, %v1232
      %v1247 = vpack.c.b16 %v1235, %v1234
      %v1248 = vpack.c.b16 %v1237, %v1236
      %v1249 = vpack.c.b16 %v1239, %v1238
      %v1250 = vpack.c.b16 %v1241, %v1240
      %v1251 = vpack.c.b16 %v1243, %v1242
      %v1253 = vsel %vm373, %v1244, 0
      %v1256 = vsel %vm373, %v1245, 0
      %v1259 = vsel %vm373, %v1246, 0
      %v1262 = vsel %vm373, %v1247, 0
      %v1265 = vsel %vm373, %v1248, 0
      %v1268 = vsel %vm373, %v1249, 0
      %v1271 = vsel %vm373, %v1250, 0
      %v1274 = vsel %vm373, %v1251, 0
      %1276 = vmatpush.bf16.msra.mxu0 0
      %1277 = vmatpush.bf16.msra.mxu0 0
      %1278 = vmatpush.bf16.msra.mxu0 0
      %1279 = vmatpush.bf16.msra.mxu0 0
      %1280 = vmatpush.bf16.msra.mxu0 %v1211
      %1281 = vmatpush.bf16.msra.mxu0 %v1210
      %1282 = vmatpush.bf16.msra.mxu0 %v1209
      %1283 = vmatpush.bf16.msra.mxu0 %v1208
      %1284 = vmatmul.bf16.gmra.mxu0 %v1253
      %v1285 = vpop.f32.mrf.mxu0
      %v1286 = vadd.f32 0.0, %v1285
      %v1287 = vpop.f32.mrf.mxu0
      %v1288 = vadd.f32 0.0, %v1287
      %1289 = vmatmul.bf16.gmra.mxu0 %v1256
      %v1290 = vpop.f32.mrf.mxu0
      %v1291 = vadd.f32 0.0, %v1290
      %v1292 = vpop.f32.mrf.mxu0
      %v1293 = vadd.f32 0.0, %v1292
      %1294 = vmatmul.bf16.gmra.mxu0 %v1259
      %v1295 = vpop.f32.mrf.mxu0
      %v1296 = vadd.f32 0.0, %v1295
      %v1297 = vpop.f32.mrf.mxu0
      %v1298 = vadd.f32 0.0, %v1297
      %1299 = vmatmul.bf16.gmra.mxu0 %v1262
      %v1300 = vpop.f32.mrf.mxu0
      %v1301 = vadd.f32 0.0, %v1300
      %v1302 = vpop.f32.mrf.mxu0
      %v1303 = vadd.f32 0.0, %v1302
      %1304 = vmatmul.bf16.gmra.mxu0 %v1265
      %v1305 = vpop.f32.mrf.mxu0
      %v1306 = vadd.f32 0.0, %v1305
      %v1307 = vpop.f32.mrf.mxu0
      %v1308 = vadd.f32 0.0, %v1307
      %1309 = vmatmul.bf16.gmra.mxu0 %v1268
      %v1310 = vpop.f32.mrf.mxu0
      %v1311 = vadd.f32 0.0, %v1310
      %v1312 = vpop.f32.mrf.mxu0
      %v1313 = vadd.f32 0.0, %v1312
      %1314 = vmatmul.bf16.gmra.mxu0 %v1271
      %v1315 = vpop.f32.mrf.mxu0
      %v1316 = vadd.f32 0.0, %v1315
      %v1317 = vpop.f32.mrf.mxu0
      %v1318 = vadd.f32 0.0, %v1317
      %1319 = vmatmul.bf16.gmra.mxu0 %v1274
      %v1320 = vpop.f32.mrf.mxu0
      %v1321 = vadd.f32 0.0, %v1320
      %v1322 = vpop.f32.mrf.mxu0
      %v1323 = vadd.f32 0.0, %v1322
      %1324 = vdwg.mxu0
      %v1325 = vadd.f32 %v1143, %v1286
      %v1326 = vadd.f32 %v1144, %v1288
      %v1327 = vadd.f32 %v1145, %v1291
      %v1328 = vadd.f32 %v1146, %v1293
      %v1329 = vadd.f32 %v1147, %v1296
      %v1330 = vadd.f32 %v1148, %v1298
      %v1331 = vadd.f32 %v1149, %v1301
      %v1332 = vadd.f32 %v1150, %v1303
      %v1333 = vadd.f32 %v1151, %v1306
      %v1334 = vadd.f32 %v1152, %v1308
      %v1335 = vadd.f32 %v1153, %v1311
      %v1336 = vadd.f32 %v1154, %v1313
      %v1337 = vadd.f32 %v1155, %v1316
      %v1338 = vadd.f32 %v1156, %v1318
      %v1339 = vadd.f32 %v1157, %v1321
      %v1340 = vadd.f32 %v1158, %v1323
      %1341 = vrot.lane.b32.xlu0 %v180, 112
      %v1342 = vpop.permute.xlu0 %1341
      %1343 = vrot.lane.b32.xlu0 %v181, 112
      %v1344 = vpop.permute.xlu0 %1343
      %1345 = vrot.lane.b32.xlu0 %v182, 112
      %v1346 = vpop.permute.xlu0 %1345
      %1347 = vrot.lane.b32.xlu0 %v183, 112
      %v1348 = vpop.permute.xlu0 %1347
      %1349 = vrot.lane.b32.xlu0 %v184, 112
      %v1350 = vpop.permute.xlu0 %1349
      %1351 = vrot.lane.b32.xlu0 %v185, 112
      %v1352 = vpop.permute.xlu0 %1351
      %1353 = vrot.lane.b32.xlu0 %v186, 112
      %v1354 = vpop.permute.xlu0 %1353
      %1355 = vrot.lane.b32.xlu0 %v187, 112
      %v1356 = vpop.permute.xlu0 %1355
      %v1365 = vsel %vm191, %v1342, 0.0
      %v1366 = vsel %vm191, %v1344, 0.0
      %v1367 = vsel %vm191, %v1346, 0.0
      %v1368 = vsel %vm191, %v1348, 0.0
      %v1369 = vsel %vm191, %v1350, 0.0
      %v1370 = vsel %vm191, %v1352, 0.0
      %v1371 = vsel %vm191, %v1354, 0.0
      %v1372 = vsel %vm191, %v1356, 0.0
      %s1373 = scalar_lea.vmem %s1, 384
      %v1374 = vld [vmem:[%s1373] sm:$0xf]
      %v1375 = vld [vmem:[%s1373 + $0x4] sm:$0xf]
      %v1376 = vld [vmem:[%s1373 + $0x8] sm:$0xf]
      %v1377 = vld [vmem:[%s1373 + $0xc] sm:$0xf]
      %v1378 = vld [vmem:[%s1373 + $0x10] sm:$0xf]
      %v1379 = vld [vmem:[%s1373 + $0x14] sm:$0xf]
      %v1380 = vld [vmem:[%s1373 + $0x18] sm:$0xf]
      %v1381 = vld [vmem:[%s1373 + $0x1c] sm:$0xf]
      %v1382 = vld [vmem:[%s1373 + $0x20] sm:$0xf]
      %v1383 = vld [vmem:[%s1373 + $0x24] sm:$0xf]
      %v1384 = vld [vmem:[%s1373 + $0x28] sm:$0xf]
      %v1385 = vld [vmem:[%s1373 + $0x2c] sm:$0xf]
      %v1386 = vld [vmem:[%s1373 + $0x30] sm:$0xf]
      %v1387 = vld [vmem:[%s1373 + $0x34] sm:$0xf]
      %v1388 = vld [vmem:[%s1373 + $0x38] sm:$0xf]
      %v1389 = vld [vmem:[%s1373 + $0x3c] sm:$0xf]
      %v1390 = vpack.c.bf16 %v1366, %v1365
      %v1391 = vpack.c.bf16 %v1368, %v1367
      %v1392 = vpack.c.bf16 %v1370, %v1369
      %v1393 = vpack.c.bf16 %v1372, %v1371
      %v1410 = vunpack.c.l.b16 %v1374
      %v1411 = vunpack.c.l.b16 %v1375
      %v1412 = vunpack.c.l.b16 %v1376
      %v1413 = vunpack.c.l.b16 %v1377
      %v1414 = vunpack.c.l.b16 %v1378
      %v1415 = vunpack.c.l.b16 %v1379
      %v1416 = vunpack.c.l.b16 %v1380
      %v1417 = vunpack.c.l.b16 %v1381
      %v1418 = vunpack.c.l.b16 %v1382
      %v1419 = vunpack.c.l.b16 %v1383
      %v1420 = vunpack.c.l.b16 %v1384
      %v1421 = vunpack.c.l.b16 %v1385
      %v1422 = vunpack.c.l.b16 %v1386
      %v1423 = vunpack.c.l.b16 %v1387
      %v1424 = vunpack.c.l.b16 %v1388
      %v1425 = vunpack.c.l.b16 %v1389
      %v1426 = vpack.c.b16 %v1411, %v1410
      %v1427 = vpack.c.b16 %v1413, %v1412
      %v1428 = vpack.c.b16 %v1415, %v1414
      %v1429 = vpack.c.b16 %v1417, %v1416
      %v1430 = vpack.c.b16 %v1419, %v1418
      %v1431 = vpack.c.b16 %v1421, %v1420
      %v1432 = vpack.c.b16 %v1423, %v1422
      %v1433 = vpack.c.b16 %v1425, %v1424
      %v1435 = vsel %vm373, %v1426, 0
      %v1438 = vsel %vm373, %v1427, 0
      %v1441 = vsel %vm373, %v1428, 0
      %v1444 = vsel %vm373, %v1429, 0
      %v1447 = vsel %vm373, %v1430, 0
      %v1450 = vsel %vm373, %v1431, 0
      %v1453 = vsel %vm373, %v1432, 0
      %v1456 = vsel %vm373, %v1433, 0
      %1458 = vmatpush.bf16.msra.mxu0 0
      %1459 = vmatpush.bf16.msra.mxu0 0
      %1460 = vmatpush.bf16.msra.mxu0 0
      %1461 = vmatpush.bf16.msra.mxu0 0
      %1462 = vmatpush.bf16.msra.mxu0 %v1393
      %1463 = vmatpush.bf16.msra.mxu0 %v1392
      %1464 = vmatpush.bf16.msra.mxu0 %v1391
      %1465 = vmatpush.bf16.msra.mxu0 %v1390
      %1466 = vmatmul.bf16.gmra.mxu0 %v1435
      %v1467 = vpop.f32.mrf.mxu0
      %v1468 = vadd.f32 0.0, %v1467
      %v1469 = vpop.f32.mrf.mxu0
      %v1470 = vadd.f32 0.0, %v1469
      %1471 = vmatmul.bf16.gmra.mxu0 %v1438
      %v1472 = vpop.f32.mrf.mxu0
      %v1473 = vadd.f32 0.0, %v1472
      %v1474 = vpop.f32.mrf.mxu0
      %v1475 = vadd.f32 0.0, %v1474
      %1476 = vmatmul.bf16.gmra.mxu0 %v1441
      %v1477 = vpop.f32.mrf.mxu0
      %v1478 = vadd.f32 0.0, %v1477
      %v1479 = vpop.f32.mrf.mxu0
      %v1480 = vadd.f32 0.0, %v1479
      %1481 = vmatmul.bf16.gmra.mxu0 %v1444
      %v1482 = vpop.f32.mrf.mxu0
      %v1483 = vadd.f32 0.0, %v1482
      %v1484 = vpop.f32.mrf.mxu0
      %v1485 = vadd.f32 0.0, %v1484
      %1486 = vmatmul.bf16.gmra.mxu0 %v1447
      %v1487 = vpop.f32.mrf.mxu0
      %v1488 = vadd.f32 0.0, %v1487
      %v1489 = vpop.f32.mrf.mxu0
      %v1490 = vadd.f32 0.0, %v1489
      %1491 = vmatmul.bf16.gmra.mxu0 %v1450
      %v1492 = vpop.f32.mrf.mxu0
      %v1493 = vadd.f32 0.0, %v1492
      %v1494 = vpop.f32.mrf.mxu0
      %v1495 = vadd.f32 0.0, %v1494
      %1496 = vmatmul.bf16.gmra.mxu0 %v1453
      %v1497 = vpop.f32.mrf.mxu0
      %v1498 = vadd.f32 0.0, %v1497
      %v1499 = vpop.f32.mrf.mxu0
      %v1500 = vadd.f32 0.0, %v1499
      %1501 = vmatmul.bf16.gmra.mxu0 %v1456
      %v1502 = vpop.f32.mrf.mxu0
      %v1503 = vadd.f32 0.0, %v1502
      %v1504 = vpop.f32.mrf.mxu0
      %v1505 = vadd.f32 0.0, %v1504
      %1506 = vdwg.mxu0
      %v1507 = vadd.f32 %v1325, %v1468
      %v1508 = vadd.f32 %v1326, %v1470
      %v1509 = vadd.f32 %v1327, %v1473
      %v1510 = vadd.f32 %v1328, %v1475
      %v1511 = vadd.f32 %v1329, %v1478
      %v1512 = vadd.f32 %v1330, %v1480
      %v1513 = vadd.f32 %v1331, %v1483
      %v1514 = vadd.f32 %v1332, %v1485
      %v1515 = vadd.f32 %v1333, %v1488
      %v1516 = vadd.f32 %v1334, %v1490
      %v1517 = vadd.f32 %v1335, %v1493
      %v1518 = vadd.f32 %v1336, %v1495
      %v1519 = vadd.f32 %v1337, %v1498
      %v1520 = vadd.f32 %v1338, %v1500
      %v1521 = vadd.f32 %v1339, %v1503
      %v1522 = vadd.f32 %v1340, %v1505
      %s1523 = scalar_lea.vmem %s1, 448
      %v1524 = vld [vmem:[%s1523] sm:$0xf]
      %v1525 = vld [vmem:[%s1523 + $0x4] sm:$0xf]
      %v1526 = vld [vmem:[%s1523 + $0x8] sm:$0xf]
      %v1527 = vld [vmem:[%s1523 + $0xc] sm:$0xf]
      %v1528 = vld [vmem:[%s1523 + $0x10] sm:$0xf]
      %v1529 = vld [vmem:[%s1523 + $0x14] sm:$0xf]
      %v1530 = vld [vmem:[%s1523 + $0x18] sm:$0xf]
      %v1531 = vld [vmem:[%s1523 + $0x1c] sm:$0xf]
      %v1532 = vld [vmem:[%s1523 + $0x20] sm:$0xf]
      %v1533 = vld [vmem:[%s1523 + $0x24] sm:$0xf]
      %v1534 = vld [vmem:[%s1523 + $0x28] sm:$0xf]
      %v1535 = vld [vmem:[%s1523 + $0x2c] sm:$0xf]
      %v1536 = vld [vmem:[%s1523 + $0x30] sm:$0xf]
      %v1537 = vld [vmem:[%s1523 + $0x34] sm:$0xf]
      %v1538 = vld [vmem:[%s1523 + $0x38] sm:$0xf]
      %v1539 = vld [vmem:[%s1523 + $0x3c] sm:$0xf]
      %v1556 = vunpack.c.l.b16 %v1524
      %v1557 = vunpack.c.l.b16 %v1525
      %v1558 = vunpack.c.l.b16 %v1526
      %v1559 = vunpack.c.l.b16 %v1527
      %v1560 = vunpack.c.l.b16 %v1528
      %v1561 = vunpack.c.l.b16 %v1529
      %v1562 = vunpack.c.l.b16 %v1530
      %v1563 = vunpack.c.l.b16 %v1531
      %v1564 = vunpack.c.l.b16 %v1532
      %v1565 = vunpack.c.l.b16 %v1533
      %v1566 = vunpack.c.l.b16 %v1534
      %v1567 = vunpack.c.l.b16 %v1535
      %v1568 = vunpack.c.l.b16 %v1536
      %v1569 = vunpack.c.l.b16 %v1537
      %v1570 = vunpack.c.l.b16 %v1538
      %v1571 = vunpack.c.l.b16 %v1539
      %v1572 = vpack.c.b16 %v1557, %v1556
      %v1573 = vpack.c.b16 %v1559, %v1558
      %v1574 = vpack.c.b16 %v1561, %v1560
      %v1575 = vpack.c.b16 %v1563, %v1562
      %v1576 = vpack.c.b16 %v1565, %v1564
      %v1577 = vpack.c.b16 %v1567, %v1566
      %v1578 = vpack.c.b16 %v1569, %v1568
      %v1579 = vpack.c.b16 %v1571, %v1570
      %1580 = vrot.lane.b32.xlu0 %v480, 111
      %v1581 = vpop.permute.xlu0 %1580
      %1582 = vrot.lane.b32.xlu0 %v481, 111
      %v1583 = vpop.permute.xlu0 %1582
      %1584 = vrot.lane.b32.xlu0 %v482, 111
      %v1585 = vpop.permute.xlu0 %1584
      %1586 = vrot.lane.b32.xlu0 %v483, 111
      %v1587 = vpop.permute.xlu0 %1586
      %v1593 = vsel %vm373, %v1572, 0
      %v1596 = vsel %vm373, %v1573, 0
      %v1599 = vsel %vm373, %v1574, 0
      %v1602 = vsel %vm373, %v1575, 0
      %v1605 = vsel %vm373, %v1576, 0
      %v1608 = vsel %vm373, %v1577, 0
      %v1611 = vsel %vm373, %v1578, 0
      %v1614 = vsel %vm373, %v1579, 0
      %1616 = vmatpush.bf16.msra.mxu0 0
      %1617 = vmatpush.bf16.msra.mxu0 0
      %1618 = vmatpush.bf16.msra.mxu0 0
      %1619 = vmatpush.bf16.msra.mxu0 0
      %1620 = vmatpush.bf16.msra.mxu0 %v1587
      %1621 = vmatpush.bf16.msra.mxu0 %v1585
      %1622 = vmatpush.bf16.msra.mxu0 %v1583
      %1623 = vmatpush.bf16.msra.mxu0 %v1581
      %1624 = vmatmul.bf16.gmra.mxu0 %v1593
      %v1625 = vpop.f32.mrf.mxu0
      %v1626 = vadd.f32 0.0, %v1625
      %v1627 = vpop.f32.mrf.mxu0
      %v1628 = vadd.f32 0.0, %v1627
      %1629 = vmatmul.bf16.gmra.mxu0 %v1596
      %v1630 = vpop.f32.mrf.mxu0
      %v1631 = vadd.f32 0.0, %v1630
      %v1632 = vpop.f32.mrf.mxu0
      %v1633 = vadd.f32 0.0, %v1632
      %1634 = vmatmul.bf16.gmra.mxu0 %v1599
      %v1635 = vpop.f32.mrf.mxu0
      %v1636 = vadd.f32 0.0, %v1635
      %v1637 = vpop.f32.mrf.mxu0
      %v1638 = vadd.f32 0.0, %v1637
      %1639 = vmatmul.bf16.gmra.mxu0 %v1602
      %v1640 = vpop.f32.mrf.mxu0
      %v1641 = vadd.f32 0.0, %v1640
      %v1642 = vpop.f32.mrf.mxu0
      %v1643 = vadd.f32 0.0, %v1642
      %1644 = vmatmul.bf16.gmra.mxu0 %v1605
      %v1645 = vpop.f32.mrf.mxu0
      %v1646 = vadd.f32 0.0, %v1645
      %v1647 = vpop.f32.mrf.mxu0
      %v1648 = vadd.f32 0.0, %v1647
      %1649 = vmatmul.bf16.gmra.mxu0 %v1608
      %v1650 = vpop.f32.mrf.mxu0
      %v1651 = vadd.f32 0.0, %v1650
      %v1652 = vpop.f32.mrf.mxu0
      %v1653 = vadd.f32 0.0, %v1652
      %1654 = vmatmul.bf16.gmra.mxu0 %v1611
      %v1655 = vpop.f32.mrf.mxu0
      %v1656 = vadd.f32 0.0, %v1655
      %v1657 = vpop.f32.mrf.mxu0
      %v1658 = vadd.f32 0.0, %v1657
      %1659 = vmatmul.bf16.gmra.mxu0 %v1614
      %v1660 = vpop.f32.mrf.mxu0
      %v1661 = vadd.f32 0.0, %v1660
      %v1662 = vpop.f32.mrf.mxu0
      %v1663 = vadd.f32 0.0, %v1662
      %1664 = vdwg.mxu0
      %v1665 = vadd.f32 %v1507, %v1626
      %v1666 = vadd.f32 %v1508, %v1628
      %v1667 = vadd.f32 %v1509, %v1631
      %v1668 = vadd.f32 %v1510, %v1633
      %v1669 = vadd.f32 %v1511, %v1636
      %v1670 = vadd.f32 %v1512, %v1638
      %v1671 = vadd.f32 %v1513, %v1641
      %v1672 = vadd.f32 %v1514, %v1643
      %v1673 = vadd.f32 %v1515, %v1646
      %v1674 = vadd.f32 %v1516, %v1648
      %v1675 = vadd.f32 %v1517, %v1651
      %v1676 = vadd.f32 %v1518, %v1653
      %v1677 = vadd.f32 %v1519, %v1656
      %v1678 = vadd.f32 %v1520, %v1658
      %v1679 = vadd.f32 %v1521, %v1661
      %v1680 = vadd.f32 %v1522, %v1663
      %1681 = vrot.lane.b32.xlu0 %v180, 110
      %v1682 = vpop.permute.xlu0 %1681
      %1683 = vrot.lane.b32.xlu0 %v181, 110
      %v1684 = vpop.permute.xlu0 %1683
      %1685 = vrot.lane.b32.xlu0 %v182, 110
      %v1686 = vpop.permute.xlu0 %1685
      %1687 = vrot.lane.b32.xlu0 %v183, 110
      %v1688 = vpop.permute.xlu0 %1687
      %1689 = vrot.lane.b32.xlu0 %v184, 110
      %v1690 = vpop.permute.xlu0 %1689
      %1691 = vrot.lane.b32.xlu0 %v185, 110
      %v1692 = vpop.permute.xlu0 %1691
      %1693 = vrot.lane.b32.xlu0 %v186, 110
      %v1694 = vpop.permute.xlu0 %1693
      %1695 = vrot.lane.b32.xlu0 %v187, 110
      %v1696 = vpop.permute.xlu0 %1695
      %v1705 = vsel %vm192, %v1682, 0.0
      %v1706 = vsel %vm192, %v1684, 0.0
      %v1707 = vsel %vm192, %v1686, 0.0
      %v1708 = vsel %vm192, %v1688, 0.0
      %v1709 = vsel %vm192, %v1690, 0.0
      %v1710 = vsel %vm192, %v1692, 0.0
      %v1711 = vsel %vm192, %v1694, 0.0
      %v1712 = vsel %vm192, %v1696, 0.0
      %s1713 = scalar_lea.vmem %s1, 512
      %v1714 = vld [vmem:[%s1713] sm:$0xf]
      %v1715 = vld [vmem:[%s1713 + $0x4] sm:$0xf]
      %v1716 = vld [vmem:[%s1713 + $0x8] sm:$0xf]
      %v1717 = vld [vmem:[%s1713 + $0xc] sm:$0xf]
      %v1718 = vld [vmem:[%s1713 + $0x10] sm:$0xf]
      %v1719 = vld [vmem:[%s1713 + $0x14] sm:$0xf]
      %v1720 = vld [vmem:[%s1713 + $0x18] sm:$0xf]
      %v1721 = vld [vmem:[%s1713 + $0x1c] sm:$0xf]
      %v1722 = vld [vmem:[%s1713 + $0x20] sm:$0xf]
      %v1723 = vld [vmem:[%s1713 + $0x24] sm:$0xf]
      %v1724 = vld [vmem:[%s1713 + $0x28] sm:$0xf]
      %v1725 = vld [vmem:[%s1713 + $0x2c] sm:$0xf]
      %v1726 = vld [vmem:[%s1713 + $0x30] sm:$0xf]
      %v1727 = vld [vmem:[%s1713 + $0x34] sm:$0xf]
      %v1728 = vld [vmem:[%s1713 + $0x38] sm:$0xf]
      %v1729 = vld [vmem:[%s1713 + $0x3c] sm:$0xf]
      %v1730 = vpack.c.bf16 %v1706, %v1705
      %v1731 = vpack.c.bf16 %v1708, %v1707
      %v1732 = vpack.c.bf16 %v1710, %v1709
      %v1733 = vpack.c.bf16 %v1712, %v1711
      %v1750 = vunpack.c.l.b16 %v1714
      %v1751 = vunpack.c.l.b16 %v1715
      %v1752 = vunpack.c.l.b16 %v1716
      %v1753 = vunpack.c.l.b16 %v1717
      %v1754 = vunpack.c.l.b16 %v1718
      %v1755 = vunpack.c.l.b16 %v1719
      %v1756 = vunpack.c.l.b16 %v1720
      %v1757 = vunpack.c.l.b16 %v1721
      %v1758 = vunpack.c.l.b16 %v1722
      %v1759 = vunpack.c.l.b16 %v1723
      %v1760 = vunpack.c.l.b16 %v1724
      %v1761 = vunpack.c.l.b16 %v1725
      %v1762 = vunpack.c.l.b16 %v1726
      %v1763 = vunpack.c.l.b16 %v1727
      %v1764 = vunpack.c.l.b16 %v1728
      %v1765 = vunpack.c.l.b16 %v1729
      %v1766 = vpack.c.b16 %v1751, %v1750
      %v1767 = vpack.c.b16 %v1753, %v1752
      %v1768 = vpack.c.b16 %v1755, %v1754
      %v1769 = vpack.c.b16 %v1757, %v1756
      %v1770 = vpack.c.b16 %v1759, %v1758
      %v1771 = vpack.c.b16 %v1761, %v1760
      %v1772 = vpack.c.b16 %v1763, %v1762
      %v1773 = vpack.c.b16 %v1765, %v1764
      %v1775 = vsel %vm373, %v1766, 0
      %v1778 = vsel %vm373, %v1767, 0
      %v1781 = vsel %vm373, %v1768, 0
      %v1784 = vsel %vm373, %v1769, 0
      %v1787 = vsel %vm373, %v1770, 0
      %v1790 = vsel %vm373, %v1771, 0
      %v1793 = vsel %vm373, %v1772, 0
      %v1796 = vsel %vm373, %v1773, 0
      %1798 = vmatpush.bf16.msra.mxu0 0
      %1799 = vmatpush.bf16.msra.mxu0 0
      %1800 = vmatpush.bf16.msra.mxu0 0
      %1801 = vmatpush.bf16.msra.mxu0 0
      %1802 = vmatpush.bf16.msra.mxu0 %v1733
      %1803 = vmatpush.bf16.msra.mxu0 %v1732
      %1804 = vmatpush.bf16.msra.mxu0 %v1731
      %1805 = vmatpush.bf16.msra.mxu0 %v1730
      %1806 = vmatmul.bf16.gmra.mxu0 %v1775
      %v1807 = vpop.f32.mrf.mxu0
      %v1808 = vadd.f32 0.0, %v1807
      %v1809 = vpop.f32.mrf.mxu0
      %v1810 = vadd.f32 0.0, %v1809
      %1811 = vmatmul.bf16.gmra.mxu0 %v1778
      %v1812 = vpop.f32.mrf.mxu0
      %v1813 = vadd.f32 0.0, %v1812
      %v1814 = vpop.f32.mrf.mxu0
      %v1815 = vadd.f32 0.0, %v1814
      %1816 = vmatmul.bf16.gmra.mxu0 %v1781
      %v1817 = vpop.f32.mrf.mxu0
      %v1818 = vadd.f32 0.0, %v1817
      %v1819 = vpop.f32.mrf.mxu0
      %v1820 = vadd.f32 0.0, %v1819
      %1821 = vmatmul.bf16.gmra.mxu0 %v1784
      %v1822 = vpop.f32.mrf.mxu0
      %v1823 = vadd.f32 0.0, %v1822
      %v1824 = vpop.f32.mrf.mxu0
      %v1825 = vadd.f32 0.0, %v1824
      %1826 = vmatmul.bf16.gmra.mxu0 %v1787
      %v1827 = vpop.f32.mrf.mxu0
      %v1828 = vadd.f32 0.0, %v1827
      %v1829 = vpop.f32.mrf.mxu0
      %v1830 = vadd.f32 0.0, %v1829
      %1831 = vmatmul.bf16.gmra.mxu0 %v1790
      %v1832 = vpop.f32.mrf.mxu0
      %v1833 = vadd.f32 0.0, %v1832
      %v1834 = vpop.f32.mrf.mxu0
      %v1835 = vadd.f32 0.0, %v1834
      %1836 = vmatmul.bf16.gmra.mxu0 %v1793
      %v1837 = vpop.f32.mrf.mxu0
      %v1838 = vadd.f32 0.0, %v1837
      %v1839 = vpop.f32.mrf.mxu0
      %v1840 = vadd.f32 0.0, %v1839
      %1841 = vmatmul.bf16.gmra.mxu0 %v1796
      %v1842 = vpop.f32.mrf.mxu0
      %v1843 = vadd.f32 0.0, %v1842
      %v1844 = vpop.f32.mrf.mxu0
      %v1845 = vadd.f32 0.0, %v1844
      %1846 = vdwg.mxu0
      %v1847 = vadd.f32 %v1665, %v1808
      %v1848 = vadd.f32 %v1666, %v1810
      %v1849 = vadd.f32 %v1667, %v1813
      %v1850 = vadd.f32 %v1668, %v1815
      %v1851 = vadd.f32 %v1669, %v1818
      %v1852 = vadd.f32 %v1670, %v1820
      %v1853 = vadd.f32 %v1671, %v1823
      %v1854 = vadd.f32 %v1672, %v1825
      %v1855 = vadd.f32 %v1673, %v1828
      %v1856 = vadd.f32 %v1674, %v1830
      %v1857 = vadd.f32 %v1675, %v1833
      %v1858 = vadd.f32 %v1676, %v1835
      %v1859 = vadd.f32 %v1677, %v1838
      %v1860 = vadd.f32 %v1678, %v1840
      %v1861 = vadd.f32 %v1679, %v1843
      %v1862 = vadd.f32 %v1680, %v1845
      %vm1863 = vcmp.gt.f32.partialorder %v1847, 0.0
      %vm1864 = vcmp.gt.f32.partialorder %v1848, 0.0
      %vm1865 = vcmp.gt.f32.partialorder %v1849, 0.0
      %vm1866 = vcmp.gt.f32.partialorder %v1850, 0.0
      %vm1867 = vcmp.gt.f32.partialorder %v1851, 0.0
      %vm1868 = vcmp.gt.f32.partialorder %v1852, 0.0
      %vm1869 = vcmp.gt.f32.partialorder %v1853, 0.0
      %vm1870 = vcmp.gt.f32.partialorder %v1854, 0.0
      %vm1871 = vcmp.gt.f32.partialorder %v1855, 0.0
      %vm1872 = vcmp.gt.f32.partialorder %v1856, 0.0
      %vm1873 = vcmp.gt.f32.partialorder %v1857, 0.0
      %vm1874 = vcmp.gt.f32.partialorder %v1858, 0.0
      %vm1875 = vcmp.gt.f32.partialorder %v1859, 0.0
      %vm1876 = vcmp.gt.f32.partialorder %v1860, 0.0
      %vm1877 = vcmp.gt.f32.partialorder %v1861, 0.0
      %vm1878 = vcmp.gt.f32.partialorder %v1862, 0.0
      %v1879 = vmin.f32 %v1847, 0.0
      %v1880 = vmin.f32 %v1848, 0.0
      %v1881 = vmin.f32 %v1849, 0.0
      %v1882 = vmin.f32 %v1850, 0.0
      %v1883 = vmin.f32 %v1851, 0.0
      %v1884 = vmin.f32 %v1852, 0.0
      %v1885 = vmin.f32 %v1853, 0.0
      %v1886 = vmin.f32 %v1854, 0.0
      %v1887 = vmin.f32 %v1855, 0.0
      %v1888 = vmin.f32 %v1856, 0.0
      %v1889 = vmin.f32 %v1857, 0.0
      %v1890 = vmin.f32 %v1858, 0.0
      %v1891 = vmin.f32 %v1859, 0.0
      %v1892 = vmin.f32 %v1860, 0.0
      %v1893 = vmin.f32 %v1861, 0.0
      %v1894 = vmin.f32 %v1862, 0.0
      %v1895 = vmul.f32 %v1879, 1.442695
      %v1896 = vpow.pop %v1895
      %v1897 = vmul.f32 %v1880, 1.442695
      %v1898 = vpow.pop %v1897
      %v1899 = vmul.f32 %v1881, 1.442695
      %v1900 = vpow.pop %v1899
      %v1901 = vmul.f32 %v1882, 1.442695
      %v1902 = vpow.pop %v1901
      %v1903 = vmul.f32 %v1883, 1.442695
      %v1904 = vpow.pop %v1903
      %v1905 = vmul.f32 %v1884, 1.442695
      %v1906 = vpow.pop %v1905
      %v1907 = vmul.f32 %v1885, 1.442695
      %v1908 = vpow.pop %v1907
      %v1909 = vmul.f32 %v1886, 1.442695
      %v1910 = vpow.pop %v1909
      %v1911 = vmul.f32 %v1887, 1.442695
      %v1912 = vpow.pop %v1911
      %v1913 = vmul.f32 %v1888, 1.442695
      %v1914 = vpow.pop %v1913
      %v1915 = vmul.f32 %v1889, 1.442695
      %v1916 = vpow.pop %v1915
      %v1917 = vmul.f32 %v1890, 1.442695
      %v1918 = vpow.pop %v1917
      %v1919 = vmul.f32 %v1891, 1.442695
      %v1920 = vpow.pop %v1919
      %v1921 = vmul.f32 %v1892, 1.442695
      %v1922 = vpow.pop %v1921
      %v1923 = vmul.f32 %v1893, 1.442695
      %v1924 = vpow.pop %v1923
      %v1925 = vmul.f32 %v1894, 1.442695
      %v1926 = vpow.pop %v1925
      %v1927 = vsub.f32 %v1896, 1.0
      %v1928 = vsub.f32 %v1898, 1.0
      %v1929 = vsub.f32 %v1900, 1.0
      %v1930 = vsub.f32 %v1902, 1.0
      %v1931 = vsub.f32 %v1904, 1.0
      %v1932 = vsub.f32 %v1906, 1.0
      %v1933 = vsub.f32 %v1908, 1.0
      %v1934 = vsub.f32 %v1910, 1.0
      %v1935 = vsub.f32 %v1912, 1.0
      %v1936 = vsub.f32 %v1914, 1.0
      %v1937 = vsub.f32 %v1916, 1.0
      %v1938 = vsub.f32 %v1918, 1.0
      %v1939 = vsub.f32 %v1920, 1.0
      %v1940 = vsub.f32 %v1922, 1.0
      %v1941 = vsub.f32 %v1924, 1.0
      %v1942 = vsub.f32 %v1926, 1.0
      %v1943 = vsel %vm1863, %v1847, %v1927
      %v1944 = vsel %vm1864, %v1848, %v1928
      %v1945 = vsel %vm1865, %v1849, %v1929
      %v1946 = vsel %vm1866, %v1850, %v1930
      %v1947 = vsel %vm1867, %v1851, %v1931
      %v1948 = vsel %vm1868, %v1852, %v1932
      %v1949 = vsel %vm1869, %v1853, %v1933
      %v1950 = vsel %vm1870, %v1854, %v1934
      %v1951 = vsel %vm1871, %v1855, %v1935
      %v1952 = vsel %vm1872, %v1856, %v1936
      %v1953 = vsel %vm1873, %v1857, %v1937
      %v1954 = vsel %vm1874, %v1858, %v1938
      %v1955 = vsel %vm1875, %v1859, %v1939
      %v1956 = vsel %vm1876, %v1860, %v1940
      %v1957 = vsel %vm1877, %v1861, %v1941
      %v1958 = vsel %vm1878, %v1862, %v1942
      %v1959 = vsel %vm373, %v1943, 0.0
      %v1960 = vsel %vm373, %v1944, 0.0
      %v1961 = vadd.f32 %v1959, %v1960
      %v1962 = vsel %vm373, %v1945, 0.0
      %v1963 = vadd.f32 %v1961, %v1962
      %v1964 = vsel %vm373, %v1946, 0.0
      %v1965 = vadd.f32 %v1963, %v1964
      %v1966 = vsel %vm373, %v1947, 0.0
      %v1967 = vadd.f32 %v1965, %v1966
      %v1968 = vsel %vm373, %v1948, 0.0
      %v1969 = vadd.f32 %v1967, %v1968
      %v1970 = vsel %vm373, %v1949, 0.0
      %v1971 = vadd.f32 %v1969, %v1970
      %v1972 = vsel %vm373, %v1950, 0.0
      %v1973 = vadd.f32 %v1971, %v1972
      %v1974 = vsel %vm373, %v1951, 0.0
      %v1975 = vadd.f32 %v1973, %v1974
      %v1976 = vsel %vm373, %v1952, 0.0
      %v1977 = vadd.f32 %v1975, %v1976
      %v1978 = vsel %vm373, %v1953, 0.0
      %v1979 = vadd.f32 %v1977, %v1978
      %v1980 = vsel %vm373, %v1954, 0.0
      %v1981 = vadd.f32 %v1979, %v1980
      %v1982 = vsel %vm373, %v1955, 0.0
      %v1983 = vadd.f32 %v1981, %v1982
      %v1984 = vsel %vm373, %v1956, 0.0
      %v1985 = vadd.f32 %v1983, %v1984
      %v1986 = vsel %vm373, %v1957, 0.0
      %v1987 = vadd.f32 %v1985, %v1986
      %v1988 = vsel %vm373, %v1958, 0.0
      %v1989 = vadd.f32 %v1987, %v1988
      %1990 = vadd.xlane.f32.xlu0 %v1989
      %v1991 = vpop.xlane.xlu0 %1990
      %v1992 = vrot.slane %v1991, 4
      %v1993 = vadd.f32 %v1991, %v1992
      %v1994 = vrot.slane %v1993, 2
      %v1995 = vadd.f32 %v1993, %v1994
      %v1996 = vrot.slane %v1995, 1
      %v1997 = vadd.f32 %v1995, %v1996
      %s1998 = vtos %v1997
      %v1999 = vstv %s1998
      %v2000 = vrcp.pop 8192.0
      %v2001 = vmul.f32 8192.0, %v2000
      %v2002 = vsub.f32 1.0, %v2001
      %v2003 = vmul.f32 %v2000, %v2002
      %v2004 = vadd.f32 %v2000, %v2003
      %vm2005 = vweird.f32 %v2000
      %v2006 = vsel %vm2005, %v2000, %v2004
      %v2007 = vmul.f32 %v1999, %v2006
      %v2008 = vsub.f32 %v1943, %v2007
      %v2009 = vsub.f32 %v1944, %v2007
      %v2010 = vsub.f32 %v1945, %v2007
      %v2011 = vsub.f32 %v1946, %v2007
      %v2012 = vsub.f32 %v1947, %v2007
      %v2013 = vsub.f32 %v1948, %v2007
      %v2014 = vsub.f32 %v1949, %v2007
      %v2015 = vsub.f32 %v1950, %v2007
      %v2016 = vsub.f32 %v1951, %v2007
      %v2017 = vsub.f32 %v1952, %v2007
      %v2018 = vsub.f32 %v1953, %v2007
      %v2019 = vsub.f32 %v1954, %v2007
      %v2020 = vsub.f32 %v1955, %v2007
      %v2021 = vsub.f32 %v1956, %v2007
      %v2022 = vsub.f32 %v1957, %v2007
      %v2023 = vsub.f32 %v1958, %v2007
      %v2024 = vmul.f32 %v2008, %v2008
      %v2025 = vmul.f32 %v2009, %v2009
      %v2026 = vmul.f32 %v2010, %v2010
      %v2027 = vmul.f32 %v2011, %v2011
      %v2028 = vmul.f32 %v2012, %v2012
      %v2029 = vmul.f32 %v2013, %v2013
      %v2030 = vmul.f32 %v2014, %v2014
      %v2031 = vmul.f32 %v2015, %v2015
      %v2032 = vmul.f32 %v2016, %v2016
      %v2033 = vmul.f32 %v2017, %v2017
      %v2034 = vmul.f32 %v2018, %v2018
      %v2035 = vmul.f32 %v2019, %v2019
      %v2036 = vmul.f32 %v2020, %v2020
      %v2037 = vmul.f32 %v2021, %v2021
      %v2038 = vmul.f32 %v2022, %v2022
      %v2039 = vmul.f32 %v2023, %v2023
      %v2040 = vsel %vm373, %v2024, 0.0
      %v2041 = vsel %vm373, %v2025, 0.0
      %v2042 = vadd.f32 %v2040, %v2041
      %v2043 = vsel %vm373, %v2026, 0.0
      %v2044 = vadd.f32 %v2042, %v2043
      %v2045 = vsel %vm373, %v2027, 0.0
      %v2046 = vadd.f32 %v2044, %v2045
      %v2047 = vsel %vm373, %v2028, 0.0
      %v2048 = vadd.f32 %v2046, %v2047
      %v2049 = vsel %vm373, %v2029, 0.0
      %v2050 = vadd.f32 %v2048, %v2049
      %v2051 = vsel %vm373, %v2030, 0.0
      %v2052 = vadd.f32 %v2050, %v2051
      %v2053 = vsel %vm373, %v2031, 0.0
      %v2054 = vadd.f32 %v2052, %v2053
      %v2055 = vsel %vm373, %v2032, 0.0
      %v2056 = vadd.f32 %v2054, %v2055
      %v2057 = vsel %vm373, %v2033, 0.0
      %v2058 = vadd.f32 %v2056, %v2057
      %v2059 = vsel %vm373, %v2034, 0.0
      %v2060 = vadd.f32 %v2058, %v2059
      %v2061 = vsel %vm373, %v2035, 0.0
      %v2062 = vadd.f32 %v2060, %v2061
      %v2063 = vsel %vm373, %v2036, 0.0
      %v2064 = vadd.f32 %v2062, %v2063
      %v2065 = vsel %vm373, %v2037, 0.0
      %v2066 = vadd.f32 %v2064, %v2065
      %v2067 = vsel %vm373, %v2038, 0.0
      %v2068 = vadd.f32 %v2066, %v2067
      %v2069 = vsel %vm373, %v2039, 0.0
      %v2070 = vadd.f32 %v2068, %v2069
      %2071 = vadd.xlane.f32.xlu0 %v2070
      %v2072 = vpop.xlane.xlu0 %2071
      %v2073 = vrot.slane %v2072, 4
      %v2074 = vadd.f32 %v2072, %v2073
      %v2075 = vrot.slane %v2074, 2
      %v2076 = vadd.f32 %v2074, %v2075
      %v2077 = vrot.slane %v2076, 1
      %v2078 = vadd.f32 %v2076, %v2077
      %s2079 = vtos %v2078
      %v2080 = vstv %s2079
      %v2081 = vmul.f32 %v2080, %v2006
      %v2082 = vadd.f32 %v2081, 1e-05
      %v2083 = vrsqrt.pop %v2082
      %v2084 = vmul.f32 %v2083, %v2082
      %v2085 = vmul.f32 %v2084, %v2083
      %v2086 = vmul.f32 0.5, %v2085
      %v2087 = vsub.f32 1.5, %v2086
      %v2088 = vmul.f32 %v2083, %v2087
      %vm2089 = vweird.f32 %v2082
      %vm2090 = vweird.f32 %v2083
      %vm2091 = vmor %vm2089, %vm2090
      %v2092 = vsel %vm2091, %v2083, %v2088
      %v2093 = vmul.f32 %v2008, %v2092
      %v2094 = vmul.f32 %v2009, %v2092
      %v2095 = vmul.f32 %v2010, %v2092
      %v2096 = vmul.f32 %v2011, %v2092
      %v2097 = vmul.f32 %v2012, %v2092
      %v2098 = vmul.f32 %v2013, %v2092
      %v2099 = vmul.f32 %v2014, %v2092
      %v2100 = vmul.f32 %v2015, %v2092
      %v2101 = vmul.f32 %v2016, %v2092
      %v2102 = vmul.f32 %v2017, %v2092
      %v2103 = vmul.f32 %v2018, %v2092
      %v2104 = vmul.f32 %v2019, %v2092
      %v2105 = vmul.f32 %v2020, %v2092
      %v2106 = vmul.f32 %v2021, %v2092
      %v2107 = vmul.f32 %v2022, %v2092
      %v2108 = vmul.f32 %v2023, %v2092
      %v2109 = vpack.c.bf16 %v2093, %v2093
      %v2110 = vpack.c.bf16 %v2094, %v2094
      %v2111 = vpack.c.bf16 %v2095, %v2095
      %v2112 = vpack.c.bf16 %v2096, %v2096
      %v2113 = vpack.c.bf16 %v2097, %v2097
      %v2114 = vpack.c.bf16 %v2098, %v2098
      %v2115 = vpack.c.bf16 %v2099, %v2099
      %v2116 = vpack.c.bf16 %v2100, %v2100
      %v2117 = vpack.c.bf16 %v2101, %v2101
      %v2118 = vpack.c.bf16 %v2102, %v2102
      %v2119 = vpack.c.bf16 %v2103, %v2103
      %v2120 = vpack.c.bf16 %v2104, %v2104
      %v2121 = vpack.c.bf16 %v2105, %v2105
      %v2122 = vpack.c.bf16 %v2106, %v2106
      %v2123 = vpack.c.bf16 %v2107, %v2107
      %v2124 = vpack.c.bf16 %v2108, %v2108
      %vm2125 = vcmask 519168
      %2126 = vst.msk [vmem:[%s170] sm:$0xf] %vm2125, %v2109
      %2127 = vst.msk [vmem:[%s170 + $0x4] sm:$0xf] %vm2125, %v2110
      %2128 = vst.msk [vmem:[%s170 + $0x8] sm:$0xf] %vm2125, %v2111
      %2129 = vst.msk [vmem:[%s170 + $0xc] sm:$0xf] %vm2125, %v2112
      %2130 = vst.msk [vmem:[%s170 + $0x10] sm:$0xf] %vm2125, %v2113
      %2131 = vst.msk [vmem:[%s170 + $0x14] sm:$0xf] %vm2125, %v2114
      %2132 = vst.msk [vmem:[%s170 + $0x18] sm:$0xf] %vm2125, %v2115
      %2133 = vst.msk [vmem:[%s170 + $0x1c] sm:$0xf] %vm2125, %v2116
      %2134 = vst.msk [vmem:[%s170 + $0x20] sm:$0xf] %vm2125, %v2117
      %2135 = vst.msk [vmem:[%s170 + $0x24] sm:$0xf] %vm2125, %v2118
      %2136 = vst.msk [vmem:[%s170 + $0x28] sm:$0xf] %vm2125, %v2119
      %2137 = vst.msk [vmem:[%s170 + $0x2c] sm:$0xf] %vm2125, %v2120
      %2138 = vst.msk [vmem:[%s170 + $0x30] sm:$0xf] %vm2125, %v2121
      %2139 = vst.msk [vmem:[%s170 + $0x34] sm:$0xf] %vm2125, %v2122
      %2140 = vst.msk [vmem:[%s170 + $0x38] sm:$0xf] %vm2125, %v2123
      %2141 = vst.msk [vmem:[%s170 + $0x3c] sm:$0xf] %vm2125, %v2124
      %p2142 = scmp.lt.s32.totalorder %s14, 1
      %s2143 = scalar_select %p2142, %s14, 1
      %s2144 = smul.addr %s2143, 16
      %s2145 = smul.addr %s2144, 4
      %s2146 = scalar_lea.vmem %s3, %s2145
      // Predicated region
      $region33: #{image_decoder.5} parent=31 // pred_check
        %p2147 = pneg %p100
      $region34: #{image_decoder.5} parent=31 // pred_check_branch
        %2149 = sbr.rel (%p2147) target = $region36
      $region35: #{image_decoder.5} parent=31 // pred_region
        _
      $region36: #{image_decoder.5} parent=31 // pred_fallthru
        _
    $region32: #{image_decoder.5} parent=5 // pred_fallthru
      _
    %p2150 = scmp.le.s32.totalorder 2, %s9
    // Predicated region
    $region37: #{image_decoder.5} parent=5 // pred_check
      %p2151 = pneg %p2150
    $region38: #{image_decoder.5} parent=5 // pred_check_branch
      %2153 = sbr.rel (%p2151) target = $region40
    $region39: #{image_decoder.5} parent=5 // pred_region
      %s2154 = ssub.s32 %s9, 2
      // Predicated region
      $region41: #{image_decoder.5} parent=39 // pred_check
        %p2155 = pneg %p106
      $region42: #{image_decoder.5} parent=39 // pred_check_branch
        %2157 = sbr.rel (%p2155) target = $region44
      $region43: #{image_decoder.5} parent=39 // pred_region
        %p2158 = scmp.lt.s32.totalorder %s15, 1
        %s2159 = scalar_select %p2158, %s15, 1
        %s2160 = smul.addr %s2159, 16
        %s2161 = smul.addr %s2160, 4
        %s2162 = scalar_lea.vmem %s3, %s2161
      $region44: #{image_decoder.5} parent=39 // pred_fallthru
        _
    $region40: #{image_decoder.5} parent=5 // pred_fallthru
      _
  $region6: #{image_decoder.5} parent=0 // loop_footer
    %s13 = sadd.s32 1, %s9
  $region7: #{image_decoder.5} parent=0 // loop_footer_branch
    %8 = sbr.rel target = $region3
  $region8: #{image_decoder.5} parent=0 // loop_exit
    _

// kernel: image_decoder.6
$region0: #{image_decoder.6}
  #allocation0 [shape = 'u32[]', space=smem, size = 0x4, offset = 0x4, fixed_abs, tag = 'smem constant byte address 0x4 - core index']
  #allocation1 [shape = 'u32[72,128]{1,0:T(1,128)}', space=vmem, size = 0x9000, scoped, tag = 'internal scratch']
  %s0 = inlined_call_operand.vmem [shape: bf16[2,32,290], index: 0, kind: input, shape index: {}]
  %s1 = inlined_call_operand.vmem [shape: bf16[9,64,32], index: 1, kind: input, shape index: {}]
  %s2 = inlined_call_operand.vmem [shape: f32[64,1], index: 2, kind: input, shape index: {}]
  %s3 = inlined_call_operand.vmem [shape: bf16[2,64,256], index: 3, kind: output, shape index: {}]
  %s4 = sld [smem:[#allocation0]]
  $region45: #{image_decoder.6} parent=0
    _
  %s6 = ssub.s32 1, %s4
  %s7 = scalar_select 0, %s6, %s4
  loop: start=0, step=1, limit=4
  $region2: #{image_decoder.6} parent=0 // loop_pre_header
    _
  $region3: #{image_decoder.6} parent=0 // loop_header
    %s9 = sphi 0, %s13
    %p10 = scmp.ge.s32.totalorder %s9, 4
    %s19 = sphi 0, %s21
    %s22 = sphi 0, %s19
    %s23 = sphi 0, %s22
    %s39 = sphi 0, %s23
    %s43 = sphi 0, %s43
    %s45 = sphi 0, %s43
    %s46 = sphi 0, %s45
    %s60 = sphi 0, %s46
    %s64 = sphi 0, %s64
    %s66 = sphi 0, %s64
    %s67 = sphi 0, %s66
    %s81 = sphi 0, %s67
    %s87 = sphi 0, %s89
    %s90 = sphi 0, %s87
    %s91 = sphi 0, %s90
    %s107 = sphi 0, %s91
  $region4: #{image_decoder.6} parent=0 // loop_header_branch
    %12 = sbr.rel (%p10) target = $region8
  $region5: #{image_decoder.6} parent=0 // loop_body
    %s14 = ssub.s32 %s9, 1
    %s15 = ssub.s32 %s9, 2
    %s16 = sadd.s32 %s9, 1
    %s17 = ssub.s32 %s9, %s16
    %p18 = scmp.eq.s32.totalorder %s17, 0
    %s20 = sadd.s32 %s19, 1
    %s21 = scalar_select %p18, %s19, %s20
    %p24 = pneg %p18
    %p25 = scmp.eq.s32.totalorder %s9, 1
    %p26 = por %p24, %p25
    %p27 = scmp.ne.s32.totalorder %s19, %s22
    %p28 = scmp.eq.s32.totalorder %s9, 0
    %p29 = por %p27, %p28
    %p30 = scmp.ne.s32.totalorder %s19, %s22
    %p31 = scmp.eq.s32.totalorder %s14, 1
    %p32 = por %p30, %p31
    %p33 = scmp.ne.s32.totalorder %s22, %s23
    %p34 = scmp.eq.s32.totalorder %s14, 0
    %p35 = por %p33, %p34
    %p36 = scmp.ne.s32.totalorder %s22, %s23
    %p37 = scmp.eq.s32.totalorder %s15, 1
    %p38 = por %p36, %p37
    %p40 = scmp.ne.s32.totalorder %s23, %s39
    %p41 = scmp.eq.s32.totalorder %s15, 0
    %p42 = por %p40, %p41
    %s44 = sadd.s32 %s43, 1
    %p47 = scmp.eq.s32.totalorder %s9, 1
    %p48 = scmp.ne.s32.totalorder %s43, %s45
    %p49 = scmp.eq.s32.totalorder %s9, 0
    %p50 = por %p48, %p49
    %p51 = scmp.ne.s32.totalorder %s43, %s45
    %p52 = scmp.eq.s32.totalorder %s14, 1
    %p53 = por %p51, %p52
    %p54 = scmp.ne.s32.totalorder %s45, %s46
    %p55 = scmp.eq.s32.totalorder %s14, 0
    %p56 = por %p54, %p55
    %p57 = scmp.ne.s32.totalorder %s45, %s46
    %p58 = scmp.eq.s32.totalorder %s15, 1
    %p59 = por %p57, %p58
    %p61 = scmp.ne.s32.totalorder %s46, %s60
    %p62 = scmp.eq.s32.totalorder %s15, 0
    %p63 = por %p61, %p62
    %s65 = sadd.s32 %s64, 1
    %p68 = scmp.eq.s32.totalorder %s9, 1
    %p69 = scmp.ne.s32.totalorder %s64, %s66
    %p70 = scmp.eq.s32.totalorder %s9, 0
    %p71 = por %p69, %p70
    %p72 = scmp.ne.s32.totalorder %s64, %s66
    %p73 = scmp.eq.s32.totalorder %s14, 1
    %p74 = por %p72, %p73
    %p75 = scmp.ne.s32.totalorder %s66, %s67
    %p76 = scmp.eq.s32.totalorder %s14, 0
    %p77 = por %p75, %p76
    %p78 = scmp.ne.s32.totalorder %s66, %s67
    %p79 = scmp.eq.s32.totalorder %s15, 1
    %p80 = por %p78, %p79
    %p82 = scmp.ne.s32.totalorder %s67, %s81
    %p83 = scmp.eq.s32.totalorder %s15, 0
    %p84 = por %p82, %p83
    %s85 = ssub.s32 %s9, %s16
    %p86 = scmp.eq.s32.totalorder %s85, 0
    %s88 = sadd.s32 %s87, 1
    %s89 = scalar_select %p86, %s87, %s88
    %p92 = pneg %p86
    %p93 = scmp.eq.s32.totalorder %s9, 1
    %p94 = por %p92, %p93
    %p95 = scmp.ne.s32.totalorder %s87, %s90
    %p96 = scmp.eq.s32.totalorder %s9, 0
    %p97 = por %p95, %p96
    %p98 = scmp.ne.s32.totalorder %s87, %s90
    %p99 = scmp.eq.s32.totalorder %s14, 1
    %p100 = por %p98, %p99
    %p101 = scmp.ne.s32.totalorder %s90, %s91
    %p102 = scmp.eq.s32.totalorder %s14, 0
    %p103 = por %p101, %p102
    %p104 = scmp.ne.s32.totalorder %s90, %s91
    %p105 = scmp.eq.s32.totalorder %s15, 1
    %p106 = por %p104, %p105
    %p108 = scmp.ne.s32.totalorder %s91, %s107
    %p109 = scmp.eq.s32.totalorder %s15, 0
    %p110 = por %p108, %p109
    %p111 = scmp.le.s32.totalorder 1, %s9
    %p112 = scmp.lt.s32.totalorder %s9, 3
    %p113 = pnand %p111, %p112
    %p114 = pneg %p113
    // Predicated region
    $region9: #{image_decoder.6} parent=5 // pred_check
      _
    $region10: #{image_decoder.6} parent=5 // pred_check_branch
      %116 = sbr.rel (%p113) target = $region12
    $region11: #{image_decoder.6} parent=5 // pred_region
      %s117 = ssub.s32 %s9, 1
      // Predicated region
      $region13: #{image_decoder.6} parent=11 // pred_check
        %p118 = pneg %p56
      $region14: #{image_decoder.6} parent=11 // pred_check_branch
        %120 = sbr.rel (%p118) target = $region16
      $region15: #{image_decoder.6} parent=11 // pred_region
        _
      $region16: #{image_decoder.6} parent=11 // pred_fallthru
        _
      // Predicated region
      $region17: #{image_decoder.6} parent=11 // pred_check
        %p121 = pneg %p77
      $region18: #{image_decoder.6} parent=11 // pred_check_branch
        %123 = sbr.rel (%p121) target = $region20
      $region19: #{image_decoder.6} parent=11 // pred_region
        _
      $region20: #{image_decoder.6} parent=11 // pred_fallthru
        _
    $region12: #{image_decoder.6} parent=5 // pred_fallthru
      _
    %p124 = scmp.lt.s32.totalorder %s9, 2
    // Predicated region
    $region21: #{image_decoder.6} parent=5 // pred_check
      %p125 = pneg %p124
    $region22: #{image_decoder.6} parent=5 // pred_check_branch
      %127 = sbr.rel (%p125) target = $region24
    $region23: #{image_decoder.6} parent=5 // pred_region
      // Predicated region
      $region25: #{image_decoder.6} parent=23 // pred_check
        %p128 = pneg %p29
      $region26: #{image_decoder.6} parent=23 // pred_check_branch
        %130 = sbr.rel (%p128) target = $region28
      $region27: #{image_decoder.6} parent=23 // pred_region
        %p131 = scmp.lt.s32.totalorder %s9, 1
        %s132 = scalar_select %p131, %s9, 1
        %s133 = smul.addr %s132, 12
        %s134 = smul.addr %s133, 4
        %s135 = scalar_lea.vmem %s0, %s134
      $region28: #{image_decoder.6} parent=23 // pred_fallthru
        _
    $region24: #{image_decoder.6} parent=5 // pred_fallthru
      _
    %p136 = scmp.le.s32.totalorder 1, %s9
    %p137 = scmp.lt.s32.totalorder %s9, 3
    %p138 = pnand %p136, %p137
    %p139 = pneg %p138
    // Predicated region
    $region29: #{image_decoder.6} parent=5 // pred_check
      _
    $region30: #{image_decoder.6} parent=5 // pred_check_branch
      %141 = sbr.rel (%p138) target = $region32
    $region31: #{image_decoder.6} parent=5 // pred_region
      %s142 = ssub.s32 %s9, 1
      %p143 = scmp.lt.s32.totalorder %s14, 1
      %s144 = scalar_select %p143, %s14, 1
      %s145 = smul.addr %s144, 12
      %s146 = smul.addr %s145, 4
      %s147 = scalar_lea.vmem %s0, %s146
      %p148 = pneg %p35
      %p149 = pneg %p32
      %p150 = pneg %p56
      %p151 = pneg %p53
      %p152 = pneg %p77
      %p153 = pneg %p74
      %p154 = pneg %p103
      %p155 = pneg %p100
      %p156 = scmp.lt.s32.totalorder %s14, 1
      %s157 = scalar_select %p156, %s14, 1
      %s158 = smul.addr %s157, 16
      %s159 = smul.addr %s158, 4
      %s160 = scalar_lea.vmem %s3, %s159
      %p161 = scmp.lt.s32.totalorder %s14, 1
      %s162 = scalar_select %p161, %s14, 1
      %s163 = smul.addr %s162, 12
      %s164 = smul.addr %s163, 4
      %s165 = scalar_lea.vmem %s0, %s164
      %p166 = scmp.lt.s32.totalorder %s14, 1
      %s167 = scalar_select %p166, %s14, 1
      %s168 = smul.addr %s167, 16
      %s169 = smul.addr %s168, 4
      %s170 = scalar_lea.vmem %s3, %s169
      %v172 = vld [vmem:[%s165] sm:$0xff]
      %v173 = vld [vmem:[%s165 + $0x8] sm:$0xf]
      %v174 = vld [vmem:[%s165 + $0xc] sm:$0xff]
      %v175 = vld [vmem:[%s165 + $0x14] sm:$0xf]
      %v176 = vld [vmem:[%s165 + $0x18] sm:$0xff]
      %v177 = vld [vmem:[%s165 + $0x20] sm:$0xf]
      %v178 = vld [vmem:[%s165 + $0x24] sm:$0xff]
      %v179 = vld [vmem:[%s165 + $0x2c] sm:$0xf]
      %v180 = vunpack.c.l.bf16 %v172
      %v181 = vunpack.c.h.bf16 %v172
      %v182 = vunpack.c.l.bf16 %v173
      %v183 = vunpack.c.l.bf16 %v174
      %v184 = vunpack.c.h.bf16 %v174
      %v185 = vunpack.c.l.bf16 %v175
      %v186 = vunpack.c.l.bf16 %v176
      %v187 = vunpack.c.h.bf16 %v176
      %v188 = vunpack.c.l.bf16 %v177
      %v189 = vunpack.c.l.bf16 %v178
      %v190 = vunpack.c.h.bf16 %v178
      %v191 = vunpack.c.l.bf16 %v179
      %v192 = vlaneseq
      %v193 = vand.u32 %v192, 127
      %v194 = vadd.s32 %v193, 128
      %v195 = vand.u32 %v193, 15
      %v196 = vand.u32 %v194, 15
      %vm197 = vcmp.ge.s32.totalorder %v195, 1
      %vm198 = vcmp.ge.s32.totalorder %v196, 1
      %vm199 = vcmp.lt.s32.totalorder %v195, 15
      %vm200 = vcmp.lt.s32.totalorder %v196, 15
      %v201 = vld [vmem:[%s2] sm:$0xff]
      %v202 = vld [vmem:[%s2 + $0x8] sm:$0xff]
      %v203 = vld [vmem:[%s2 + $0x10] sm:$0xff]
      %v204 = vld [vmem:[%s2 + $0x18] sm:$0xff]
      %v205 = vld [vmem:[%s2 + $0x20] sm:$0xff]
      %v206 = vld [vmem:[%s2 + $0x28] sm:$0xff]
      %v207 = vld [vmem:[%s2 + $0x30] sm:$0xff]
      %v208 = vld [vmem:[%s2 + $0x38] sm:$0xff]
      %210 = vset.pattern.permute.xlu0 0
      %211 = vperm.xlu0 %210, %v201
      %v212 = vpop.permute.xlu0 %211
      %215 = vset.pattern.permute.xlu0 0
      %216 = vperm.xlu0 %215, %v202
      %v217 = vpop.permute.xlu0 %216
      %220 = vset.pattern.permute.xlu0 0
      %221 = vperm.xlu0 %220, %v203
      %v222 = vpop.permute.xlu0 %221
      %225 = vset.pattern.permute.xlu0 0
      %226 = vperm.xlu0 %225, %v204
      %v227 = vpop.permute.xlu0 %226
      %230 = vset.pattern.permute.xlu0 0
      %231 = vperm.xlu0 %230, %v205
      %v232 = vpop.permute.xlu0 %231
      %235 = vset.pattern.permute.xlu0 0
      %236 = vperm.xlu0 %235, %v206
      %v237 = vpop.permute.xlu0 %236
      %240 = vset.pattern.permute.xlu0 0
      %241 = vperm.xlu0 %240, %v207
      %v242 = vpop.permute.xlu0 %241
      %245 = vset.pattern.permute.xlu0 0
      %246 = vperm.xlu0 %245, %v208
      %v247 = vpop.permute.xlu0 %246
      %v249 = vadd.f32 %v212, 0.0
      %v250 = vadd.f32 %v217, 0.0
      %v251 = vadd.f32 %v222, 0.0
      %v252 = vadd.f32 %v227, 0.0
      %v253 = vadd.f32 %v232, 0.0
      %v254 = vadd.f32 %v237, 0.0
      %v255 = vadd.f32 %v242, 0.0
      %v256 = vadd.f32 %v247, 0.0
      %v257 = vsel %vm197, %v180, 0.0
      %v258 = vsel %vm198, %v181, 0.0
      %v259 = vsel %vm197, %v183, 0.0
      %v260 = vsel %vm198, %v184, 0.0
      %v261 = vsel %vm197, %v186, 0.0
      %v262 = vsel %vm198, %v187, 0.0
      %v263 = vsel %vm197, %v189, 0.0
      %v264 = vsel %vm198, %v190, 0.0
      %v265 = vld [vmem:[%s1] sm:$0xf]
      %v266 = vld [vmem:[%s1 + $0x4] sm:$0xf]
      %v267 = vld [vmem:[%s1 + $0x8] sm:$0xf]
      %v268 = vld [vmem:[%s1 + $0xc] sm:$0xf]
      %v269 = vld [vmem:[%s1 + $0x10] sm:$0xf]
      %v270 = vld [vmem:[%s1 + $0x14] sm:$0xf]
      %v271 = vld [vmem:[%s1 + $0x18] sm:$0xf]
      %v272 = vld [vmem:[%s1 + $0x1c] sm:$0xf]
      %v273 = vpack.c.bf16 %v259, %v257
      %v274 = vpack.c.bf16 %v260, %v258
      %v275 = vpack.c.bf16 %v263, %v261
      %v276 = vpack.c.bf16 %v264, %v262
      %v285 = vunpack.c.l.b16 %v265
      %v286 = vunpack.c.l.b16 %v266
      %v287 = vunpack.c.l.b16 %v267
      %v288 = vunpack.c.l.b16 %v268
      %v289 = vunpack.c.l.b16 %v269
      %v290 = vunpack.c.l.b16 %v270
      %v291 = vunpack.c.l.b16 %v271
      %v292 = vunpack.c.l.b16 %v272
      %v293 = vpack.c.b16 %v286, %v285
      %v294 = vpack.c.b16 %v288, %v287
      %v295 = vpack.c.b16 %v290, %v289
      %v296 = vpack.c.b16 %v292, %v291
      %vm297 = vcmask 261120
      %v299 = vsel %vm297, %v293, 0
      %v302 = vsel %vm297, %v294, 0
      %v305 = vsel %vm297, %v295, 0
      %v308 = vsel %vm297, %v296, 0
      %310 = vmatpush.bf16.msra.mxu0 0
      %311 = vmatpush.bf16.msra.mxu0 0
      %312 = vmatpush.bf16.msra.mxu0 0
      %313 = vmatpush.bf16.msra.mxu0 0
      %314 = vmatpush.bf16.msra.mxu0 0
      %315 = vmatpush.bf16.msra.mxu0 0
      %316 = vmatpush.bf16.msra.mxu0 %v275
      %317 = vmatpush.bf16.msra.mxu0 %v273
      %318 = vmatmul.bf16.gmra.mxu0 %v299
      %v319 = vpop.f32.mrf.mxu0
      %v320 = vadd.f32 0.0, %v319
      %v321 = vpop.f32.mrf.mxu0
      %v322 = vadd.f32 0.0, %v321
      %323 = vmatmul.bf16.gmra.mxu0 %v302
      %v324 = vpop.f32.mrf.mxu0
      %v325 = vadd.f32 0.0, %v324
      %v326 = vpop.f32.mrf.mxu0
      %v327 = vadd.f32 0.0, %v326
      %328 = vmatmul.bf16.gmra.mxu0 %v305
      %v329 = vpop.f32.mrf.mxu0
      %v330 = vadd.f32 0.0, %v329
      %v331 = vpop.f32.mrf.mxu0
      %v332 = vadd.f32 0.0, %v331
      %333 = vmatmul.bf16.gmra.mxu0 %v308
      %v334 = vpop.f32.mrf.mxu0
      %v335 = vadd.f32 0.0, %v334
      %v336 = vpop.f32.mrf.mxu0
      %v337 = vadd.f32 0.0, %v336
      %338 = vdwg.mxu0
      %339 = vmatpush.bf16.msra.mxu0 0
      %340 = vmatpush.bf16.msra.mxu0 0
      %341 = vmatpush.bf16.msra.mxu0 0
      %342 = vmatpush.bf16.msra.mxu0 0
      %343 = vmatpush.bf16.msra.mxu0 0
      %344 = vmatpush.bf16.msra.mxu0 0
      %345 = vmatpush.bf16.msra.mxu0 %v276
      %346 = vmatpush.bf16.msra.mxu0 %v274
      %347 = vmatmul.bf16.gmra.mxu0 %v299
      %v348 = vpop.f32.mrf.mxu0
      %v349 = vadd.f32 0.0, %v348
      %v350 = vpop.f32.mrf.mxu0
      %v351 = vadd.f32 0.0, %v350
      %352 = vmatmul.bf16.gmra.mxu0 %v302
      %v353 = vpop.f32.mrf.mxu0
      %v354 = vadd.f32 0.0, %v353
      %v355 = vpop.f32.mrf.mxu0
      %v356 = vadd.f32 0.0, %v355
      %357 = vmatmul.bf16.gmra.mxu0 %v305
      %v358 = vpop.f32.mrf.mxu0
      %v359 = vadd.f32 0.0, %v358
      %v360 = vpop.f32.mrf.mxu0
      %v361 = vadd.f32 0.0, %v360
      %362 = vmatmul.bf16.gmra.mxu0 %v308
      %v363 = vpop.f32.mrf.mxu0
      %v364 = vadd.f32 0.0, %v363
      %v365 = vpop.f32.mrf.mxu0
      %v366 = vadd.f32 0.0, %v365
      %367 = vdwg.mxu0
      %v368 = vadd.f32 %v249, %v320
      %v369 = vadd.f32 %v249, %v349
      %v370 = vadd.f32 %v250, %v322
      %v371 = vadd.f32 %v250, %v351
      %v372 = vadd.f32 %v251, %v325
      %v373 = vadd.f32 %v251, %v354
      %v374 = vadd.f32 %v252, %v327
      %v375 = vadd.f32 %v252, %v356
      %v376 = vadd.f32 %v253, %v330
      %v377 = vadd.f32 %v253, %v359
      %v378 = vadd.f32 %v254, %v332
      %v379 = vadd.f32 %v254, %v361
      %v380 = vadd.f32 %v255, %v335
      %v381 = vadd.f32 %v255, %v364
      %v382 = vadd.f32 %v256, %v337
      %v383 = vadd.f32 %v256, %v366
      %s384 = scalar_lea.vmem %s1, 32
      %v385 = vld [vmem:[%s384] sm:$0xf]
      %v386 = vld [vmem:[%s384 + $0x4] sm:$0xf]
      %v387 = vld [vmem:[%s384 + $0x8] sm:$0xf]
      %v388 = vld [vmem:[%s384 + $0xc] sm:$0xf]
      %v389 = vld [vmem:[%s384 + $0x10] sm:$0xf]
      %v390 = vld [vmem:[%s384 + $0x14] sm:$0xf]
      %v391 = vld [vmem:[%s384 + $0x18] sm:$0xf]
      %v392 = vld [vmem:[%s384 + $0x1c] sm:$0xf]
      %v393 = vpack.c.bf16 %v183, %v180
      %v394 = vpack.c.bf16 %v184, %v181
      %v395 = vpack.c.bf16 %v185, %v182
      %v396 = vpack.c.bf16 %v189, %v186
      %v397 = vpack.c.bf16 %v190, %v187
      %v398 = vpack.c.bf16 %v191, %v188
      %v407 = vunpack.c.l.b16 %v385
      %v408 = vunpack.c.l.b16 %v386
      %v409 = vunpack.c.l.b16 %v387
      %v410 = vunpack.c.l.b16 %v388
      %v411 = vunpack.c.l.b16 %v389
      %v412 = vunpack.c.l.b16 %v390
      %v413 = vunpack.c.l.b16 %v391
      %v414 = vunpack.c.l.b16 %v392
      %v415 = vpack.c.b16 %v408, %v407
      %v416 = vpack.c.b16 %v410, %v409
      %v417 = vpack.c.b16 %v412, %v411
      %v418 = vpack.c.b16 %v414, %v413
      %425 = vrot.lane.b32.xlu0 %v393, 127
      %v426 = vpop.permute.xlu0 %425
      %427 = vrot.lane.b32.xlu0 %v394, 127
      %v428 = vpop.permute.xlu0 %427
      %429 = vrot.lane.b32.xlu0 %v395, 127
      %v430 = vpop.permute.xlu0 %429
      %431 = vrot.lane.b32.xlu0 %v396, 127
      %v432 = vpop.permute.xlu0 %431
      %433 = vrot.lane.b32.xlu0 %v397, 127
      %v434 = vpop.permute.xlu0 %433
      %435 = vrot.lane.b32.xlu0 %v398, 127
      %v436 = vpop.permute.xlu0 %435
      %vm437 = vcmask 1039360
      %v438 = vsel %vm437, %v426, %v428
      %v439 = vsel %vm437, %v428, %v430
      %v440 = vsel %vm437, %v432, %v434
      %v441 = vsel %vm437, %v434, %v436
      %v447 = vsel %vm297, %v415, 0
      %v450 = vsel %vm297, %v416, 0
      %v453 = vsel %vm297, %v417, 0
      %v456 = vsel %vm297, %v418, 0
      %458 = vmatpush.bf16.msra.mxu0 0
      %459 = vmatpush.bf16.msra.mxu0 0
      %460 = vmatpush.bf16.msra.mxu0 0
      %461 = vmatpush.bf16.msra.mxu0 0
      %462 = vmatpush.bf16.msra.mxu0 0
      %463 = vmatpush.bf16.msra.mxu0 0
      %464 = vmatpush.bf16.msra.mxu0 %v440
      %465 = vmatpush.bf16.msra.mxu0 %v438
      %466 = vmatmul.bf16.gmra.mxu0 %v447
      %v467 = vpop.f32.mrf.mxu0
      %v468 = vadd.f32 0.0, %v467
      %v469 = vpop.f32.mrf.mxu0
      %v470 = vadd.f32 0.0, %v469
      %471 = vmatmul.bf16.gmra.mxu0 %v450
      %v472 = vpop.f32.mrf.mxu0
      %v473 = vadd.f32 0.0, %v472
      %v474 = vpop.f32.mrf.mxu0
      %v475 = vadd.f32 0.0, %v474
      %476 = vmatmul.bf16.gmra.mxu0 %v453
      %v477 = vpop.f32.mrf.mxu0
      %v478 = vadd.f32 0.0, %v477
      %v479 = vpop.f32.mrf.mxu0
      %v480 = vadd.f32 0.0, %v479
      %481 = vmatmul.bf16.gmra.mxu0 %v456
      %v482 = vpop.f32.mrf.mxu0
      %v483 = vadd.f32 0.0, %v482
      %v484 = vpop.f32.mrf.mxu0
      %v485 = vadd.f32 0.0, %v484
      %486 = vdwg.mxu0
      %487 = vmatpush.bf16.msra.mxu0 0
      %488 = vmatpush.bf16.msra.mxu0 0
      %489 = vmatpush.bf16.msra.mxu0 0
      %490 = vmatpush.bf16.msra.mxu0 0
      %491 = vmatpush.bf16.msra.mxu0 0
      %492 = vmatpush.bf16.msra.mxu0 0
      %493 = vmatpush.bf16.msra.mxu0 %v441
      %494 = vmatpush.bf16.msra.mxu0 %v439
      %495 = vmatmul.bf16.gmra.mxu0 %v447
      %v496 = vpop.f32.mrf.mxu0
      %v497 = vadd.f32 0.0, %v496
      %v498 = vpop.f32.mrf.mxu0
      %v499 = vadd.f32 0.0, %v498
      %500 = vmatmul.bf16.gmra.mxu0 %v450
      %v501 = vpop.f32.mrf.mxu0
      %v502 = vadd.f32 0.0, %v501
      %v503 = vpop.f32.mrf.mxu0
      %v504 = vadd.f32 0.0, %v503
      %505 = vmatmul.bf16.gmra.mxu0 %v453
      %v506 = vpop.f32.mrf.mxu0
      %v507 = vadd.f32 0.0, %v506
      %v508 = vpop.f32.mrf.mxu0
      %v509 = vadd.f32 0.0, %v508
      %510 = vmatmul.bf16.gmra.mxu0 %v456
      %v511 = vpop.f32.mrf.mxu0
      %v512 = vadd.f32 0.0, %v511
      %v513 = vpop.f32.mrf.mxu0
      %v514 = vadd.f32 0.0, %v513
      %515 = vdwg.mxu0
      %v516 = vadd.f32 %v368, %v468
      %v517 = vadd.f32 %v369, %v497
      %v518 = vadd.f32 %v370, %v470
      %v519 = vadd.f32 %v371, %v499
      %v520 = vadd.f32 %v372, %v473
      %v521 = vadd.f32 %v373, %v502
      %v522 = vadd.f32 %v374, %v475
      %v523 = vadd.f32 %v375, %v504
      %v524 = vadd.f32 %v376, %v478
      %v525 = vadd.f32 %v377, %v507
      %v526 = vadd.f32 %v378, %v480
      %v527 = vadd.f32 %v379, %v509
      %v528 = vadd.f32 %v380, %v483
      %v529 = vadd.f32 %v381, %v512
      %v530 = vadd.f32 %v382, %v485
      %v531 = vadd.f32 %v383, %v514
      %544 = vrot.lane.b32.xlu0 %v180, 126
      %v545 = vpop.permute.xlu0 %544
      %546 = vrot.lane.b32.xlu0 %v181, 126
      %v547 = vpop.permute.xlu0 %546
      %548 = vrot.lane.b32.xlu0 %v182, 126
      %v549 = vpop.permute.xlu0 %548
      %550 = vrot.lane.b32.xlu0 %v183, 126
      %v551 = vpop.permute.xlu0 %550
      %552 = vrot.lane.b32.xlu0 %v184, 126
      %v553 = vpop.permute.xlu0 %552
      %554 = vrot.lane.b32.xlu0 %v185, 126
      %v555 = vpop.permute.xlu0 %554
      %556 = vrot.lane.b32.xlu0 %v186, 126
      %v557 = vpop.permute.xlu0 %556
      %558 = vrot.lane.b32.xlu0 %v187, 126
      %v559 = vpop.permute.xlu0 %558
      %560 = vrot.lane.b32.xlu0 %v188, 126
      %v561 = vpop.permute.xlu0 %560
      %562 = vrot.lane.b32.xlu0 %v189, 126
      %v563 = vpop.permute.xlu0 %562
      %564 = vrot.lane.b32.xlu0 %v190, 126
      %v565 = vpop.permute.xlu0 %564
      %566 = vrot.lane.b32.xlu0 %v191, 126
      %v567 = vpop.permute.xlu0 %566
      %vm568 = vcmask 1031168
      %v569 = vsel %vm568, %v545, %v547
      %v570 = vsel %vm568, %v547, %v549
      %v571 = vsel %vm568, %v551, %v553
      %v572 = vsel %vm568, %v553, %v555
      %v573 = vsel %vm568, %v557, %v559
      %v574 = vsel %vm568, %v559, %v561
      %v575 = vsel %vm568, %v563, %v565
      %v576 = vsel %vm568, %v565, %v567
      %v585 = vsel %vm199, %v569, 0.0
      %v586 = vsel %vm200, %v570, 0.0
      %v587 = vsel %vm199, %v571, 0.0
      %v588 = vsel %vm200, %v572, 0.0
      %v589 = vsel %vm199, %v573, 0.0
      %v590 = vsel %vm200, %v574, 0.0
      %v591 = vsel %vm199, %v575, 0.0
      %v592 = vsel %vm200, %v576, 0.0
      %s593 = scalar_lea.vmem %s1, 64
      %v594 = vld [vmem:[%s593] sm:$0xf]
      %v595 = vld [vmem:[%s593 + $0x4] sm:$0xf]
      %v596 = vld [vmem:[%s593 + $0x8] sm:$0xf]
      %v597 = vld [vmem:[%s593 + $0xc] sm:$0xf]
      %v598 = vld [vmem:[%s593 + $0x10] sm:$0xf]
      %v599 = vld [vmem:[%s593 + $0x14] sm:$0xf]
      %v600 = vld [vmem:[%s593 + $0x18] sm:$0xf]
      %v601 = vld [vmem:[%s593 + $0x1c] sm:$0xf]
      %v602 = vpack.c.bf16 %v587, %v585
      %v603 = vpack.c.bf16 %v588, %v586
      %v604 = vpack.c.bf16 %v591, %v589
      %v605 = vpack.c.bf16 %v592, %v590
      %v614 = vunpack.c.l.b16 %v594
      %v615 = vunpack.c.l.b16 %v595
      %v616 = vunpack.c.l.b16 %v596
      %v617 = vunpack.c.l.b16 %v597
      %v618 = vunpack.c.l.b16 %v598
      %v619 = vunpack.c.l.b16 %v599
      %v620 = vunpack.c.l.b16 %v600
      %v621 = vunpack.c.l.b16 %v601
      %v622 = vpack.c.b16 %v615, %v614
      %v623 = vpack.c.b16 %v617, %v616
      %v624 = vpack.c.b16 %v619, %v618
      %v625 = vpack.c.b16 %v621, %v620
      %v627 = vsel %vm297, %v622, 0
      %v630 = vsel %vm297, %v623, 0
      %v633 = vsel %vm297, %v624, 0
      %v636 = vsel %vm297, %v625, 0
      %638 = vmatpush.bf16.msra.mxu0 0
      %639 = vmatpush.bf16.msra.mxu0 0
      %640 = vmatpush.bf16.msra.mxu0 0
      %641 = vmatpush.bf16.msra.mxu0 0
      %642 = vmatpush.bf16.msra.mxu0 0
      %643 = vmatpush.bf16.msra.mxu0 0
      %644 = vmatpush.bf16.msra.mxu0 %v604
      %645 = vmatpush.bf16.msra.mxu0 %v602
      %646 = vmatmul.bf16.gmra.mxu0 %v627
      %v647 = vpop.f32.mrf.mxu0
      %v648 = vadd.f32 0.0, %v647
      %v649 = vpop.f32.mrf.mxu0
      %v650 = vadd.f32 0.0, %v649
      %651 = vmatmul.bf16.gmra.mxu0 %v630
      %v652 = vpop.f32.mrf.mxu0
      %v653 = vadd.f32 0.0, %v652
      %v654 = vpop.f32.mrf.mxu0
      %v655 = vadd.f32 0.0, %v654
      %656 = vmatmul.bf16.gmra.mxu0 %v633
      %v657 = vpop.f32.mrf.mxu0
      %v658 = vadd.f32 0.0, %v657
      %v659 = vpop.f32.mrf.mxu0
      %v660 = vadd.f32 0.0, %v659
      %661 = vmatmul.bf16.gmra.mxu0 %v636
      %v662 = vpop.f32.mrf.mxu0
      %v663 = vadd.f32 0.0, %v662
      %v664 = vpop.f32.mrf.mxu0
      %v665 = vadd.f32 0.0, %v664
      %666 = vdwg.mxu0
      %667 = vmatpush.bf16.msra.mxu0 0
      %668 = vmatpush.bf16.msra.mxu0 0
      %669 = vmatpush.bf16.msra.mxu0 0
      %670 = vmatpush.bf16.msra.mxu0 0
      %671 = vmatpush.bf16.msra.mxu0 0
      %672 = vmatpush.bf16.msra.mxu0 0
      %673 = vmatpush.bf16.msra.mxu0 %v605
      %674 = vmatpush.bf16.msra.mxu0 %v603
      %675 = vmatmul.bf16.gmra.mxu0 %v627
      %v676 = vpop.f32.mrf.mxu0
      %v677 = vadd.f32 0.0, %v676
      %v678 = vpop.f32.mrf.mxu0
      %v679 = vadd.f32 0.0, %v678
      %680 = vmatmul.bf16.gmra.mxu0 %v630
      %v681 = vpop.f32.mrf.mxu0
      %v682 = vadd.f32 0.0, %v681
      %v683 = vpop.f32.mrf.mxu0
      %v684 = vadd.f32 0.0, %v683
      %685 = vmatmul.bf16.gmra.mxu0 %v633
      %v686 = vpop.f32.mrf.mxu0
      %v687 = vadd.f32 0.0, %v686
      %v688 = vpop.f32.mrf.mxu0
      %v689 = vadd.f32 0.0, %v688
      %690 = vmatmul.bf16.gmra.mxu0 %v636
      %v691 = vpop.f32.mrf.mxu0
      %v692 = vadd.f32 0.0, %v691
      %v693 = vpop.f32.mrf.mxu0
      %v694 = vadd.f32 0.0, %v693
      %695 = vdwg.mxu0
      %v696 = vadd.f32 %v516, %v648
      %v697 = vadd.f32 %v517, %v677
      %v698 = vadd.f32 %v518, %v650
      %v699 = vadd.f32 %v519, %v679
      %v700 = vadd.f32 %v520, %v653
      %v701 = vadd.f32 %v521, %v682
      %v702 = vadd.f32 %v522, %v655
      %v703 = vadd.f32 %v523, %v684
      %v704 = vadd.f32 %v524, %v658
      %v705 = vadd.f32 %v525, %v687
      %v706 = vadd.f32 %v526, %v660
      %v707 = vadd.f32 %v527, %v689
      %v708 = vadd.f32 %v528, %v663
      %v709 = vadd.f32 %v529, %v692
      %v710 = vadd.f32 %v530, %v665
      %v711 = vadd.f32 %v531, %v694
      %712 = vrot.lane.b32.xlu0 %v180, 112
      %v713 = vpop.permute.xlu0 %712
      %714 = vrot.lane.b32.xlu0 %v181, 112
      %v715 = vpop.permute.xlu0 %714
      %716 = vrot.lane.b32.xlu0 %v182, 112
      %v717 = vpop.permute.xlu0 %716
      %718 = vrot.lane.b32.xlu0 %v183, 112
      %v719 = vpop.permute.xlu0 %718
      %720 = vrot.lane.b32.xlu0 %v184, 112
      %v721 = vpop.permute.xlu0 %720
      %722 = vrot.lane.b32.xlu0 %v185, 112
      %v723 = vpop.permute.xlu0 %722
      %724 = vrot.lane.b32.xlu0 %v186, 112
      %v725 = vpop.permute.xlu0 %724
      %726 = vrot.lane.b32.xlu0 %v187, 112
      %v727 = vpop.permute.xlu0 %726
      %728 = vrot.lane.b32.xlu0 %v188, 112
      %v729 = vpop.permute.xlu0 %728
      %730 = vrot.lane.b32.xlu0 %v189, 112
      %v731 = vpop.permute.xlu0 %730
      %732 = vrot.lane.b32.xlu0 %v190, 112
      %v733 = vpop.permute.xlu0 %732
      %734 = vrot.lane.b32.xlu0 %v191, 112
      %v735 = vpop.permute.xlu0 %734
      %vm736 = vcmask 916480
      %v737 = vsel %vm736, %v713, %v715
      %v738 = vsel %vm736, %v715, %v717
      %v739 = vsel %vm736, %v719, %v721
      %v740 = vsel %vm736, %v721, %v723
      %v741 = vsel %vm736, %v725, %v727
      %v742 = vsel %vm736, %v727, %v729
      %v743 = vsel %vm736, %v731, %v733
      %v744 = vsel %vm736, %v733, %v735
      %v753 = vsel %vm197, %v737, 0.0
      %v754 = vsel %vm198, %v738, 0.0
      %v755 = vsel %vm197, %v739, 0.0
      %v756 = vsel %vm198, %v740, 0.0
      %v757 = vsel %vm197, %v741, 0.0
      %v758 = vsel %vm198, %v742, 0.0
      %v759 = vsel %vm197, %v743, 0.0
      %v760 = vsel %vm198, %v744, 0.0
      %s761 = scalar_lea.vmem %s1, 96
      %v762 = vld [vmem:[%s761] sm:$0xf]
      %v763 = vld [vmem:[%s761 + $0x4] sm:$0xf]
      %v764 = vld [vmem:[%s761 + $0x8] sm:$0xf]
      %v765 = vld [vmem:[%s761 + $0xc] sm:$0xf]
      %v766 = vld [vmem:[%s761 + $0x10] sm:$0xf]
      %v767 = vld [vmem:[%s761 + $0x14] sm:$0xf]
      %v768 = vld [vmem:[%s761 + $0x18] sm:$0xf]
      %v769 = vld [vmem:[%s761 + $0x1c] sm:$0xf]
      %v770 = vpack.c.bf16 %v755, %v753
      %v771 = vpack.c.bf16 %v756, %v754
      %v772 = vpack.c.bf16 %v759, %v757
      %v773 = vpack.c.bf16 %v760, %v758
      %v782 = vunpack.c.l.b16 %v762
      %v783 = vunpack.c.l.b16 %v763
      %v784 = vunpack.c.l.b16 %v764
      %v785 = vunpack.c.l.b16 %v765
      %v786 = vunpack.c.l.b16 %v766
      %v787 = vunpack.c.l.b16 %v767
      %v788 = vunpack.c.l.b16 %v768
      %v789 = vunpack.c.l.b16 %v769
      %v790 = vpack.c.b16 %v783, %v782
      %v791 = vpack.c.b16 %v785, %v784
      %v792 = vpack.c.b16 %v787, %v786
      %v793 = vpack.c.b16 %v789, %v788
      %v795 = vsel %vm297, %v790, 0
      %v798 = vsel %vm297, %v791, 0
      %v801 = vsel %vm297, %v792, 0
      %v804 = vsel %vm297, %v793, 0
      %806 = vmatpush.bf16.msra.mxu0 0
      %807 = vmatpush.bf16.msra.mxu0 0
      %808 = vmatpush.bf16.msra.mxu0 0
      %809 = vmatpush.bf16.msra.mxu0 0
      %810 = vmatpush.bf16.msra.mxu0 0
      %811 = vmatpush.bf16.msra.mxu0 0
      %812 = vmatpush.bf16.msra.mxu0 %v772
      %813 = vmatpush.bf16.msra.mxu0 %v770
      %814 = vmatmul.bf16.gmra.mxu0 %v795
      %v815 = vpop.f32.mrf.mxu0
      %v816 = vadd.f32 0.0, %v815
      %v817 = vpop.f32.mrf.mxu0
      %v818 = vadd.f32 0.0, %v817
      %819 = vmatmul.bf16.gmra.mxu0 %v798
      %v820 = vpop.f32.mrf.mxu0
      %v821 = vadd.f32 0.0, %v820
      %v822 = vpop.f32.mrf.mxu0
      %v823 = vadd.f32 0.0, %v822
      %824 = vmatmul.bf16.gmra.mxu0 %v801
      %v825 = vpop.f32.mrf.mxu0
      %v826 = vadd.f32 0.0, %v825
      %v827 = vpop.f32.mrf.mxu0
      %v828 = vadd.f32 0.0, %v827
      %829 = vmatmul.bf16.gmra.mxu0 %v804
      %v830 = vpop.f32.mrf.mxu0
      %v831 = vadd.f32 0.0, %v830
      %v832 = vpop.f32.mrf.mxu0
      %v833 = vadd.f32 0.0, %v832
      %834 = vdwg.mxu0
      %835 = vmatpush.bf16.msra.mxu0 0
      %836 = vmatpush.bf16.msra.mxu0 0
      %837 = vmatpush.bf16.msra.mxu0 0
      %838 = vmatpush.bf16.msra.mxu0 0
      %839 = vmatpush.bf16.msra.mxu0 0
      %840 = vmatpush.bf16.msra.mxu0 0
      %841 = vmatpush.bf16.msra.mxu0 %v773
      %842 = vmatpush.bf16.msra.mxu0 %v771
      %843 = vmatmul.bf16.gmra.mxu0 %v795
      %v844 = vpop.f32.mrf.mxu0
      %v845 = vadd.f32 0.0, %v844
      %v846 = vpop.f32.mrf.mxu0
      %v847 = vadd.f32 0.0, %v846
      %848 = vmatmul.bf16.gmra.mxu0 %v798
      %v849 = vpop.f32.mrf.mxu0
      %v850 = vadd.f32 0.0, %v849
      %v851 = vpop.f32.mrf.mxu0
      %v852 = vadd.f32 0.0, %v851
      %853 = vmatmul.bf16.gmra.mxu0 %v801
      %v854 = vpop.f32.mrf.mxu0
      %v855 = vadd.f32 0.0, %v854
      %v856 = vpop.f32.mrf.mxu0
      %v857 = vadd.f32 0.0, %v856
      %858 = vmatmul.bf16.gmra.mxu0 %v804
      %v859 = vpop.f32.mrf.mxu0
      %v860 = vadd.f32 0.0, %v859
      %v861 = vpop.f32.mrf.mxu0
      %v862 = vadd.f32 0.0, %v861
      %863 = vdwg.mxu0
      %v864 = vadd.f32 %v696, %v816
      %v865 = vadd.f32 %v697, %v845
      %v866 = vadd.f32 %v698, %v818
      %v867 = vadd.f32 %v699, %v847
      %v868 = vadd.f32 %v700, %v821
      %v869 = vadd.f32 %v701, %v850
      %v870 = vadd.f32 %v702, %v823
      %v871 = vadd.f32 %v703, %v852
      %v872 = vadd.f32 %v704, %v826
      %v873 = vadd.f32 %v705, %v855
      %v874 = vadd.f32 %v706, %v828
      %v875 = vadd.f32 %v707, %v857
      %v876 = vadd.f32 %v708, %v831
      %v877 = vadd.f32 %v709, %v860
      %v878 = vadd.f32 %v710, %v833
      %v879 = vadd.f32 %v711, %v862
      %s880 = scalar_lea.vmem %s1, 128
      %v881 = vld [vmem:[%s880] sm:$0xf]
      %v882 = vld [vmem:[%s880 + $0x4] sm:$0xf]
      %v883 = vld [vmem:[%s880 + $0x8] sm:$0xf]
      %v884 = vld [vmem:[%s880 + $0xc] sm:$0xf]
      %v885 = vld [vmem:[%s880 + $0x10] sm:$0xf]
      %v886 = vld [vmem:[%s880 + $0x14] sm:$0xf]
      %v887 = vld [vmem:[%s880 + $0x18] sm:$0xf]
      %v888 = vld [vmem:[%s880 + $0x1c] sm:$0xf]
      %v897 = vunpack.c.l.b16 %v881
      %v898 = vunpack.c.l.b16 %v882
      %v899 = vunpack.c.l.b16 %v883
      %v900 = vunpack.c.l.b16 %v884
      %v901 = vunpack.c.l.b16 %v885
      %v902 = vunpack.c.l.b16 %v886
      %v903 = vunpack.c.l.b16 %v887
      %v904 = vunpack.c.l.b16 %v888
      %v905 = vpack.c.b16 %v898, %v897
      %v906 = vpack.c.b16 %v900, %v899
      %v907 = vpack.c.b16 %v902, %v901
      %v908 = vpack.c.b16 %v904, %v903
      %909 = vrot.lane.b32.xlu0 %v393, 111
      %v910 = vpop.permute.xlu0 %909
      %911 = vrot.lane.b32.xlu0 %v394, 111
      %v912 = vpop.permute.xlu0 %911
      %913 = vrot.lane.b32.xlu0 %v395, 111
      %v914 = vpop.permute.xlu0 %913
      %915 = vrot.lane.b32.xlu0 %v396, 111
      %v916 = vpop.permute.xlu0 %915
      %917 = vrot.lane.b32.xlu0 %v397, 111
      %v918 = vpop.permute.xlu0 %917
      %919 = vrot.lane.b32.xlu0 %v398, 111
      %v920 = vpop.permute.xlu0 %919
      %vm921 = vcmask 908288
      %v922 = vsel %vm921, %v910, %v912
      %v923 = vsel %vm921, %v912, %v914
      %v924 = vsel %vm921, %v916, %v918
      %v925 = vsel %vm921, %v918, %v920
      %v931 = vsel %vm297, %v905, 0
      %v934 = vsel %vm297, %v906, 0
      %v937 = vsel %vm297, %v907, 0
      %v940 = vsel %vm297, %v908, 0
      %942 = vmatpush.bf16.msra.mxu0 0
      %943 = vmatpush.bf16.msra.mxu0 0
      %944 = vmatpush.bf16.msra.mxu0 0
      %945 = vmatpush.bf16.msra.mxu0 0
      %946 = vmatpush.bf16.msra.mxu0 0
      %947 = vmatpush.bf16.msra.mxu0 0
      %948 = vmatpush.bf16.msra.mxu0 %v924
      %949 = vmatpush.bf16.msra.mxu0 %v922
      %950 = vmatmul.bf16.gmra.mxu0 %v931
      %v951 = vpop.f32.mrf.mxu0
      %v952 = vadd.f32 0.0, %v951
      %v953 = vpop.f32.mrf.mxu0
      %v954 = vadd.f32 0.0, %v953
      %955 = vmatmul.bf16.gmra.mxu0 %v934
      %v956 = vpop.f32.mrf.mxu0
      %v957 = vadd.f32 0.0, %v956
      %v958 = vpop.f32.mrf.mxu0
      %v959 = vadd.f32 0.0, %v958
      %960 = vmatmul.bf16.gmra.mxu0 %v937
      %v961 = vpop.f32.mrf.mxu0
      %v962 = vadd.f32 0.0, %v961
      %v963 = vpop.f32.mrf.mxu0
      %v964 = vadd.f32 0.0, %v963
      %965 = vmatmul.bf16.gmra.mxu0 %v940
      %v966 = vpop.f32.mrf.mxu0
      %v967 = vadd.f32 0.0, %v966
      %v968 = vpop.f32.mrf.mxu0
      %v969 = vadd.f32 0.0, %v968
      %970 = vdwg.mxu0
      %971 = vmatpush.bf16.msra.mxu0 0
      %972 = vmatpush.bf16.msra.mxu0 0
      %973 = vmatpush.bf16.msra.mxu0 0
      %974 = vmatpush.bf16.msra.mxu0 0
      %975 = vmatpush.bf16.msra.mxu0 0
      %976 = vmatpush.bf16.msra.mxu0 0
      %977 = vmatpush.bf16.msra.mxu0 %v925
      %978 = vmatpush.bf16.msra.mxu0 %v923
      %979 = vmatmul.bf16.gmra.mxu0 %v931
      %v980 = vpop.f32.mrf.mxu0
      %v981 = vadd.f32 0.0, %v980
      %v982 = vpop.f32.mrf.mxu0
      %v983 = vadd.f32 0.0, %v982
      %984 = vmatmul.bf16.gmra.mxu0 %v934
      %v985 = vpop.f32.mrf.mxu0
      %v986 = vadd.f32 0.0, %v985
      %v987 = vpop.f32.mrf.mxu0
      %v988 = vadd.f32 0.0, %v987
      %989 = vmatmul.bf16.gmra.mxu0 %v937
      %v990 = vpop.f32.mrf.mxu0
      %v991 = vadd.f32 0.0, %v990
      %v992 = vpop.f32.mrf.mxu0
      %v993 = vadd.f32 0.0, %v992
      %994 = vmatmul.bf16.gmra.mxu0 %v940
      %v995 = vpop.f32.mrf.mxu0
      %v996 = vadd.f32 0.0, %v995
      %v997 = vpop.f32.mrf.mxu0
      %v998 = vadd.f32 0.0, %v997
      %999 = vdwg.mxu0
      %v1000 = vadd.f32 %v864, %v952
      %v1001 = vadd.f32 %v865, %v981
      %v1002 = vadd.f32 %v866, %v954
      %v1003 = vadd.f32 %v867, %v983
      %v1004 = vadd.f32 %v868, %v957
      %v1005 = vadd.f32 %v869, %v986
      %v1006 = vadd.f32 %v870, %v959
      %v1007 = vadd.f32 %v871, %v988
      %v1008 = vadd.f32 %v872, %v962
      %v1009 = vadd.f32 %v873, %v991
      %v1010 = vadd.f32 %v874, %v964
      %v1011 = vadd.f32 %v875, %v993
      %v1012 = vadd.f32 %v876, %v967
      %v1013 = vadd.f32 %v877, %v996
      %v1014 = vadd.f32 %v878, %v969
      %v1015 = vadd.f32 %v879, %v998
      %1016 = vrot.lane.b32.xlu0 %v180, 110
      %v1017 = vpop.permute.xlu0 %1016
      %1018 = vrot.lane.b32.xlu0 %v181, 110
      %v1019 = vpop.permute.xlu0 %1018
      %1020 = vrot.lane.b32.xlu0 %v182, 110
      %v1021 = vpop.permute.xlu0 %1020
      %1022 = vrot.lane.b32.xlu0 %v183, 110
      %v1023 = vpop.permute.xlu0 %1022
      %1024 = vrot.lane.b32.xlu0 %v184, 110
      %v1025 = vpop.permute.xlu0 %1024
      %1026 = vrot.lane.b32.xlu0 %v185, 110
      %v1027 = vpop.permute.xlu0 %1026
      %1028 = vrot.lane.b32.xlu0 %v186, 110
      %v1029 = vpop.permute.xlu0 %1028
      %1030 = vrot.lane.b32.xlu0 %v187, 110
      %v1031 = vpop.permute.xlu0 %1030
      %1032 = vrot.lane.b32.xlu0 %v188, 110
      %v1033 = vpop.permute.xlu0 %1032
      %1034 = vrot.lane.b32.xlu0 %v189, 110
      %v1035 = vpop.permute.xlu0 %1034
      %1036 = vrot.lane.b32.xlu0 %v190, 110
      %v1037 = vpop.permute.xlu0 %1036
      %1038 = vrot.lane.b32.xlu0 %v191, 110
      %v1039 = vpop.permute.xlu0 %1038
      %vm1040 = vcmask 900096
      %v1041 = vsel %vm1040, %v1017, %v1019
      %v1042 = vsel %vm1040, %v1019, %v1021
      %v1043 = vsel %vm1040, %v1023, %v1025
      %v1044 = vsel %vm1040, %v1025, %v1027
      %v1045 = vsel %vm1040, %v1029, %v1031
      %v1046 = vsel %vm1040, %v1031, %v1033
      %v1047 = vsel %vm1040, %v1035, %v1037
      %v1048 = vsel %vm1040, %v1037, %v1039
      %v1057 = vsel %vm199, %v1041, 0.0
      %v1058 = vsel %vm200, %v1042, 0.0
      %v1059 = vsel %vm199, %v1043, 0.0
      %v1060 = vsel %vm200, %v1044, 0.0
      %v1061 = vsel %vm199, %v1045, 0.0
      %v1062 = vsel %vm200, %v1046, 0.0
      %v1063 = vsel %vm199, %v1047, 0.0
      %v1064 = vsel %vm200, %v1048, 0.0
      %s1065 = scalar_lea.vmem %s1, 160
      %v1066 = vld [vmem:[%s1065] sm:$0xf]
      %v1067 = vld [vmem:[%s1065 + $0x4] sm:$0xf]
      %v1068 = vld [vmem:[%s1065 + $0x8] sm:$0xf]
      %v1069 = vld [vmem:[%s1065 + $0xc] sm:$0xf]
      %v1070 = vld [vmem:[%s1065 + $0x10] sm:$0xf]
      %v1071 = vld [vmem:[%s1065 + $0x14] sm:$0xf]
      %v1072 = vld [vmem:[%s1065 + $0x18] sm:$0xf]
      %v1073 = vld [vmem:[%s1065 + $0x1c] sm:$0xf]
      %v1074 = vpack.c.bf16 %v1059, %v1057
      %v1075 = vpack.c.bf16 %v1060, %v1058
      %v1076 = vpack.c.bf16 %v1063, %v1061
      %v1077 = vpack.c.bf16 %v1064, %v1062
      %v1086 = vunpack.c.l.b16 %v1066
      %v1087 = vunpack.c.l.b16 %v1067
      %v1088 = vunpack.c.l.b16 %v1068
      %v1089 = vunpack.c.l.b16 %v1069
      %v1090 = vunpack.c.l.b16 %v1070
      %v1091 = vunpack.c.l.b16 %v1071
      %v1092 = vunpack.c.l.b16 %v1072
      %v1093 = vunpack.c.l.b16 %v1073
      %v1094 = vpack.c.b16 %v1087, %v1086
      %v1095 = vpack.c.b16 %v1089, %v1088
      %v1096 = vpack.c.b16 %v1091, %v1090
      %v1097 = vpack.c.b16 %v1093, %v1092
      %v1099 = vsel %vm297, %v1094, 0
      %v1102 = vsel %vm297, %v1095, 0
      %v1105 = vsel %vm297, %v1096, 0
      %v1108 = vsel %vm297, %v1097, 0
      %1110 = vmatpush.bf16.msra.mxu0 0
      %1111 = vmatpush.bf16.msra.mxu0 0
      %1112 = vmatpush.bf16.msra.mxu0 0
      %1113 = vmatpush.bf16.msra.mxu0 0
      %1114 = vmatpush.bf16.msra.mxu0 0
      %1115 = vmatpush.bf16.msra.mxu0 0
      %1116 = vmatpush.bf16.msra.mxu0 %v1076
      %1117 = vmatpush.bf16.msra.mxu0 %v1074
      %1118 = vmatmul.bf16.gmra.mxu0 %v1099
      %v1119 = vpop.f32.mrf.mxu0
      %v1120 = vadd.f32 0.0, %v1119
      %v1121 = vpop.f32.mrf.mxu0
      %v1122 = vadd.f32 0.0, %v1121
      %1123 = vmatmul.bf16.gmra.mxu0 %v1102
      %v1124 = vpop.f32.mrf.mxu0
      %v1125 = vadd.f32 0.0, %v1124
      %v1126 = vpop.f32.mrf.mxu0
      %v1127 = vadd.f32 0.0, %v1126
      %1128 = vmatmul.bf16.gmra.mxu0 %v1105
      %v1129 = vpop.f32.mrf.mxu0
      %v1130 = vadd.f32 0.0, %v1129
      %v1131 = vpop.f32.mrf.mxu0
      %v1132 = vadd.f32 0.0, %v1131
      %1133 = vmatmul.bf16.gmra.mxu0 %v1108
      %v1134 = vpop.f32.mrf.mxu0
      %v1135 = vadd.f32 0.0, %v1134
      %v1136 = vpop.f32.mrf.mxu0
      %v1137 = vadd.f32 0.0, %v1136
      %1138 = vdwg.mxu0
      %1139 = vmatpush.bf16.msra.mxu0 0
      %1140 = vmatpush.bf16.msra.mxu0 0
      %1141 = vmatpush.bf16.msra.mxu0 0
      %1142 = vmatpush.bf16.msra.mxu0 0
      %1143 = vmatpush.bf16.msra.mxu0 0
      %1144 = vmatpush.bf16.msra.mxu0 0
      %1145 = vmatpush.bf16.msra.mxu0 %v1077
      %1146 = vmatpush.bf16.msra.mxu0 %v1075
      %1147 = vmatmul.bf16.gmra.mxu0 %v1099
      %v1148 = vpop.f32.mrf.mxu0
      %v1149 = vadd.f32 0.0, %v1148
      %v1150 = vpop.f32.mrf.mxu0
      %v1151 = vadd.f32 0.0, %v1150
      %1152 = vmatmul.bf16.gmra.mxu0 %v1102
      %v1153 = vpop.f32.mrf.mxu0
      %v1154 = vadd.f32 0.0, %v1153
      %v1155 = vpop.f32.mrf.mxu0
      %v1156 = vadd.f32 0.0, %v1155
      %1157 = vmatmul.bf16.gmra.mxu0 %v1105
      %v1158 = vpop.f32.mrf.mxu0
      %v1159 = vadd.f32 0.0, %v1158
      %v1160 = vpop.f32.mrf.mxu0
      %v1161 = vadd.f32 0.0, %v1160
      %1162 = vmatmul.bf16.gmra.mxu0 %v1108
      %v1163 = vpop.f32.mrf.mxu0
      %v1164 = vadd.f32 0.0, %v1163
      %v1165 = vpop.f32.mrf.mxu0
      %v1166 = vadd.f32 0.0, %v1165
      %1167 = vdwg.mxu0
      %v1168 = vadd.f32 %v1000, %v1120
      %v1169 = vadd.f32 %v1001, %v1149
      %v1170 = vadd.f32 %v1002, %v1122
      %v1171 = vadd.f32 %v1003, %v1151
      %v1172 = vadd.f32 %v1004, %v1125
      %v1173 = vadd.f32 %v1005, %v1154
      %v1174 = vadd.f32 %v1006, %v1127
      %v1175 = vadd.f32 %v1007, %v1156
      %v1176 = vadd.f32 %v1008, %v1130
      %v1177 = vadd.f32 %v1009, %v1159
      %v1178 = vadd.f32 %v1010, %v1132
      %v1179 = vadd.f32 %v1011, %v1161
      %v1180 = vadd.f32 %v1012, %v1135
      %v1181 = vadd.f32 %v1013, %v1164
      %v1182 = vadd.f32 %v1014, %v1137
      %v1183 = vadd.f32 %v1015, %v1166
      %1184 = vrot.lane.b32.xlu0 %v180, 96
      %v1185 = vpop.permute.xlu0 %1184
      %1186 = vrot.lane.b32.xlu0 %v181, 96
      %v1187 = vpop.permute.xlu0 %1186
      %1188 = vrot.lane.b32.xlu0 %v182, 96
      %v1189 = vpop.permute.xlu0 %1188
      %1190 = vrot.lane.b32.xlu0 %v183, 96
      %v1191 = vpop.permute.xlu0 %1190
      %1192 = vrot.lane.b32.xlu0 %v184, 96
      %v1193 = vpop.permute.xlu0 %1192
      %1194 = vrot.lane.b32.xlu0 %v185, 96
      %v1195 = vpop.permute.xlu0 %1194
      %1196 = vrot.lane.b32.xlu0 %v186, 96
      %v1197 = vpop.permute.xlu0 %1196
      %1198 = vrot.lane.b32.xlu0 %v187, 96
      %v1199 = vpop.permute.xlu0 %1198
      %1200 = vrot.lane.b32.xlu0 %v188, 96
      %v1201 = vpop.permute.xlu0 %1200
      %1202 = vrot.lane.b32.xlu0 %v189, 96
      %v1203 = vpop.permute.xlu0 %1202
      %1204 = vrot.lane.b32.xlu0 %v190, 96
      %v1205 = vpop.permute.xlu0 %1204
      %1206 = vrot.lane.b32.xlu0 %v191, 96
      %v1207 = vpop.permute.xlu0 %1206
      %vm1208 = vcmask 785408
      %v1209 = vsel %vm1208, %v1185, %v1187
      %v1210 = vsel %vm1208, %v1187, %v1189
      %v1211 = vsel %vm1208, %v1191, %v1193
      %v1212 = vsel %vm1208, %v1193, %v1195
      %v1213 = vsel %vm1208, %v1197, %v1199
      %v1214 = vsel %vm1208, %v1199, %v1201
      %v1215 = vsel %vm1208, %v1203, %v1205
      %v1216 = vsel %vm1208, %v1205, %v1207
      %v1225 = vsel %vm197, %v1209, 0.0
      %v1226 = vsel %vm198, %v1210, 0.0
      %v1227 = vsel %vm197, %v1211, 0.0
      %v1228 = vsel %vm198, %v1212, 0.0
      %v1229 = vsel %vm197, %v1213, 0.0
      %v1230 = vsel %vm198, %v1214, 0.0
      %v1231 = vsel %vm197, %v1215, 0.0
      %v1232 = vsel %vm198, %v1216, 0.0
      %s1233 = scalar_lea.vmem %s1, 192
      %v1234 = vld [vmem:[%s1233] sm:$0xf]
      %v1235 = vld [vmem:[%s1233 + $0x4] sm:$0xf]
      %v1236 = vld [vmem:[%s1233 + $0x8] sm:$0xf]
      %v1237 = vld [vmem:[%s1233 + $0xc] sm:$0xf]
      %v1238 = vld [vmem:[%s1233 + $0x10] sm:$0xf]
      %v1239 = vld [vmem:[%s1233 + $0x14] sm:$0xf]
      %v1240 = vld [vmem:[%s1233 + $0x18] sm:$0xf]
      %v1241 = vld [vmem:[%s1233 + $0x1c] sm:$0xf]
      %v1242 = vpack.c.bf16 %v1227, %v1225
      %v1243 = vpack.c.bf16 %v1228, %v1226
      %v1244 = vpack.c.bf16 %v1231, %v1229
      %v1245 = vpack.c.bf16 %v1232, %v1230
      %v1254 = vunpack.c.l.b16 %v1234
      %v1255 = vunpack.c.l.b16 %v1235
      %v1256 = vunpack.c.l.b16 %v1236
      %v1257 = vunpack.c.l.b16 %v1237
      %v1258 = vunpack.c.l.b16 %v1238
      %v1259 = vunpack.c.l.b16 %v1239
      %v1260 = vunpack.c.l.b16 %v1240
      %v1261 = vunpack.c.l.b16 %v1241
      %v1262 = vpack.c.b16 %v1255, %v1254
      %v1263 = vpack.c.b16 %v1257, %v1256
      %v1264 = vpack.c.b16 %v1259, %v1258
      %v1265 = vpack.c.b16 %v1261, %v1260
      %v1267 = vsel %vm297, %v1262, 0
      %v1270 = vsel %vm297, %v1263, 0
      %v1273 = vsel %vm297, %v1264, 0
      %v1276 = vsel %vm297, %v1265, 0
      %1278 = vmatpush.bf16.msra.mxu0 0
      %1279 = vmatpush.bf16.msra.mxu0 0
      %1280 = vmatpush.bf16.msra.mxu0 0
      %1281 = vmatpush.bf16.msra.mxu0 0
      %1282 = vmatpush.bf16.msra.mxu0 0
      %1283 = vmatpush.bf16.msra.mxu0 0
      %1284 = vmatpush.bf16.msra.mxu0 %v1244
      %1285 = vmatpush.bf16.msra.mxu0 %v1242
      %1286 = vmatmul.bf16.gmra.mxu0 %v1267
      %v1287 = vpop.f32.mrf.mxu0
      %v1288 = vadd.f32 0.0, %v1287
      %v1289 = vpop.f32.mrf.mxu0
      %v1290 = vadd.f32 0.0, %v1289
      %1291 = vmatmul.bf16.gmra.mxu0 %v1270
      %v1292 = vpop.f32.mrf.mxu0
      %v1293 = vadd.f32 0.0, %v1292
      %v1294 = vpop.f32.mrf.mxu0
      %v1295 = vadd.f32 0.0, %v1294
      %1296 = vmatmul.bf16.gmra.mxu0 %v1273
      %v1297 = vpop.f32.mrf.mxu0
      %v1298 = vadd.f32 0.0, %v1297
      %v1299 = vpop.f32.mrf.mxu0
      %v1300 = vadd.f32 0.0, %v1299
      %1301 = vmatmul.bf16.gmra.mxu0 %v1276
      %v1302 = vpop.f32.mrf.mxu0
      %v1303 = vadd.f32 0.0, %v1302
      %v1304 = vpop.f32.mrf.mxu0
      %v1305 = vadd.f32 0.0, %v1304
      %1306 = vdwg.mxu0
      %1307 = vmatpush.bf16.msra.mxu0 0
      %1308 = vmatpush.bf16.msra.mxu0 0
      %1309 = vmatpush.bf16.msra.mxu0 0
      %1310 = vmatpush.bf16.msra.mxu0 0
      %1311 = vmatpush.bf16.msra.mxu0 0
      %1312 = vmatpush.bf16.msra.mxu0 0
      %1313 = vmatpush.bf16.msra.mxu0 %v1245
      %1314 = vmatpush.bf16.msra.mxu0 %v1243
      %1315 = vmatmul.bf16.gmra.mxu0 %v1267
      %v1316 = vpop.f32.mrf.mxu0
      %v1317 = vadd.f32 0.0, %v1316
      %v1318 = vpop.f32.mrf.mxu0
      %v1319 = vadd.f32 0.0, %v1318
      %1320 = vmatmul.bf16.gmra.mxu0 %v1270
      %v1321 = vpop.f32.mrf.mxu0
      %v1322 = vadd.f32 0.0, %v1321
      %v1323 = vpop.f32.mrf.mxu0
      %v1324 = vadd.f32 0.0, %v1323
      %1325 = vmatmul.bf16.gmra.mxu0 %v1273
      %v1326 = vpop.f32.mrf.mxu0
      %v1327 = vadd.f32 0.0, %v1326
      %v1328 = vpop.f32.mrf.mxu0
      %v1329 = vadd.f32 0.0, %v1328
      %1330 = vmatmul.bf16.gmra.mxu0 %v1276
      %v1331 = vpop.f32.mrf.mxu0
      %v1332 = vadd.f32 0.0, %v1331
      %v1333 = vpop.f32.mrf.mxu0
      %v1334 = vadd.f32 0.0, %v1333
      %1335 = vdwg.mxu0
      %v1336 = vadd.f32 %v1168, %v1288
      %v1337 = vadd.f32 %v1169, %v1317
      %v1338 = vadd.f32 %v1170, %v1290
      %v1339 = vadd.f32 %v1171, %v1319
      %v1340 = vadd.f32 %v1172, %v1293
      %v1341 = vadd.f32 %v1173, %v1322
      %v1342 = vadd.f32 %v1174, %v1295
      %v1343 = vadd.f32 %v1175, %v1324
      %v1344 = vadd.f32 %v1176, %v1298
      %v1345 = vadd.f32 %v1177, %v1327
      %v1346 = vadd.f32 %v1178, %v1300
      %v1347 = vadd.f32 %v1179, %v1329
      %v1348 = vadd.f32 %v1180, %v1303
      %v1349 = vadd.f32 %v1181, %v1332
      %v1350 = vadd.f32 %v1182, %v1305
      %v1351 = vadd.f32 %v1183, %v1334
      %s1352 = scalar_lea.vmem %s1, 224
      %v1353 = vld [vmem:[%s1352] sm:$0xf]
      %v1354 = vld [vmem:[%s1352 + $0x4] sm:$0xf]
      %v1355 = vld [vmem:[%s1352 + $0x8] sm:$0xf]
      %v1356 = vld [vmem:[%s1352 + $0xc] sm:$0xf]
      %v1357 = vld [vmem:[%s1352 + $0x10] sm:$0xf]
      %v1358 = vld [vmem:[%s1352 + $0x14] sm:$0xf]
      %v1359 = vld [vmem:[%s1352 + $0x18] sm:$0xf]
      %v1360 = vld [vmem:[%s1352 + $0x1c] sm:$0xf]
      %v1369 = vunpack.c.l.b16 %v1353
      %v1370 = vunpack.c.l.b16 %v1354
      %v1371 = vunpack.c.l.b16 %v1355
      %v1372 = vunpack.c.l.b16 %v1356
      %v1373 = vunpack.c.l.b16 %v1357
      %v1374 = vunpack.c.l.b16 %v1358
      %v1375 = vunpack.c.l.b16 %v1359
      %v1376 = vunpack.c.l.b16 %v1360
      %v1377 = vpack.c.b16 %v1370, %v1369
      %v1378 = vpack.c.b16 %v1372, %v1371
      %v1379 = vpack.c.b16 %v1374, %v1373
      %v1380 = vpack.c.b16 %v1376, %v1375
      %1381 = vrot.lane.b32.xlu0 %v393, 95
      %v1382 = vpop.permute.xlu0 %1381
      %1383 = vrot.lane.b32.xlu0 %v394, 95
      %v1384 = vpop.permute.xlu0 %1383
      %1385 = vrot.lane.b32.xlu0 %v395, 95
      %v1386 = vpop.permute.xlu0 %1385
      %1387 = vrot.lane.b32.xlu0 %v396, 95
      %v1388 = vpop.permute.xlu0 %1387
      %1389 = vrot.lane.b32.xlu0 %v397, 95
      %v1390 = vpop.permute.xlu0 %1389
      %1391 = vrot.lane.b32.xlu0 %v398, 95
      %v1392 = vpop.permute.xlu0 %1391
      %vm1393 = vcmask 777216
      %v1394 = vsel %vm1393, %v1382, %v1384
      %v1395 = vsel %vm1393, %v1384, %v1386
      %v1396 = vsel %vm1393, %v1388, %v1390
      %v1397 = vsel %vm1393, %v1390, %v1392
      %v1403 = vsel %vm297, %v1377, 0
      %v1406 = vsel %vm297, %v1378, 0
      %v1409 = vsel %vm297, %v1379, 0
      %v1412 = vsel %vm297, %v1380, 0
      %1414 = vmatpush.bf16.msra.mxu0 0
      %1415 = vmatpush.bf16.msra.mxu0 0
      %1416 = vmatpush.bf16.msra.mxu0 0
      %1417 = vmatpush.bf16.msra.mxu0 0
      %1418 = vmatpush.bf16.msra.mxu0 0
      %1419 = vmatpush.bf16.msra.mxu0 0
      %1420 = vmatpush.bf16.msra.mxu0 %v1396
      %1421 = vmatpush.bf16.msra.mxu0 %v1394
      %1422 = vmatmul.bf16.gmra.mxu0 %v1403
      %v1423 = vpop.f32.mrf.mxu0
      %v1424 = vadd.f32 0.0, %v1423
      %v1425 = vpop.f32.mrf.mxu0
      %v1426 = vadd.f32 0.0, %v1425
      %1427 = vmatmul.bf16.gmra.mxu0 %v1406
      %v1428 = vpop.f32.mrf.mxu0
      %v1429 = vadd.f32 0.0, %v1428
      %v1430 = vpop.f32.mrf.mxu0
      %v1431 = vadd.f32 0.0, %v1430
      %1432 = vmatmul.bf16.gmra.mxu0 %v1409
      %v1433 = vpop.f32.mrf.mxu0
      %v1434 = vadd.f32 0.0, %v1433
      %v1435 = vpop.f32.mrf.mxu0
      %v1436 = vadd.f32 0.0, %v1435
      %1437 = vmatmul.bf16.gmra.mxu0 %v1412
      %v1438 = vpop.f32.mrf.mxu0
      %v1439 = vadd.f32 0.0, %v1438
      %v1440 = vpop.f32.mrf.mxu0
      %v1441 = vadd.f32 0.0, %v1440
      %1442 = vdwg.mxu0
      %1443 = vmatpush.bf16.msra.mxu0 0
      %1444 = vmatpush.bf16.msra.mxu0 0
      %1445 = vmatpush.bf16.msra.mxu0 0
      %1446 = vmatpush.bf16.msra.mxu0 0
      %1447 = vmatpush.bf16.msra.mxu0 0
      %1448 = vmatpush.bf16.msra.mxu0 0
      %1449 = vmatpush.bf16.msra.mxu0 %v1397
      %1450 = vmatpush.bf16.msra.mxu0 %v1395
      %1451 = vmatmul.bf16.gmra.mxu0 %v1403
      %v1452 = vpop.f32.mrf.mxu0
      %v1453 = vadd.f32 0.0, %v1452
      %v1454 = vpop.f32.mrf.mxu0
      %v1455 = vadd.f32 0.0, %v1454
      %1456 = vmatmul.bf16.gmra.mxu0 %v1406
      %v1457 = vpop.f32.mrf.mxu0
      %v1458 = vadd.f32 0.0, %v1457
      %v1459 = vpop.f32.mrf.mxu0
      %v1460 = vadd.f32 0.0, %v1459
      %1461 = vmatmul.bf16.gmra.mxu0 %v1409
      %v1462 = vpop.f32.mrf.mxu0
      %v1463 = vadd.f32 0.0, %v1462
      %v1464 = vpop.f32.mrf.mxu0
      %v1465 = vadd.f32 0.0, %v1464
      %1466 = vmatmul.bf16.gmra.mxu0 %v1412
      %v1467 = vpop.f32.mrf.mxu0
      %v1468 = vadd.f32 0.0, %v1467
      %v1469 = vpop.f32.mrf.mxu0
      %v1470 = vadd.f32 0.0, %v1469
      %1471 = vdwg.mxu0
      %v1472 = vadd.f32 %v1336, %v1424
      %v1473 = vadd.f32 %v1337, %v1453
      %v1474 = vadd.f32 %v1338, %v1426
      %v1475 = vadd.f32 %v1339, %v1455
      %v1476 = vadd.f32 %v1340, %v1429
      %v1477 = vadd.f32 %v1341, %v1458
      %v1478 = vadd.f32 %v1342, %v1431
      %v1479 = vadd.f32 %v1343, %v1460
      %v1480 = vadd.f32 %v1344, %v1434
      %v1481 = vadd.f32 %v1345, %v1463
      %v1482 = vadd.f32 %v1346, %v1436
      %v1483 = vadd.f32 %v1347, %v1465
      %v1484 = vadd.f32 %v1348, %v1439
      %v1485 = vadd.f32 %v1349, %v1468
      %v1486 = vadd.f32 %v1350, %v1441
      %v1487 = vadd.f32 %v1351, %v1470
      %1488 = vrot.lane.b32.xlu0 %v180, 94
      %v1489 = vpop.permute.xlu0 %1488
      %1490 = vrot.lane.b32.xlu0 %v181, 94
      %v1491 = vpop.permute.xlu0 %1490
      %1492 = vrot.lane.b32.xlu0 %v182, 94
      %v1493 = vpop.permute.xlu0 %1492
      %1494 = vrot.lane.b32.xlu0 %v183, 94
      %v1495 = vpop.permute.xlu0 %1494
      %1496 = vrot.lane.b32.xlu0 %v184, 94
      %v1497 = vpop.permute.xlu0 %1496
      %1498 = vrot.lane.b32.xlu0 %v185, 94
      %v1499 = vpop.permute.xlu0 %1498
      %1500 = vrot.lane.b32.xlu0 %v186, 94
      %v1501 = vpop.permute.xlu0 %1500
      %1502 = vrot.lane.b32.xlu0 %v187, 94
      %v1503 = vpop.permute.xlu0 %1502
      %1504 = vrot.lane.b32.xlu0 %v188, 94
      %v1505 = vpop.permute.xlu0 %1504
      %1506 = vrot.lane.b32.xlu0 %v189, 94
      %v1507 = vpop.permute.xlu0 %1506
      %1508 = vrot.lane.b32.xlu0 %v190, 94
      %v1509 = vpop.permute.xlu0 %1508
      %1510 = vrot.lane.b32.xlu0 %v191, 94
      %v1511 = vpop.permute.xlu0 %1510
      %vm1512 = vcmask 769024
      %v1513 = vsel %vm1512, %v1489, %v1491
      %v1514 = vsel %vm1512, %v1491, %v1493
      %v1515 = vsel %vm1512, %v1495, %v1497
      %v1516 = vsel %vm1512, %v1497, %v1499
      %v1517 = vsel %vm1512, %v1501, %v1503
      %v1518 = vsel %vm1512, %v1503, %v1505
      %v1519 = vsel %vm1512, %v1507, %v1509
      %v1520 = vsel %vm1512, %v1509, %v1511
      %v1529 = vsel %vm199, %v1513, 0.0
      %v1530 = vsel %vm200, %v1514, 0.0
      %v1531 = vsel %vm199, %v1515, 0.0
      %v1532 = vsel %vm200, %v1516, 0.0
      %v1533 = vsel %vm199, %v1517, 0.0
      %v1534 = vsel %vm200, %v1518, 0.0
      %v1535 = vsel %vm199, %v1519, 0.0
      %v1536 = vsel %vm200, %v1520, 0.0
      %s1537 = scalar_lea.vmem %s1, 256
      %v1538 = vld [vmem:[%s1537] sm:$0xf]
      %v1539 = vld [vmem:[%s1537 + $0x4] sm:$0xf]
      %v1540 = vld [vmem:[%s1537 + $0x8] sm:$0xf]
      %v1541 = vld [vmem:[%s1537 + $0xc] sm:$0xf]
      %v1542 = vld [vmem:[%s1537 + $0x10] sm:$0xf]
      %v1543 = vld [vmem:[%s1537 + $0x14] sm:$0xf]
      %v1544 = vld [vmem:[%s1537 + $0x18] sm:$0xf]
      %v1545 = vld [vmem:[%s1537 + $0x1c] sm:$0xf]
      %v1546 = vpack.c.bf16 %v1531, %v1529
      %v1547 = vpack.c.bf16 %v1532, %v1530
      %v1548 = vpack.c.bf16 %v1535, %v1533
      %v1549 = vpack.c.bf16 %v1536, %v1534
      %v1558 = vunpack.c.l.b16 %v1538
      %v1559 = vunpack.c.l.b16 %v1539
      %v1560 = vunpack.c.l.b16 %v1540
      %v1561 = vunpack.c.l.b16 %v1541
      %v1562 = vunpack.c.l.b16 %v1542
      %v1563 = vunpack.c.l.b16 %v1543
      %v1564 = vunpack.c.l.b16 %v1544
      %v1565 = vunpack.c.l.b16 %v1545
      %v1566 = vpack.c.b16 %v1559, %v1558
      %v1567 = vpack.c.b16 %v1561, %v1560
      %v1568 = vpack.c.b16 %v1563, %v1562
      %v1569 = vpack.c.b16 %v1565, %v1564
      %v1571 = vsel %vm297, %v1566, 0
      %v1574 = vsel %vm297, %v1567, 0
      %v1577 = vsel %vm297, %v1568, 0
      %v1580 = vsel %vm297, %v1569, 0
      %1582 = vmatpush.bf16.msra.mxu0 0
      %1583 = vmatpush.bf16.msra.mxu0 0
      %1584 = vmatpush.bf16.msra.mxu0 0
      %1585 = vmatpush.bf16.msra.mxu0 0
      %1586 = vmatpush.bf16.msra.mxu0 0
      %1587 = vmatpush.bf16.msra.mxu0 0
      %1588 = vmatpush.bf16.msra.mxu0 %v1548
      %1589 = vmatpush.bf16.msra.mxu0 %v1546
      %1590 = vmatmul.bf16.gmra.mxu0 %v1571
      %v1591 = vpop.f32.mrf.mxu0
      %v1592 = vadd.f32 0.0, %v1591
      %v1593 = vpop.f32.mrf.mxu0
      %v1594 = vadd.f32 0.0, %v1593
      %1595 = vmatmul.bf16.gmra.mxu0 %v1574
      %v1596 = vpop.f32.mrf.mxu0
      %v1597 = vadd.f32 0.0, %v1596
      %v1598 = vpop.f32.mrf.mxu0
      %v1599 = vadd.f32 0.0, %v1598
      %1600 = vmatmul.bf16.gmra.mxu0 %v1577
      %v1601 = vpop.f32.mrf.mxu0
      %v1602 = vadd.f32 0.0, %v1601
      %v1603 = vpop.f32.mrf.mxu0
      %v1604 = vadd.f32 0.0, %v1603
      %1605 = vmatmul.bf16.gmra.mxu0 %v1580
      %v1606 = vpop.f32.mrf.mxu0
      %v1607 = vadd.f32 0.0, %v1606
      %v1608 = vpop.f32.mrf.mxu0
      %v1609 = vadd.f32 0.0, %v1608
      %1610 = vdwg.mxu0
      %1611 = vmatpush.bf16.msra.mxu0 0
      %1612 = vmatpush.bf16.msra.mxu0 0
      %1613 = vmatpush.bf16.msra.mxu0 0
      %1614 = vmatpush.bf16.msra.mxu0 0
      %1615 = vmatpush.bf16.msra.mxu0 0
      %1616 = vmatpush.bf16.msra.mxu0 0
      %1617 = vmatpush.bf16.msra.mxu0 %v1549
      %1618 = vmatpush.bf16.msra.mxu0 %v1547
      %1619 = vmatmul.bf16.gmra.mxu0 %v1571
      %v1620 = vpop.f32.mrf.mxu0
      %v1621 = vadd.f32 0.0, %v1620
      %v1622 = vpop.f32.mrf.mxu0
      %v1623 = vadd.f32 0.0, %v1622
      %1624 = vmatmul.bf16.gmra.mxu0 %v1574
      %v1625 = vpop.f32.mrf.mxu0
      %v1626 = vadd.f32 0.0, %v1625
      %v1627 = vpop.f32.mrf.mxu0
      %v1628 = vadd.f32 0.0, %v1627
      %1629 = vmatmul.bf16.gmra.mxu0 %v1577
      %v1630 = vpop.f32.mrf.mxu0
      %v1631 = vadd.f32 0.0, %v1630
      %v1632 = vpop.f32.mrf.mxu0
      %v1633 = vadd.f32 0.0, %v1632
      %1634 = vmatmul.bf16.gmra.mxu0 %v1580
      %v1635 = vpop.f32.mrf.mxu0
      %v1636 = vadd.f32 0.0, %v1635
      %v1637 = vpop.f32.mrf.mxu0
      %v1638 = vadd.f32 0.0, %v1637
      %1639 = vdwg.mxu0
      %v1640 = vadd.f32 %v1472, %v1592
      %v1641 = vadd.f32 %v1473, %v1621
      %v1642 = vadd.f32 %v1474, %v1594
      %v1643 = vadd.f32 %v1475, %v1623
      %v1644 = vadd.f32 %v1476, %v1597
      %v1645 = vadd.f32 %v1477, %v1626
      %v1646 = vadd.f32 %v1478, %v1599
      %v1647 = vadd.f32 %v1479, %v1628
      %v1648 = vadd.f32 %v1480, %v1602
      %v1649 = vadd.f32 %v1481, %v1631
      %v1650 = vadd.f32 %v1482, %v1604
      %v1651 = vadd.f32 %v1483, %v1633
      %v1652 = vadd.f32 %v1484, %v1607
      %v1653 = vadd.f32 %v1485, %v1636
      %v1654 = vadd.f32 %v1486, %v1609
      %v1655 = vadd.f32 %v1487, %v1638
      %vm1656 = vcmp.gt.f32.partialorder %v1640, 0.0
      %vm1657 = vcmp.gt.f32.partialorder %v1641, 0.0
      %vm1658 = vcmp.gt.f32.partialorder %v1642, 0.0
      %vm1659 = vcmp.gt.f32.partialorder %v1643, 0.0
      %vm1660 = vcmp.gt.f32.partialorder %v1644, 0.0
      %vm1661 = vcmp.gt.f32.partialorder %v1645, 0.0
      %vm1662 = vcmp.gt.f32.partialorder %v1646, 0.0
      %vm1663 = vcmp.gt.f32.partialorder %v1647, 0.0
      %vm1664 = vcmp.gt.f32.partialorder %v1648, 0.0
      %vm1665 = vcmp.gt.f32.partialorder %v1649, 0.0
      %vm1666 = vcmp.gt.f32.partialorder %v1650, 0.0
      %vm1667 = vcmp.gt.f32.partialorder %v1651, 0.0
      %vm1668 = vcmp.gt.f32.partialorder %v1652, 0.0
      %vm1669 = vcmp.gt.f32.partialorder %v1653, 0.0
      %vm1670 = vcmp.gt.f32.partialorder %v1654, 0.0
      %vm1671 = vcmp.gt.f32.partialorder %v1655, 0.0
      %v1672 = vmin.f32 %v1640, 0.0
      %v1673 = vmin.f32 %v1641, 0.0
      %v1674 = vmin.f32 %v1642, 0.0
      %v1675 = vmin.f32 %v1643, 0.0
      %v1676 = vmin.f32 %v1644, 0.0
      %v1677 = vmin.f32 %v1645, 0.0
      %v1678 = vmin.f32 %v1646, 0.0
      %v1679 = vmin.f32 %v1647, 0.0
      %v1680 = vmin.f32 %v1648, 0.0
      %v1681 = vmin.f32 %v1649, 0.0
      %v1682 = vmin.f32 %v1650, 0.0
      %v1683 = vmin.f32 %v1651, 0.0
      %v1684 = vmin.f32 %v1652, 0.0
      %v1685 = vmin.f32 %v1653, 0.0
      %v1686 = vmin.f32 %v1654, 0.0
      %v1687 = vmin.f32 %v1655, 0.0
      %v1688 = vmul.f32 %v1672, 1.442695
      %v1689 = vpow.pop %v1688
      %v1690 = vmul.f32 %v1673, 1.442695
      %v1691 = vpow.pop %v1690
      %v1692 = vmul.f32 %v1674, 1.442695
      %v1693 = vpow.pop %v1692
      %v1694 = vmul.f32 %v1675, 1.442695
      %v1695 = vpow.pop %v1694
      %v1696 = vmul.f32 %v1676, 1.442695
      %v1697 = vpow.pop %v1696
      %v1698 = vmul.f32 %v1677, 1.442695
      %v1699 = vpow.pop %v1698
      %v1700 = vmul.f32 %v1678, 1.442695
      %v1701 = vpow.pop %v1700
      %v1702 = vmul.f32 %v1679, 1.442695
      %v1703 = vpow.pop %v1702
      %v1704 = vmul.f32 %v1680, 1.442695
      %v1705 = vpow.pop %v1704
      %v1706 = vmul.f32 %v1681, 1.442695
      %v1707 = vpow.pop %v1706
      %v1708 = vmul.f32 %v1682, 1.442695
      %v1709 = vpow.pop %v1708
      %v1710 = vmul.f32 %v1683, 1.442695
      %v1711 = vpow.pop %v1710
      %v1712 = vmul.f32 %v1684, 1.442695
      %v1713 = vpow.pop %v1712
      %v1714 = vmul.f32 %v1685, 1.442695
      %v1715 = vpow.pop %v1714
      %v1716 = vmul.f32 %v1686, 1.442695
      %v1717 = vpow.pop %v1716
      %v1718 = vmul.f32 %v1687, 1.442695
      %v1719 = vpow.pop %v1718
      %v1720 = vsub.f32 %v1689, 1.0
      %v1721 = vsub.f32 %v1691, 1.0
      %v1722 = vsub.f32 %v1693, 1.0
      %v1723 = vsub.f32 %v1695, 1.0
      %v1724 = vsub.f32 %v1697, 1.0
      %v1725 = vsub.f32 %v1699, 1.0
      %v1726 = vsub.f32 %v1701, 1.0
      %v1727 = vsub.f32 %v1703, 1.0
      %v1728 = vsub.f32 %v1705, 1.0
      %v1729 = vsub.f32 %v1707, 1.0
      %v1730 = vsub.f32 %v1709, 1.0
      %v1731 = vsub.f32 %v1711, 1.0
      %v1732 = vsub.f32 %v1713, 1.0
      %v1733 = vsub.f32 %v1715, 1.0
      %v1734 = vsub.f32 %v1717, 1.0
      %v1735 = vsub.f32 %v1719, 1.0
      %v1736 = vsel %vm1656, %v1640, %v1720
      %v1737 = vsel %vm1657, %v1641, %v1721
      %v1738 = vsel %vm1658, %v1642, %v1722
      %v1739 = vsel %vm1659, %v1643, %v1723
      %v1740 = vsel %vm1660, %v1644, %v1724
      %v1741 = vsel %vm1661, %v1645, %v1725
      %v1742 = vsel %vm1662, %v1646, %v1726
      %v1743 = vsel %vm1663, %v1647, %v1727
      %v1744 = vsel %vm1664, %v1648, %v1728
      %v1745 = vsel %vm1665, %v1649, %v1729
      %v1746 = vsel %vm1666, %v1650, %v1730
      %v1747 = vsel %vm1667, %v1651, %v1731
      %v1748 = vsel %vm1668, %v1652, %v1732
      %v1749 = vsel %vm1669, %v1653, %v1733
      %v1750 = vsel %vm1670, %v1654, %v1734
      %v1751 = vsel %vm1671, %v1655, %v1735
      %v1752 = vadd.f32 %v1736, %v1737
      %v1753 = vadd.f32 %v1752, %v1738
      %v1754 = vadd.f32 %v1753, %v1739
      %v1755 = vadd.f32 %v1754, %v1740
      %v1756 = vadd.f32 %v1755, %v1741
      %v1757 = vadd.f32 %v1756, %v1742
      %v1758 = vadd.f32 %v1757, %v1743
      %v1759 = vadd.f32 %v1758, %v1744
      %v1760 = vadd.f32 %v1759, %v1745
      %v1761 = vadd.f32 %v1760, %v1746
      %v1762 = vadd.f32 %v1761, %v1747
      %v1763 = vadd.f32 %v1762, %v1748
      %v1764 = vadd.f32 %v1763, %v1749
      %v1765 = vadd.f32 %v1764, %v1750
      %v1766 = vadd.f32 %v1765, %v1751
      %1767 = vadd.xlane.f32.xlu0 %v1766
      %v1768 = vpop.xlane.xlu0 %1767
      %v1769 = vrot.slane %v1768, 4
      %v1770 = vadd.f32 %v1768, %v1769
      %v1771 = vrot.slane %v1770, 2
      %v1772 = vadd.f32 %v1770, %v1771
      %v1773 = vrot.slane %v1772, 1
      %v1774 = vadd.f32 %v1772, %v1773
      %s1775 = vtos %v1774
      %v1776 = vstv %s1775
      %v1777 = vrcp.pop 16384.0
      %v1778 = vmul.f32 16384.0, %v1777
      %v1779 = vsub.f32 1.0, %v1778
      %v1780 = vmul.f32 %v1777, %v1779
      %v1781 = vadd.f32 %v1777, %v1780
      %vm1782 = vweird.f32 %v1777
      %v1783 = vsel %vm1782, %v1777, %v1781
      %v1784 = vmul.f32 %v1776, %v1783
      %v1785 = vsub.f32 %v1736, %v1784
      %v1786 = vsub.f32 %v1737, %v1784
      %v1787 = vsub.f32 %v1738, %v1784
      %v1788 = vsub.f32 %v1739, %v1784
      %v1789 = vsub.f32 %v1740, %v1784
      %v1790 = vsub.f32 %v1741, %v1784
      %v1791 = vsub.f32 %v1742, %v1784
      %v1792 = vsub.f32 %v1743, %v1784
      %v1793 = vsub.f32 %v1744, %v1784
      %v1794 = vsub.f32 %v1745, %v1784
      %v1795 = vsub.f32 %v1746, %v1784
      %v1796 = vsub.f32 %v1747, %v1784
      %v1797 = vsub.f32 %v1748, %v1784
      %v1798 = vsub.f32 %v1749, %v1784
      %v1799 = vsub.f32 %v1750, %v1784
      %v1800 = vsub.f32 %v1751, %v1784
      %v1801 = vmul.f32 %v1785, %v1785
      %v1802 = vmul.f32 %v1786, %v1786
      %v1803 = vmul.f32 %v1787, %v1787
      %v1804 = vmul.f32 %v1788, %v1788
      %v1805 = vmul.f32 %v1789, %v1789
      %v1806 = vmul.f32 %v1790, %v1790
      %v1807 = vmul.f32 %v1791, %v1791
      %v1808 = vmul.f32 %v1792, %v1792
      %v1809 = vmul.f32 %v1793, %v1793
      %v1810 = vmul.f32 %v1794, %v1794
      %v1811 = vmul.f32 %v1795, %v1795
      %v1812 = vmul.f32 %v1796, %v1796
      %v1813 = vmul.f32 %v1797, %v1797
      %v1814 = vmul.f32 %v1798, %v1798
      %v1815 = vmul.f32 %v1799, %v1799
      %v1816 = vmul.f32 %v1800, %v1800
      %v1817 = vadd.f32 %v1801, %v1802
      %v1818 = vadd.f32 %v1817, %v1803
      %v1819 = vadd.f32 %v1818, %v1804
      %v1820 = vadd.f32 %v1819, %v1805
      %v1821 = vadd.f32 %v1820, %v1806
      %v1822 = vadd.f32 %v1821, %v1807
      %v1823 = vadd.f32 %v1822, %v1808
      %v1824 = vadd.f32 %v1823, %v1809
      %v1825 = vadd.f32 %v1824, %v1810
      %v1826 = vadd.f32 %v1825, %v1811
      %v1827 = vadd.f32 %v1826, %v1812
      %v1828 = vadd.f32 %v1827, %v1813
      %v1829 = vadd.f32 %v1828, %v1814
      %v1830 = vadd.f32 %v1829, %v1815
      %v1831 = vadd.f32 %v1830, %v1816
      %1832 = vadd.xlane.f32.xlu0 %v1831
      %v1833 = vpop.xlane.xlu0 %1832
      %v1834 = vrot.slane %v1833, 4
      %v1835 = vadd.f32 %v1833, %v1834
      %v1836 = vrot.slane %v1835, 2
      %v1837 = vadd.f32 %v1835, %v1836
      %v1838 = vrot.slane %v1837, 1
      %v1839 = vadd.f32 %v1837, %v1838
      %s1840 = vtos %v1839
      %v1841 = vstv %s1840
      %v1842 = vmul.f32 %v1841, %v1783
      %v1843 = vadd.f32 %v1842, 1e-05
      %v1844 = vrsqrt.pop %v1843
      %v1845 = vmul.f32 %v1844, %v1843
      %v1846 = vmul.f32 %v1845, %v1844
      %v1847 = vmul.f32 0.5, %v1846
      %v1848 = vsub.f32 1.5, %v1847
      %v1849 = vmul.f32 %v1844, %v1848
      %vm1850 = vweird.f32 %v1843
      %vm1851 = vweird.f32 %v1844
      %vm1852 = vmor %vm1850, %vm1851
      %v1853 = vsel %vm1852, %v1844, %v1849
      %v1854 = vmul.f32 %v1785, %v1853
      %v1855 = vmul.f32 %v1786, %v1853
      %v1856 = vmul.f32 %v1787, %v1853
      %v1857 = vmul.f32 %v1788, %v1853
      %v1858 = vmul.f32 %v1789, %v1853
      %v1859 = vmul.f32 %v1790, %v1853
      %v1860 = vmul.f32 %v1791, %v1853
      %v1861 = vmul.f32 %v1792, %v1853
      %v1862 = vmul.f32 %v1793, %v1853
      %v1863 = vmul.f32 %v1794, %v1853
      %v1864 = vmul.f32 %v1795, %v1853
      %v1865 = vmul.f32 %v1796, %v1853
      %v1866 = vmul.f32 %v1797, %v1853
      %v1867 = vmul.f32 %v1798, %v1853
      %v1868 = vmul.f32 %v1799, %v1853
      %v1869 = vmul.f32 %v1800, %v1853
      %v1870 = vpack.c.bf16 %v1855, %v1854
      %v1871 = vpack.c.bf16 %v1857, %v1856
      %v1872 = vpack.c.bf16 %v1859, %v1858
      %v1873 = vpack.c.bf16 %v1861, %v1860
      %v1874 = vpack.c.bf16 %v1863, %v1862
      %v1875 = vpack.c.bf16 %v1865, %v1864
      %v1876 = vpack.c.bf16 %v1867, %v1866
      %v1877 = vpack.c.bf16 %v1869, %v1868
      %1878 = vst [vmem:[%s170] sm:$0xff] %v1870
      %1879 = vst [vmem:[%s170 + $0x8] sm:$0xff] %v1871
      %1880 = vst [vmem:[%s170 + $0x10] sm:$0xff] %v1872
      %1881 = vst [vmem:[%s170 + $0x18] sm:$0xff] %v1873
      %1882 = vst [vmem:[%s170 + $0x20] sm:$0xff] %v1874
      %1883 = vst [vmem:[%s170 + $0x28] sm:$0xff] %v1875
      %1884 = vst [vmem:[%s170 + $0x30] sm:$0xff] %v1876
      %1885 = vst [vmem:[%s170 + $0x38] sm:$0xff] %v1877
      %p1886 = scmp.lt.s32.totalorder %s14, 1
      %s1887 = scalar_select %p1886, %s14, 1
      %s1888 = smul.addr %s1887, 16
      %s1889 = smul.addr %s1888, 4
      %s1890 = scalar_lea.vmem %s3, %s1889
      // Predicated region
      $region33: #{image_decoder.6} parent=31 // pred_check
        %p1891 = pneg %p100
      $region34: #{image_decoder.6} parent=31 // pred_check_branch
        %1893 = sbr.rel (%p1891) target = $region36
      $region35: #{image_decoder.6} parent=31 // pred_region
        _
      $region36: #{image_decoder.6} parent=31 // pred_fallthru
        _
    $region32: #{image_decoder.6} parent=5 // pred_fallthru
      _
    %p1894 = scmp.le.s32.totalorder 2, %s9
    // Predicated region
    $region37: #{image_decoder.6} parent=5 // pred_check
      %p1895 = pneg %p1894
    $region38: #{image_decoder.6} parent=5 // pred_check_branch
      %1897 = sbr.rel (%p1895) target = $region40
    $region39: #{image_decoder.6} parent=5 // pred_region
      %s1898 = ssub.s32 %s9, 2
      // Predicated region
      $region41: #{image_decoder.6} parent=39 // pred_check
        %p1899 = pneg %p106
      $region42: #{image_decoder.6} parent=39 // pred_check_branch
        %1901 = sbr.rel (%p1899) target = $region44
      $region43: #{image_decoder.6} parent=39 // pred_region
        %p1902 = scmp.lt.s32.totalorder %s15, 1
        %s1903 = scalar_select %p1902, %s15, 1
        %s1904 = smul.addr %s1903, 16
        %s1905 = smul.addr %s1904, 4
        %s1906 = scalar_lea.vmem %s3, %s1905
      $region44: #{image_decoder.6} parent=39 // pred_fallthru
        _
    $region40: #{image_decoder.6} parent=5 // pred_fallthru
      _
  $region6: #{image_decoder.6} parent=0 // loop_footer
    %s13 = sadd.s32 1, %s9
  $region7: #{image_decoder.6} parent=0 // loop_footer_branch
    %8 = sbr.rel target = $region3
  $region8: #{image_decoder.6} parent=0 // loop_exit
    _

// kernel: image_decoder.7
$region0: #{image_decoder.7}
  #allocation0 [shape = 'u32[]', space=smem, size = 0x4, offset = 0x4, fixed_abs, tag = 'smem constant byte address 0x4 - core index']
  #allocation1 [shape = 'u32[72,128]{1,0:T(1,128)}', space=vmem, size = 0x9000, scoped, tag = 'internal scratch']
  %s0 = inlined_call_operand.vmem [shape: bf16[2,16,1156], index: 0, kind: input, shape index: {}]
  %s1 = inlined_call_operand.vmem [shape: bf16[25,4,16], index: 1, kind: input, shape index: {}]
  %s2 = inlined_call_operand.vmem [shape: f32[4,1], index: 2, kind: input, shape index: {}]
  %s3 = inlined_call_operand.vmem [shape: f32[2,4,1024], index: 3, kind: output, shape index: {}]
  %s4 = sld [smem:[#allocation0]]
  $region45: #{image_decoder.7} parent=0
    _
  %s6 = ssub.s32 1, %s4
  %s7 = scalar_select 0, %s6, %s4
  loop: start=0, step=1, limit=4
  $region2: #{image_decoder.7} parent=0 // loop_pre_header
    _
  $region3: #{image_decoder.7} parent=0 // loop_header
    %s9 = sphi 0, %s13
    %p10 = scmp.ge.s32.totalorder %s9, 4
    %s19 = sphi 0, %s21
    %s22 = sphi 0, %s19
    %s23 = sphi 0, %s22
    %s39 = sphi 0, %s23
    %s43 = sphi 0, %s43
    %s45 = sphi 0, %s43
    %s46 = sphi 0, %s45
    %s60 = sphi 0, %s46
    %s64 = sphi 0, %s64
    %s66 = sphi 0, %s64
    %s67 = sphi 0, %s66
    %s81 = sphi 0, %s67
    %s87 = sphi 0, %s89
    %s90 = sphi 0, %s87
    %s91 = sphi 0, %s90
    %s107 = sphi 0, %s91
  $region4: #{image_decoder.7} parent=0 // loop_header_branch
    %12 = sbr.rel (%p10) target = $region8
  $region5: #{image_decoder.7} parent=0 // loop_body
    %s14 = ssub.s32 %s9, 1
    %s15 = ssub.s32 %s9, 2
    %s16 = sadd.s32 %s9, 1
    %s17 = ssub.s32 %s9, %s16
    %p18 = scmp.eq.s32.totalorder %s17, 0
    %s20 = sadd.s32 %s19, 1
    %s21 = scalar_select %p18, %s19, %s20
    %p24 = pneg %p18
    %p25 = scmp.eq.s32.totalorder %s9, 1
    %p26 = por %p24, %p25
    %p27 = scmp.ne.s32.totalorder %s19, %s22
    %p28 = scmp.eq.s32.totalorder %s9, 0
    %p29 = por %p27, %p28
    %p30 = scmp.ne.s32.totalorder %s19, %s22
    %p31 = scmp.eq.s32.totalorder %s14, 1
    %p32 = por %p30, %p31
    %p33 = scmp.ne.s32.totalorder %s22, %s23
    %p34 = scmp.eq.s32.totalorder %s14, 0
    %p35 = por %p33, %p34
    %p36 = scmp.ne.s32.totalorder %s22, %s23
    %p37 = scmp.eq.s32.totalorder %s15, 1
    %p38 = por %p36, %p37
    %p40 = scmp.ne.s32.totalorder %s23, %s39
    %p41 = scmp.eq.s32.totalorder %s15, 0
    %p42 = por %p40, %p41
    %s44 = sadd.s32 %s43, 1
    %p47 = scmp.eq.s32.totalorder %s9, 1
    %p48 = scmp.ne.s32.totalorder %s43, %s45
    %p49 = scmp.eq.s32.totalorder %s9, 0
    %p50 = por %p48, %p49
    %p51 = scmp.ne.s32.totalorder %s43, %s45
    %p52 = scmp.eq.s32.totalorder %s14, 1
    %p53 = por %p51, %p52
    %p54 = scmp.ne.s32.totalorder %s45, %s46
    %p55 = scmp.eq.s32.totalorder %s14, 0
    %p56 = por %p54, %p55
    %p57 = scmp.ne.s32.totalorder %s45, %s46
    %p58 = scmp.eq.s32.totalorder %s15, 1
    %p59 = por %p57, %p58
    %p61 = scmp.ne.s32.totalorder %s46, %s60
    %p62 = scmp.eq.s32.totalorder %s15, 0
    %p63 = por %p61, %p62
    %s65 = sadd.s32 %s64, 1
    %p68 = scmp.eq.s32.totalorder %s9, 1
    %p69 = scmp.ne.s32.totalorder %s64, %s66
    %p70 = scmp.eq.s32.totalorder %s9, 0
    %p71 = por %p69, %p70
    %p72 = scmp.ne.s32.totalorder %s64, %s66
    %p73 = scmp.eq.s32.totalorder %s14, 1
    %p74 = por %p72, %p73
    %p75 = scmp.ne.s32.totalorder %s66, %s67
    %p76 = scmp.eq.s32.totalorder %s14, 0
    %p77 = por %p75, %p76
    %p78 = scmp.ne.s32.totalorder %s66, %s67
    %p79 = scmp.eq.s32.totalorder %s15, 1
    %p80 = por %p78, %p79
    %p82 = scmp.ne.s32.totalorder %s67, %s81
    %p83 = scmp.eq.s32.totalorder %s15, 0
    %p84 = por %p82, %p83
    %s85 = ssub.s32 %s9, %s16
    %p86 = scmp.eq.s32.totalorder %s85, 0
    %s88 = sadd.s32 %s87, 1
    %s89 = scalar_select %p86, %s87, %s88
    %p92 = pneg %p86
    %p93 = scmp.eq.s32.totalorder %s9, 1
    %p94 = por %p92, %p93
    %p95 = scmp.ne.s32.totalorder %s87, %s90
    %p96 = scmp.eq.s32.totalorder %s9, 0
    %p97 = por %p95, %p96
    %p98 = scmp.ne.s32.totalorder %s87, %s90
    %p99 = scmp.eq.s32.totalorder %s14, 1
    %p100 = por %p98, %p99
    %p101 = scmp.ne.s32.totalorder %s90, %s91
    %p102 = scmp.eq.s32.totalorder %s14, 0
    %p103 = por %p101, %p102
    %p104 = scmp.ne.s32.totalorder %s90, %s91
    %p105 = scmp.eq.s32.totalorder %s15, 1
    %p106 = por %p104, %p105
    %p108 = scmp.ne.s32.totalorder %s91, %s107
    %p109 = scmp.eq.s32.totalorder %s15, 0
    %p110 = por %p108, %p109
    %p111 = scmp.le.s32.totalorder 1, %s9
    %p112 = scmp.lt.s32.totalorder %s9, 3
    %p113 = pnand %p111, %p112
    %p114 = pneg %p113
    // Predicated region
    $region9: #{image_decoder.7} parent=5 // pred_check
      _
    $region10: #{image_decoder.7} parent=5 // pred_check_branch
      %116 = sbr.rel (%p113) target = $region12
    $region11: #{image_decoder.7} parent=5 // pred_region
      %s117 = ssub.s32 %s9, 1
      // Predicated region
      $region13: #{image_decoder.7} parent=11 // pred_check
        %p118 = pneg %p56
      $region14: #{image_decoder.7} parent=11 // pred_check_branch
        %120 = sbr.rel (%p118) target = $region16
      $region15: #{image_decoder.7} parent=11 // pred_region
        _
      $region16: #{image_decoder.7} parent=11 // pred_fallthru
        _
      // Predicated region
      $region17: #{image_decoder.7} parent=11 // pred_check
        %p121 = pneg %p77
      $region18: #{image_decoder.7} parent=11 // pred_check_branch
        %123 = sbr.rel (%p121) target = $region20
      $region19: #{image_decoder.7} parent=11 // pred_region
        _
      $region20: #{image_decoder.7} parent=11 // pred_fallthru
        _
    $region12: #{image_decoder.7} parent=5 // pred_fallthru
      _
    %p124 = scmp.lt.s32.totalorder %s9, 2
    // Predicated region
    $region21: #{image_decoder.7} parent=5 // pred_check
      %p125 = pneg %p124
    $region22: #{image_decoder.7} parent=5 // pred_check_branch
      %127 = sbr.rel (%p125) target = $region24
    $region23: #{image_decoder.7} parent=5 // pred_region
      // Predicated region
      $region25: #{image_decoder.7} parent=23 // pred_check
        %p128 = pneg %p29
      $region26: #{image_decoder.7} parent=23 // pred_check_branch
        %130 = sbr.rel (%p128) target = $region28
      $region27: #{image_decoder.7} parent=23 // pred_region
        %p131 = scmp.lt.s32.totalorder %s9, 1
        %s132 = scalar_select %p131, %s9, 1
        %s133 = smul.addr %s132, 20
        %s134 = smul.addr %s133, 4
        %s135 = scalar_lea.vmem %s0, %s134
      $region28: #{image_decoder.7} parent=23 // pred_fallthru
        _
    $region24: #{image_decoder.7} parent=5 // pred_fallthru
      _
    %p136 = scmp.le.s32.totalorder 1, %s9
    %p137 = scmp.lt.s32.totalorder %s9, 3
    %p138 = pnand %p136, %p137
    %p139 = pneg %p138
    // Predicated region
    $region29: #{image_decoder.7} parent=5 // pred_check
      _
    $region30: #{image_decoder.7} parent=5 // pred_check_branch
      %141 = sbr.rel (%p138) target = $region32
    $region31: #{image_decoder.7} parent=5 // pred_region
      %s142 = ssub.s32 %s9, 1
      %p143 = scmp.lt.s32.totalorder %s14, 1
      %s144 = scalar_select %p143, %s14, 1
      %s145 = smul.addr %s144, 20
      %s146 = smul.addr %s145, 4
      %s147 = scalar_lea.vmem %s0, %s146
      %p148 = pneg %p35
      %p149 = pneg %p32
      %p150 = pneg %p56
      %p151 = pneg %p53
      %p152 = pneg %p77
      %p153 = pneg %p74
      %p154 = pneg %p103
      %p155 = pneg %p100
      %p156 = scmp.lt.s32.totalorder %s14, 1
      %s157 = scalar_select %p156, %s14, 1
      %s158 = smul.addr %s157, 8
      %s159 = smul.addr %s158, 4
      %s160 = scalar_lea.vmem %s3, %s159
      %p161 = scmp.lt.s32.totalorder %s14, 1
      %s162 = scalar_select %p161, %s14, 1
      %s163 = smul.addr %s162, 20
      %s164 = smul.addr %s163, 4
      %s165 = scalar_lea.vmem %s0, %s164
      %p166 = scmp.lt.s32.totalorder %s14, 1
      %s167 = scalar_select %p166, %s14, 1
      %s168 = smul.addr %s167, 8
      %s169 = smul.addr %s168, 4
      %s170 = scalar_lea.vmem %s3, %s169
      %v172 = vld [vmem:[%s165] sm:$0xff]
      %v173 = vld [vmem:[%s165 + $0x8] sm:$0xff]
      %v174 = vld [vmem:[%s165 + $0x10] sm:$0xff]
      %v175 = vld [vmem:[%s165 + $0x18] sm:$0xff]
      %v176 = vld [vmem:[%s165 + $0x20] sm:$0xff]
      %v177 = vld [vmem:[%s165 + $0x28] sm:$0xff]
      %v178 = vld [vmem:[%s165 + $0x30] sm:$0xff]
      %v179 = vld [vmem:[%s165 + $0x38] sm:$0xff]
      %v180 = vld [vmem:[%s165 + $0x40] sm:$0xff]
      %v181 = vld [vmem:[%s165 + $0x48] sm:$0xff]
      %v182 = vunpack.c.l.bf16 %v172
      %v183 = vunpack.c.h.bf16 %v172
      %v184 = vunpack.c.l.bf16 %v173
      %v185 = vunpack.c.h.bf16 %v173
      %v186 = vunpack.c.l.bf16 %v174
      %v187 = vunpack.c.h.bf16 %v174
      %v188 = vunpack.c.l.bf16 %v175
      %v189 = vunpack.c.h.bf16 %v175
      %v190 = vunpack.c.l.bf16 %v176
      %v191 = vunpack.c.h.bf16 %v176
      %v192 = vunpack.c.l.bf16 %v177
      %v193 = vunpack.c.h.bf16 %v177
      %v194 = vunpack.c.l.bf16 %v178
      %v195 = vunpack.c.h.bf16 %v178
      %v196 = vunpack.c.l.bf16 %v179
      %v197 = vunpack.c.h.bf16 %v179
      %v198 = vunpack.c.l.bf16 %v180
      %v199 = vunpack.c.h.bf16 %v180
      %v200 = vunpack.c.l.bf16 %v181
      %v201 = vunpack.c.h.bf16 %v181
      %v202 = vlaneseq
      %v203 = vand.u32 %v202, 127
      %v204 = vadd.s32 %v203, 128
      %v205 = vadd.s32 %v203, 256
      %v206 = vadd.s32 %v203, 384
      %v207 = vadd.s32 %v203, 512
      %v208 = vadd.s32 %v203, 640
      %v209 = vadd.s32 %v203, 768
      %v210 = vadd.s32 %v203, 896
      %v211 = vand.u32 %v203, 31
      %v212 = vand.u32 %v204, 31
      %v213 = vand.u32 %v205, 31
      %v214 = vand.u32 %v206, 31
      %v215 = vand.u32 %v207, 31
      %v216 = vand.u32 %v208, 31
      %v217 = vand.u32 %v209, 31
      %v218 = vand.u32 %v210, 31
      %vm219 = vcmp.ge.s32.totalorder %v211, 2
      %vm220 = vcmp.ge.s32.totalorder %v212, 2
      %vm221 = vcmp.ge.s32.totalorder %v213, 2
      %vm222 = vcmp.ge.s32.totalorder %v214, 2
      %vm223 = vcmp.ge.s32.totalorder %v215, 2
      %vm224 = vcmp.ge.s32.totalorder %v216, 2
      %vm225 = vcmp.ge.s32.totalorder %v217, 2
      %vm226 = vcmp.ge.s32.totalorder %v218, 2
      %vm227 = vcmp.ge.s32.totalorder %v211, 1
      %vm228 = vcmp.ge.s32.totalorder %v212, 1
      %vm229 = vcmp.ge.s32.totalorder %v213, 1
      %vm230 = vcmp.ge.s32.totalorder %v214, 1
      %vm231 = vcmp.ge.s32.totalorder %v215, 1
      %vm232 = vcmp.ge.s32.totalorder %v216, 1
      %vm233 = vcmp.ge.s32.totalorder %v217, 1
      %vm234 = vcmp.ge.s32.totalorder %v218, 1
      %vm235 = vcmp.lt.s32.totalorder %v211, 31
      %vm236 = vcmp.lt.s32.totalorder %v212, 31
      %vm237 = vcmp.lt.s32.totalorder %v213, 31
      %vm238 = vcmp.lt.s32.totalorder %v214, 31
      %vm239 = vcmp.lt.s32.totalorder %v215, 31
      %vm240 = vcmp.lt.s32.totalorder %v216, 31
      %vm241 = vcmp.lt.s32.totalorder %v217, 31
      %vm242 = vcmp.lt.s32.totalorder %v218, 31
      %vm243 = vcmp.lt.s32.totalorder %v211, 30
      %vm244 = vcmp.lt.s32.totalorder %v212, 30
      %vm245 = vcmp.lt.s32.totalorder %v213, 30
      %vm246 = vcmp.lt.s32.totalorder %v214, 30
      %vm247 = vcmp.lt.s32.totalorder %v215, 30
      %vm248 = vcmp.lt.s32.totalorder %v216, 30
      %vm249 = vcmp.lt.s32.totalorder %v217, 30
      %vm250 = vcmp.lt.s32.totalorder %v218, 30
      %v251 = vld [vmem:[%s2] sm:$0xf]
      %253 = vset.pattern.permute.xlu0 0
      %254 = vperm.xlu0 %253, %v251
      %v255 = vpop.permute.xlu0 %254
      %v257 = vadd.f32 %v255, 0.0
      %v258 = vsel %vm219, %v182, 0.0
      %v259 = vsel %vm220, %v183, 0.0
      %v260 = vsel %vm221, %v184, 0.0
      %v261 = vsel %vm222, %v185, 0.0
      %v262 = vsel %vm223, %v186, 0.0
      %v263 = vsel %vm224, %v187, 0.0
      %v264 = vsel %vm225, %v188, 0.0
      %v265 = vsel %vm226, %v189, 0.0
      %v266 = vsel %vm219, %v192, 0.0
      %v267 = vsel %vm220, %v193, 0.0
      %v268 = vsel %vm221, %v194, 0.0
      %v269 = vsel %vm222, %v195, 0.0
      %v270 = vsel %vm223, %v196, 0.0
      %v271 = vsel %vm224, %v197, 0.0
      %v272 = vsel %vm225, %v198, 0.0
      %v273 = vsel %vm226, %v199, 0.0
      %v274 = vld [vmem:[%s1] sm:$0x3]
      %v275 = vpack.c.bf16 %v266, %v258
      %v276 = vpack.c.bf16 %v267, %v259
      %v277 = vpack.c.bf16 %v268, %v260
      %v278 = vpack.c.bf16 %v269, %v261
      %v279 = vpack.c.bf16 %v270, %v262
      %v280 = vpack.c.bf16 %v271, %v263
      %v281 = vpack.c.bf16 %v272, %v264
      %v282 = vpack.c.bf16 %v273, %v265
      %vm283 = vcmask 130048
      %v285 = vsel %vm283, %v274, 0
      %287 = vmatpush.bf16.msra.mxu0 0
      %288 = vmatpush.bf16.msra.mxu0 0
      %289 = vmatpush.bf16.msra.mxu0 0
      %290 = vmatpush.bf16.msra.mxu0 0
      %291 = vmatpush.bf16.msra.mxu0 0
      %292 = vmatpush.bf16.msra.mxu0 0
      %293 = vmatpush.bf16.msra.mxu0 0
      %294 = vmatpush.bf16.msra.mxu0 %v275
      %295 = vmatmul.bf16.gmra.mxu0 %v285
      %v296 = vpop.f32.mrf.mxu0
      %v297 = vadd.f32 0.0, %v296
      %v298 = vpop.f32.mrf.mxu0
      %299 = vdwg.mxu0
      %300 = vmatpush.bf16.msra.mxu0 0
      %301 = vmatpush.bf16.msra.mxu0 0
      %302 = vmatpush.bf16.msra.mxu0 0
      %303 = vmatpush.bf16.msra.mxu0 0
      %304 = vmatpush.bf16.msra.mxu0 0
      %305 = vmatpush.bf16.msra.mxu0 0
      %306 = vmatpush.bf16.msra.mxu0 0
      %307 = vmatpush.bf16.msra.mxu0 %v276
      %308 = vmatmul.bf16.gmra.mxu0 %v285
      %v309 = vpop.f32.mrf.mxu0
      %v310 = vadd.f32 0.0, %v309
      %v311 = vpop.f32.mrf.mxu0
      %312 = vdwg.mxu0
      %313 = vmatpush.bf16.msra.mxu0 0
      %314 = vmatpush.bf16.msra.mxu0 0
      %315 = vmatpush.bf16.msra.mxu0 0
      %316 = vmatpush.bf16.msra.mxu0 0
      %317 = vmatpush.bf16.msra.mxu0 0
      %318 = vmatpush.bf16.msra.mxu0 0
      %319 = vmatpush.bf16.msra.mxu0 0
      %320 = vmatpush.bf16.msra.mxu0 %v277
      %321 = vmatmul.bf16.gmra.mxu0 %v285
      %v322 = vpop.f32.mrf.mxu0
      %v323 = vadd.f32 0.0, %v322
      %v324 = vpop.f32.mrf.mxu0
      %325 = vdwg.mxu0
      %326 = vmatpush.bf16.msra.mxu0 0
      %327 = vmatpush.bf16.msra.mxu0 0
      %328 = vmatpush.bf16.msra.mxu0 0
      %329 = vmatpush.bf16.msra.mxu0 0
      %330 = vmatpush.bf16.msra.mxu0 0
      %331 = vmatpush.bf16.msra.mxu0 0
      %332 = vmatpush.bf16.msra.mxu0 0
      %333 = vmatpush.bf16.msra.mxu0 %v278
      %334 = vmatmul.bf16.gmra.mxu0 %v285
      %v335 = vpop.f32.mrf.mxu0
      %v336 = vadd.f32 0.0, %v335
      %v337 = vpop.f32.mrf.mxu0
      %338 = vdwg.mxu0
      %339 = vmatpush.bf16.msra.mxu0 0
      %340 = vmatpush.bf16.msra.mxu0 0
      %341 = vmatpush.bf16.msra.mxu0 0
      %342 = vmatpush.bf16.msra.mxu0 0
      %343 = vmatpush.bf16.msra.mxu0 0
      %344 = vmatpush.bf16.msra.mxu0 0
      %345 = vmatpush.bf16.msra.mxu0 0
      %346 = vmatpush.bf16.msra.mxu0 %v279
      %347 = vmatmul.bf16.gmra.mxu0 %v285
      %v348 = vpop.f32.mrf.mxu0
      %v349 = vadd.f32 0.0, %v348
      %v350 = vpop.f32.mrf.mxu0
      %351 = vdwg.mxu0
      %352 = vmatpush.bf16.msra.mxu0 0
      %353 = vmatpush.bf16.msra.mxu0 0
      %354 = vmatpush.bf16.msra.mxu0 0
      %355 = vmatpush.bf16.msra.mxu0 0
      %356 = vmatpush.bf16.msra.mxu0 0
      %357 = vmatpush.bf16.msra.mxu0 0
      %358 = vmatpush.bf16.msra.mxu0 0
      %359 = vmatpush.bf16.msra.mxu0 %v280
      %360 = vmatmul.bf16.gmra.mxu0 %v285
      %v361 = vpop.f32.mrf.mxu0
      %v362 = vadd.f32 0.0, %v361
      %v363 = vpop.f32.mrf.mxu0
      %364 = vdwg.mxu0
      %365 = vmatpush.bf16.msra.mxu0 0
      %366 = vmatpush.bf16.msra.mxu0 0
      %367 = vmatpush.bf16.msra.mxu0 0
      %368 = vmatpush.bf16.msra.mxu0 0
      %369 = vmatpush.bf16.msra.mxu0 0
      %370 = vmatpush.bf16.msra.mxu0 0
      %371 = vmatpush.bf16.msra.mxu0 0
      %372 = vmatpush.bf16.msra.mxu0 %v281
      %373 = vmatmul.bf16.gmra.mxu0 %v285
      %v374 = vpop.f32.mrf.mxu0
      %v375 = vadd.f32 0.0, %v374
      %v376 = vpop.f32.mrf.mxu0
      %377 = vdwg.mxu0
      %378 = vmatpush.bf16.msra.mxu0 0
      %379 = vmatpush.bf16.msra.mxu0 0
      %380 = vmatpush.bf16.msra.mxu0 0
      %381 = vmatpush.bf16.msra.mxu0 0
      %382 = vmatpush.bf16.msra.mxu0 0
      %383 = vmatpush.bf16.msra.mxu0 0
      %384 = vmatpush.bf16.msra.mxu0 0
      %385 = vmatpush.bf16.msra.mxu0 %v282
      %386 = vmatmul.bf16.gmra.mxu0 %v285
      %v387 = vpop.f32.mrf.mxu0
      %v388 = vadd.f32 0.0, %v387
      %v389 = vpop.f32.mrf.mxu0
      %390 = vdwg.mxu0
      %v391 = vadd.f32 %v257, %v297
      %v392 = vadd.f32 %v257, %v310
      %v393 = vadd.f32 %v257, %v323
      %v394 = vadd.f32 %v257, %v336
      %v395 = vadd.f32 %v257, %v349
      %v396 = vadd.f32 %v257, %v362
      %v397 = vadd.f32 %v257, %v375
      %v398 = vadd.f32 %v257, %v388
      %417 = vrot.lane.b32.xlu0 %v182, 127
      %v418 = vpop.permute.xlu0 %417
      %419 = vrot.lane.b32.xlu0 %v183, 127
      %v420 = vpop.permute.xlu0 %419
      %421 = vrot.lane.b32.xlu0 %v184, 127
      %v422 = vpop.permute.xlu0 %421
      %423 = vrot.lane.b32.xlu0 %v185, 127
      %v424 = vpop.permute.xlu0 %423
      %425 = vrot.lane.b32.xlu0 %v186, 127
      %v426 = vpop.permute.xlu0 %425
      %427 = vrot.lane.b32.xlu0 %v187, 127
      %v428 = vpop.permute.xlu0 %427
      %429 = vrot.lane.b32.xlu0 %v188, 127
      %v430 = vpop.permute.xlu0 %429
      %431 = vrot.lane.b32.xlu0 %v189, 127
      %v432 = vpop.permute.xlu0 %431
      %433 = vrot.lane.b32.xlu0 %v190, 127
      %v434 = vpop.permute.xlu0 %433
      %435 = vrot.lane.b32.xlu0 %v192, 127
      %v436 = vpop.permute.xlu0 %435
      %437 = vrot.lane.b32.xlu0 %v193, 127
      %v438 = vpop.permute.xlu0 %437
      %439 = vrot.lane.b32.xlu0 %v194, 127
      %v440 = vpop.permute.xlu0 %439
      %441 = vrot.lane.b32.xlu0 %v195, 127
      %v442 = vpop.permute.xlu0 %441
      %443 = vrot.lane.b32.xlu0 %v196, 127
      %v444 = vpop.permute.xlu0 %443
      %445 = vrot.lane.b32.xlu0 %v197, 127
      %v446 = vpop.permute.xlu0 %445
      %447 = vrot.lane.b32.xlu0 %v198, 127
      %v448 = vpop.permute.xlu0 %447
      %449 = vrot.lane.b32.xlu0 %v199, 127
      %v450 = vpop.permute.xlu0 %449
      %451 = vrot.lane.b32.xlu0 %v200, 127
      %v452 = vpop.permute.xlu0 %451
      %vm453 = vcmask 1039360
      %v454 = vsel %vm453, %v418, %v420
      %v455 = vsel %vm453, %v420, %v422
      %v456 = vsel %vm453, %v422, %v424
      %v457 = vsel %vm453, %v424, %v426
      %v458 = vsel %vm453, %v426, %v428
      %v459 = vsel %vm453, %v428, %v430
      %v460 = vsel %vm453, %v430, %v432
      %v461 = vsel %vm453, %v432, %v434
      %v462 = vsel %vm453, %v436, %v438
      %v463 = vsel %vm453, %v438, %v440
      %v464 = vsel %vm453, %v440, %v442
      %v465 = vsel %vm453, %v442, %v444
      %v466 = vsel %vm453, %v444, %v446
      %v467 = vsel %vm453, %v446, %v448
      %v468 = vsel %vm453, %v448, %v450
      %v469 = vsel %vm453, %v450, %v452
      %v486 = vsel %vm227, %v454, 0.0
      %v487 = vsel %vm228, %v455, 0.0
      %v488 = vsel %vm229, %v456, 0.0
      %v489 = vsel %vm230, %v457, 0.0
      %v490 = vsel %vm231, %v458, 0.0
      %v491 = vsel %vm232, %v459, 0.0
      %v492 = vsel %vm233, %v460, 0.0
      %v493 = vsel %vm234, %v461, 0.0
      %v494 = vsel %vm227, %v462, 0.0
      %v495 = vsel %vm228, %v463, 0.0
      %v496 = vsel %vm229, %v464, 0.0
      %v497 = vsel %vm230, %v465, 0.0
      %v498 = vsel %vm231, %v466, 0.0
      %v499 = vsel %vm232, %v467, 0.0
      %v500 = vsel %vm233, %v468, 0.0
      %v501 = vsel %vm234, %v469, 0.0
      %s502 = scalar_lea.vmem %s1, 2
      %v503 = vld [vmem:[%s502] sm:$0x3]
      %v504 = vpack.c.bf16 %v494, %v486
      %v505 = vpack.c.bf16 %v495, %v487
      %v506 = vpack.c.bf16 %v496, %v488
      %v507 = vpack.c.bf16 %v497, %v489
      %v508 = vpack.c.bf16 %v498, %v490
      %v509 = vpack.c.bf16 %v499, %v491
      %v510 = vpack.c.bf16 %v500, %v492
      %v511 = vpack.c.bf16 %v501, %v493
      %v513 = vsel %vm283, %v503, 0
      %515 = vmatpush.bf16.msra.mxu0 0
      %516 = vmatpush.bf16.msra.mxu0 0
      %517 = vmatpush.bf16.msra.mxu0 0
      %518 = vmatpush.bf16.msra.mxu0 0
      %519 = vmatpush.bf16.msra.mxu0 0
      %520 = vmatpush.bf16.msra.mxu0 0
      %521 = vmatpush.bf16.msra.mxu0 0
      %522 = vmatpush.bf16.msra.mxu0 %v504
      %523 = vmatmul.bf16.gmra.mxu0 %v513
      %v524 = vpop.f32.mrf.mxu0
      %v525 = vadd.f32 0.0, %v524
      %v526 = vpop.f32.mrf.mxu0
      %527 = vdwg.mxu0
      %528 = vmatpush.bf16.msra.mxu0 0
      %529 = vmatpush.bf16.msra.mxu0 0
      %530 = vmatpush.bf16.msra.mxu0 0
      %531 = vmatpush.bf16.msra.mxu0 0
      %532 = vmatpush.bf16.msra.mxu0 0
      %533 = vmatpush.bf16.msra.mxu0 0
      %534 = vmatpush.bf16.msra.mxu0 0
      %535 = vmatpush.bf16.msra.mxu0 %v505
      %536 = vmatmul.bf16.gmra.mxu0 %v513
      %v537 = vpop.f32.mrf.mxu0
      %v538 = vadd.f32 0.0, %v537
      %v539 = vpop.f32.mrf.mxu0
      %540 = vdwg.mxu0
      %541 = vmatpush.bf16.msra.mxu0 0
      %542 = vmatpush.bf16.msra.mxu0 0
      %543 = vmatpush.bf16.msra.mxu0 0
      %544 = vmatpush.bf16.msra.mxu0 0
      %545 = vmatpush.bf16.msra.mxu0 0
      %546 = vmatpush.bf16.msra.mxu0 0
      %547 = vmatpush.bf16.msra.mxu0 0
      %548 = vmatpush.bf16.msra.mxu0 %v506
      %549 = vmatmul.bf16.gmra.mxu0 %v513
      %v550 = vpop.f32.mrf.mxu0
      %v551 = vadd.f32 0.0, %v550
      %v552 = vpop.f32.mrf.mxu0
      %553 = vdwg.mxu0
      %554 = vmatpush.bf16.msra.mxu0 0
      %555 = vmatpush.bf16.msra.mxu0 0
      %556 = vmatpush.bf16.msra.mxu0 0
      %557 = vmatpush.bf16.msra.mxu0 0
      %558 = vmatpush.bf16.msra.mxu0 0
      %559 = vmatpush.bf16.msra.mxu0 0
      %560 = vmatpush.bf16.msra.mxu0 0
      %561 = vmatpush.bf16.msra.mxu0 %v507
      %562 = vmatmul.bf16.gmra.mxu0 %v513
      %v563 = vpop.f32.mrf.mxu0
      %v564 = vadd.f32 0.0, %v563
      %v565 = vpop.f32.mrf.mxu0
      %566 = vdwg.mxu0
      %567 = vmatpush.bf16.msra.mxu0 0
      %568 = vmatpush.bf16.msra.mxu0 0
      %569 = vmatpush.bf16.msra.mxu0 0
      %570 = vmatpush.bf16.msra.mxu0 0
      %571 = vmatpush.bf16.msra.mxu0 0
      %572 = vmatpush.bf16.msra.mxu0 0
      %573 = vmatpush.bf16.msra.mxu0 0
      %574 = vmatpush.bf16.msra.mxu0 %v508
      %575 = vmatmul.bf16.gmra.mxu0 %v513
      %v576 = vpop.f32.mrf.mxu0
      %v577 = vadd.f32 0.0, %v576
      %v578 = vpop.f32.mrf.mxu0
      %579 = vdwg.mxu0
      %580 = vmatpush.bf16.msra.mxu0 0
      %581 = vmatpush.bf16.msra.mxu0 0
      %582 = vmatpush.bf16.msra.mxu0 0
      %583 = vmatpush.bf16.msra.mxu0 0
      %584 = vmatpush.bf16.msra.mxu0 0
      %585 = vmatpush.bf16.msra.mxu0 0
      %586 = vmatpush.bf16.msra.mxu0 0
      %587 = vmatpush.bf16.msra.mxu0 %v509
      %588 = vmatmul.bf16.gmra.mxu0 %v513
      %v589 = vpop.f32.mrf.mxu0
      %v590 = vadd.f32 0.0, %v589
      %v591 = vpop.f32.mrf.mxu0
      %592 = vdwg.mxu0
      %593 = vmatpush.bf16.msra.mxu0 0
      %594 = vmatpush.bf16.msra.mxu0 0
      %595 = vmatpush.bf16.msra.mxu0 0
      %596 = vmatpush.bf16.msra.mxu0 0
      %597 = vmatpush.bf16.msra.mxu0 0
      %598 = vmatpush.bf16.msra.mxu0 0
      %599 = vmatpush.bf16.msra.mxu0 0
      %600 = vmatpush.bf16.msra.mxu0 %v510
      %601 = vmatmul.bf16.gmra.mxu0 %v513
      %v602 = vpop.f32.mrf.mxu0
      %v603 = vadd.f32 0.0, %v602
      %v604 = vpop.f32.mrf.mxu0
      %605 = vdwg.mxu0
      %606 = vmatpush.bf16.msra.mxu0 0
      %607 = vmatpush.bf16.msra.mxu0 0
      %608 = vmatpush.bf16.msra.mxu0 0
      %609 = vmatpush.bf16.msra.mxu0 0
      %610 = vmatpush.bf16.msra.mxu0 0
      %611 = vmatpush.bf16.msra.mxu0 0
      %612 = vmatpush.bf16.msra.mxu0 0
      %613 = vmatpush.bf16.msra.mxu0 %v511
      %614 = vmatmul.bf16.gmra.mxu0 %v513
      %v615 = vpop.f32.mrf.mxu0
      %v616 = vadd.f32 0.0, %v615
      %v617 = vpop.f32.mrf.mxu0
      %618 = vdwg.mxu0
      %v619 = vadd.f32 %v391, %v525
      %v620 = vadd.f32 %v392, %v538
      %v621 = vadd.f32 %v393, %v551
      %v622 = vadd.f32 %v394, %v564
      %v623 = vadd.f32 %v395, %v577
      %v624 = vadd.f32 %v396, %v590
      %v625 = vadd.f32 %v397, %v603
      %v626 = vadd.f32 %v398, %v616
      %s627 = scalar_lea.vmem %s1, 4
      %v628 = vld [vmem:[%s627] sm:$0x3]
      %v629 = vpack.c.bf16 %v192, %v182
      %v630 = vpack.c.bf16 %v193, %v183
      %v631 = vpack.c.bf16 %v194, %v184
      %v632 = vpack.c.bf16 %v195, %v185
      %v633 = vpack.c.bf16 %v196, %v186
      %v634 = vpack.c.bf16 %v197, %v187
      %v635 = vpack.c.bf16 %v198, %v188
      %v636 = vpack.c.bf16 %v199, %v189
      %v637 = vpack.c.bf16 %v200, %v190
      %647 = vrot.lane.b32.xlu0 %v629, 126
      %v648 = vpop.permute.xlu0 %647
      %649 = vrot.lane.b32.xlu0 %v630, 126
      %v650 = vpop.permute.xlu0 %649
      %651 = vrot.lane.b32.xlu0 %v631, 126
      %v652 = vpop.permute.xlu0 %651
      %653 = vrot.lane.b32.xlu0 %v632, 126
      %v654 = vpop.permute.xlu0 %653
      %655 = vrot.lane.b32.xlu0 %v633, 126
      %v656 = vpop.permute.xlu0 %655
      %657 = vrot.lane.b32.xlu0 %v634, 126
      %v658 = vpop.permute.xlu0 %657
      %659 = vrot.lane.b32.xlu0 %v635, 126
      %v660 = vpop.permute.xlu0 %659
      %661 = vrot.lane.b32.xlu0 %v636, 126
      %v662 = vpop.permute.xlu0 %661
      %663 = vrot.lane.b32.xlu0 %v637, 126
      %v664 = vpop.permute.xlu0 %663
      %vm665 = vcmask 1031168
      %v666 = vsel %vm665, %v648, %v650
      %v667 = vsel %vm665, %v650, %v652
      %v668 = vsel %vm665, %v652, %v654
      %v669 = vsel %vm665, %v654, %v656
      %v670 = vsel %vm665, %v656, %v658
      %v671 = vsel %vm665, %v658, %v660
      %v672 = vsel %vm665, %v660, %v662
      %v673 = vsel %vm665, %v662, %v664
      %v683 = vsel %vm283, %v628, 0
      %685 = vmatpush.bf16.msra.mxu0 0
      %686 = vmatpush.bf16.msra.mxu0 0
      %687 = vmatpush.bf16.msra.mxu0 0
      %688 = vmatpush.bf16.msra.mxu0 0
      %689 = vmatpush.bf16.msra.mxu0 0
      %690 = vmatpush.bf16.msra.mxu0 0
      %691 = vmatpush.bf16.msra.mxu0 0
      %692 = vmatpush.bf16.msra.mxu0 %v666
      %693 = vmatmul.bf16.gmra.mxu0 %v683
      %v694 = vpop.f32.mrf.mxu0
      %v695 = vadd.f32 0.0, %v694
      %v696 = vpop.f32.mrf.mxu0
      %697 = vdwg.mxu0
      %698 = vmatpush.bf16.msra.mxu0 0
      %699 = vmatpush.bf16.msra.mxu0 0
      %700 = vmatpush.bf16.msra.mxu0 0
      %701 = vmatpush.bf16.msra.mxu0 0
      %702 = vmatpush.bf16.msra.mxu0 0
      %703 = vmatpush.bf16.msra.mxu0 0
      %704 = vmatpush.bf16.msra.mxu0 0
      %705 = vmatpush.bf16.msra.mxu0 %v667
      %706 = vmatmul.bf16.gmra.mxu0 %v683
      %v707 = vpop.f32.mrf.mxu0
      %v708 = vadd.f32 0.0, %v707
      %v709 = vpop.f32.mrf.mxu0
      %710 = vdwg.mxu0
      %711 = vmatpush.bf16.msra.mxu0 0
      %712 = vmatpush.bf16.msra.mxu0 0
      %713 = vmatpush.bf16.msra.mxu0 0
      %714 = vmatpush.bf16.msra.mxu0 0
      %715 = vmatpush.bf16.msra.mxu0 0
      %716 = vmatpush.bf16.msra.mxu0 0
      %717 = vmatpush.bf16.msra.mxu0 0
      %718 = vmatpush.bf16.msra.mxu0 %v668
      %719 = vmatmul.bf16.gmra.mxu0 %v683
      %v720 = vpop.f32.mrf.mxu0
      %v721 = vadd.f32 0.0, %v720
      %v722 = vpop.f32.mrf.mxu0
      %723 = vdwg.mxu0
      %724 = vmatpush.bf16.msra.mxu0 0
      %725 = vmatpush.bf16.msra.mxu0 0
      %726 = vmatpush.bf16.msra.mxu0 0
      %727 = vmatpush.bf16.msra.mxu0 0
      %728 = vmatpush.bf16.msra.mxu0 0
      %729 = vmatpush.bf16.msra.mxu0 0
      %730 = vmatpush.bf16.msra.mxu0 0
      %731 = vmatpush.bf16.msra.mxu0 %v669
      %732 = vmatmul.bf16.gmra.mxu0 %v683
      %v733 = vpop.f32.mrf.mxu0
      %v734 = vadd.f32 0.0, %v733
      %v735 = vpop.f32.mrf.mxu0
      %736 = vdwg.mxu0
      %737 = vmatpush.bf16.msra.mxu0 0
      %738 = vmatpush.bf16.msra.mxu0 0
      %739 = vmatpush.bf16.msra.mxu0 0
      %740 = vmatpush.bf16.msra.mxu0 0
      %741 = vmatpush.bf16.msra.mxu0 0
      %742 = vmatpush.bf16.msra.mxu0 0
      %743 = vmatpush.bf16.msra.mxu0 0
      %744 = vmatpush.bf16.msra.mxu0 %v670
      %745 = vmatmul.bf16.gmra.mxu0 %v683
      %v746 = vpop.f32.mrf.mxu0
      %v747 = vadd.f32 0.0, %v746
      %v748 = vpop.f32.mrf.mxu0
      %749 = vdwg.mxu0
      %750 = vmatpush.bf16.msra.mxu0 0
      %751 = vmatpush.bf16.msra.mxu0 0
      %752 = vmatpush.bf16.msra.mxu0 0
      %753 = vmatpush.bf16.msra.mxu0 0
      %754 = vmatpush.bf16.msra.mxu0 0
      %755 = vmatpush.bf16.msra.mxu0 0
      %756 = vmatpush.bf16.msra.mxu0 0
      %757 = vmatpush.bf16.msra.mxu0 %v671
      %758 = vmatmul.bf16.gmra.mxu0 %v683
      %v759 = vpop.f32.mrf.mxu0
      %v760 = vadd.f32 0.0, %v759
      %v761 = vpop.f32.mrf.mxu0
      %762 = vdwg.mxu0
      %763 = vmatpush.bf16.msra.mxu0 0
      %764 = vmatpush.bf16.msra.mxu0 0
      %765 = vmatpush.bf16.msra.mxu0 0
      %766 = vmatpush.bf16.msra.mxu0 0
      %767 = vmatpush.bf16.msra.mxu0 0
      %768 = vmatpush.bf16.msra.mxu0 0
      %769 = vmatpush.bf16.msra.mxu0 0
      %770 = vmatpush.bf16.msra.mxu0 %v672
      %771 = vmatmul.bf16.gmra.mxu0 %v683
      %v772 = vpop.f32.mrf.mxu0
      %v773 = vadd.f32 0.0, %v772
      %v774 = vpop.f32.mrf.mxu0
      %775 = vdwg.mxu0
      %776 = vmatpush.bf16.msra.mxu0 0
      %777 = vmatpush.bf16.msra.mxu0 0
      %778 = vmatpush.bf16.msra.mxu0 0
      %779 = vmatpush.bf16.msra.mxu0 0
      %780 = vmatpush.bf16.msra.mxu0 0
      %781 = vmatpush.bf16.msra.mxu0 0
      %782 = vmatpush.bf16.msra.mxu0 0
      %783 = vmatpush.bf16.msra.mxu0 %v673
      %784 = vmatmul.bf16.gmra.mxu0 %v683
      %v785 = vpop.f32.mrf.mxu0
      %v786 = vadd.f32 0.0, %v785
      %v787 = vpop.f32.mrf.mxu0
      %788 = vdwg.mxu0
      %v789 = vadd.f32 %v619, %v695
      %v790 = vadd.f32 %v620, %v708
      %v791 = vadd.f32 %v621, %v721
      %v792 = vadd.f32 %v622, %v734
      %v793 = vadd.f32 %v623, %v747
      %v794 = vadd.f32 %v624, %v760
      %v795 = vadd.f32 %v625, %v773
      %v796 = vadd.f32 %v626, %v786
      %797 = vrot.lane.b32.xlu0 %v182, 125
      %v798 = vpop.permute.xlu0 %797
      %799 = vrot.lane.b32.xlu0 %v183, 125
      %v800 = vpop.permute.xlu0 %799
      %801 = vrot.lane.b32.xlu0 %v184, 125
      %v802 = vpop.permute.xlu0 %801
      %803 = vrot.lane.b32.xlu0 %v185, 125
      %v804 = vpop.permute.xlu0 %803
      %805 = vrot.lane.b32.xlu0 %v186, 125
      %v806 = vpop.permute.xlu0 %805
      %807 = vrot.lane.b32.xlu0 %v187, 125
      %v808 = vpop.permute.xlu0 %807
      %809 = vrot.lane.b32.xlu0 %v188, 125
      %v810 = vpop.permute.xlu0 %809
      %811 = vrot.lane.b32.xlu0 %v189, 125
      %v812 = vpop.permute.xlu0 %811
      %813 = vrot.lane.b32.xlu0 %v190, 125
      %v814 = vpop.permute.xlu0 %813
      %815 = vrot.lane.b32.xlu0 %v192, 125
      %v816 = vpop.permute.xlu0 %815
      %817 = vrot.lane.b32.xlu0 %v193, 125
      %v818 = vpop.permute.xlu0 %817
      %819 = vrot.lane.b32.xlu0 %v194, 125
      %v820 = vpop.permute.xlu0 %819
      %821 = vrot.lane.b32.xlu0 %v195, 125
      %v822 = vpop.permute.xlu0 %821
      %823 = vrot.lane.b32.xlu0 %v196, 125
      %v824 = vpop.permute.xlu0 %823
      %825 = vrot.lane.b32.xlu0 %v197, 125
      %v826 = vpop.permute.xlu0 %825
      %827 = vrot.lane.b32.xlu0 %v198, 125
      %v828 = vpop.permute.xlu0 %827
      %829 = vrot.lane.b32.xlu0 %v199, 125
      %v830 = vpop.permute.xlu0 %829
      %831 = vrot.lane.b32.xlu0 %v200, 125
      %v832 = vpop.permute.xlu0 %831
      %vm833 = vcmask 1022976
      %v834 = vsel %vm833, %v798, %v800
      %v835 = vsel %vm833, %v800, %v802
      %v836 = vsel %vm833, %v802, %v804
      %v837 = vsel %vm833, %v804, %v806
      %v838 = vsel %vm833, %v806, %v808
      %v839 = vsel %vm833, %v808, %v810
      %v840 = vsel %vm833, %v810, %v812
      %v841 = vsel %vm833, %v812, %v814
      %v842 = vsel %vm833, %v816, %v818
      %v843 = vsel %vm833, %v818, %v820
      %v844 = vsel %vm833, %v820, %v822
      %v845 = vsel %vm833, %v822, %v824
      %v846 = vsel %vm833, %v824, %v826
      %v847 = vsel %vm833, %v826, %v828
      %v848 = vsel %vm833, %v828, %v830
      %v849 = vsel %vm833, %v830, %v832
      %v866 = vsel %vm235, %v834, 0.0
      %v867 = vsel %vm236, %v835, 0.0
      %v868 = vsel %vm237, %v836, 0.0
      %v869 = vsel %vm238, %v837, 0.0
      %v870 = vsel %vm239, %v838, 0.0
      %v871 = vsel %vm240, %v839, 0.0
      %v872 = vsel %vm241, %v840, 0.0
      %v873 = vsel %vm242, %v841, 0.0
      %v874 = vsel %vm235, %v842, 0.0
      %v875 = vsel %vm236, %v843, 0.0
      %v876 = vsel %vm237, %v844, 0.0
      %v877 = vsel %vm238, %v845, 0.0
      %v878 = vsel %vm239, %v846, 0.0
      %v879 = vsel %vm240, %v847, 0.0
      %v880 = vsel %vm241, %v848, 0.0
      %v881 = vsel %vm242, %v849, 0.0
      %s882 = scalar_lea.vmem %s1, 6
      %v883 = vld [vmem:[%s882] sm:$0x3]
      %v884 = vpack.c.bf16 %v874, %v866
      %v885 = vpack.c.bf16 %v875, %v867
      %v886 = vpack.c.bf16 %v876, %v868
      %v887 = vpack.c.bf16 %v877, %v869
      %v888 = vpack.c.bf16 %v878, %v870
      %v889 = vpack.c.bf16 %v879, %v871
      %v890 = vpack.c.bf16 %v880, %v872
      %v891 = vpack.c.bf16 %v881, %v873
      %v893 = vsel %vm283, %v883, 0
      %895 = vmatpush.bf16.msra.mxu0 0
      %896 = vmatpush.bf16.msra.mxu0 0
      %897 = vmatpush.bf16.msra.mxu0 0
      %898 = vmatpush.bf16.msra.mxu0 0
      %899 = vmatpush.bf16.msra.mxu0 0
      %900 = vmatpush.bf16.msra.mxu0 0
      %901 = vmatpush.bf16.msra.mxu0 0
      %902 = vmatpush.bf16.msra.mxu0 %v884
      %903 = vmatmul.bf16.gmra.mxu0 %v893
      %v904 = vpop.f32.mrf.mxu0
      %v905 = vadd.f32 0.0, %v904
      %v906 = vpop.f32.mrf.mxu0
      %907 = vdwg.mxu0
      %908 = vmatpush.bf16.msra.mxu0 0
      %909 = vmatpush.bf16.msra.mxu0 0
      %910 = vmatpush.bf16.msra.mxu0 0
      %911 = vmatpush.bf16.msra.mxu0 0
      %912 = vmatpush.bf16.msra.mxu0 0
      %913 = vmatpush.bf16.msra.mxu0 0
      %914 = vmatpush.bf16.msra.mxu0 0
      %915 = vmatpush.bf16.msra.mxu0 %v885
      %916 = vmatmul.bf16.gmra.mxu0 %v893
      %v917 = vpop.f32.mrf.mxu0
      %v918 = vadd.f32 0.0, %v917
      %v919 = vpop.f32.mrf.mxu0
      %920 = vdwg.mxu0
      %921 = vmatpush.bf16.msra.mxu0 0
      %922 = vmatpush.bf16.msra.mxu0 0
      %923 = vmatpush.bf16.msra.mxu0 0
      %924 = vmatpush.bf16.msra.mxu0 0
      %925 = vmatpush.bf16.msra.mxu0 0
      %926 = vmatpush.bf16.msra.mxu0 0
      %927 = vmatpush.bf16.msra.mxu0 0
      %928 = vmatpush.bf16.msra.mxu0 %v886
      %929 = vmatmul.bf16.gmra.mxu0 %v893
      %v930 = vpop.f32.mrf.mxu0
      %v931 = vadd.f32 0.0, %v930
      %v932 = vpop.f32.mrf.mxu0
      %933 = vdwg.mxu0
      %934 = vmatpush.bf16.msra.mxu0 0
      %935 = vmatpush.bf16.msra.mxu0 0
      %936 = vmatpush.bf16.msra.mxu0 0
      %937 = vmatpush.bf16.msra.mxu0 0
      %938 = vmatpush.bf16.msra.mxu0 0
      %939 = vmatpush.bf16.msra.mxu0 0
      %940 = vmatpush.bf16.msra.mxu0 0
      %941 = vmatpush.bf16.msra.mxu0 %v887
      %942 = vmatmul.bf16.gmra.mxu0 %v893
      %v943 = vpop.f32.mrf.mxu0
      %v944 = vadd.f32 0.0, %v943
      %v945 = vpop.f32.mrf.mxu0
      %946 = vdwg.mxu0
      %947 = vmatpush.bf16.msra.mxu0 0
      %948 = vmatpush.bf16.msra.mxu0 0
      %949 = vmatpush.bf16.msra.mxu0 0
      %950 = vmatpush.bf16.msra.mxu0 0
      %951 = vmatpush.bf16.msra.mxu0 0
      %952 = vmatpush.bf16.msra.mxu0 0
      %953 = vmatpush.bf16.msra.mxu0 0
      %954 = vmatpush.bf16.msra.mxu0 %v888
      %955 = vmatmul.bf16.gmra.mxu0 %v893
      %v956 = vpop.f32.mrf.mxu0
      %v957 = vadd.f32 0.0, %v956
      %v958 = vpop.f32.mrf.mxu0
      %959 = vdwg.mxu0
      %960 = vmatpush.bf16.msra.mxu0 0
      %961 = vmatpush.bf16.msra.mxu0 0
      %962 = vmatpush.bf16.msra.mxu0 0
      %963 = vmatpush.bf16.msra.mxu0 0
      %964 = vmatpush.bf16.msra.mxu0 0
      %965 = vmatpush.bf16.msra.mxu0 0
      %966 = vmatpush.bf16.msra.mxu0 0
      %967 = vmatpush.bf16.msra.mxu0 %v889
      %968 = vmatmul.bf16.gmra.mxu0 %v893
      %v969 = vpop.f32.mrf.mxu0
      %v970 = vadd.f32 0.0, %v969
      %v971 = vpop.f32.mrf.mxu0
      %972 = vdwg.mxu0
      %973 = vmatpush.bf16.msra.mxu0 0
      %974 = vmatpush.bf16.msra.mxu0 0
      %975 = vmatpush.bf16.msra.mxu0 0
      %976 = vmatpush.bf16.msra.mxu0 0
      %977 = vmatpush.bf16.msra.mxu0 0
      %978 = vmatpush.bf16.msra.mxu0 0
      %979 = vmatpush.bf16.msra.mxu0 0
      %980 = vmatpush.bf16.msra.mxu0 %v890
      %981 = vmatmul.bf16.gmra.mxu0 %v893
      %v982 = vpop.f32.mrf.mxu0
      %v983 = vadd.f32 0.0, %v982
      %v984 = vpop.f32.mrf.mxu0
      %985 = vdwg.mxu0
      %986 = vmatpush.bf16.msra.mxu0 0
      %987 = vmatpush.bf16.msra.mxu0 0
      %988 = vmatpush.bf16.msra.mxu0 0
      %989 = vmatpush.bf16.msra.mxu0 0
      %990 = vmatpush.bf16.msra.mxu0 0
      %991 = vmatpush.bf16.msra.mxu0 0
      %992 = vmatpush.bf16.msra.mxu0 0
      %993 = vmatpush.bf16.msra.mxu0 %v891
      %994 = vmatmul.bf16.gmra.mxu0 %v893
      %v995 = vpop.f32.mrf.mxu0
      %v996 = vadd.f32 0.0, %v995
      %v997 = vpop.f32.mrf.mxu0
      %998 = vdwg.mxu0
      %v999 = vadd.f32 %v789, %v905
      %v1000 = vadd.f32 %v790, %v918
      %v1001 = vadd.f32 %v791, %v931
      %v1002 = vadd.f32 %v792, %v944
      %v1003 = vadd.f32 %v793, %v957
      %v1004 = vadd.f32 %v794, %v970
      %v1005 = vadd.f32 %v795, %v983
      %v1006 = vadd.f32 %v796, %v996
      %1007 = vrot.lane.b32.xlu0 %v182, 124
      %v1008 = vpop.permute.xlu0 %1007
      %1009 = vrot.lane.b32.xlu0 %v183, 124
      %v1010 = vpop.permute.xlu0 %1009
      %1011 = vrot.lane.b32.xlu0 %v184, 124
      %v1012 = vpop.permute.xlu0 %1011
      %1013 = vrot.lane.b32.xlu0 %v185, 124
      %v1014 = vpop.permute.xlu0 %1013
      %1015 = vrot.lane.b32.xlu0 %v186, 124
      %v1016 = vpop.permute.xlu0 %1015
      %1017 = vrot.lane.b32.xlu0 %v187, 124
      %v1018 = vpop.permute.xlu0 %1017
      %1019 = vrot.lane.b32.xlu0 %v188, 124
      %v1020 = vpop.permute.xlu0 %1019
      %1021 = vrot.lane.b32.xlu0 %v189, 124
      %v1022 = vpop.permute.xlu0 %1021
      %1023 = vrot.lane.b32.xlu0 %v190, 124
      %v1024 = vpop.permute.xlu0 %1023
      %1025 = vrot.lane.b32.xlu0 %v192, 124
      %v1026 = vpop.permute.xlu0 %1025
      %1027 = vrot.lane.b32.xlu0 %v193, 124
      %v1028 = vpop.permute.xlu0 %1027
      %1029 = vrot.lane.b32.xlu0 %v194, 124
      %v1030 = vpop.permute.xlu0 %1029
      %1031 = vrot.lane.b32.xlu0 %v195, 124
      %v1032 = vpop.permute.xlu0 %1031
      %1033 = vrot.lane.b32.xlu0 %v196, 124
      %v1034 = vpop.permute.xlu0 %1033
      %1035 = vrot.lane.b32.xlu0 %v197, 124
      %v1036 = vpop.permute.xlu0 %1035
      %1037 = vrot.lane.b32.xlu0 %v198, 124
      %v1038 = vpop.permute.xlu0 %1037
      %1039 = vrot.lane.b32.xlu0 %v199, 124
      %v1040 = vpop.permute.xlu0 %1039
      %1041 = vrot.lane.b32.xlu0 %v200, 124
      %v1042 = vpop.permute.xlu0 %1041
      %vm1043 = vcmask 1014784
      %v1044 = vsel %vm1043, %v1008, %v1010
      %v1045 = vsel %vm1043, %v1010, %v1012
      %v1046 = vsel %vm1043, %v1012, %v1014
      %v1047 = vsel %vm1043, %v1014, %v1016
      %v1048 = vsel %vm1043, %v1016, %v1018
      %v1049 = vsel %vm1043, %v1018, %v1020
      %v1050 = vsel %vm1043, %v1020, %v1022
      %v1051 = vsel %vm1043, %v1022, %v1024
      %v1052 = vsel %vm1043, %v1026, %v1028
      %v1053 = vsel %vm1043, %v1028, %v1030
      %v1054 = vsel %vm1043, %v1030, %v1032
      %v1055 = vsel %vm1043, %v1032, %v1034
      %v1056 = vsel %vm1043, %v1034, %v1036
      %v1057 = vsel %vm1043, %v1036, %v1038
      %v1058 = vsel %vm1043, %v1038, %v1040
      %v1059 = vsel %vm1043, %v1040, %v1042
      %v1076 = vsel %vm243, %v1044, 0.0
      %v1077 = vsel %vm244, %v1045, 0.0
      %v1078 = vsel %vm245, %v1046, 0.0
      %v1079 = vsel %vm246, %v1047, 0.0
      %v1080 = vsel %vm247, %v1048, 0.0
      %v1081 = vsel %vm248, %v1049, 0.0
      %v1082 = vsel %vm249, %v1050, 0.0
      %v1083 = vsel %vm250, %v1051, 0.0
      %v1084 = vsel %vm243, %v1052, 0.0
      %v1085 = vsel %vm244, %v1053, 0.0
      %v1086 = vsel %vm245, %v1054, 0.0
      %v1087 = vsel %vm246, %v1055, 0.0
      %v1088 = vsel %vm247, %v1056, 0.0
      %v1089 = vsel %vm248, %v1057, 0.0
      %v1090 = vsel %vm249, %v1058, 0.0
      %v1091 = vsel %vm250, %v1059, 0.0
      %s1092 = scalar_lea.vmem %s1, 8
      %v1093 = vld [vmem:[%s1092] sm:$0x3]
      %v1094 = vpack.c.bf16 %v1084, %v1076
      %v1095 = vpack.c.bf16 %v1085, %v1077
      %v1096 = vpack.c.bf16 %v1086, %v1078
      %v1097 = vpack.c.bf16 %v1087, %v1079
      %v1098 = vpack.c.bf16 %v1088, %v1080
      %v1099 = vpack.c.bf16 %v1089, %v1081
      %v1100 = vpack.c.bf16 %v1090, %v1082
      %v1101 = vpack.c.bf16 %v1091, %v1083
      %v1103 = vsel %vm283, %v1093, 0
      %1105 = vmatpush.bf16.msra.mxu0 0
      %1106 = vmatpush.bf16.msra.mxu0 0
      %1107 = vmatpush.bf16.msra.mxu0 0
      %1108 = vmatpush.bf16.msra.mxu0 0
      %1109 = vmatpush.bf16.msra.mxu0 0
      %1110 = vmatpush.bf16.msra.mxu0 0
      %1111 = vmatpush.bf16.msra.mxu0 0
      %1112 = vmatpush.bf16.msra.mxu0 %v1094
      %1113 = vmatmul.bf16.gmra.mxu0 %v1103
      %v1114 = vpop.f32.mrf.mxu0
      %v1115 = vadd.f32 0.0, %v1114
      %v1116 = vpop.f32.mrf.mxu0
      %1117 = vdwg.mxu0
      %1118 = vmatpush.bf16.msra.mxu0 0
      %1119 = vmatpush.bf16.msra.mxu0 0
      %1120 = vmatpush.bf16.msra.mxu0 0
      %1121 = vmatpush.bf16.msra.mxu0 0
      %1122 = vmatpush.bf16.msra.mxu0 0
      %1123 = vmatpush.bf16.msra.mxu0 0
      %1124 = vmatpush.bf16.msra.mxu0 0
      %1125 = vmatpush.bf16.msra.mxu0 %v1095
      %1126 = vmatmul.bf16.gmra.mxu0 %v1103
      %v1127 = vpop.f32.mrf.mxu0
      %v1128 = vadd.f32 0.0, %v1127
      %v1129 = vpop.f32.mrf.mxu0
      %1130 = vdwg.mxu0
      %1131 = vmatpush.bf16.msra.mxu0 0
      %1132 = vmatpush.bf16.msra.mxu0 0
      %1133 = vmatpush.bf16.msra.mxu0 0
      %1134 = vmatpush.bf16.msra.mxu0 0
      %1135 = vmatpush.bf16.msra.mxu0 0
      %1136 = vmatpush.bf16.msra.mxu0 0
      %1137 = vmatpush.bf16.msra.mxu0 0
      %1138 = vmatpush.bf16.msra.mxu0 %v1096
      %1139 = vmatmul.bf16.gmra.mxu0 %v1103
      %v1140 = vpop.f32.mrf.mxu0
      %v1141 = vadd.f32 0.0, %v1140
      %v1142 = vpop.f32.mrf.mxu0
      %1143 = vdwg.mxu0
      %1144 = vmatpush.bf16.msra.mxu0 0
      %1145 = vmatpush.bf16.msra.mxu0 0
      %1146 = vmatpush.bf16.msra.mxu0 0
      %1147 = vmatpush.bf16.msra.mxu0 0
      %1148 = vmatpush.bf16.msra.mxu0 0
      %1149 = vmatpush.bf16.msra.mxu0 0
      %1150 = vmatpush.bf16.msra.mxu0 0
      %1151 = vmatpush.bf16.msra.mxu0 %v1097
      %1152 = vmatmul.bf16.gmra.mxu0 %v1103
      %v1153 = vpop.f32.mrf.mxu0
      %v1154 = vadd.f32 0.0, %v1153
      %v1155 = vpop.f32.mrf.mxu0
      %1156 = vdwg.mxu0
      %1157 = vmatpush.bf16.msra.mxu0 0
      %1158 = vmatpush.bf16.msra.mxu0 0
      %1159 = vmatpush.bf16.msra.mxu0 0
      %1160 = vmatpush.bf16.msra.mxu0 0
      %1161 = vmatpush.bf16.msra.mxu0 0
      %1162 = vmatpush.bf16.msra.mxu0 0
      %1163 = vmatpush.bf16.msra.mxu0 0
      %1164 = vmatpush.bf16.msra.mxu0 %v1098
      %1165 = vmatmul.bf16.gmra.mxu0 %v1103
      %v1166 = vpop.f32.mrf.mxu0
      %v1167 = vadd.f32 0.0, %v1166
      %v1168 = vpop.f32.mrf.mxu0
      %1169 = vdwg.mxu0
      %1170 = vmatpush.bf16.msra.mxu0 0
      %1171 = vmatpush.bf16.msra.mxu0 0
      %1172 = vmatpush.bf16.msra.mxu0 0
      %1173 = vmatpush.bf16.msra.mxu0 0
      %1174 = vmatpush.bf16.msra.mxu0 0
      %1175 = vmatpush.bf16.msra.mxu0 0
      %1176 = vmatpush.bf16.msra.mxu0 0
      %1177 = vmatpush.bf16.msra.mxu0 %v1099
      %1178 = vmatmul.bf16.gmra.mxu0 %v1103
      %v1179 = vpop.f32.mrf.mxu0
      %v1180 = vadd.f32 0.0, %v1179
      %v1181 = vpop.f32.mrf.mxu0
      %1182 = vdwg.mxu0
      %1183 = vmatpush.bf16.msra.mxu0 0
      %1184 = vmatpush.bf16.msra.mxu0 0
      %1185 = vmatpush.bf16.msra.mxu0 0
      %1186 = vmatpush.bf16.msra.mxu0 0
      %1187 = vmatpush.bf16.msra.mxu0 0
      %1188 = vmatpush.bf16.msra.mxu0 0
      %1189 = vmatpush.bf16.msra.mxu0 0
      %1190 = vmatpush.bf16.msra.mxu0 %v1100
      %1191 = vmatmul.bf16.gmra.mxu0 %v1103
      %v1192 = vpop.f32.mrf.mxu0
      %v1193 = vadd.f32 0.0, %v1192
      %v1194 = vpop.f32.mrf.mxu0
      %1195 = vdwg.mxu0
      %1196 = vmatpush.bf16.msra.mxu0 0
      %1197 = vmatpush.bf16.msra.mxu0 0
      %1198 = vmatpush.bf16.msra.mxu0 0
      %1199 = vmatpush.bf16.msra.mxu0 0
      %1200 = vmatpush.bf16.msra.mxu0 0
      %1201 = vmatpush.bf16.msra.mxu0 0
      %1202 = vmatpush.bf16.msra.mxu0 0
      %1203 = vmatpush.bf16.msra.mxu0 %v1101
      %1204 = vmatmul.bf16.gmra.mxu0 %v1103
      %v1205 = vpop.f32.mrf.mxu0
      %v1206 = vadd.f32 0.0, %v1205
      %v1207 = vpop.f32.mrf.mxu0
      %1208 = vdwg.mxu0
      %v1209 = vadd.f32 %v999, %v1115
      %v1210 = vadd.f32 %v1000, %v1128
      %v1211 = vadd.f32 %v1001, %v1141
      %v1212 = vadd.f32 %v1002, %v1154
      %v1213 = vadd.f32 %v1003, %v1167
      %v1214 = vadd.f32 %v1004, %v1180
      %v1215 = vadd.f32 %v1005, %v1193
      %v1216 = vadd.f32 %v1006, %v1206
      %1217 = vrot.lane.b32.xlu0 %v182, 96
      %v1218 = vpop.permute.xlu0 %1217
      %1219 = vrot.lane.b32.xlu0 %v183, 96
      %v1220 = vpop.permute.xlu0 %1219
      %1221 = vrot.lane.b32.xlu0 %v184, 96
      %v1222 = vpop.permute.xlu0 %1221
      %1223 = vrot.lane.b32.xlu0 %v185, 96
      %v1224 = vpop.permute.xlu0 %1223
      %1225 = vrot.lane.b32.xlu0 %v186, 96
      %v1226 = vpop.permute.xlu0 %1225
      %1227 = vrot.lane.b32.xlu0 %v187, 96
      %v1228 = vpop.permute.xlu0 %1227
      %1229 = vrot.lane.b32.xlu0 %v188, 96
      %v1230 = vpop.permute.xlu0 %1229
      %1231 = vrot.lane.b32.xlu0 %v189, 96
      %v1232 = vpop.permute.xlu0 %1231
      %1233 = vrot.lane.b32.xlu0 %v190, 96
      %v1234 = vpop.permute.xlu0 %1233
      %1235 = vrot.lane.b32.xlu0 %v192, 96
      %v1236 = vpop.permute.xlu0 %1235
      %1237 = vrot.lane.b32.xlu0 %v193, 96
      %v1238 = vpop.permute.xlu0 %1237
      %1239 = vrot.lane.b32.xlu0 %v194, 96
      %v1240 = vpop.permute.xlu0 %1239
      %1241 = vrot.lane.b32.xlu0 %v195, 96
      %v1242 = vpop.permute.xlu0 %1241
      %1243 = vrot.lane.b32.xlu0 %v196, 96
      %v1244 = vpop.permute.xlu0 %1243
      %1245 = vrot.lane.b32.xlu0 %v197, 96
      %v1246 = vpop.permute.xlu0 %1245
      %1247 = vrot.lane.b32.xlu0 %v198, 96
      %v1248 = vpop.permute.xlu0 %1247
      %1249 = vrot.lane.b32.xlu0 %v199, 96
      %v1250 = vpop.permute.xlu0 %1249
      %1251 = vrot.lane.b32.xlu0 %v200, 96
      %v1252 = vpop.permute.xlu0 %1251
      %vm1253 = vcmask 785408
      %v1254 = vsel %vm1253, %v1218, %v1220
      %v1255 = vsel %vm1253, %v1220, %v1222
      %v1256 = vsel %vm1253, %v1222, %v1224
      %v1257 = vsel %vm1253, %v1224, %v1226
      %v1258 = vsel %vm1253, %v1226, %v1228
      %v1259 = vsel %vm1253, %v1228, %v1230
      %v1260 = vsel %vm1253, %v1230, %v1232
      %v1261 = vsel %vm1253, %v1232, %v1234
      %v1262 = vsel %vm1253, %v1236, %v1238
      %v1263 = vsel %vm1253, %v1238, %v1240
      %v1264 = vsel %vm1253, %v1240, %v1242
      %v1265 = vsel %vm1253, %v1242, %v1244
      %v1266 = vsel %vm1253, %v1244, %v1246
      %v1267 = vsel %vm1253, %v1246, %v1248
      %v1268 = vsel %vm1253, %v1248, %v1250
      %v1269 = vsel %vm1253, %v1250, %v1252
      %v1286 = vsel %vm219, %v1254, 0.0
      %v1287 = vsel %vm220, %v1255, 0.0
      %v1288 = vsel %vm221, %v1256, 0.0
      %v1289 = vsel %vm222, %v1257, 0.0
      %v1290 = vsel %vm223, %v1258, 0.0
      %v1291 = vsel %vm224, %v1259, 0.0
      %v1292 = vsel %vm225, %v1260, 0.0
      %v1293 = vsel %vm226, %v1261, 0.0
      %v1294 = vsel %vm219, %v1262, 0.0
      %v1295 = vsel %vm220, %v1263, 0.0
      %v1296 = vsel %vm221, %v1264, 0.0
      %v1297 = vsel %vm222, %v1265, 0.0
      %v1298 = vsel %vm223, %v1266, 0.0
      %v1299 = vsel %vm224, %v1267, 0.0
      %v1300 = vsel %vm225, %v1268, 0.0
      %v1301 = vsel %vm226, %v1269, 0.0
      %s1302 = scalar_lea.vmem %s1, 10
      %v1303 = vld [vmem:[%s1302] sm:$0x3]
      %v1304 = vpack.c.bf16 %v1294, %v1286
      %v1305 = vpack.c.bf16 %v1295, %v1287
      %v1306 = vpack.c.bf16 %v1296, %v1288
      %v1307 = vpack.c.bf16 %v1297, %v1289
      %v1308 = vpack.c.bf16 %v1298, %v1290
      %v1309 = vpack.c.bf16 %v1299, %v1291
      %v1310 = vpack.c.bf16 %v1300, %v1292
      %v1311 = vpack.c.bf16 %v1301, %v1293
      %v1313 = vsel %vm283, %v1303, 0
      %1315 = vmatpush.bf16.msra.mxu0 0
      %1316 = vmatpush.bf16.msra.mxu0 0
      %1317 = vmatpush.bf16.msra.mxu0 0
      %1318 = vmatpush.bf16.msra.mxu0 0
      %1319 = vmatpush.bf16.msra.mxu0 0
      %1320 = vmatpush.bf16.msra.mxu0 0
      %1321 = vmatpush.bf16.msra.mxu0 0
      %1322 = vmatpush.bf16.msra.mxu0 %v1304
      %1323 = vmatmul.bf16.gmra.mxu0 %v1313
      %v1324 = vpop.f32.mrf.mxu0
      %v1325 = vadd.f32 0.0, %v1324
      %v1326 = vpop.f32.mrf.mxu0
      %1327 = vdwg.mxu0
      %1328 = vmatpush.bf16.msra.mxu0 0
      %1329 = vmatpush.bf16.msra.mxu0 0
      %1330 = vmatpush.bf16.msra.mxu0 0
      %1331 = vmatpush.bf16.msra.mxu0 0
      %1332 = vmatpush.bf16.msra.mxu0 0
      %1333 = vmatpush.bf16.msra.mxu0 0
      %1334 = vmatpush.bf16.msra.mxu0 0
      %1335 = vmatpush.bf16.msra.mxu0 %v1305
      %1336 = vmatmul.bf16.gmra.mxu0 %v1313
      %v1337 = vpop.f32.mrf.mxu0
      %v1338 = vadd.f32 0.0, %v1337
      %v1339 = vpop.f32.mrf.mxu0
      %1340 = vdwg.mxu0
      %1341 = vmatpush.bf16.msra.mxu0 0
      %1342 = vmatpush.bf16.msra.mxu0 0
      %1343 = vmatpush.bf16.msra.mxu0 0
      %1344 = vmatpush.bf16.msra.mxu0 0
      %1345 = vmatpush.bf16.msra.mxu0 0
      %1346 = vmatpush.bf16.msra.mxu0 0
      %1347 = vmatpush.bf16.msra.mxu0 0
      %1348 = vmatpush.bf16.msra.mxu0 %v1306
      %1349 = vmatmul.bf16.gmra.mxu0 %v1313
      %v1350 = vpop.f32.mrf.mxu0
      %v1351 = vadd.f32 0.0, %v1350
      %v1352 = vpop.f32.mrf.mxu0
      %1353 = vdwg.mxu0
      %1354 = vmatpush.bf16.msra.mxu0 0
      %1355 = vmatpush.bf16.msra.mxu0 0
      %1356 = vmatpush.bf16.msra.mxu0 0
      %1357 = vmatpush.bf16.msra.mxu0 0
      %1358 = vmatpush.bf16.msra.mxu0 0
      %1359 = vmatpush.bf16.msra.mxu0 0
      %1360 = vmatpush.bf16.msra.mxu0 0
      %1361 = vmatpush.bf16.msra.mxu0 %v1307
      %1362 = vmatmul.bf16.gmra.mxu0 %v1313
      %v1363 = vpop.f32.mrf.mxu0
      %v1364 = vadd.f32 0.0, %v1363
      %v1365 = vpop.f32.mrf.mxu0
      %1366 = vdwg.mxu0
      %1367 = vmatpush.bf16.msra.mxu0 0
      %1368 = vmatpush.bf16.msra.mxu0 0
      %1369 = vmatpush.bf16.msra.mxu0 0
      %1370 = vmatpush.bf16.msra.mxu0 0
      %1371 = vmatpush.bf16.msra.mxu0 0
      %1372 = vmatpush.bf16.msra.mxu0 0
      %1373 = vmatpush.bf16.msra.mxu0 0
      %1374 = vmatpush.bf16.msra.mxu0 %v1308
      %1375 = vmatmul.bf16.gmra.mxu0 %v1313
      %v1376 = vpop.f32.mrf.mxu0
      %v1377 = vadd.f32 0.0, %v1376
      %v1378 = vpop.f32.mrf.mxu0
      %1379 = vdwg.mxu0
      %1380 = vmatpush.bf16.msra.mxu0 0
      %1381 = vmatpush.bf16.msra.mxu0 0
      %1382 = vmatpush.bf16.msra.mxu0 0
      %1383 = vmatpush.bf16.msra.mxu0 0
      %1384 = vmatpush.bf16.msra.mxu0 0
      %1385 = vmatpush.bf16.msra.mxu0 0
      %1386 = vmatpush.bf16.msra.mxu0 0
      %1387 = vmatpush.bf16.msra.mxu0 %v1309
      %1388 = vmatmul.bf16.gmra.mxu0 %v1313
      %v1389 = vpop.f32.mrf.mxu0
      %v1390 = vadd.f32 0.0, %v1389
      %v1391 = vpop.f32.mrf.mxu0
      %1392 = vdwg.mxu0
      %1393 = vmatpush.bf16.msra.mxu0 0
      %1394 = vmatpush.bf16.msra.mxu0 0
      %1395 = vmatpush.bf16.msra.mxu0 0
      %1396 = vmatpush.bf16.msra.mxu0 0
      %1397 = vmatpush.bf16.msra.mxu0 0
      %1398 = vmatpush.bf16.msra.mxu0 0
      %1399 = vmatpush.bf16.msra.mxu0 0
      %1400 = vmatpush.bf16.msra.mxu0 %v1310
      %1401 = vmatmul.bf16.gmra.mxu0 %v1313
      %v1402 = vpop.f32.mrf.mxu0
      %v1403 = vadd.f32 0.0, %v1402
      %v1404 = vpop.f32.mrf.mxu0
      %1405 = vdwg.mxu0
      %1406 = vmatpush.bf16.msra.mxu0 0
      %1407 = vmatpush.bf16.msra.mxu0 0
      %1408 = vmatpush.bf16.msra.mxu0 0
      %1409 = vmatpush.bf16.msra.mxu0 0
      %1410 = vmatpush.bf16.msra.mxu0 0
      %1411 = vmatpush.bf16.msra.mxu0 0
      %1412 = vmatpush.bf16.msra.mxu0 0
      %1413 = vmatpush.bf16.msra.mxu0 %v1311
      %1414 = vmatmul.bf16.gmra.mxu0 %v1313
      %v1415 = vpop.f32.mrf.mxu0
      %v1416 = vadd.f32 0.0, %v1415
      %v1417 = vpop.f32.mrf.mxu0
      %1418 = vdwg.mxu0
      %v1419 = vadd.f32 %v1209, %v1325
      %v1420 = vadd.f32 %v1210, %v1338
      %v1421 = vadd.f32 %v1211, %v1351
      %v1422 = vadd.f32 %v1212, %v1364
      %v1423 = vadd.f32 %v1213, %v1377
      %v1424 = vadd.f32 %v1214, %v1390
      %v1425 = vadd.f32 %v1215, %v1403
      %v1426 = vadd.f32 %v1216, %v1416
      %1427 = vrot.lane.b32.xlu0 %v182, 95
      %v1428 = vpop.permute.xlu0 %1427
      %1429 = vrot.lane.b32.xlu0 %v183, 95
      %v1430 = vpop.permute.xlu0 %1429
      %1431 = vrot.lane.b32.xlu0 %v184, 95
      %v1432 = vpop.permute.xlu0 %1431
      %1433 = vrot.lane.b32.xlu0 %v185, 95
      %v1434 = vpop.permute.xlu0 %1433
      %1435 = vrot.lane.b32.xlu0 %v186, 95
      %v1436 = vpop.permute.xlu0 %1435
      %1437 = vrot.lane.b32.xlu0 %v187, 95
      %v1438 = vpop.permute.xlu0 %1437
      %1439 = vrot.lane.b32.xlu0 %v188, 95
      %v1440 = vpop.permute.xlu0 %1439
      %1441 = vrot.lane.b32.xlu0 %v189, 95
      %v1442 = vpop.permute.xlu0 %1441
      %1443 = vrot.lane.b32.xlu0 %v190, 95
      %v1444 = vpop.permute.xlu0 %1443
      %1445 = vrot.lane.b32.xlu0 %v192, 95
      %v1446 = vpop.permute.xlu0 %1445
      %1447 = vrot.lane.b32.xlu0 %v193, 95
      %v1448 = vpop.permute.xlu0 %1447
      %1449 = vrot.lane.b32.xlu0 %v194, 95
      %v1450 = vpop.permute.xlu0 %1449
      %1451 = vrot.lane.b32.xlu0 %v195, 95
      %v1452 = vpop.permute.xlu0 %1451
      %1453 = vrot.lane.b32.xlu0 %v196, 95
      %v1454 = vpop.permute.xlu0 %1453
      %1455 = vrot.lane.b32.xlu0 %v197, 95
      %v1456 = vpop.permute.xlu0 %1455
      %1457 = vrot.lane.b32.xlu0 %v198, 95
      %v1458 = vpop.permute.xlu0 %1457
      %1459 = vrot.lane.b32.xlu0 %v199, 95
      %v1460 = vpop.permute.xlu0 %1459
      %1461 = vrot.lane.b32.xlu0 %v200, 95
      %v1462 = vpop.permute.xlu0 %1461
      %vm1463 = vcmask 777216
      %v1464 = vsel %vm1463, %v1428, %v1430
      %v1465 = vsel %vm1463, %v1430, %v1432
      %v1466 = vsel %vm1463, %v1432, %v1434
      %v1467 = vsel %vm1463, %v1434, %v1436
      %v1468 = vsel %vm1463, %v1436, %v1438
      %v1469 = vsel %vm1463, %v1438, %v1440
      %v1470 = vsel %vm1463, %v1440, %v1442
      %v1471 = vsel %vm1463, %v1442, %v1444
      %v1472 = vsel %vm1463, %v1446, %v1448
      %v1473 = vsel %vm1463, %v1448, %v1450
      %v1474 = vsel %vm1463, %v1450, %v1452
      %v1475 = vsel %vm1463, %v1452, %v1454
      %v1476 = vsel %vm1463, %v1454, %v1456
      %v1477 = vsel %vm1463, %v1456, %v1458
      %v1478 = vsel %vm1463, %v1458, %v1460
      %v1479 = vsel %vm1463, %v1460, %v1462
      %v1496 = vsel %vm227, %v1464, 0.0
      %v1497 = vsel %vm228, %v1465, 0.0
      %v1498 = vsel %vm229, %v1466, 0.0
      %v1499 = vsel %vm230, %v1467, 0.0
      %v1500 = vsel %vm231, %v1468, 0.0
      %v1501 = vsel %vm232, %v1469, 0.0
      %v1502 = vsel %vm233, %v1470, 0.0
      %v1503 = vsel %vm234, %v1471, 0.0
      %v1504 = vsel %vm227, %v1472, 0.0
      %v1505 = vsel %vm228, %v1473, 0.0
      %v1506 = vsel %vm229, %v1474, 0.0
      %v1507 = vsel %vm230, %v1475, 0.0
      %v1508 = vsel %vm231, %v1476, 0.0
      %v1509 = vsel %vm232, %v1477, 0.0
      %v1510 = vsel %vm233, %v1478, 0.0
      %v1511 = vsel %vm234, %v1479, 0.0
      %s1512 = scalar_lea.vmem %s1, 12
      %v1513 = vld [vmem:[%s1512] sm:$0x3]
      %v1514 = vpack.c.bf16 %v1504, %v1496
      %v1515 = vpack.c.bf16 %v1505, %v1497
      %v1516 = vpack.c.bf16 %v1506, %v1498
      %v1517 = vpack.c.bf16 %v1507, %v1499
      %v1518 = vpack.c.bf16 %v1508, %v1500
      %v1519 = vpack.c.bf16 %v1509, %v1501
      %v1520 = vpack.c.bf16 %v1510, %v1502
      %v1521 = vpack.c.bf16 %v1511, %v1503
      %v1523 = vsel %vm283, %v1513, 0
      %1525 = vmatpush.bf16.msra.mxu0 0
      %1526 = vmatpush.bf16.msra.mxu0 0
      %1527 = vmatpush.bf16.msra.mxu0 0
      %1528 = vmatpush.bf16.msra.mxu0 0
      %1529 = vmatpush.bf16.msra.mxu0 0
      %1530 = vmatpush.bf16.msra.mxu0 0
      %1531 = vmatpush.bf16.msra.mxu0 0
      %1532 = vmatpush.bf16.msra.mxu0 %v1514
      %1533 = vmatmul.bf16.gmra.mxu0 %v1523
      %v1534 = vpop.f32.mrf.mxu0
      %v1535 = vadd.f32 0.0, %v1534
      %v1536 = vpop.f32.mrf.mxu0
      %1537 = vdwg.mxu0
      %1538 = vmatpush.bf16.msra.mxu0 0
      %1539 = vmatpush.bf16.msra.mxu0 0
      %1540 = vmatpush.bf16.msra.mxu0 0
      %1541 = vmatpush.bf16.msra.mxu0 0
      %1542 = vmatpush.bf16.msra.mxu0 0
      %1543 = vmatpush.bf16.msra.mxu0 0
      %1544 = vmatpush.bf16.msra.mxu0 0
      %1545 = vmatpush.bf16.msra.mxu0 %v1515
      %1546 = vmatmul.bf16.gmra.mxu0 %v1523
      %v1547 = vpop.f32.mrf.mxu0
      %v1548 = vadd.f32 0.0, %v1547
      %v1549 = vpop.f32.mrf.mxu0
      %1550 = vdwg.mxu0
      %1551 = vmatpush.bf16.msra.mxu0 0
      %1552 = vmatpush.bf16.msra.mxu0 0
      %1553 = vmatpush.bf16.msra.mxu0 0
      %1554 = vmatpush.bf16.msra.mxu0 0
      %1555 = vmatpush.bf16.msra.mxu0 0
      %1556 = vmatpush.bf16.msra.mxu0 0
      %1557 = vmatpush.bf16.msra.mxu0 0
      %1558 = vmatpush.bf16.msra.mxu0 %v1516
      %1559 = vmatmul.bf16.gmra.mxu0 %v1523
      %v1560 = vpop.f32.mrf.mxu0
      %v1561 = vadd.f32 0.0, %v1560
      %v1562 = vpop.f32.mrf.mxu0
      %1563 = vdwg.mxu0
      %1564 = vmatpush.bf16.msra.mxu0 0
      %1565 = vmatpush.bf16.msra.mxu0 0
      %1566 = vmatpush.bf16.msra.mxu0 0
      %1567 = vmatpush.bf16.msra.mxu0 0
      %1568 = vmatpush.bf16.msra.mxu0 0
      %1569 = vmatpush.bf16.msra.mxu0 0
      %1570 = vmatpush.bf16.msra.mxu0 0
      %1571 = vmatpush.bf16.msra.mxu0 %v1517
      %1572 = vmatmul.bf16.gmra.mxu0 %v1523
      %v1573 = vpop.f32.mrf.mxu0
      %v1574 = vadd.f32 0.0, %v1573
      %v1575 = vpop.f32.mrf.mxu0
      %1576 = vdwg.mxu0
      %1577 = vmatpush.bf16.msra.mxu0 0
      %1578 = vmatpush.bf16.msra.mxu0 0
      %1579 = vmatpush.bf16.msra.mxu0 0
      %1580 = vmatpush.bf16.msra.mxu0 0
      %1581 = vmatpush.bf16.msra.mxu0 0
      %1582 = vmatpush.bf16.msra.mxu0 0
      %1583 = vmatpush.bf16.msra.mxu0 0
      %1584 = vmatpush.bf16.msra.mxu0 %v1518
      %1585 = vmatmul.bf16.gmra.mxu0 %v1523
      %v1586 = vpop.f32.mrf.mxu0
      %v1587 = vadd.f32 0.0, %v1586
      %v1588 = vpop.f32.mrf.mxu0
      %1589 = vdwg.mxu0
      %1590 = vmatpush.bf16.msra.mxu0 0
      %1591 = vmatpush.bf16.msra.mxu0 0
      %1592 = vmatpush.bf16.msra.mxu0 0
      %1593 = vmatpush.bf16.msra.mxu0 0
      %1594 = vmatpush.bf16.msra.mxu0 0
      %1595 = vmatpush.bf16.msra.mxu0 0
      %1596 = vmatpush.bf16.msra.mxu0 0
      %1597 = vmatpush.bf16.msra.mxu0 %v1519
      %1598 = vmatmul.bf16.gmra.mxu0 %v1523
      %v1599 = vpop.f32.mrf.mxu0
      %v1600 = vadd.f32 0.0, %v1599
      %v1601 = vpop.f32.mrf.mxu0
      %1602 = vdwg.mxu0
      %1603 = vmatpush.bf16.msra.mxu0 0
      %1604 = vmatpush.bf16.msra.mxu0 0
      %1605 = vmatpush.bf16.msra.mxu0 0
      %1606 = vmatpush.bf16.msra.mxu0 0
      %1607 = vmatpush.bf16.msra.mxu0 0
      %1608 = vmatpush.bf16.msra.mxu0 0
      %1609 = vmatpush.bf16.msra.mxu0 0
      %1610 = vmatpush.bf16.msra.mxu0 %v1520
      %1611 = vmatmul.bf16.gmra.mxu0 %v1523
      %v1612 = vpop.f32.mrf.mxu0
      %v1613 = vadd.f32 0.0, %v1612
      %v1614 = vpop.f32.mrf.mxu0
      %1615 = vdwg.mxu0
      %1616 = vmatpush.bf16.msra.mxu0 0
      %1617 = vmatpush.bf16.msra.mxu0 0
      %1618 = vmatpush.bf16.msra.mxu0 0
      %1619 = vmatpush.bf16.msra.mxu0 0
      %1620 = vmatpush.bf16.msra.mxu0 0
      %1621 = vmatpush.bf16.msra.mxu0 0
      %1622 = vmatpush.bf16.msra.mxu0 0
      %1623 = vmatpush.bf16.msra.mxu0 %v1521
      %1624 = vmatmul.bf16.gmra.mxu0 %v1523
      %v1625 = vpop.f32.mrf.mxu0
      %v1626 = vadd.f32 0.0, %v1625
      %v1627 = vpop.f32.mrf.mxu0
      %1628 = vdwg.mxu0
      %v1629 = vadd.f32 %v1419, %v1535
      %v1630 = vadd.f32 %v1420, %v1548
      %v1631 = vadd.f32 %v1421, %v1561
      %v1632 = vadd.f32 %v1422, %v1574
      %v1633 = vadd.f32 %v1423, %v1587
      %v1634 = vadd.f32 %v1424, %v1600
      %v1635 = vadd.f32 %v1425, %v1613
      %v1636 = vadd.f32 %v1426, %v1626
      %s1637 = scalar_lea.vmem %s1, 14
      %v1638 = vld [vmem:[%s1637] sm:$0x3]
      %1639 = vrot.lane.b32.xlu0 %v629, 94
      %v1640 = vpop.permute.xlu0 %1639
      %1641 = vrot.lane.b32.xlu0 %v630, 94
      %v1642 = vpop.permute.xlu0 %1641
      %1643 = vrot.lane.b32.xlu0 %v631, 94
      %v1644 = vpop.permute.xlu0 %1643
      %1645 = vrot.lane.b32.xlu0 %v632, 94
      %v1646 = vpop.permute.xlu0 %1645
      %1647 = vrot.lane.b32.xlu0 %v633, 94
      %v1648 = vpop.permute.xlu0 %1647
      %1649 = vrot.lane.b32.xlu0 %v634, 94
      %v1650 = vpop.permute.xlu0 %1649
      %1651 = vrot.lane.b32.xlu0 %v635, 94
      %v1652 = vpop.permute.xlu0 %1651
      %1653 = vrot.lane.b32.xlu0 %v636, 94
      %v1654 = vpop.permute.xlu0 %1653
      %1655 = vrot.lane.b32.xlu0 %v637, 94
      %v1656 = vpop.permute.xlu0 %1655
      %vm1657 = vcmask 769024
      %v1658 = vsel %vm1657, %v1640, %v1642
      %v1659 = vsel %vm1657, %v1642, %v1644
      %v1660 = vsel %vm1657, %v1644, %v1646
      %v1661 = vsel %vm1657, %v1646, %v1648
      %v1662 = vsel %vm1657, %v1648, %v1650
      %v1663 = vsel %vm1657, %v1650, %v1652
      %v1664 = vsel %vm1657, %v1652, %v1654
      %v1665 = vsel %vm1657, %v1654, %v1656
      %v1675 = vsel %vm283, %v1638, 0
      %1677 = vmatpush.bf16.msra.mxu0 0
      %1678 = vmatpush.bf16.msra.mxu0 0
      %1679 = vmatpush.bf16.msra.mxu0 0
      %1680 = vmatpush.bf16.msra.mxu0 0
      %1681 = vmatpush.bf16.msra.mxu0 0
      %1682 = vmatpush.bf16.msra.mxu0 0
      %1683 = vmatpush.bf16.msra.mxu0 0
      %1684 = vmatpush.bf16.msra.mxu0 %v1658
      %1685 = vmatmul.bf16.gmra.mxu0 %v1675
      %v1686 = vpop.f32.mrf.mxu0
      %v1687 = vadd.f32 0.0, %v1686
      %v1688 = vpop.f32.mrf.mxu0
      %1689 = vdwg.mxu0
      %1690 = vmatpush.bf16.msra.mxu0 0
      %1691 = vmatpush.bf16.msra.mxu0 0
      %1692 = vmatpush.bf16.msra.mxu0 0
      %1693 = vmatpush.bf16.msra.mxu0 0
      %1694 = vmatpush.bf16.msra.mxu0 0
      %1695 = vmatpush.bf16.msra.mxu0 0
      %1696 = vmatpush.bf16.msra.mxu0 0
      %1697 = vmatpush.bf16.msra.mxu0 %v1659
      %1698 = vmatmul.bf16.gmra.mxu0 %v1675
      %v1699 = vpop.f32.mrf.mxu0
      %v1700 = vadd.f32 0.0, %v1699
      %v1701 = vpop.f32.mrf.mxu0
      %1702 = vdwg.mxu0
      %1703 = vmatpush.bf16.msra.mxu0 0
      %1704 = vmatpush.bf16.msra.mxu0 0
      %1705 = vmatpush.bf16.msra.mxu0 0
      %1706 = vmatpush.bf16.msra.mxu0 0
      %1707 = vmatpush.bf16.msra.mxu0 0
      %1708 = vmatpush.bf16.msra.mxu0 0
      %1709 = vmatpush.bf16.msra.mxu0 0
      %1710 = vmatpush.bf16.msra.mxu0 %v1660
      %1711 = vmatmul.bf16.gmra.mxu0 %v1675
      %v1712 = vpop.f32.mrf.mxu0
      %v1713 = vadd.f32 0.0, %v1712
      %v1714 = vpop.f32.mrf.mxu0
      %1715 = vdwg.mxu0
      %1716 = vmatpush.bf16.msra.mxu0 0
      %1717 = vmatpush.bf16.msra.mxu0 0
      %1718 = vmatpush.bf16.msra.mxu0 0
      %1719 = vmatpush.bf16.msra.mxu0 0
      %1720 = vmatpush.bf16.msra.mxu0 0
      %1721 = vmatpush.bf16.msra.mxu0 0
      %1722 = vmatpush.bf16.msra.mxu0 0
      %1723 = vmatpush.bf16.msra.mxu0 %v1661
      %1724 = vmatmul.bf16.gmra.mxu0 %v1675
      %v1725 = vpop.f32.mrf.mxu0
      %v1726 = vadd.f32 0.0, %v1725
      %v1727 = vpop.f32.mrf.mxu0
      %1728 = vdwg.mxu0
      %1729 = vmatpush.bf16.msra.mxu0 0
      %1730 = vmatpush.bf16.msra.mxu0 0
      %1731 = vmatpush.bf16.msra.mxu0 0
      %1732 = vmatpush.bf16.msra.mxu0 0
      %1733 = vmatpush.bf16.msra.mxu0 0
      %1734 = vmatpush.bf16.msra.mxu0 0
      %1735 = vmatpush.bf16.msra.mxu0 0
      %1736 = vmatpush.bf16.msra.mxu0 %v1662
      %1737 = vmatmul.bf16.gmra.mxu0 %v1675
      %v1738 = vpop.f32.mrf.mxu0
      %v1739 = vadd.f32 0.0, %v1738
      %v1740 = vpop.f32.mrf.mxu0
      %1741 = vdwg.mxu0
      %1742 = vmatpush.bf16.msra.mxu0 0
      %1743 = vmatpush.bf16.msra.mxu0 0
      %1744 = vmatpush.bf16.msra.mxu0 0
      %1745 = vmatpush.bf16.msra.mxu0 0
      %1746 = vmatpush.bf16.msra.mxu0 0
      %1747 = vmatpush.bf16.msra.mxu0 0
      %1748 = vmatpush.bf16.msra.mxu0 0
      %1749 = vmatpush.bf16.msra.mxu0 %v1663
      %1750 = vmatmul.bf16.gmra.mxu0 %v1675
      %v1751 = vpop.f32.mrf.mxu0
      %v1752 = vadd.f32 0.0, %v1751
      %v1753 = vpop.f32.mrf.mxu0
      %1754 = vdwg.mxu0
      %1755 = vmatpush.bf16.msra.mxu0 0
      %1756 = vmatpush.bf16.msra.mxu0 0
      %1757 = vmatpush.bf16.msra.mxu0 0
      %1758 = vmatpush.bf16.msra.mxu0 0
      %1759 = vmatpush.bf16.msra.mxu0 0
      %1760 = vmatpush.bf16.msra.mxu0 0
      %1761 = vmatpush.bf16.msra.mxu0 0
      %1762 = vmatpush.bf16.msra.mxu0 %v1664
      %1763 = vmatmul.bf16.gmra.mxu0 %v1675
      %v1764 = vpop.f32.mrf.mxu0
      %v1765 = vadd.f32 0.0, %v1764
      %v1766 = vpop.f32.mrf.mxu0
      %1767 = vdwg.mxu0
      %1768 = vmatpush.bf16.msra.mxu0 0
      %1769 = vmatpush.bf16.msra.mxu0 0
      %1770 = vmatpush.bf16.msra.mxu0 0
      %1771 = vmatpush.bf16.msra.mxu0 0
      %1772 = vmatpush.bf16.msra.mxu0 0
      %1773 = vmatpush.bf16.msra.mxu0 0
      %1774 = vmatpush.bf16.msra.mxu0 0
      %1775 = vmatpush.bf16.msra.mxu0 %v1665
      %1776 = vmatmul.bf16.gmra.mxu0 %v1675
      %v1777 = vpop.f32.mrf.mxu0
      %v1778 = vadd.f32 0.0, %v1777
      %v1779 = vpop.f32.mrf.mxu0
      %1780 = vdwg.mxu0
      %v1781 = vadd.f32 %v1629, %v1687
      %v1782 = vadd.f32 %v1630, %v1700
      %v1783 = vadd.f32 %v1631, %v1713
      %v1784 = vadd.f32 %v1632, %v1726
      %v1785 = vadd.f32 %v1633, %v1739
      %v1786 = vadd.f32 %v1634, %v1752
      %v1787 = vadd.f32 %v1635, %v1765
      %v1788 = vadd.f32 %v1636, %v1778
      %1789 = vrot.lane.b32.xlu0 %v182, 93
      %v1790 = vpop.permute.xlu0 %1789
      %1791 = vrot.lane.b32.xlu0 %v183, 93
      %v1792 = vpop.permute.xlu0 %1791
      %1793 = vrot.lane.b32.xlu0 %v184, 93
      %v1794 = vpop.permute.xlu0 %1793
      %1795 = vrot.lane.b32.xlu0 %v185, 93
      %v1796 = vpop.permute.xlu0 %1795
      %1797 = vrot.lane.b32.xlu0 %v186, 93
      %v1798 = vpop.permute.xlu0 %1797
      %1799 = vrot.lane.b32.xlu0 %v187, 93
      %v1800 = vpop.permute.xlu0 %1799
      %1801 = vrot.lane.b32.xlu0 %v188, 93
      %v1802 = vpop.permute.xlu0 %1801
      %1803 = vrot.lane.b32.xlu0 %v189, 93
      %v1804 = vpop.permute.xlu0 %1803
      %1805 = vrot.lane.b32.xlu0 %v190, 93
      %v1806 = vpop.permute.xlu0 %1805
      %1807 = vrot.lane.b32.xlu0 %v192, 93
      %v1808 = vpop.permute.xlu0 %1807
      %1809 = vrot.lane.b32.xlu0 %v193, 93
      %v1810 = vpop.permute.xlu0 %1809
      %1811 = vrot.lane.b32.xlu0 %v194, 93
      %v1812 = vpop.permute.xlu0 %1811
      %1813 = vrot.lane.b32.xlu0 %v195, 93
      %v1814 = vpop.permute.xlu0 %1813
      %1815 = vrot.lane.b32.xlu0 %v196, 93
      %v1816 = vpop.permute.xlu0 %1815
      %1817 = vrot.lane.b32.xlu0 %v197, 93
      %v1818 = vpop.permute.xlu0 %1817
      %1819 = vrot.lane.b32.xlu0 %v198, 93
      %v1820 = vpop.permute.xlu0 %1819
      %1821 = vrot.lane.b32.xlu0 %v199, 93
      %v1822 = vpop.permute.xlu0 %1821
      %1823 = vrot.lane.b32.xlu0 %v200, 93
      %v1824 = vpop.permute.xlu0 %1823
      %vm1825 = vcmask 760832
      %v1826 = vsel %vm1825, %v1790, %v1792
      %v1827 = vsel %vm1825, %v1792, %v1794
      %v1828 = vsel %vm1825, %v1794, %v1796
      %v1829 = vsel %vm1825, %v1796, %v1798
      %v1830 = vsel %vm1825, %v1798, %v1800
      %v1831 = vsel %vm1825, %v1800, %v1802
      %v1832 = vsel %vm1825, %v1802, %v1804
      %v1833 = vsel %vm1825, %v1804, %v1806
      %v1834 = vsel %vm1825, %v1808, %v1810
      %v1835 = vsel %vm1825, %v1810, %v1812
      %v1836 = vsel %vm1825, %v1812, %v1814
      %v1837 = vsel %vm1825, %v1814, %v1816
      %v1838 = vsel %vm1825, %v1816, %v1818
      %v1839 = vsel %vm1825, %v1818, %v1820
      %v1840 = vsel %vm1825, %v1820, %v1822
      %v1841 = vsel %vm1825, %v1822, %v1824
      %v1858 = vsel %vm235, %v1826, 0.0
      %v1859 = vsel %vm236, %v1827, 0.0
      %v1860 = vsel %vm237, %v1828, 0.0
      %v1861 = vsel %vm238, %v1829, 0.0
      %v1862 = vsel %vm239, %v1830, 0.0
      %v1863 = vsel %vm240, %v1831, 0.0
      %v1864 = vsel %vm241, %v1832, 0.0
      %v1865 = vsel %vm242, %v1833, 0.0
      %v1866 = vsel %vm235, %v1834, 0.0
      %v1867 = vsel %vm236, %v1835, 0.0
      %v1868 = vsel %vm237, %v1836, 0.0
      %v1869 = vsel %vm238, %v1837, 0.0
      %v1870 = vsel %vm239, %v1838, 0.0
      %v1871 = vsel %vm240, %v1839, 0.0
      %v1872 = vsel %vm241, %v1840, 0.0
      %v1873 = vsel %vm242, %v1841, 0.0
      %s1874 = scalar_lea.vmem %s1, 16
      %v1875 = vld [vmem:[%s1874] sm:$0x3]
      %v1876 = vpack.c.bf16 %v1866, %v1858
      %v1877 = vpack.c.bf16 %v1867, %v1859
      %v1878 = vpack.c.bf16 %v1868, %v1860
      %v1879 = vpack.c.bf16 %v1869, %v1861
      %v1880 = vpack.c.bf16 %v1870, %v1862
      %v1881 = vpack.c.bf16 %v1871, %v1863
      %v1882 = vpack.c.bf16 %v1872, %v1864
      %v1883 = vpack.c.bf16 %v1873, %v1865
      %v1885 = vsel %vm283, %v1875, 0
      %1887 = vmatpush.bf16.msra.mxu0 0
      %1888 = vmatpush.bf16.msra.mxu0 0
      %1889 = vmatpush.bf16.msra.mxu0 0
      %1890 = vmatpush.bf16.msra.mxu0 0
      %1891 = vmatpush.bf16.msra.mxu0 0
      %1892 = vmatpush.bf16.msra.mxu0 0
      %1893 = vmatpush.bf16.msra.mxu0 0
      %1894 = vmatpush.bf16.msra.mxu0 %v1876
      %1895 = vmatmul.bf16.gmra.mxu0 %v1885
      %v1896 = vpop.f32.mrf.mxu0
      %v1897 = vadd.f32 0.0, %v1896
      %v1898 = vpop.f32.mrf.mxu0
      %1899 = vdwg.mxu0
      %1900 = vmatpush.bf16.msra.mxu0 0
      %1901 = vmatpush.bf16.msra.mxu0 0
      %1902 = vmatpush.bf16.msra.mxu0 0
      %1903 = vmatpush.bf16.msra.mxu0 0
      %1904 = vmatpush.bf16.msra.mxu0 0
      %1905 = vmatpush.bf16.msra.mxu0 0
      %1906 = vmatpush.bf16.msra.mxu0 0
      %1907 = vmatpush.bf16.msra.mxu0 %v1877
      %1908 = vmatmul.bf16.gmra.mxu0 %v1885
      %v1909 = vpop.f32.mrf.mxu0
      %v1910 = vadd.f32 0.0, %v1909
      %v1911 = vpop.f32.mrf.mxu0
      %1912 = vdwg.mxu0
      %1913 = vmatpush.bf16.msra.mxu0 0
      %1914 = vmatpush.bf16.msra.mxu0 0
      %1915 = vmatpush.bf16.msra.mxu0 0
      %1916 = vmatpush.bf16.msra.mxu0 0
      %1917 = vmatpush.bf16.msra.mxu0 0
      %1918 = vmatpush.bf16.msra.mxu0 0
      %1919 = vmatpush.bf16.msra.mxu0 0
      %1920 = vmatpush.bf16.msra.mxu0 %v1878
      %1921 = vmatmul.bf16.gmra.mxu0 %v1885
      %v1922 = vpop.f32.mrf.mxu0
      %v1923 = vadd.f32 0.0, %v1922
      %v1924 = vpop.f32.mrf.mxu0
      %1925 = vdwg.mxu0
      %1926 = vmatpush.bf16.msra.mxu0 0
      %1927 = vmatpush.bf16.msra.mxu0 0
      %1928 = vmatpush.bf16.msra.mxu0 0
      %1929 = vmatpush.bf16.msra.mxu0 0
      %1930 = vmatpush.bf16.msra.mxu0 0
      %1931 = vmatpush.bf16.msra.mxu0 0
      %1932 = vmatpush.bf16.msra.mxu0 0
      %1933 = vmatpush.bf16.msra.mxu0 %v1879
      %1934 = vmatmul.bf16.gmra.mxu0 %v1885
      %v1935 = vpop.f32.mrf.mxu0
      %v1936 = vadd.f32 0.0, %v1935
      %v1937 = vpop.f32.mrf.mxu0
      %1938 = vdwg.mxu0
      %1939 = vmatpush.bf16.msra.mxu0 0
      %1940 = vmatpush.bf16.msra.mxu0 0
      %1941 = vmatpush.bf16.msra.mxu0 0
      %1942 = vmatpush.bf16.msra.mxu0 0
      %1943 = vmatpush.bf16.msra.mxu0 0
      %1944 = vmatpush.bf16.msra.mxu0 0
      %1945 = vmatpush.bf16.msra.mxu0 0
      %1946 = vmatpush.bf16.msra.mxu0 %v1880
      %1947 = vmatmul.bf16.gmra.mxu0 %v1885
      %v1948 = vpop.f32.mrf.mxu0
      %v1949 = vadd.f32 0.0, %v1948
      %v1950 = vpop.f32.mrf.mxu0
      %1951 = vdwg.mxu0
      %1952 = vmatpush.bf16.msra.mxu0 0
      %1953 = vmatpush.bf16.msra.mxu0 0
      %1954 = vmatpush.bf16.msra.mxu0 0
      %1955 = vmatpush.bf16.msra.mxu0 0
      %1956 = vmatpush.bf16.msra.mxu0 0
      %1957 = vmatpush.bf16.msra.mxu0 0
      %1958 = vmatpush.bf16.msra.mxu0 0
      %1959 = vmatpush.bf16.msra.mxu0 %v1881
      %1960 = vmatmul.bf16.gmra.mxu0 %v1885
      %v1961 = vpop.f32.mrf.mxu0
      %v1962 = vadd.f32 0.0, %v1961
      %v1963 = vpop.f32.mrf.mxu0
      %1964 = vdwg.mxu0
      %1965 = vmatpush.bf16.msra.mxu0 0
      %1966 = vmatpush.bf16.msra.mxu0 0
      %1967 = vmatpush.bf16.msra.mxu0 0
      %1968 = vmatpush.bf16.msra.mxu0 0
      %1969 = vmatpush.bf16.msra.mxu0 0
      %1970 = vmatpush.bf16.msra.mxu0 0
      %1971 = vmatpush.bf16.msra.mxu0 0
      %1972 = vmatpush.bf16.msra.mxu0 %v1882
      %1973 = vmatmul.bf16.gmra.mxu0 %v1885
      %v1974 = vpop.f32.mrf.mxu0
      %v1975 = vadd.f32 0.0, %v1974
      %v1976 = vpop.f32.mrf.mxu0
      %1977 = vdwg.mxu0
      %1978 = vmatpush.bf16.msra.mxu0 0
      %1979 = vmatpush.bf16.msra.mxu0 0
      %1980 = vmatpush.bf16.msra.mxu0 0
      %1981 = vmatpush.bf16.msra.mxu0 0
      %1982 = vmatpush.bf16.msra.mxu0 0
      %1983 = vmatpush.bf16.msra.mxu0 0
      %1984 = vmatpush.bf16.msra.mxu0 0
      %1985 = vmatpush.bf16.msra.mxu0 %v1883
      %1986 = vmatmul.bf16.gmra.mxu0 %v1885
      %v1987 = vpop.f32.mrf.mxu0
      %v1988 = vadd.f32 0.0, %v1987
      %v1989 = vpop.f32.mrf.mxu0
      %1990 = vdwg.mxu0
      %v1991 = vadd.f32 %v1781, %v1897
      %v1992 = vadd.f32 %v1782, %v1910
      %v1993 = vadd.f32 %v1783, %v1923
      %v1994 = vadd.f32 %v1784, %v1936
      %v1995 = vadd.f32 %v1785, %v1949
      %v1996 = vadd.f32 %v1786, %v1962
      %v1997 = vadd.f32 %v1787, %v1975
      %v1998 = vadd.f32 %v1788, %v1988
      %1999 = vrot.lane.b32.xlu0 %v182, 92
      %v2000 = vpop.permute.xlu0 %1999
      %2001 = vrot.lane.b32.xlu0 %v183, 92
      %v2002 = vpop.permute.xlu0 %2001
      %2003 = vrot.lane.b32.xlu0 %v184, 92
      %v2004 = vpop.permute.xlu0 %2003
      %2005 = vrot.lane.b32.xlu0 %v185, 92
      %v2006 = vpop.permute.xlu0 %2005
      %2007 = vrot.lane.b32.xlu0 %v186, 92
      %v2008 = vpop.permute.xlu0 %2007
      %2009 = vrot.lane.b32.xlu0 %v187, 92
      %v2010 = vpop.permute.xlu0 %2009
      %2011 = vrot.lane.b32.xlu0 %v188, 92
      %v2012 = vpop.permute.xlu0 %2011
      %2013 = vrot.lane.b32.xlu0 %v189, 92
      %v2014 = vpop.permute.xlu0 %2013
      %2015 = vrot.lane.b32.xlu0 %v190, 92
      %v2016 = vpop.permute.xlu0 %2015
      %2017 = vrot.lane.b32.xlu0 %v192, 92
      %v2018 = vpop.permute.xlu0 %2017
      %2019 = vrot.lane.b32.xlu0 %v193, 92
      %v2020 = vpop.permute.xlu0 %2019
      %2021 = vrot.lane.b32.xlu0 %v194, 92
      %v2022 = vpop.permute.xlu0 %2021
      %2023 = vrot.lane.b32.xlu0 %v195, 92
      %v2024 = vpop.permute.xlu0 %2023
      %2025 = vrot.lane.b32.xlu0 %v196, 92
      %v2026 = vpop.permute.xlu0 %2025
      %2027 = vrot.lane.b32.xlu0 %v197, 92
      %v2028 = vpop.permute.xlu0 %2027
      %2029 = vrot.lane.b32.xlu0 %v198, 92
      %v2030 = vpop.permute.xlu0 %2029
      %2031 = vrot.lane.b32.xlu0 %v199, 92
      %v2032 = vpop.permute.xlu0 %2031
      %2033 = vrot.lane.b32.xlu0 %v200, 92
      %v2034 = vpop.permute.xlu0 %2033
      %vm2035 = vcmask 752640
      %v2036 = vsel %vm2035, %v2000, %v2002
      %v2037 = vsel %vm2035, %v2002, %v2004
      %v2038 = vsel %vm2035, %v2004, %v2006
      %v2039 = vsel %vm2035, %v2006, %v2008
      %v2040 = vsel %vm2035, %v2008, %v2010
      %v2041 = vsel %vm2035, %v2010, %v2012
      %v2042 = vsel %vm2035, %v2012, %v2014
      %v2043 = vsel %vm2035, %v2014, %v2016
      %v2044 = vsel %vm2035, %v2018, %v2020
      %v2045 = vsel %vm2035, %v2020, %v2022
      %v2046 = vsel %vm2035, %v2022, %v2024
      %v2047 = vsel %vm2035, %v2024, %v2026
      %v2048 = vsel %vm2035, %v2026, %v2028
      %v2049 = vsel %vm2035, %v2028, %v2030
      %v2050 = vsel %vm2035, %v2030, %v2032
      %v2051 = vsel %vm2035, %v2032, %v2034
      %v2068 = vsel %vm243, %v2036, 0.0
      %v2069 = vsel %vm244, %v2037, 0.0
      %v2070 = vsel %vm245, %v2038, 0.0
      %v2071 = vsel %vm246, %v2039, 0.0
      %v2072 = vsel %vm247, %v2040, 0.0
      %v2073 = vsel %vm248, %v2041, 0.0
      %v2074 = vsel %vm249, %v2042, 0.0
      %v2075 = vsel %vm250, %v2043, 0.0
      %v2076 = vsel %vm243, %v2044, 0.0
      %v2077 = vsel %vm244, %v2045, 0.0
      %v2078 = vsel %vm245, %v2046, 0.0
      %v2079 = vsel %vm246, %v2047, 0.0
      %v2080 = vsel %vm247, %v2048, 0.0
      %v2081 = vsel %vm248, %v2049, 0.0
      %v2082 = vsel %vm249, %v2050, 0.0
      %v2083 = vsel %vm250, %v2051, 0.0
      %s2084 = scalar_lea.vmem %s1, 18
      %v2085 = vld [vmem:[%s2084] sm:$0x3]
      %v2086 = vpack.c.bf16 %v2076, %v2068
      %v2087 = vpack.c.bf16 %v2077, %v2069
      %v2088 = vpack.c.bf16 %v2078, %v2070
      %v2089 = vpack.c.bf16 %v2079, %v2071
      %v2090 = vpack.c.bf16 %v2080, %v2072
      %v2091 = vpack.c.bf16 %v2081, %v2073
      %v2092 = vpack.c.bf16 %v2082, %v2074
      %v2093 = vpack.c.bf16 %v2083, %v2075
      %v2095 = vsel %vm283, %v2085, 0
      %2097 = vmatpush.bf16.msra.mxu0 0
      %2098 = vmatpush.bf16.msra.mxu0 0
      %2099 = vmatpush.bf16.msra.mxu0 0
      %2100 = vmatpush.bf16.msra.mxu0 0
      %2101 = vmatpush.bf16.msra.mxu0 0
      %2102 = vmatpush.bf16.msra.mxu0 0
      %2103 = vmatpush.bf16.msra.mxu0 0
      %2104 = vmatpush.bf16.msra.mxu0 %v2086
      %2105 = vmatmul.bf16.gmra.mxu0 %v2095
      %v2106 = vpop.f32.mrf.mxu0
      %v2107 = vadd.f32 0.0, %v2106
      %v2108 = vpop.f32.mrf.mxu0
      %2109 = vdwg.mxu0
      %2110 = vmatpush.bf16.msra.mxu0 0
      %2111 = vmatpush.bf16.msra.mxu0 0
      %2112 = vmatpush.bf16.msra.mxu0 0
      %2113 = vmatpush.bf16.msra.mxu0 0
      %2114 = vmatpush.bf16.msra.mxu0 0
      %2115 = vmatpush.bf16.msra.mxu0 0
      %2116 = vmatpush.bf16.msra.mxu0 0
      %2117 = vmatpush.bf16.msra.mxu0 %v2087
      %2118 = vmatmul.bf16.gmra.mxu0 %v2095
      %v2119 = vpop.f32.mrf.mxu0
      %v2120 = vadd.f32 0.0, %v2119
      %v2121 = vpop.f32.mrf.mxu0
      %2122 = vdwg.mxu0
      %2123 = vmatpush.bf16.msra.mxu0 0
      %2124 = vmatpush.bf16.msra.mxu0 0
      %2125 = vmatpush.bf16.msra.mxu0 0
      %2126 = vmatpush.bf16.msra.mxu0 0
      %2127 = vmatpush.bf16.msra.mxu0 0
      %2128 = vmatpush.bf16.msra.mxu0 0
      %2129 = vmatpush.bf16.msra.mxu0 0
      %2130 = vmatpush.bf16.msra.mxu0 %v2088
      %2131 = vmatmul.bf16.gmra.mxu0 %v2095
      %v2132 = vpop.f32.mrf.mxu0
      %v2133 = vadd.f32 0.0, %v2132
      %v2134 = vpop.f32.mrf.mxu0
      %2135 = vdwg.mxu0
      %2136 = vmatpush.bf16.msra.mxu0 0
      %2137 = vmatpush.bf16.msra.mxu0 0
      %2138 = vmatpush.bf16.msra.mxu0 0
      %2139 = vmatpush.bf16.msra.mxu0 0
      %2140 = vmatpush.bf16.msra.mxu0 0
      %2141 = vmatpush.bf16.msra.mxu0 0
      %2142 = vmatpush.bf16.msra.mxu0 0
      %2143 = vmatpush.bf16.msra.mxu0 %v2089
      %2144 = vmatmul.bf16.gmra.mxu0 %v2095
      %v2145 = vpop.f32.mrf.mxu0
      %v2146 = vadd.f32 0.0, %v2145
      %v2147 = vpop.f32.mrf.mxu0
      %2148 = vdwg.mxu0
      %2149 = vmatpush.bf16.msra.mxu0 0
      %2150 = vmatpush.bf16.msra.mxu0 0
      %2151 = vmatpush.bf16.msra.mxu0 0
      %2152 = vmatpush.bf16.msra.mxu0 0
      %2153 = vmatpush.bf16.msra.mxu0 0
      %2154 = vmatpush.bf16.msra.mxu0 0
      %2155 = vmatpush.bf16.msra.mxu0 0
      %2156 = vmatpush.bf16.msra.mxu0 %v2090
      %2157 = vmatmul.bf16.gmra.mxu0 %v2095
      %v2158 = vpop.f32.mrf.mxu0
      %v2159 = vadd.f32 0.0, %v2158
      %v2160 = vpop.f32.mrf.mxu0
      %2161 = vdwg.mxu0
      %2162 = vmatpush.bf16.msra.mxu0 0
      %2163 = vmatpush.bf16.msra.mxu0 0
      %2164 = vmatpush.bf16.msra.mxu0 0
      %2165 = vmatpush.bf16.msra.mxu0 0
      %2166 = vmatpush.bf16.msra.mxu0 0
      %2167 = vmatpush.bf16.msra.mxu0 0
      %2168 = vmatpush.bf16.msra.mxu0 0
      %2169 = vmatpush.bf16.msra.mxu0 %v2091
      %2170 = vmatmul.bf16.gmra.mxu0 %v2095
      %v2171 = vpop.f32.mrf.mxu0
      %v2172 = vadd.f32 0.0, %v2171
      %v2173 = vpop.f32.mrf.mxu0
      %2174 = vdwg.mxu0
      %2175 = vmatpush.bf16.msra.mxu0 0
      %2176 = vmatpush.bf16.msra.mxu0 0
      %2177 = vmatpush.bf16.msra.mxu0 0
      %2178 = vmatpush.bf16.msra.mxu0 0
      %2179 = vmatpush.bf16.msra.mxu0 0
      %2180 = vmatpush.bf16.msra.mxu0 0
      %2181 = vmatpush.bf16.msra.mxu0 0
      %2182 = vmatpush.bf16.msra.mxu0 %v2092
      %2183 = vmatmul.bf16.gmra.mxu0 %v2095
      %v2184 = vpop.f32.mrf.mxu0
      %v2185 = vadd.f32 0.0, %v2184
      %v2186 = vpop.f32.mrf.mxu0
      %2187 = vdwg.mxu0
      %2188 = vmatpush.bf16.msra.mxu0 0
      %2189 = vmatpush.bf16.msra.mxu0 0
      %2190 = vmatpush.bf16.msra.mxu0 0
      %2191 = vmatpush.bf16.msra.mxu0 0
      %2192 = vmatpush.bf16.msra.mxu0 0
      %2193 = vmatpush.bf16.msra.mxu0 0
      %2194 = vmatpush.bf16.msra.mxu0 0
      %2195 = vmatpush.bf16.msra.mxu0 %v2093
      %2196 = vmatmul.bf16.gmra.mxu0 %v2095
      %v2197 = vpop.f32.mrf.mxu0
      %v2198 = vadd.f32 0.0, %v2197
      %v2199 = vpop.f32.mrf.mxu0
      %2200 = vdwg.mxu0
      %v2201 = vadd.f32 %v1991, %v2107
      %v2202 = vadd.f32 %v1992, %v2120
      %v2203 = vadd.f32 %v1993, %v2133
      %v2204 = vadd.f32 %v1994, %v2146
      %v2205 = vadd.f32 %v1995, %v2159
      %v2206 = vadd.f32 %v1996, %v2172
      %v2207 = vadd.f32 %v1997, %v2185
      %v2208 = vadd.f32 %v1998, %v2198
      %2209 = vrot.lane.b32.xlu0 %v182, 64
      %v2210 = vpop.permute.xlu0 %2209
      %2211 = vrot.lane.b32.xlu0 %v183, 64
      %v2212 = vpop.permute.xlu0 %2211
      %2213 = vrot.lane.b32.xlu0 %v184, 64
      %v2214 = vpop.permute.xlu0 %2213
      %2215 = vrot.lane.b32.xlu0 %v185, 64
      %v2216 = vpop.permute.xlu0 %2215
      %2217 = vrot.lane.b32.xlu0 %v186, 64
      %v2218 = vpop.permute.xlu0 %2217
      %2219 = vrot.lane.b32.xlu0 %v187, 64
      %v2220 = vpop.permute.xlu0 %2219
      %2221 = vrot.lane.b32.xlu0 %v188, 64
      %v2222 = vpop.permute.xlu0 %2221
      %2223 = vrot.lane.b32.xlu0 %v189, 64
      %v2224 = vpop.permute.xlu0 %2223
      %2225 = vrot.lane.b32.xlu0 %v190, 64
      %v2226 = vpop.permute.xlu0 %2225
      %2227 = vrot.lane.b32.xlu0 %v192, 64
      %v2228 = vpop.permute.xlu0 %2227
      %2229 = vrot.lane.b32.xlu0 %v193, 64
      %v2230 = vpop.permute.xlu0 %2229
      %2231 = vrot.lane.b32.xlu0 %v194, 64
      %v2232 = vpop.permute.xlu0 %2231
      %2233 = vrot.lane.b32.xlu0 %v195, 64
      %v2234 = vpop.permute.xlu0 %2233
      %2235 = vrot.lane.b32.xlu0 %v196, 64
      %v2236 = vpop.permute.xlu0 %2235
      %2237 = vrot.lane.b32.xlu0 %v197, 64
      %v2238 = vpop.permute.xlu0 %2237
      %2239 = vrot.lane.b32.xlu0 %v198, 64
      %v2240 = vpop.permute.xlu0 %2239
      %2241 = vrot.lane.b32.xlu0 %v199, 64
      %v2242 = vpop.permute.xlu0 %2241
      %2243 = vrot.lane.b32.xlu0 %v200, 64
      %v2244 = vpop.permute.xlu0 %2243
      %vm2245 = vcmask 523264
      %v2246 = vsel %vm2245, %v2210, %v2212
      %v2247 = vsel %vm2245, %v2212, %v2214
      %v2248 = vsel %vm2245, %v2214, %v2216
      %v2249 = vsel %vm2245, %v2216, %v2218
      %v2250 = vsel %vm2245, %v2218, %v2220
      %v2251 = vsel %vm2245, %v2220, %v2222
      %v2252 = vsel %vm2245, %v2222, %v2224
      %v2253 = vsel %vm2245, %v2224, %v2226
      %v2254 = vsel %vm2245, %v2228, %v2230
      %v2255 = vsel %vm2245, %v2230, %v2232
      %v2256 = vsel %vm2245, %v2232, %v2234
      %v2257 = vsel %vm2245, %v2234, %v2236
      %v2258 = vsel %vm2245, %v2236, %v2238
      %v2259 = vsel %vm2245, %v2238, %v2240
      %v2260 = vsel %vm2245, %v2240, %v2242
      %v2261 = vsel %vm2245, %v2242, %v2244
      %v2278 = vsel %vm219, %v2246, 0.0
      %v2279 = vsel %vm220, %v2247, 0.0
      %v2280 = vsel %vm221, %v2248, 0.0
      %v2281 = vsel %vm222, %v2249, 0.0
      %v2282 = vsel %vm223, %v2250, 0.0
      %v2283 = vsel %vm224, %v2251, 0.0
      %v2284 = vsel %vm225, %v2252, 0.0
      %v2285 = vsel %vm226, %v2253, 0.0
      %v2286 = vsel %vm219, %v2254, 0.0
      %v2287 = vsel %vm220, %v2255, 0.0
      %v2288 = vsel %vm221, %v2256, 0.0
      %v2289 = vsel %vm222, %v2257, 0.0
      %v2290 = vsel %vm223, %v2258, 0.0
      %v2291 = vsel %vm224, %v2259, 0.0
      %v2292 = vsel %vm225, %v2260, 0.0
      %v2293 = vsel %vm226, %v2261, 0.0
      %s2294 = scalar_lea.vmem %s1, 20
      %v2295 = vld [vmem:[%s2294] sm:$0x3]
      %v2296 = vpack.c.bf16 %v2286, %v2278
      %v2297 = vpack.c.bf16 %v2287, %v2279
      %v2298 = vpack.c.bf16 %v2288, %v2280
      %v2299 = vpack.c.bf16 %v2289, %v2281
      %v2300 = vpack.c.bf16 %v2290, %v2282
      %v2301 = vpack.c.bf16 %v2291, %v2283
      %v2302 = vpack.c.bf16 %v2292, %v2284
      %v2303 = vpack.c.bf16 %v2293, %v2285
      %v2305 = vsel %vm283, %v2295, 0
      %2307 = vmatpush.bf16.msra.mxu0 0
      %2308 = vmatpush.bf16.msra.mxu0 0
      %2309 = vmatpush.bf16.msra.mxu0 0
      %2310 = vmatpush.bf16.msra.mxu0 0
      %2311 = vmatpush.bf16.msra.mxu0 0
      %2312 = vmatpush.bf16.msra.mxu0 0
      %2313 = vmatpush.bf16.msra.mxu0 0
      %2314 = vmatpush.bf16.msra.mxu0 %v2296
      %2315 = vmatmul.bf16.gmra.mxu0 %v2305
      %v2316 = vpop.f32.mrf.mxu0
      %v2317 = vadd.f32 0.0, %v2316
      %v2318 = vpop.f32.mrf.mxu0
      %2319 = vdwg.mxu0
      %2320 = vmatpush.bf16.msra.mxu0 0
      %2321 = vmatpush.bf16.msra.mxu0 0
      %2322 = vmatpush.bf16.msra.mxu0 0
      %2323 = vmatpush.bf16.msra.mxu0 0
      %2324 = vmatpush.bf16.msra.mxu0 0
      %2325 = vmatpush.bf16.msra.mxu0 0
      %2326 = vmatpush.bf16.msra.mxu0 0
      %2327 = vmatpush.bf16.msra.mxu0 %v2297
      %2328 = vmatmul.bf16.gmra.mxu0 %v2305
      %v2329 = vpop.f32.mrf.mxu0
      %v2330 = vadd.f32 0.0, %v2329
      %v2331 = vpop.f32.mrf.mxu0
      %2332 = vdwg.mxu0
      %2333 = vmatpush.bf16.msra.mxu0 0
      %2334 = vmatpush.bf16.msra.mxu0 0
      %2335 = vmatpush.bf16.msra.mxu0 0
      %2336 = vmatpush.bf16.msra.mxu0 0
      %2337 = vmatpush.bf16.msra.mxu0 0
      %2338 = vmatpush.bf16.msra.mxu0 0
      %2339 = vmatpush.bf16.msra.mxu0 0
      %2340 = vmatpush.bf16.msra.mxu0 %v2298
      %2341 = vmatmul.bf16.gmra.mxu0 %v2305
      %v2342 = vpop.f32.mrf.mxu0
      %v2343 = vadd.f32 0.0, %v2342
      %v2344 = vpop.f32.mrf.mxu0
      %2345 = vdwg.mxu0
      %2346 = vmatpush.bf16.msra.mxu0 0
      %2347 = vmatpush.bf16.msra.mxu0 0
      %2348 = vmatpush.bf16.msra.mxu0 0
      %2349 = vmatpush.bf16.msra.mxu0 0
      %2350 = vmatpush.bf16.msra.mxu0 0
      %2351 = vmatpush.bf16.msra.mxu0 0
      %2352 = vmatpush.bf16.msra.mxu0 0
      %2353 = vmatpush.bf16.msra.mxu0 %v2299
      %2354 = vmatmul.bf16.gmra.mxu0 %v2305
      %v2355 = vpop.f32.mrf.mxu0
      %v2356 = vadd.f32 0.0, %v2355
      %v2357 = vpop.f32.mrf.mxu0
      %2358 = vdwg.mxu0
      %2359 = vmatpush.bf16.msra.mxu0 0
      %2360 = vmatpush.bf16.msra.mxu0 0
      %2361 = vmatpush.bf16.msra.mxu0 0
      %2362 = vmatpush.bf16.msra.mxu0 0
      %2363 = vmatpush.bf16.msra.mxu0 0
      %2364 = vmatpush.bf16.msra.mxu0 0
      %2365 = vmatpush.bf16.msra.mxu0 0
      %2366 = vmatpush.bf16.msra.mxu0 %v2300
      %2367 = vmatmul.bf16.gmra.mxu0 %v2305
      %v2368 = vpop.f32.mrf.mxu0
      %v2369 = vadd.f32 0.0, %v2368
      %v2370 = vpop.f32.mrf.mxu0
      %2371 = vdwg.mxu0
      %2372 = vmatpush.bf16.msra.mxu0 0
      %2373 = vmatpush.bf16.msra.mxu0 0
      %2374 = vmatpush.bf16.msra.mxu0 0
      %2375 = vmatpush.bf16.msra.mxu0 0
      %2376 = vmatpush.bf16.msra.mxu0 0
      %2377 = vmatpush.bf16.msra.mxu0 0
      %2378 = vmatpush.bf16.msra.mxu0 0
      %2379 = vmatpush.bf16.msra.mxu0 %v2301
      %2380 = vmatmul.bf16.gmra.mxu0 %v2305
      %v2381 = vpop.f32.mrf.mxu0
      %v2382 = vadd.f32 0.0, %v2381
      %v2383 = vpop.f32.mrf.mxu0
      %2384 = vdwg.mxu0
      %2385 = vmatpush.bf16.msra.mxu0 0
      %2386 = vmatpush.bf16.msra.mxu0 0
      %2387 = vmatpush.bf16.msra.mxu0 0
      %2388 = vmatpush.bf16.msra.mxu0 0
      %2389 = vmatpush.bf16.msra.mxu0 0
      %2390 = vmatpush.bf16.msra.mxu0 0
      %2391 = vmatpush.bf16.msra.mxu0 0
      %2392 = vmatpush.bf16.msra.mxu0 %v2302
      %2393 = vmatmul.bf16.gmra.mxu0 %v2305
      %v2394 = vpop.f32.mrf.mxu0
      %v2395 = vadd.f32 0.0, %v2394
      %v2396 = vpop.f32.mrf.mxu0
      %2397 = vdwg.mxu0
      %2398 = vmatpush.bf16.msra.mxu0 0
      %2399 = vmatpush.bf16.msra.mxu0 0
      %2400 = vmatpush.bf16.msra.mxu0 0
      %2401 = vmatpush.bf16.msra.mxu0 0
      %2402 = vmatpush.bf16.msra.mxu0 0
      %2403 = vmatpush.bf16.msra.mxu0 0
      %2404 = vmatpush.bf16.msra.mxu0 0
      %2405 = vmatpush.bf16.msra.mxu0 %v2303
      %2406 = vmatmul.bf16.gmra.mxu0 %v2305
      %v2407 = vpop.f32.mrf.mxu0
      %v2408 = vadd.f32 0.0, %v2407
      %v2409 = vpop.f32.mrf.mxu0
      %2410 = vdwg.mxu0
      %v2411 = vadd.f32 %v2201, %v2317
      %v2412 = vadd.f32 %v2202, %v2330
      %v2413 = vadd.f32 %v2203, %v2343
      %v2414 = vadd.f32 %v2204, %v2356
      %v2415 = vadd.f32 %v2205, %v2369
      %v2416 = vadd.f32 %v2206, %v2382
      %v2417 = vadd.f32 %v2207, %v2395
      %v2418 = vadd.f32 %v2208, %v2408
      %2419 = vrot.lane.b32.xlu0 %v182, 63
      %v2420 = vpop.permute.xlu0 %2419
      %2421 = vrot.lane.b32.xlu0 %v183, 63
      %v2422 = vpop.permute.xlu0 %2421
      %2423 = vrot.lane.b32.xlu0 %v184, 63
      %v2424 = vpop.permute.xlu0 %2423
      %2425 = vrot.lane.b32.xlu0 %v185, 63
      %v2426 = vpop.permute.xlu0 %2425
      %2427 = vrot.lane.b32.xlu0 %v186, 63
      %v2428 = vpop.permute.xlu0 %2427
      %2429 = vrot.lane.b32.xlu0 %v187, 63
      %v2430 = vpop.permute.xlu0 %2429
      %2431 = vrot.lane.b32.xlu0 %v188, 63
      %v2432 = vpop.permute.xlu0 %2431
      %2433 = vrot.lane.b32.xlu0 %v189, 63
      %v2434 = vpop.permute.xlu0 %2433
      %2435 = vrot.lane.b32.xlu0 %v190, 63
      %v2436 = vpop.permute.xlu0 %2435
      %2437 = vrot.lane.b32.xlu0 %v192, 63
      %v2438 = vpop.permute.xlu0 %2437
      %2439 = vrot.lane.b32.xlu0 %v193, 63
      %v2440 = vpop.permute.xlu0 %2439
      %2441 = vrot.lane.b32.xlu0 %v194, 63
      %v2442 = vpop.permute.xlu0 %2441
      %2443 = vrot.lane.b32.xlu0 %v195, 63
      %v2444 = vpop.permute.xlu0 %2443
      %2445 = vrot.lane.b32.xlu0 %v196, 63
      %v2446 = vpop.permute.xlu0 %2445
      %2447 = vrot.lane.b32.xlu0 %v197, 63
      %v2448 = vpop.permute.xlu0 %2447
      %2449 = vrot.lane.b32.xlu0 %v198, 63
      %v2450 = vpop.permute.xlu0 %2449
      %2451 = vrot.lane.b32.xlu0 %v199, 63
      %v2452 = vpop.permute.xlu0 %2451
      %2453 = vrot.lane.b32.xlu0 %v200, 63
      %v2454 = vpop.permute.xlu0 %2453
      %vm2455 = vcmask 515072
      %v2456 = vsel %vm2455, %v2420, %v2422
      %v2457 = vsel %vm2455, %v2422, %v2424
      %v2458 = vsel %vm2455, %v2424, %v2426
      %v2459 = vsel %vm2455, %v2426, %v2428
      %v2460 = vsel %vm2455, %v2428, %v2430
      %v2461 = vsel %vm2455, %v2430, %v2432
      %v2462 = vsel %vm2455, %v2432, %v2434
      %v2463 = vsel %vm2455, %v2434, %v2436
      %v2464 = vsel %vm2455, %v2438, %v2440
      %v2465 = vsel %vm2455, %v2440, %v2442
      %v2466 = vsel %vm2455, %v2442, %v2444
      %v2467 = vsel %vm2455, %v2444, %v2446
      %v2468 = vsel %vm2455, %v2446, %v2448
      %v2469 = vsel %vm2455, %v2448, %v2450
      %v2470 = vsel %vm2455, %v2450, %v2452
      %v2471 = vsel %vm2455, %v2452, %v2454
      %v2488 = vsel %vm227, %v2456, 0.0
      %v2489 = vsel %vm228, %v2457, 0.0
      %v2490 = vsel %vm229, %v2458, 0.0
      %v2491 = vsel %vm230, %v2459, 0.0
      %v2492 = vsel %vm231, %v2460, 0.0
      %v2493 = vsel %vm232, %v2461, 0.0
      %v2494 = vsel %vm233, %v2462, 0.0
      %v2495 = vsel %vm234, %v2463, 0.0
      %v2496 = vsel %vm227, %v2464, 0.0
      %v2497 = vsel %vm228, %v2465, 0.0
      %v2498 = vsel %vm229, %v2466, 0.0
      %v2499 = vsel %vm230, %v2467, 0.0
      %v2500 = vsel %vm231, %v2468, 0.0
      %v2501 = vsel %vm232, %v2469, 0.0
      %v2502 = vsel %vm233, %v2470, 0.0
      %v2503 = vsel %vm234, %v2471, 0.0
      %s2504 = scalar_lea.vmem %s1, 22
      %v2505 = vld [vmem:[%s2504] sm:$0x3]
      %v2506 = vpack.c.bf16 %v2496, %v2488
      %v2507 = vpack.c.bf16 %v2497, %v2489
      %v2508 = vpack.c.bf16 %v2498, %v2490
      %v2509 = vpack.c.bf16 %v2499, %v2491
      %v2510 = vpack.c.bf16 %v2500, %v2492
      %v2511 = vpack.c.bf16 %v2501, %v2493
      %v2512 = vpack.c.bf16 %v2502, %v2494
      %v2513 = vpack.c.bf16 %v2503, %v2495
      %v2515 = vsel %vm283, %v2505, 0
      %2517 = vmatpush.bf16.msra.mxu0 0
      %2518 = vmatpush.bf16.msra.mxu0 0
      %2519 = vmatpush.bf16.msra.mxu0 0
      %2520 = vmatpush.bf16.msra.mxu0 0
      %2521 = vmatpush.bf16.msra.mxu0 0
      %2522 = vmatpush.bf16.msra.mxu0 0
      %2523 = vmatpush.bf16.msra.mxu0 0
      %2524 = vmatpush.bf16.msra.mxu0 %v2506
      %2525 = vmatmul.bf16.gmra.mxu0 %v2515
      %v2526 = vpop.f32.mrf.mxu0
      %v2527 = vadd.f32 0.0, %v2526
      %v2528 = vpop.f32.mrf.mxu0
      %2529 = vdwg.mxu0
      %2530 = vmatpush.bf16.msra.mxu0 0
      %2531 = vmatpush.bf16.msra.mxu0 0
      %2532 = vmatpush.bf16.msra.mxu0 0
      %2533 = vmatpush.bf16.msra.mxu0 0
      %2534 = vmatpush.bf16.msra.mxu0 0
      %2535 = vmatpush.bf16.msra.mxu0 0
      %2536 = vmatpush.bf16.msra.mxu0 0
      %2537 = vmatpush.bf16.msra.mxu0 %v2507
      %2538 = vmatmul.bf16.gmra.mxu0 %v2515
      %v2539 = vpop.f32.mrf.mxu0
      %v2540 = vadd.f32 0.0, %v2539
      %v2541 = vpop.f32.mrf.mxu0
      %2542 = vdwg.mxu0
      %2543 = vmatpush.bf16.msra.mxu0 0
      %2544 = vmatpush.bf16.msra.mxu0 0
      %2545 = vmatpush.bf16.msra.mxu0 0
      %2546 = vmatpush.bf16.msra.mxu0 0
      %2547 = vmatpush.bf16.msra.mxu0 0
      %2548 = vmatpush.bf16.msra.mxu0 0
      %2549 = vmatpush.bf16.msra.mxu0 0
      %2550 = vmatpush.bf16.msra.mxu0 %v2508
      %2551 = vmatmul.bf16.gmra.mxu0 %v2515
      %v2552 = vpop.f32.mrf.mxu0
      %v2553 = vadd.f32 0.0, %v2552
      %v2554 = vpop.f32.mrf.mxu0
      %2555 = vdwg.mxu0
      %2556 = vmatpush.bf16.msra.mxu0 0
      %2557 = vmatpush.bf16.msra.mxu0 0
      %2558 = vmatpush.bf16.msra.mxu0 0
      %2559 = vmatpush.bf16.msra.mxu0 0
      %2560 = vmatpush.bf16.msra.mxu0 0
      %2561 = vmatpush.bf16.msra.mxu0 0
      %2562 = vmatpush.bf16.msra.mxu0 0
      %2563 = vmatpush.bf16.msra.mxu0 %v2509
      %2564 = vmatmul.bf16.gmra.mxu0 %v2515
      %v2565 = vpop.f32.mrf.mxu0
      %v2566 = vadd.f32 0.0, %v2565
      %v2567 = vpop.f32.mrf.mxu0
      %2568 = vdwg.mxu0
      %2569 = vmatpush.bf16.msra.mxu0 0
      %2570 = vmatpush.bf16.msra.mxu0 0
      %2571 = vmatpush.bf16.msra.mxu0 0
      %2572 = vmatpush.bf16.msra.mxu0 0
      %2573 = vmatpush.bf16.msra.mxu0 0
      %2574 = vmatpush.bf16.msra.mxu0 0
      %2575 = vmatpush.bf16.msra.mxu0 0
      %2576 = vmatpush.bf16.msra.mxu0 %v2510
      %2577 = vmatmul.bf16.gmra.mxu0 %v2515
      %v2578 = vpop.f32.mrf.mxu0
      %v2579 = vadd.f32 0.0, %v2578
      %v2580 = vpop.f32.mrf.mxu0
      %2581 = vdwg.mxu0
      %2582 = vmatpush.bf16.msra.mxu0 0
      %2583 = vmatpush.bf16.msra.mxu0 0
      %2584 = vmatpush.bf16.msra.mxu0 0
      %2585 = vmatpush.bf16.msra.mxu0 0
      %2586 = vmatpush.bf16.msra.mxu0 0
      %2587 = vmatpush.bf16.msra.mxu0 0
      %2588 = vmatpush.bf16.msra.mxu0 0
      %2589 = vmatpush.bf16.msra.mxu0 %v2511
      %2590 = vmatmul.bf16.gmra.mxu0 %v2515
      %v2591 = vpop.f32.mrf.mxu0
      %v2592 = vadd.f32 0.0, %v2591
      %v2593 = vpop.f32.mrf.mxu0
      %2594 = vdwg.mxu0
      %2595 = vmatpush.bf16.msra.mxu0 0
      %2596 = vmatpush.bf16.msra.mxu0 0
      %2597 = vmatpush.bf16.msra.mxu0 0
      %2598 = vmatpush.bf16.msra.mxu0 0
      %2599 = vmatpush.bf16.msra.mxu0 0
      %2600 = vmatpush.bf16.msra.mxu0 0
      %2601 = vmatpush.bf16.msra.mxu0 0
      %2602 = vmatpush.bf16.msra.mxu0 %v2512
      %2603 = vmatmul.bf16.gmra.mxu0 %v2515
      %v2604 = vpop.f32.mrf.mxu0
      %v2605 = vadd.f32 0.0, %v2604
      %v2606 = vpop.f32.mrf.mxu0
      %2607 = vdwg.mxu0
      %2608 = vmatpush.bf16.msra.mxu0 0
      %2609 = vmatpush.bf16.msra.mxu0 0
      %2610 = vmatpush.bf16.msra.mxu0 0
      %2611 = vmatpush.bf16.msra.mxu0 0
      %2612 = vmatpush.bf16.msra.mxu0 0
      %2613 = vmatpush.bf16.msra.mxu0 0
      %2614 = vmatpush.bf16.msra.mxu0 0
      %2615 = vmatpush.bf16.msra.mxu0 %v2513
      %2616 = vmatmul.bf16.gmra.mxu0 %v2515
      %v2617 = vpop.f32.mrf.mxu0
      %v2618 = vadd.f32 0.0, %v2617
      %v2619 = vpop.f32.mrf.mxu0
      %2620 = vdwg.mxu0
      %v2621 = vadd.f32 %v2411, %v2527
      %v2622 = vadd.f32 %v2412, %v2540
      %v2623 = vadd.f32 %v2413, %v2553
      %v2624 = vadd.f32 %v2414, %v2566
      %v2625 = vadd.f32 %v2415, %v2579
      %v2626 = vadd.f32 %v2416, %v2592
      %v2627 = vadd.f32 %v2417, %v2605
      %v2628 = vadd.f32 %v2418, %v2618
      %s2629 = scalar_lea.vmem %s1, 24
      %v2630 = vld [vmem:[%s2629] sm:$0x3]
      %2631 = vrot.lane.b32.xlu0 %v629, 62
      %v2632 = vpop.permute.xlu0 %2631
      %2633 = vrot.lane.b32.xlu0 %v630, 62
      %v2634 = vpop.permute.xlu0 %2633
      %2635 = vrot.lane.b32.xlu0 %v631, 62
      %v2636 = vpop.permute.xlu0 %2635
      %2637 = vrot.lane.b32.xlu0 %v632, 62
      %v2638 = vpop.permute.xlu0 %2637
      %2639 = vrot.lane.b32.xlu0 %v633, 62
      %v2640 = vpop.permute.xlu0 %2639
      %2641 = vrot.lane.b32.xlu0 %v634, 62
      %v2642 = vpop.permute.xlu0 %2641
      %2643 = vrot.lane.b32.xlu0 %v635, 62
      %v2644 = vpop.permute.xlu0 %2643
      %2645 = vrot.lane.b32.xlu0 %v636, 62
      %v2646 = vpop.permute.xlu0 %2645
      %2647 = vrot.lane.b32.xlu0 %v637, 62
      %v2648 = vpop.permute.xlu0 %2647
      %vm2649 = vcmask 506880
      %v2650 = vsel %vm2649, %v2632, %v2634
      %v2651 = vsel %vm2649, %v2634, %v2636
      %v2652 = vsel %vm2649, %v2636, %v2638
      %v2653 = vsel %vm2649, %v2638, %v2640
      %v2654 = vsel %vm2649, %v2640, %v2642
      %v2655 = vsel %vm2649, %v2642, %v2644
      %v2656 = vsel %vm2649, %v2644, %v2646
      %v2657 = vsel %vm2649, %v2646, %v2648
      %v2667 = vsel %vm283, %v2630, 0
      %2669 = vmatpush.bf16.msra.mxu0 0
      %2670 = vmatpush.bf16.msra.mxu0 0
      %2671 = vmatpush.bf16.msra.mxu0 0
      %2672 = vmatpush.bf16.msra.mxu0 0
      %2673 = vmatpush.bf16.msra.mxu0 0
      %2674 = vmatpush.bf16.msra.mxu0 0
      %2675 = vmatpush.bf16.msra.mxu0 0
      %2676 = vmatpush.bf16.msra.mxu0 %v2650
      %2677 = vmatmul.bf16.gmra.mxu0 %v2667
      %v2678 = vpop.f32.mrf.mxu0
      %v2679 = vadd.f32 0.0, %v2678
      %v2680 = vpop.f32.mrf.mxu0
      %2681 = vdwg.mxu0
      %2682 = vmatpush.bf16.msra.mxu0 0
      %2683 = vmatpush.bf16.msra.mxu0 0
      %2684 = vmatpush.bf16.msra.mxu0 0
      %2685 = vmatpush.bf16.msra.mxu0 0
      %2686 = vmatpush.bf16.msra.mxu0 0
      %2687 = vmatpush.bf16.msra.mxu0 0
      %2688 = vmatpush.bf16.msra.mxu0 0
      %2689 = vmatpush.bf16.msra.mxu0 %v2651
      %2690 = vmatmul.bf16.gmra.mxu0 %v2667
      %v2691 = vpop.f32.mrf.mxu0
      %v2692 = vadd.f32 0.0, %v2691
      %v2693 = vpop.f32.mrf.mxu0
      %2694 = vdwg.mxu0
      %2695 = vmatpush.bf16.msra.mxu0 0
      %2696 = vmatpush.bf16.msra.mxu0 0
      %2697 = vmatpush.bf16.msra.mxu0 0
      %2698 = vmatpush.bf16.msra.mxu0 0
      %2699 = vmatpush.bf16.msra.mxu0 0
      %2700 = vmatpush.bf16.msra.mxu0 0
      %2701 = vmatpush.bf16.msra.mxu0 0
      %2702 = vmatpush.bf16.msra.mxu0 %v2652
      %2703 = vmatmul.bf16.gmra.mxu0 %v2667
      %v2704 = vpop.f32.mrf.mxu0
      %v2705 = vadd.f32 0.0, %v2704
      %v2706 = vpop.f32.mrf.mxu0
      %2707 = vdwg.mxu0
      %2708 = vmatpush.bf16.msra.mxu0 0
      %2709 = vmatpush.bf16.msra.mxu0 0
      %2710 = vmatpush.bf16.msra.mxu0 0
      %2711 = vmatpush.bf16.msra.mxu0 0
      %2712 = vmatpush.bf16.msra.mxu0 0
      %2713 = vmatpush.bf16.msra.mxu0 0
      %2714 = vmatpush.bf16.msra.mxu0 0
      %2715 = vmatpush.bf16.msra.mxu0 %v2653
      %2716 = vmatmul.bf16.gmra.mxu0 %v2667
      %v2717 = vpop.f32.mrf.mxu0
      %v2718 = vadd.f32 0.0, %v2717
      %v2719 = vpop.f32.mrf.mxu0
      %2720 = vdwg.mxu0
      %2721 = vmatpush.bf16.msra.mxu0 0
      %2722 = vmatpush.bf16.msra.mxu0 0
      %2723 = vmatpush.bf16.msra.mxu0 0
      %2724 = vmatpush.bf16.msra.mxu0 0
      %2725 = vmatpush.bf16.msra.mxu0 0
      %2726 = vmatpush.bf16.msra.mxu0 0
      %2727 = vmatpush.bf16.msra.mxu0 0
      %2728 = vmatpush.bf16.msra.mxu0 %v2654
      %2729 = vmatmul.bf16.gmra.mxu0 %v2667
      %v2730 = vpop.f32.mrf.mxu0
      %v2731 = vadd.f32 0.0, %v2730
      %v2732 = vpop.f32.mrf.mxu0
      %2733 = vdwg.mxu0
      %2734 = vmatpush.bf16.msra.mxu0 0
      %2735 = vmatpush.bf16.msra.mxu0 0
      %2736 = vmatpush.bf16.msra.mxu0 0
      %2737 = vmatpush.bf16.msra.mxu0 0
      %2738 = vmatpush.bf16.msra.mxu0 0
      %2739 = vmatpush.bf16.msra.mxu0 0
      %2740 = vmatpush.bf16.msra.mxu0 0
      %2741 = vmatpush.bf16.msra.mxu0 %v2655
      %2742 = vmatmul.bf16.gmra.mxu0 %v2667
      %v2743 = vpop.f32.mrf.mxu0
      %v2744 = vadd.f32 0.0, %v2743
      %v2745 = vpop.f32.mrf.mxu0
      %2746 = vdwg.mxu0
      %2747 = vmatpush.bf16.msra.mxu0 0
      %2748 = vmatpush.bf16.msra.mxu0 0
      %2749 = vmatpush.bf16.msra.mxu0 0
      %2750 = vmatpush.bf16.msra.mxu0 0
      %2751 = vmatpush.bf16.msra.mxu0 0
      %2752 = vmatpush.bf16.msra.mxu0 0
      %2753 = vmatpush.bf16.msra.mxu0 0
      %2754 = vmatpush.bf16.msra.mxu0 %v2656
      %2755 = vmatmul.bf16.gmra.mxu0 %v2667
      %v2756 = vpop.f32.mrf.mxu0
      %v2757 = vadd.f32 0.0, %v2756
      %v2758 = vpop.f32.mrf.mxu0
      %2759 = vdwg.mxu0
      %2760 = vmatpush.bf16.msra.mxu0 0
      %2761 = vmatpush.bf16.msra.mxu0 0
      %2762 = vmatpush.bf16.msra.mxu0 0
      %2763 = vmatpush.bf16.msra.mxu0 0
      %2764 = vmatpush.bf16.msra.mxu0 0
      %2765 = vmatpush.bf16.msra.mxu0 0
      %2766 = vmatpush.bf16.msra.mxu0 0
      %2767 = vmatpush.bf16.msra.mxu0 %v2657
      %2768 = vmatmul.bf16.gmra.mxu0 %v2667
      %v2769 = vpop.f32.mrf.mxu0
      %v2770 = vadd.f32 0.0, %v2769
      %v2771 = vpop.f32.mrf.mxu0
      %2772 = vdwg.mxu0
      %v2773 = vadd.f32 %v2621, %v2679
      %v2774 = vadd.f32 %v2622, %v2692
      %v2775 = vadd.f32 %v2623, %v2705
      %v2776 = vadd.f32 %v2624, %v2718
      %v2777 = vadd.f32 %v2625, %v2731
      %v2778 = vadd.f32 %v2626, %v2744
      %v2779 = vadd.f32 %v2627, %v2757
      %v2780 = vadd.f32 %v2628, %v2770
      %2781 = vrot.lane.b32.xlu0 %v182, 61
      %v2782 = vpop.permute.xlu0 %2781
      %2783 = vrot.lane.b32.xlu0 %v183, 61
      %v2784 = vpop.permute.xlu0 %2783
      %2785 = vrot.lane.b32.xlu0 %v184, 61
      %v2786 = vpop.permute.xlu0 %2785
      %2787 = vrot.lane.b32.xlu0 %v185, 61
      %v2788 = vpop.permute.xlu0 %2787
      %2789 = vrot.lane.b32.xlu0 %v186, 61
      %v2790 = vpop.permute.xlu0 %2789
      %2791 = vrot.lane.b32.xlu0 %v187, 61
      %v2792 = vpop.permute.xlu0 %2791
      %2793 = vrot.lane.b32.xlu0 %v188, 61
      %v2794 = vpop.permute.xlu0 %2793
      %2795 = vrot.lane.b32.xlu0 %v189, 61
      %v2796 = vpop.permute.xlu0 %2795
      %2797 = vrot.lane.b32.xlu0 %v190, 61
      %v2798 = vpop.permute.xlu0 %2797
      %2799 = vrot.lane.b32.xlu0 %v192, 61
      %v2800 = vpop.permute.xlu0 %2799
      %2801 = vrot.lane.b32.xlu0 %v193, 61
      %v2802 = vpop.permute.xlu0 %2801
      %2803 = vrot.lane.b32.xlu0 %v194, 61
      %v2804 = vpop.permute.xlu0 %2803
      %2805 = vrot.lane.b32.xlu0 %v195, 61
      %v2806 = vpop.permute.xlu0 %2805
      %2807 = vrot.lane.b32.xlu0 %v196, 61
      %v2808 = vpop.permute.xlu0 %2807
      %2809 = vrot.lane.b32.xlu0 %v197, 61
      %v2810 = vpop.permute.xlu0 %2809
      %2811 = vrot.lane.b32.xlu0 %v198, 61
      %v2812 = vpop.permute.xlu0 %2811
      %2813 = vrot.lane.b32.xlu0 %v199, 61
      %v2814 = vpop.permute.xlu0 %2813
      %2815 = vrot.lane.b32.xlu0 %v200, 61
      %v2816 = vpop.permute.xlu0 %2815
      %vm2817 = vcmask 498688
      %v2818 = vsel %vm2817, %v2782, %v2784
      %v2819 = vsel %vm2817, %v2784, %v2786
      %v2820 = vsel %vm2817, %v2786, %v2788
      %v2821 = vsel %vm2817, %v2788, %v2790
      %v2822 = vsel %vm2817, %v2790, %v2792
      %v2823 = vsel %vm2817, %v2792, %v2794
      %v2824 = vsel %vm2817, %v2794, %v2796
      %v2825 = vsel %vm2817, %v2796, %v2798
      %v2826 = vsel %vm2817, %v2800, %v2802
      %v2827 = vsel %vm2817, %v2802, %v2804
      %v2828 = vsel %vm2817, %v2804, %v2806
      %v2829 = vsel %vm2817, %v2806, %v2808
      %v2830 = vsel %vm2817, %v2808, %v2810
      %v2831 = vsel %vm2817, %v2810, %v2812
      %v2832 = vsel %vm2817, %v2812, %v2814
      %v2833 = vsel %vm2817, %v2814, %v2816
      %v2850 = vsel %vm235, %v2818, 0.0
      %v2851 = vsel %vm236, %v2819, 0.0
      %v2852 = vsel %vm237, %v2820, 0.0
      %v2853 = vsel %vm238, %v2821, 0.0
      %v2854 = vsel %vm239, %v2822, 0.0
      %v2855 = vsel %vm240, %v2823, 0.0
      %v2856 = vsel %vm241, %v2824, 0.0
      %v2857 = vsel %vm242, %v2825, 0.0
      %v2858 = vsel %vm235, %v2826, 0.0
      %v2859 = vsel %vm236, %v2827, 0.0
      %v2860 = vsel %vm237, %v2828, 0.0
      %v2861 = vsel %vm238, %v2829, 0.0
      %v2862 = vsel %vm239, %v2830, 0.0
      %v2863 = vsel %vm240, %v2831, 0.0
      %v2864 = vsel %vm241, %v2832, 0.0
      %v2865 = vsel %vm242, %v2833, 0.0
      %s2866 = scalar_lea.vmem %s1, 26
      %v2867 = vld [vmem:[%s2866] sm:$0x3]
      %v2868 = vpack.c.bf16 %v2858, %v2850
      %v2869 = vpack.c.bf16 %v2859, %v2851
      %v2870 = vpack.c.bf16 %v2860, %v2852
      %v2871 = vpack.c.bf16 %v2861, %v2853
      %v2872 = vpack.c.bf16 %v2862, %v2854
      %v2873 = vpack.c.bf16 %v2863, %v2855
      %v2874 = vpack.c.bf16 %v2864, %v2856
      %v2875 = vpack.c.bf16 %v2865, %v2857
      %v2877 = vsel %vm283, %v2867, 0
      %2879 = vmatpush.bf16.msra.mxu0 0
      %2880 = vmatpush.bf16.msra.mxu0 0
      %2881 = vmatpush.bf16.msra.mxu0 0
      %2882 = vmatpush.bf16.msra.mxu0 0
      %2883 = vmatpush.bf16.msra.mxu0 0
      %2884 = vmatpush.bf16.msra.mxu0 0
      %2885 = vmatpush.bf16.msra.mxu0 0
      %2886 = vmatpush.bf16.msra.mxu0 %v2868
      %2887 = vmatmul.bf16.gmra.mxu0 %v2877
      %v2888 = vpop.f32.mrf.mxu0
      %v2889 = vadd.f32 0.0, %v2888
      %v2890 = vpop.f32.mrf.mxu0
      %2891 = vdwg.mxu0
      %2892 = vmatpush.bf16.msra.mxu0 0
      %2893 = vmatpush.bf16.msra.mxu0 0
      %2894 = vmatpush.bf16.msra.mxu0 0
      %2895 = vmatpush.bf16.msra.mxu0 0
      %2896 = vmatpush.bf16.msra.mxu0 0
      %2897 = vmatpush.bf16.msra.mxu0 0
      %2898 = vmatpush.bf16.msra.mxu0 0
      %2899 = vmatpush.bf16.msra.mxu0 %v2869
      %2900 = vmatmul.bf16.gmra.mxu0 %v2877
      %v2901 = vpop.f32.mrf.mxu0
      %v2902 = vadd.f32 0.0, %v2901
      %v2903 = vpop.f32.mrf.mxu0
      %2904 = vdwg.mxu0
      %2905 = vmatpush.bf16.msra.mxu0 0
      %2906 = vmatpush.bf16.msra.mxu0 0
      %2907 = vmatpush.bf16.msra.mxu0 0
      %2908 = vmatpush.bf16.msra.mxu0 0
      %2909 = vmatpush.bf16.msra.mxu0 0
      %2910 = vmatpush.bf16.msra.mxu0 0
      %2911 = vmatpush.bf16.msra.mxu0 0
      %2912 = vmatpush.bf16.msra.mxu0 %v2870
      %2913 = vmatmul.bf16.gmra.mxu0 %v2877
      %v2914 = vpop.f32.mrf.mxu0
      %v2915 = vadd.f32 0.0, %v2914
      %v2916 = vpop.f32.mrf.mxu0
      %2917 = vdwg.mxu0
      %2918 = vmatpush.bf16.msra.mxu0 0
      %2919 = vmatpush.bf16.msra.mxu0 0
      %2920 = vmatpush.bf16.msra.mxu0 0
      %2921 = vmatpush.bf16.msra.mxu0 0
      %2922 = vmatpush.bf16.msra.mxu0 0
      %2923 = vmatpush.bf16.msra.mxu0 0
      %2924 = vmatpush.bf16.msra.mxu0 0
      %2925 = vmatpush.bf16.msra.mxu0 %v2871
      %2926 = vmatmul.bf16.gmra.mxu0 %v2877
      %v2927 = vpop.f32.mrf.mxu0
      %v2928 = vadd.f32 0.0, %v2927
      %v2929 = vpop.f32.mrf.mxu0
      %2930 = vdwg.mxu0
      %2931 = vmatpush.bf16.msra.mxu0 0
      %2932 = vmatpush.bf16.msra.mxu0 0
      %2933 = vmatpush.bf16.msra.mxu0 0
      %2934 = vmatpush.bf16.msra.mxu0 0
      %2935 = vmatpush.bf16.msra.mxu0 0
      %2936 = vmatpush.bf16.msra.mxu0 0
      %2937 = vmatpush.bf16.msra.mxu0 0
      %2938 = vmatpush.bf16.msra.mxu0 %v2872
      %2939 = vmatmul.bf16.gmra.mxu0 %v2877
      %v2940 = vpop.f32.mrf.mxu0
      %v2941 = vadd.f32 0.0, %v2940
      %v2942 = vpop.f32.mrf.mxu0
      %2943 = vdwg.mxu0
      %2944 = vmatpush.bf16.msra.mxu0 0
      %2945 = vmatpush.bf16.msra.mxu0 0
      %2946 = vmatpush.bf16.msra.mxu0 0
      %2947 = vmatpush.bf16.msra.mxu0 0
      %2948 = vmatpush.bf16.msra.mxu0 0
      %2949 = vmatpush.bf16.msra.mxu0 0
      %2950 = vmatpush.bf16.msra.mxu0 0
      %2951 = vmatpush.bf16.msra.mxu0 %v2873
      %2952 = vmatmul.bf16.gmra.mxu0 %v2877
      %v2953 = vpop.f32.mrf.mxu0
      %v2954 = vadd.f32 0.0, %v2953
      %v2955 = vpop.f32.mrf.mxu0
      %2956 = vdwg.mxu0
      %2957 = vmatpush.bf16.msra.mxu0 0
      %2958 = vmatpush.bf16.msra.mxu0 0
      %2959 = vmatpush.bf16.msra.mxu0 0
      %2960 = vmatpush.bf16.msra.mxu0 0
      %2961 = vmatpush.bf16.msra.mxu0 0
      %2962 = vmatpush.bf16.msra.mxu0 0
      %2963 = vmatpush.bf16.msra.mxu0 0
      %2964 = vmatpush.bf16.msra.mxu0 %v2874
      %2965 = vmatmul.bf16.gmra.mxu0 %v2877
      %v2966 = vpop.f32.mrf.mxu0
      %v2967 = vadd.f32 0.0, %v2966
      %v2968 = vpop.f32.mrf.mxu0
      %2969 = vdwg.mxu0
      %2970 = vmatpush.bf16.msra.mxu0 0
      %2971 = vmatpush.bf16.msra.mxu0 0
      %2972 = vmatpush.bf16.msra.mxu0 0
      %2973 = vmatpush.bf16.msra.mxu0 0
      %2974 = vmatpush.bf16.msra.mxu0 0
      %2975 = vmatpush.bf16.msra.mxu0 0
      %2976 = vmatpush.bf16.msra.mxu0 0
      %2977 = vmatpush.bf16.msra.mxu0 %v2875
      %2978 = vmatmul.bf16.gmra.mxu0 %v2877
      %v2979 = vpop.f32.mrf.mxu0
      %v2980 = vadd.f32 0.0, %v2979
      %v2981 = vpop.f32.mrf.mxu0
      %2982 = vdwg.mxu0
      %v2983 = vadd.f32 %v2773, %v2889
      %v2984 = vadd.f32 %v2774, %v2902
      %v2985 = vadd.f32 %v2775, %v2915
      %v2986 = vadd.f32 %v2776, %v2928
      %v2987 = vadd.f32 %v2777, %v2941
      %v2988 = vadd.f32 %v2778, %v2954
      %v2989 = vadd.f32 %v2779, %v2967
      %v2990 = vadd.f32 %v2780, %v2980
      %2991 = vrot.lane.b32.xlu0 %v182, 60
      %v2992 = vpop.permute.xlu0 %2991
      %2993 = vrot.lane.b32.xlu0 %v183, 60
      %v2994 = vpop.permute.xlu0 %2993
      %2995 = vrot.lane.b32.xlu0 %v184, 60
      %v2996 = vpop.permute.xlu0 %2995
      %2997 = vrot.lane.b32.xlu0 %v185, 60
      %v2998 = vpop.permute.xlu0 %2997
      %2999 = vrot.lane.b32.xlu0 %v186, 60
      %v3000 = vpop.permute.xlu0 %2999
      %3001 = vrot.lane.b32.xlu0 %v187, 60
      %v3002 = vpop.permute.xlu0 %3001
      %3003 = vrot.lane.b32.xlu0 %v188, 60
      %v3004 = vpop.permute.xlu0 %3003
      %3005 = vrot.lane.b32.xlu0 %v189, 60
      %v3006 = vpop.permute.xlu0 %3005
      %3007 = vrot.lane.b32.xlu0 %v190, 60
      %v3008 = vpop.permute.xlu0 %3007
      %3009 = vrot.lane.b32.xlu0 %v192, 60
      %v3010 = vpop.permute.xlu0 %3009
      %3011 = vrot.lane.b32.xlu0 %v193, 60
      %v3012 = vpop.permute.xlu0 %3011
      %3013 = vrot.lane.b32.xlu0 %v194, 60
      %v3014 = vpop.permute.xlu0 %3013
      %3015 = vrot.lane.b32.xlu0 %v195, 60
      %v3016 = vpop.permute.xlu0 %3015
      %3017 = vrot.lane.b32.xlu0 %v196, 60
      %v3018 = vpop.permute.xlu0 %3017
      %3019 = vrot.lane.b32.xlu0 %v197, 60
      %v3020 = vpop.permute.xlu0 %3019
      %3021 = vrot.lane.b32.xlu0 %v198, 60
      %v3022 = vpop.permute.xlu0 %3021
      %3023 = vrot.lane.b32.xlu0 %v199, 60
      %v3024 = vpop.permute.xlu0 %3023
      %3025 = vrot.lane.b32.xlu0 %v200, 60
      %v3026 = vpop.permute.xlu0 %3025
      %vm3027 = vcmask 490496
      %v3028 = vsel %vm3027, %v2992, %v2994
      %v3029 = vsel %vm3027, %v2994, %v2996
      %v3030 = vsel %vm3027, %v2996, %v2998
      %v3031 = vsel %vm3027, %v2998, %v3000
      %v3032 = vsel %vm3027, %v3000, %v3002
      %v3033 = vsel %vm3027, %v3002, %v3004
      %v3034 = vsel %vm3027, %v3004, %v3006
      %v3035 = vsel %vm3027, %v3006, %v3008
      %v3036 = vsel %vm3027, %v3010, %v3012
      %v3037 = vsel %vm3027, %v3012, %v3014
      %v3038 = vsel %vm3027, %v3014, %v3016
      %v3039 = vsel %vm3027, %v3016, %v3018
      %v3040 = vsel %vm3027, %v3018, %v3020
      %v3041 = vsel %vm3027, %v3020, %v3022
      %v3042 = vsel %vm3027, %v3022, %v3024
      %v3043 = vsel %vm3027, %v3024, %v3026
      %v3060 = vsel %vm243, %v3028, 0.0
      %v3061 = vsel %vm244, %v3029, 0.0
      %v3062 = vsel %vm245, %v3030, 0.0
      %v3063 = vsel %vm246, %v3031, 0.0
      %v3064 = vsel %vm247, %v3032, 0.0
      %v3065 = vsel %vm248, %v3033, 0.0
      %v3066 = vsel %vm249, %v3034, 0.0
      %v3067 = vsel %vm250, %v3035, 0.0
      %v3068 = vsel %vm243, %v3036, 0.0
      %v3069 = vsel %vm244, %v3037, 0.0
      %v3070 = vsel %vm245, %v3038, 0.0
      %v3071 = vsel %vm246, %v3039, 0.0
      %v3072 = vsel %vm247, %v3040, 0.0
      %v3073 = vsel %vm248, %v3041, 0.0
      %v3074 = vsel %vm249, %v3042, 0.0
      %v3075 = vsel %vm250, %v3043, 0.0
      %s3076 = scalar_lea.vmem %s1, 28
      %v3077 = vld [vmem:[%s3076] sm:$0x3]
      %v3078 = vpack.c.bf16 %v3068, %v3060
      %v3079 = vpack.c.bf16 %v3069, %v3061
      %v3080 = vpack.c.bf16 %v3070, %v3062
      %v3081 = vpack.c.bf16 %v3071, %v3063
      %v3082 = vpack.c.bf16 %v3072, %v3064
      %v3083 = vpack.c.bf16 %v3073, %v3065
      %v3084 = vpack.c.bf16 %v3074, %v3066
      %v3085 = vpack.c.bf16 %v3075, %v3067
      %v3087 = vsel %vm283, %v3077, 0
      %3089 = vmatpush.bf16.msra.mxu0 0
      %3090 = vmatpush.bf16.msra.mxu0 0
      %3091 = vmatpush.bf16.msra.mxu0 0
      %3092 = vmatpush.bf16.msra.mxu0 0
      %3093 = vmatpush.bf16.msra.mxu0 0
      %3094 = vmatpush.bf16.msra.mxu0 0
      %3095 = vmatpush.bf16.msra.mxu0 0
      %3096 = vmatpush.bf16.msra.mxu0 %v3078
      %3097 = vmatmul.bf16.gmra.mxu0 %v3087
      %v3098 = vpop.f32.mrf.mxu0
      %v3099 = vadd.f32 0.0, %v3098
      %v3100 = vpop.f32.mrf.mxu0
      %3101 = vdwg.mxu0
      %3102 = vmatpush.bf16.msra.mxu0 0
      %3103 = vmatpush.bf16.msra.mxu0 0
      %3104 = vmatpush.bf16.msra.mxu0 0
      %3105 = vmatpush.bf16.msra.mxu0 0
      %3106 = vmatpush.bf16.msra.mxu0 0
      %3107 = vmatpush.bf16.msra.mxu0 0
      %3108 = vmatpush.bf16.msra.mxu0 0
      %3109 = vmatpush.bf16.msra.mxu0 %v3079
      %3110 = vmatmul.bf16.gmra.mxu0 %v3087
      %v3111 = vpop.f32.mrf.mxu0
      %v3112 = vadd.f32 0.0, %v3111
      %v3113 = vpop.f32.mrf.mxu0
      %3114 = vdwg.mxu0
      %3115 = vmatpush.bf16.msra.mxu0 0
      %3116 = vmatpush.bf16.msra.mxu0 0
      %3117 = vmatpush.bf16.msra.mxu0 0
      %3118 = vmatpush.bf16.msra.mxu0 0
      %3119 = vmatpush.bf16.msra.mxu0 0
      %3120 = vmatpush.bf16.msra.mxu0 0
      %3121 = vmatpush.bf16.msra.mxu0 0
      %3122 = vmatpush.bf16.msra.mxu0 %v3080
      %3123 = vmatmul.bf16.gmra.mxu0 %v3087
      %v3124 = vpop.f32.mrf.mxu0
      %v3125 = vadd.f32 0.0, %v3124
      %v3126 = vpop.f32.mrf.mxu0
      %3127 = vdwg.mxu0
      %3128 = vmatpush.bf16.msra.mxu0 0
      %3129 = vmatpush.bf16.msra.mxu0 0
      %3130 = vmatpush.bf16.msra.mxu0 0
      %3131 = vmatpush.bf16.msra.mxu0 0
      %3132 = vmatpush.bf16.msra.mxu0 0
      %3133 = vmatpush.bf16.msra.mxu0 0
      %3134 = vmatpush.bf16.msra.mxu0 0
      %3135 = vmatpush.bf16.msra.mxu0 %v3081
      %3136 = vmatmul.bf16.gmra.mxu0 %v3087
      %v3137 = vpop.f32.mrf.mxu0
      %v3138 = vadd.f32 0.0, %v3137
      %v3139 = vpop.f32.mrf.mxu0
      %3140 = vdwg.mxu0
      %3141 = vmatpush.bf16.msra.mxu0 0
      %3142 = vmatpush.bf16.msra.mxu0 0
      %3143 = vmatpush.bf16.msra.mxu0 0
      %3144 = vmatpush.bf16.msra.mxu0 0
      %3145 = vmatpush.bf16.msra.mxu0 0
      %3146 = vmatpush.bf16.msra.mxu0 0
      %3147 = vmatpush.bf16.msra.mxu0 0
      %3148 = vmatpush.bf16.msra.mxu0 %v3082
      %3149 = vmatmul.bf16.gmra.mxu0 %v3087
      %v3150 = vpop.f32.mrf.mxu0
      %v3151 = vadd.f32 0.0, %v3150
      %v3152 = vpop.f32.mrf.mxu0
      %3153 = vdwg.mxu0
      %3154 = vmatpush.bf16.msra.mxu0 0
      %3155 = vmatpush.bf16.msra.mxu0 0
      %3156 = vmatpush.bf16.msra.mxu0 0
      %3157 = vmatpush.bf16.msra.mxu0 0
      %3158 = vmatpush.bf16.msra.mxu0 0
      %3159 = vmatpush.bf16.msra.mxu0 0
      %3160 = vmatpush.bf16.msra.mxu0 0
      %3161 = vmatpush.bf16.msra.mxu0 %v3083
      %3162 = vmatmul.bf16.gmra.mxu0 %v3087
      %v3163 = vpop.f32.mrf.mxu0
      %v3164 = vadd.f32 0.0, %v3163
      %v3165 = vpop.f32.mrf.mxu0
      %3166 = vdwg.mxu0
      %3167 = vmatpush.bf16.msra.mxu0 0
      %3168 = vmatpush.bf16.msra.mxu0 0
      %3169 = vmatpush.bf16.msra.mxu0 0
      %3170 = vmatpush.bf16.msra.mxu0 0
      %3171 = vmatpush.bf16.msra.mxu0 0
      %3172 = vmatpush.bf16.msra.mxu0 0
      %3173 = vmatpush.bf16.msra.mxu0 0
      %3174 = vmatpush.bf16.msra.mxu0 %v3084
      %3175 = vmatmul.bf16.gmra.mxu0 %v3087
      %v3176 = vpop.f32.mrf.mxu0
      %v3177 = vadd.f32 0.0, %v3176
      %v3178 = vpop.f32.mrf.mxu0
      %3179 = vdwg.mxu0
      %3180 = vmatpush.bf16.msra.mxu0 0
      %3181 = vmatpush.bf16.msra.mxu0 0
      %3182 = vmatpush.bf16.msra.mxu0 0
      %3183 = vmatpush.bf16.msra.mxu0 0
      %3184 = vmatpush.bf16.msra.mxu0 0
      %3185 = vmatpush.bf16.msra.mxu0 0
      %3186 = vmatpush.bf16.msra.mxu0 0
      %3187 = vmatpush.bf16.msra.mxu0 %v3085
      %3188 = vmatmul.bf16.gmra.mxu0 %v3087
      %v3189 = vpop.f32.mrf.mxu0
      %v3190 = vadd.f32 0.0, %v3189
      %v3191 = vpop.f32.mrf.mxu0
      %3192 = vdwg.mxu0
      %v3193 = vadd.f32 %v2983, %v3099
      %v3194 = vadd.f32 %v2984, %v3112
      %v3195 = vadd.f32 %v2985, %v3125
      %v3196 = vadd.f32 %v2986, %v3138
      %v3197 = vadd.f32 %v2987, %v3151
      %v3198 = vadd.f32 %v2988, %v3164
      %v3199 = vadd.f32 %v2989, %v3177
      %v3200 = vadd.f32 %v2990, %v3190
      %3201 = vrot.lane.b32.xlu0 %v182, 32
      %v3202 = vpop.permute.xlu0 %3201
      %3203 = vrot.lane.b32.xlu0 %v183, 32
      %v3204 = vpop.permute.xlu0 %3203
      %3205 = vrot.lane.b32.xlu0 %v184, 32
      %v3206 = vpop.permute.xlu0 %3205
      %3207 = vrot.lane.b32.xlu0 %v185, 32
      %v3208 = vpop.permute.xlu0 %3207
      %3209 = vrot.lane.b32.xlu0 %v186, 32
      %v3210 = vpop.permute.xlu0 %3209
      %3211 = vrot.lane.b32.xlu0 %v187, 32
      %v3212 = vpop.permute.xlu0 %3211
      %3213 = vrot.lane.b32.xlu0 %v188, 32
      %v3214 = vpop.permute.xlu0 %3213
      %3215 = vrot.lane.b32.xlu0 %v189, 32
      %v3216 = vpop.permute.xlu0 %3215
      %3217 = vrot.lane.b32.xlu0 %v190, 32
      %v3218 = vpop.permute.xlu0 %3217
      %3219 = vrot.lane.b32.xlu0 %v192, 32
      %v3220 = vpop.permute.xlu0 %3219
      %3221 = vrot.lane.b32.xlu0 %v193, 32
      %v3222 = vpop.permute.xlu0 %3221
      %3223 = vrot.lane.b32.xlu0 %v194, 32
      %v3224 = vpop.permute.xlu0 %3223
      %3225 = vrot.lane.b32.xlu0 %v195, 32
      %v3226 = vpop.permute.xlu0 %3225
      %3227 = vrot.lane.b32.xlu0 %v196, 32
      %v3228 = vpop.permute.xlu0 %3227
      %3229 = vrot.lane.b32.xlu0 %v197, 32
      %v3230 = vpop.permute.xlu0 %3229
      %3231 = vrot.lane.b32.xlu0 %v198, 32
      %v3232 = vpop.permute.xlu0 %3231
      %3233 = vrot.lane.b32.xlu0 %v199, 32
      %v3234 = vpop.permute.xlu0 %3233
      %3235 = vrot.lane.b32.xlu0 %v200, 32
      %v3236 = vpop.permute.xlu0 %3235
      %vm3237 = vcmask 261120
      %v3238 = vsel %vm3237, %v3202, %v3204
      %v3239 = vsel %vm3237, %v3204, %v3206
      %v3240 = vsel %vm3237, %v3206, %v3208
      %v3241 = vsel %vm3237, %v3208, %v3210
      %v3242 = vsel %vm3237, %v3210, %v3212
      %v3243 = vsel %vm3237, %v3212, %v3214
      %v3244 = vsel %vm3237, %v3214, %v3216
      %v3245 = vsel %vm3237, %v3216, %v3218
      %v3246 = vsel %vm3237, %v3220, %v3222
      %v3247 = vsel %vm3237, %v3222, %v3224
      %v3248 = vsel %vm3237, %v3224, %v3226
      %v3249 = vsel %vm3237, %v3226, %v3228
      %v3250 = vsel %vm3237, %v3228, %v3230
      %v3251 = vsel %vm3237, %v3230, %v3232
      %v3252 = vsel %vm3237, %v3232, %v3234
      %v3253 = vsel %vm3237, %v3234, %v3236
      %v3270 = vsel %vm219, %v3238, 0.0
      %v3271 = vsel %vm220, %v3239, 0.0
      %v3272 = vsel %vm221, %v3240, 0.0
      %v3273 = vsel %vm222, %v3241, 0.0
      %v3274 = vsel %vm223, %v3242, 0.0
      %v3275 = vsel %vm224, %v3243, 0.0
      %v3276 = vsel %vm225, %v3244, 0.0
      %v3277 = vsel %vm226, %v3245, 0.0
      %v3278 = vsel %vm219, %v3246, 0.0
      %v3279 = vsel %vm220, %v3247, 0.0
      %v3280 = vsel %vm221, %v3248, 0.0
      %v3281 = vsel %vm222, %v3249, 0.0
      %v3282 = vsel %vm223, %v3250, 0.0
      %v3283 = vsel %vm224, %v3251, 0.0
      %v3284 = vsel %vm225, %v3252, 0.0
      %v3285 = vsel %vm226, %v3253, 0.0
      %s3286 = scalar_lea.vmem %s1, 30
      %v3287 = vld [vmem:[%s3286] sm:$0x3]
      %v3288 = vpack.c.bf16 %v3278, %v3270
      %v3289 = vpack.c.bf16 %v3279, %v3271
      %v3290 = vpack.c.bf16 %v3280, %v3272
      %v3291 = vpack.c.bf16 %v3281, %v3273
      %v3292 = vpack.c.bf16 %v3282, %v3274
      %v3293 = vpack.c.bf16 %v3283, %v3275
      %v3294 = vpack.c.bf16 %v3284, %v3276
      %v3295 = vpack.c.bf16 %v3285, %v3277
      %v3297 = vsel %vm283, %v3287, 0
      %3299 = vmatpush.bf16.msra.mxu0 0
      %3300 = vmatpush.bf16.msra.mxu0 0
      %3301 = vmatpush.bf16.msra.mxu0 0
      %3302 = vmatpush.bf16.msra.mxu0 0
      %3303 = vmatpush.bf16.msra.mxu0 0
      %3304 = vmatpush.bf16.msra.mxu0 0
      %3305 = vmatpush.bf16.msra.mxu0 0
      %3306 = vmatpush.bf16.msra.mxu0 %v3288
      %3307 = vmatmul.bf16.gmra.mxu0 %v3297
      %v3308 = vpop.f32.mrf.mxu0
      %v3309 = vadd.f32 0.0, %v3308
      %v3310 = vpop.f32.mrf.mxu0
      %3311 = vdwg.mxu0
      %3312 = vmatpush.bf16.msra.mxu0 0
      %3313 = vmatpush.bf16.msra.mxu0 0
      %3314 = vmatpush.bf16.msra.mxu0 0
      %3315 = vmatpush.bf16.msra.mxu0 0
      %3316 = vmatpush.bf16.msra.mxu0 0
      %3317 = vmatpush.bf16.msra.mxu0 0
      %3318 = vmatpush.bf16.msra.mxu0 0
      %3319 = vmatpush.bf16.msra.mxu0 %v3289
      %3320 = vmatmul.bf16.gmra.mxu0 %v3297
      %v3321 = vpop.f32.mrf.mxu0
      %v3322 = vadd.f32 0.0, %v3321
      %v3323 = vpop.f32.mrf.mxu0
      %3324 = vdwg.mxu0
      %3325 = vmatpush.bf16.msra.mxu0 0
      %3326 = vmatpush.bf16.msra.mxu0 0
      %3327 = vmatpush.bf16.msra.mxu0 0
      %3328 = vmatpush.bf16.msra.mxu0 0
      %3329 = vmatpush.bf16.msra.mxu0 0
      %3330 = vmatpush.bf16.msra.mxu0 0
      %3331 = vmatpush.bf16.msra.mxu0 0
      %3332 = vmatpush.bf16.msra.mxu0 %v3290
      %3333 = vmatmul.bf16.gmra.mxu0 %v3297
      %v3334 = vpop.f32.mrf.mxu0
      %v3335 = vadd.f32 0.0, %v3334
      %v3336 = vpop.f32.mrf.mxu0
      %3337 = vdwg.mxu0
      %3338 = vmatpush.bf16.msra.mxu0 0
      %3339 = vmatpush.bf16.msra.mxu0 0
      %3340 = vmatpush.bf16.msra.mxu0 0
      %3341 = vmatpush.bf16.msra.mxu0 0
      %3342 = vmatpush.bf16.msra.mxu0 0
      %3343 = vmatpush.bf16.msra.mxu0 0
      %3344 = vmatpush.bf16.msra.mxu0 0
      %3345 = vmatpush.bf16.msra.mxu0 %v3291
      %3346 = vmatmul.bf16.gmra.mxu0 %v3297
      %v3347 = vpop.f32.mrf.mxu0
      %v3348 = vadd.f32 0.0, %v3347
      %v3349 = vpop.f32.mrf.mxu0
      %3350 = vdwg.mxu0
      %3351 = vmatpush.bf16.msra.mxu0 0
      %3352 = vmatpush.bf16.msra.mxu0 0
      %3353 = vmatpush.bf16.msra.mxu0 0
      %3354 = vmatpush.bf16.msra.mxu0 0
      %3355 = vmatpush.bf16.msra.mxu0 0
      %3356 = vmatpush.bf16.msra.mxu0 0
      %3357 = vmatpush.bf16.msra.mxu0 0
      %3358 = vmatpush.bf16.msra.mxu0 %v3292
      %3359 = vmatmul.bf16.gmra.mxu0 %v3297
      %v3360 = vpop.f32.mrf.mxu0
      %v3361 = vadd.f32 0.0, %v3360
      %v3362 = vpop.f32.mrf.mxu0
      %3363 = vdwg.mxu0
      %3364 = vmatpush.bf16.msra.mxu0 0
      %3365 = vmatpush.bf16.msra.mxu0 0
      %3366 = vmatpush.bf16.msra.mxu0 0
      %3367 = vmatpush.bf16.msra.mxu0 0
      %3368 = vmatpush.bf16.msra.mxu0 0
      %3369 = vmatpush.bf16.msra.mxu0 0
      %3370 = vmatpush.bf16.msra.mxu0 0
      %3371 = vmatpush.bf16.msra.mxu0 %v3293
      %3372 = vmatmul.bf16.gmra.mxu0 %v3297
      %v3373 = vpop.f32.mrf.mxu0
      %v3374 = vadd.f32 0.0, %v3373
      %v3375 = vpop.f32.mrf.mxu0
      %3376 = vdwg.mxu0
      %3377 = vmatpush.bf16.msra.mxu0 0
      %3378 = vmatpush.bf16.msra.mxu0 0
      %3379 = vmatpush.bf16.msra.mxu0 0
      %3380 = vmatpush.bf16.msra.mxu0 0
      %3381 = vmatpush.bf16.msra.mxu0 0
      %3382 = vmatpush.bf16.msra.mxu0 0
      %3383 = vmatpush.bf16.msra.mxu0 0
      %3384 = vmatpush.bf16.msra.mxu0 %v3294
      %3385 = vmatmul.bf16.gmra.mxu0 %v3297
      %v3386 = vpop.f32.mrf.mxu0
      %v3387 = vadd.f32 0.0, %v3386
      %v3388 = vpop.f32.mrf.mxu0
      %3389 = vdwg.mxu0
      %3390 = vmatpush.bf16.msra.mxu0 0
      %3391 = vmatpush.bf16.msra.mxu0 0
      %3392 = vmatpush.bf16.msra.mxu0 0
      %3393 = vmatpush.bf16.msra.mxu0 0
      %3394 = vmatpush.bf16.msra.mxu0 0
      %3395 = vmatpush.bf16.msra.mxu0 0
      %3396 = vmatpush.bf16.msra.mxu0 0
      %3397 = vmatpush.bf16.msra.mxu0 %v3295
      %3398 = vmatmul.bf16.gmra.mxu0 %v3297
      %v3399 = vpop.f32.mrf.mxu0
      %v3400 = vadd.f32 0.0, %v3399
      %v3401 = vpop.f32.mrf.mxu0
      %3402 = vdwg.mxu0
      %v3403 = vadd.f32 %v3193, %v3309
      %v3404 = vadd.f32 %v3194, %v3322
      %v3405 = vadd.f32 %v3195, %v3335
      %v3406 = vadd.f32 %v3196, %v3348
      %v3407 = vadd.f32 %v3197, %v3361
      %v3408 = vadd.f32 %v3198, %v3374
      %v3409 = vadd.f32 %v3199, %v3387
      %v3410 = vadd.f32 %v3200, %v3400
      %3411 = vrot.lane.b32.xlu0 %v182, 31
      %v3412 = vpop.permute.xlu0 %3411
      %3413 = vrot.lane.b32.xlu0 %v183, 31
      %v3414 = vpop.permute.xlu0 %3413
      %3415 = vrot.lane.b32.xlu0 %v184, 31
      %v3416 = vpop.permute.xlu0 %3415
      %3417 = vrot.lane.b32.xlu0 %v185, 31
      %v3418 = vpop.permute.xlu0 %3417
      %3419 = vrot.lane.b32.xlu0 %v186, 31
      %v3420 = vpop.permute.xlu0 %3419
      %3421 = vrot.lane.b32.xlu0 %v187, 31
      %v3422 = vpop.permute.xlu0 %3421
      %3423 = vrot.lane.b32.xlu0 %v188, 31
      %v3424 = vpop.permute.xlu0 %3423
      %3425 = vrot.lane.b32.xlu0 %v189, 31
      %v3426 = vpop.permute.xlu0 %3425
      %3427 = vrot.lane.b32.xlu0 %v190, 31
      %v3428 = vpop.permute.xlu0 %3427
      %3429 = vrot.lane.b32.xlu0 %v192, 31
      %v3430 = vpop.permute.xlu0 %3429
      %3431 = vrot.lane.b32.xlu0 %v193, 31
      %v3432 = vpop.permute.xlu0 %3431
      %3433 = vrot.lane.b32.xlu0 %v194, 31
      %v3434 = vpop.permute.xlu0 %3433
      %3435 = vrot.lane.b32.xlu0 %v195, 31
      %v3436 = vpop.permute.xlu0 %3435
      %3437 = vrot.lane.b32.xlu0 %v196, 31
      %v3438 = vpop.permute.xlu0 %3437
      %3439 = vrot.lane.b32.xlu0 %v197, 31
      %v3440 = vpop.permute.xlu0 %3439
      %3441 = vrot.lane.b32.xlu0 %v198, 31
      %v3442 = vpop.permute.xlu0 %3441
      %3443 = vrot.lane.b32.xlu0 %v199, 31
      %v3444 = vpop.permute.xlu0 %3443
      %3445 = vrot.lane.b32.xlu0 %v200, 31
      %v3446 = vpop.permute.xlu0 %3445
      %vm3447 = vcmask 252928
      %v3448 = vsel %vm3447, %v3412, %v3414
      %v3449 = vsel %vm3447, %v3414, %v3416
      %v3450 = vsel %vm3447, %v3416, %v3418
      %v3451 = vsel %vm3447, %v3418, %v3420
      %v3452 = vsel %vm3447, %v3420, %v3422
      %v3453 = vsel %vm3447, %v3422, %v3424
      %v3454 = vsel %vm3447, %v3424, %v3426
      %v3455 = vsel %vm3447, %v3426, %v3428
      %v3456 = vsel %vm3447, %v3430, %v3432
      %v3457 = vsel %vm3447, %v3432, %v3434
      %v3458 = vsel %vm3447, %v3434, %v3436
      %v3459 = vsel %vm3447, %v3436, %v3438
      %v3460 = vsel %vm3447, %v3438, %v3440
      %v3461 = vsel %vm3447, %v3440, %v3442
      %v3462 = vsel %vm3447, %v3442, %v3444
      %v3463 = vsel %vm3447, %v3444, %v3446
      %v3480 = vsel %vm227, %v3448, 0.0
      %v3481 = vsel %vm228, %v3449, 0.0
      %v3482 = vsel %vm229, %v3450, 0.0
      %v3483 = vsel %vm230, %v3451, 0.0
      %v3484 = vsel %vm231, %v3452, 0.0
      %v3485 = vsel %vm232, %v3453, 0.0
      %v3486 = vsel %vm233, %v3454, 0.0
      %v3487 = vsel %vm234, %v3455, 0.0
      %v3488 = vsel %vm227, %v3456, 0.0
      %v3489 = vsel %vm228, %v3457, 0.0
      %v3490 = vsel %vm229, %v3458, 0.0
      %v3491 = vsel %vm230, %v3459, 0.0
      %v3492 = vsel %vm231, %v3460, 0.0
      %v3493 = vsel %vm232, %v3461, 0.0
      %v3494 = vsel %vm233, %v3462, 0.0
      %v3495 = vsel %vm234, %v3463, 0.0
      %s3496 = scalar_lea.vmem %s1, 32
      %v3497 = vld [vmem:[%s3496] sm:$0x3]
      %v3498 = vpack.c.bf16 %v3488, %v3480
      %v3499 = vpack.c.bf16 %v3489, %v3481
      %v3500 = vpack.c.bf16 %v3490, %v3482
      %v3501 = vpack.c.bf16 %v3491, %v3483
      %v3502 = vpack.c.bf16 %v3492, %v3484
      %v3503 = vpack.c.bf16 %v3493, %v3485
      %v3504 = vpack.c.bf16 %v3494, %v3486
      %v3505 = vpack.c.bf16 %v3495, %v3487
      %v3507 = vsel %vm283, %v3497, 0
      %3509 = vmatpush.bf16.msra.mxu0 0
      %3510 = vmatpush.bf16.msra.mxu0 0
      %3511 = vmatpush.bf16.msra.mxu0 0
      %3512 = vmatpush.bf16.msra.mxu0 0
      %3513 = vmatpush.bf16.msra.mxu0 0
      %3514 = vmatpush.bf16.msra.mxu0 0
      %3515 = vmatpush.bf16.msra.mxu0 0
      %3516 = vmatpush.bf16.msra.mxu0 %v3498
      %3517 = vmatmul.bf16.gmra.mxu0 %v3507
      %v3518 = vpop.f32.mrf.mxu0
      %v3519 = vadd.f32 0.0, %v3518
      %v3520 = vpop.f32.mrf.mxu0
      %3521 = vdwg.mxu0
      %3522 = vmatpush.bf16.msra.mxu0 0
      %3523 = vmatpush.bf16.msra.mxu0 0
      %3524 = vmatpush.bf16.msra.mxu0 0
      %3525 = vmatpush.bf16.msra.mxu0 0
      %3526 = vmatpush.bf16.msra.mxu0 0
      %3527 = vmatpush.bf16.msra.mxu0 0
      %3528 = vmatpush.bf16.msra.mxu0 0
      %3529 = vmatpush.bf16.msra.mxu0 %v3499
      %3530 = vmatmul.bf16.gmra.mxu0 %v3507
      %v3531 = vpop.f32.mrf.mxu0
      %v3532 = vadd.f32 0.0, %v3531
      %v3533 = vpop.f32.mrf.mxu0
      %3534 = vdwg.mxu0
      %3535 = vmatpush.bf16.msra.mxu0 0
      %3536 = vmatpush.bf16.msra.mxu0 0
      %3537 = vmatpush.bf16.msra.mxu0 0
      %3538 = vmatpush.bf16.msra.mxu0 0
      %3539 = vmatpush.bf16.msra.mxu0 0
      %3540 = vmatpush.bf16.msra.mxu0 0
      %3541 = vmatpush.bf16.msra.mxu0 0
      %3542 = vmatpush.bf16.msra.mxu0 %v3500
      %3543 = vmatmul.bf16.gmra.mxu0 %v3507
      %v3544 = vpop.f32.mrf.mxu0
      %v3545 = vadd.f32 0.0, %v3544
      %v3546 = vpop.f32.mrf.mxu0
      %3547 = vdwg.mxu0
      %3548 = vmatpush.bf16.msra.mxu0 0
      %3549 = vmatpush.bf16.msra.mxu0 0
      %3550 = vmatpush.bf16.msra.mxu0 0
      %3551 = vmatpush.bf16.msra.mxu0 0
      %3552 = vmatpush.bf16.msra.mxu0 0
      %3553 = vmatpush.bf16.msra.mxu0 0
      %3554 = vmatpush.bf16.msra.mxu0 0
      %3555 = vmatpush.bf16.msra.mxu0 %v3501
      %3556 = vmatmul.bf16.gmra.mxu0 %v3507
      %v3557 = vpop.f32.mrf.mxu0
      %v3558 = vadd.f32 0.0, %v3557
      %v3559 = vpop.f32.mrf.mxu0
      %3560 = vdwg.mxu0
      %3561 = vmatpush.bf16.msra.mxu0 0
      %3562 = vmatpush.bf16.msra.mxu0 0
      %3563 = vmatpush.bf16.msra.mxu0 0
      %3564 = vmatpush.bf16.msra.mxu0 0
      %3565 = vmatpush.bf16.msra.mxu0 0
      %3566 = vmatpush.bf16.msra.mxu0 0
      %3567 = vmatpush.bf16.msra.mxu0 0
      %3568 = vmatpush.bf16.msra.mxu0 %v3502
      %3569 = vmatmul.bf16.gmra.mxu0 %v3507
      %v3570 = vpop.f32.mrf.mxu0
      %v3571 = vadd.f32 0.0, %v3570
      %v3572 = vpop.f32.mrf.mxu0
      %3573 = vdwg.mxu0
      %3574 = vmatpush.bf16.msra.mxu0 0
      %3575 = vmatpush.bf16.msra.mxu0 0
      %3576 = vmatpush.bf16.msra.mxu0 0
      %3577 = vmatpush.bf16.msra.mxu0 0
      %3578 = vmatpush.bf16.msra.mxu0 0
      %3579 = vmatpush.bf16.msra.mxu0 0
      %3580 = vmatpush.bf16.msra.mxu0 0
      %3581 = vmatpush.bf16.msra.mxu0 %v3503
      %3582 = vmatmul.bf16.gmra.mxu0 %v3507
      %v3583 = vpop.f32.mrf.mxu0
      %v3584 = vadd.f32 0.0, %v3583
      %v3585 = vpop.f32.mrf.mxu0
      %3586 = vdwg.mxu0
      %3587 = vmatpush.bf16.msra.mxu0 0
      %3588 = vmatpush.bf16.msra.mxu0 0
      %3589 = vmatpush.bf16.msra.mxu0 0
      %3590 = vmatpush.bf16.msra.mxu0 0
      %3591 = vmatpush.bf16.msra.mxu0 0
      %3592 = vmatpush.bf16.msra.mxu0 0
      %3593 = vmatpush.bf16.msra.mxu0 0
      %3594 = vmatpush.bf16.msra.mxu0 %v3504
      %3595 = vmatmul.bf16.gmra.mxu0 %v3507
      %v3596 = vpop.f32.mrf.mxu0
      %v3597 = vadd.f32 0.0, %v3596
      %v3598 = vpop.f32.mrf.mxu0
      %3599 = vdwg.mxu0
      %3600 = vmatpush.bf16.msra.mxu0 0
      %3601 = vmatpush.bf16.msra.mxu0 0
      %3602 = vmatpush.bf16.msra.mxu0 0
      %3603 = vmatpush.bf16.msra.mxu0 0
      %3604 = vmatpush.bf16.msra.mxu0 0
      %3605 = vmatpush.bf16.msra.mxu0 0
      %3606 = vmatpush.bf16.msra.mxu0 0
      %3607 = vmatpush.bf16.msra.mxu0 %v3505
      %3608 = vmatmul.bf16.gmra.mxu0 %v3507
      %v3609 = vpop.f32.mrf.mxu0
      %v3610 = vadd.f32 0.0, %v3609
      %v3611 = vpop.f32.mrf.mxu0
      %3612 = vdwg.mxu0
      %v3613 = vadd.f32 %v3403, %v3519
      %v3614 = vadd.f32 %v3404, %v3532
      %v3615 = vadd.f32 %v3405, %v3545
      %v3616 = vadd.f32 %v3406, %v3558
      %v3617 = vadd.f32 %v3407, %v3571
      %v3618 = vadd.f32 %v3408, %v3584
      %v3619 = vadd.f32 %v3409, %v3597
      %v3620 = vadd.f32 %v3410, %v3610
      %s3621 = scalar_lea.vmem %s1, 34
      %v3622 = vld [vmem:[%s3621] sm:$0x3]
      %3623 = vrot.lane.b32.xlu0 %v629, 30
      %v3624 = vpop.permute.xlu0 %3623
      %3625 = vrot.lane.b32.xlu0 %v630, 30
      %v3626 = vpop.permute.xlu0 %3625
      %3627 = vrot.lane.b32.xlu0 %v631, 30
      %v3628 = vpop.permute.xlu0 %3627
      %3629 = vrot.lane.b32.xlu0 %v632, 30
      %v3630 = vpop.permute.xlu0 %3629
      %3631 = vrot.lane.b32.xlu0 %v633, 30
      %v3632 = vpop.permute.xlu0 %3631
      %3633 = vrot.lane.b32.xlu0 %v634, 30
      %v3634 = vpop.permute.xlu0 %3633
      %3635 = vrot.lane.b32.xlu0 %v635, 30
      %v3636 = vpop.permute.xlu0 %3635
      %3637 = vrot.lane.b32.xlu0 %v636, 30
      %v3638 = vpop.permute.xlu0 %3637
      %3639 = vrot.lane.b32.xlu0 %v637, 30
      %v3640 = vpop.permute.xlu0 %3639
      %vm3641 = vcmask 244736
      %v3642 = vsel %vm3641, %v3624, %v3626
      %v3643 = vsel %vm3641, %v3626, %v3628
      %v3644 = vsel %vm3641, %v3628, %v3630
      %v3645 = vsel %vm3641, %v3630, %v3632
      %v3646 = vsel %vm3641, %v3632, %v3634
      %v3647 = vsel %vm3641, %v3634, %v3636
      %v3648 = vsel %vm3641, %v3636, %v3638
      %v3649 = vsel %vm3641, %v3638, %v3640
      %v3659 = vsel %vm283, %v3622, 0
      %3661 = vmatpush.bf16.msra.mxu0 0
      %3662 = vmatpush.bf16.msra.mxu0 0
      %3663 = vmatpush.bf16.msra.mxu0 0
      %3664 = vmatpush.bf16.msra.mxu0 0
      %3665 = vmatpush.bf16.msra.mxu0 0
      %3666 = vmatpush.bf16.msra.mxu0 0
      %3667 = vmatpush.bf16.msra.mxu0 0
      %3668 = vmatpush.bf16.msra.mxu0 %v3642
      %3669 = vmatmul.bf16.gmra.mxu0 %v3659
      %v3670 = vpop.f32.mrf.mxu0
      %v3671 = vadd.f32 0.0, %v3670
      %v3672 = vpop.f32.mrf.mxu0
      %3673 = vdwg.mxu0
      %3674 = vmatpush.bf16.msra.mxu0 0
      %3675 = vmatpush.bf16.msra.mxu0 0
      %3676 = vmatpush.bf16.msra.mxu0 0
      %3677 = vmatpush.bf16.msra.mxu0 0
      %3678 = vmatpush.bf16.msra.mxu0 0
      %3679 = vmatpush.bf16.msra.mxu0 0
      %3680 = vmatpush.bf16.msra.mxu0 0
      %3681 = vmatpush.bf16.msra.mxu0 %v3643
      %3682 = vmatmul.bf16.gmra.mxu0 %v3659
      %v3683 = vpop.f32.mrf.mxu0
      %v3684 = vadd.f32 0.0, %v3683
      %v3685 = vpop.f32.mrf.mxu0
      %3686 = vdwg.mxu0
      %3687 = vmatpush.bf16.msra.mxu0 0
      %3688 = vmatpush.bf16.msra.mxu0 0
      %3689 = vmatpush.bf16.msra.mxu0 0
      %3690 = vmatpush.bf16.msra.mxu0 0
      %3691 = vmatpush.bf16.msra.mxu0 0
      %3692 = vmatpush.bf16.msra.mxu0 0
      %3693 = vmatpush.bf16.msra.mxu0 0
      %3694 = vmatpush.bf16.msra.mxu0 %v3644
      %3695 = vmatmul.bf16.gmra.mxu0 %v3659
      %v3696 = vpop.f32.mrf.mxu0
      %v3697 = vadd.f32 0.0, %v3696
      %v3698 = vpop.f32.mrf.mxu0
      %3699 = vdwg.mxu0
      %3700 = vmatpush.bf16.msra.mxu0 0
      %3701 = vmatpush.bf16.msra.mxu0 0
      %3702 = vmatpush.bf16.msra.mxu0 0
      %3703 = vmatpush.bf16.msra.mxu0 0
      %3704 = vmatpush.bf16.msra.mxu0 0
      %3705 = vmatpush.bf16.msra.mxu0 0
      %3706 = vmatpush.bf16.msra.mxu0 0
      %3707 = vmatpush.bf16.msra.mxu0 %v3645
      %3708 = vmatmul.bf16.gmra.mxu0 %v3659
      %v3709 = vpop.f32.mrf.mxu0
      %v3710 = vadd.f32 0.0, %v3709
      %v3711 = vpop.f32.mrf.mxu0
      %3712 = vdwg.mxu0
      %3713 = vmatpush.bf16.msra.mxu0 0
      %3714 = vmatpush.bf16.msra.mxu0 0
      %3715 = vmatpush.bf16.msra.mxu0 0
      %3716 = vmatpush.bf16.msra.mxu0 0
      %3717 = vmatpush.bf16.msra.mxu0 0
      %3718 = vmatpush.bf16.msra.mxu0 0
      %3719 = vmatpush.bf16.msra.mxu0 0
      %3720 = vmatpush.bf16.msra.mxu0 %v3646
      %3721 = vmatmul.bf16.gmra.mxu0 %v3659
      %v3722 = vpop.f32.mrf.mxu0
      %v3723 = vadd.f32 0.0, %v3722
      %v3724 = vpop.f32.mrf.mxu0
      %3725 = vdwg.mxu0
      %3726 = vmatpush.bf16.msra.mxu0 0
      %3727 = vmatpush.bf16.msra.mxu0 0
      %3728 = vmatpush.bf16.msra.mxu0 0
      %3729 = vmatpush.bf16.msra.mxu0 0
      %3730 = vmatpush.bf16.msra.mxu0 0
      %3731 = vmatpush.bf16.msra.mxu0 0
      %3732 = vmatpush.bf16.msra.mxu0 0
      %3733 = vmatpush.bf16.msra.mxu0 %v3647
      %3734 = vmatmul.bf16.gmra.mxu0 %v3659
      %v3735 = vpop.f32.mrf.mxu0
      %v3736 = vadd.f32 0.0, %v3735
      %v3737 = vpop.f32.mrf.mxu0
      %3738 = vdwg.mxu0
      %3739 = vmatpush.bf16.msra.mxu0 0
      %3740 = vmatpush.bf16.msra.mxu0 0
      %3741 = vmatpush.bf16.msra.mxu0 0
      %3742 = vmatpush.bf16.msra.mxu0 0
      %3743 = vmatpush.bf16.msra.mxu0 0
      %3744 = vmatpush.bf16.msra.mxu0 0
      %3745 = vmatpush.bf16.msra.mxu0 0
      %3746 = vmatpush.bf16.msra.mxu0 %v3648
      %3747 = vmatmul.bf16.gmra.mxu0 %v3659
      %v3748 = vpop.f32.mrf.mxu0
      %v3749 = vadd.f32 0.0, %v3748
      %v3750 = vpop.f32.mrf.mxu0
      %3751 = vdwg.mxu0
      %3752 = vmatpush.bf16.msra.mxu0 0
      %3753 = vmatpush.bf16.msra.mxu0 0
      %3754 = vmatpush.bf16.msra.mxu0 0
      %3755 = vmatpush.bf16.msra.mxu0 0
      %3756 = vmatpush.bf16.msra.mxu0 0
      %3757 = vmatpush.bf16.msra.mxu0 0
      %3758 = vmatpush.bf16.msra.mxu0 0
      %3759 = vmatpush.bf16.msra.mxu0 %v3649
      %3760 = vmatmul.bf16.gmra.mxu0 %v3659
      %v3761 = vpop.f32.mrf.mxu0
      %v3762 = vadd.f32 0.0, %v3761
      %v3763 = vpop.f32.mrf.mxu0
      %3764 = vdwg.mxu0
      %v3765 = vadd.f32 %v3613, %v3671
      %v3766 = vadd.f32 %v3614, %v3684
      %v3767 = vadd.f32 %v3615, %v3697
      %v3768 = vadd.f32 %v3616, %v3710
      %v3769 = vadd.f32 %v3617, %v3723
      %v3770 = vadd.f32 %v3618, %v3736
      %v3771 = vadd.f32 %v3619, %v3749
      %v3772 = vadd.f32 %v3620, %v3762
      %3773 = vrot.lane.b32.xlu0 %v182, 29
      %v3774 = vpop.permute.xlu0 %3773
      %3775 = vrot.lane.b32.xlu0 %v183, 29
      %v3776 = vpop.permute.xlu0 %3775
      %3777 = vrot.lane.b32.xlu0 %v184, 29
      %v3778 = vpop.permute.xlu0 %3777
      %3779 = vrot.lane.b32.xlu0 %v185, 29
      %v3780 = vpop.permute.xlu0 %3779
      %3781 = vrot.lane.b32.xlu0 %v186, 29
      %v3782 = vpop.permute.xlu0 %3781
      %3783 = vrot.lane.b32.xlu0 %v187, 29
      %v3784 = vpop.permute.xlu0 %3783
      %3785 = vrot.lane.b32.xlu0 %v188, 29
      %v3786 = vpop.permute.xlu0 %3785
      %3787 = vrot.lane.b32.xlu0 %v189, 29
      %v3788 = vpop.permute.xlu0 %3787
      %3789 = vrot.lane.b32.xlu0 %v190, 29
      %v3790 = vpop.permute.xlu0 %3789
      %3791 = vrot.lane.b32.xlu0 %v192, 29
      %v3792 = vpop.permute.xlu0 %3791
      %3793 = vrot.lane.b32.xlu0 %v193, 29
      %v3794 = vpop.permute.xlu0 %3793
      %3795 = vrot.lane.b32.xlu0 %v194, 29
      %v3796 = vpop.permute.xlu0 %3795
      %3797 = vrot.lane.b32.xlu0 %v195, 29
      %v3798 = vpop.permute.xlu0 %3797
      %3799 = vrot.lane.b32.xlu0 %v196, 29
      %v3800 = vpop.permute.xlu0 %3799
      %3801 = vrot.lane.b32.xlu0 %v197, 29
      %v3802 = vpop.permute.xlu0 %3801
      %3803 = vrot.lane.b32.xlu0 %v198, 29
      %v3804 = vpop.permute.xlu0 %3803
      %3805 = vrot.lane.b32.xlu0 %v199, 29
      %v3806 = vpop.permute.xlu0 %3805
      %3807 = vrot.lane.b32.xlu0 %v200, 29
      %v3808 = vpop.permute.xlu0 %3807
      %vm3809 = vcmask 236544
      %v3810 = vsel %vm3809, %v3774, %v3776
      %v3811 = vsel %vm3809, %v3776, %v3778
      %v3812 = vsel %vm3809, %v3778, %v3780
      %v3813 = vsel %vm3809, %v3780, %v3782
      %v3814 = vsel %vm3809, %v3782, %v3784
      %v3815 = vsel %vm3809, %v3784, %v3786
      %v3816 = vsel %vm3809, %v3786, %v3788
      %v3817 = vsel %vm3809, %v3788, %v3790
      %v3818 = vsel %vm3809, %v3792, %v3794
      %v3819 = vsel %vm3809, %v3794, %v3796
      %v3820 = vsel %vm3809, %v3796, %v3798
      %v3821 = vsel %vm3809, %v3798, %v3800
      %v3822 = vsel %vm3809, %v3800, %v3802
      %v3823 = vsel %vm3809, %v3802, %v3804
      %v3824 = vsel %vm3809, %v3804, %v3806
      %v3825 = vsel %vm3809, %v3806, %v3808
      %v3842 = vsel %vm235, %v3810, 0.0
      %v3843 = vsel %vm236, %v3811, 0.0
      %v3844 = vsel %vm237, %v3812, 0.0
      %v3845 = vsel %vm238, %v3813, 0.0
      %v3846 = vsel %vm239, %v3814, 0.0
      %v3847 = vsel %vm240, %v3815, 0.0
      %v3848 = vsel %vm241, %v3816, 0.0
      %v3849 = vsel %vm242, %v3817, 0.0
      %v3850 = vsel %vm235, %v3818, 0.0
      %v3851 = vsel %vm236, %v3819, 0.0
      %v3852 = vsel %vm237, %v3820, 0.0
      %v3853 = vsel %vm238, %v3821, 0.0
      %v3854 = vsel %vm239, %v3822, 0.0
      %v3855 = vsel %vm240, %v3823, 0.0
      %v3856 = vsel %vm241, %v3824, 0.0
      %v3857 = vsel %vm242, %v3825, 0.0
      %s3858 = scalar_lea.vmem %s1, 36
      %v3859 = vld [vmem:[%s3858] sm:$0x3]
      %v3860 = vpack.c.bf16 %v3850, %v3842
      %v3861 = vpack.c.bf16 %v3851, %v3843
      %v3862 = vpack.c.bf16 %v3852, %v3844
      %v3863 = vpack.c.bf16 %v3853, %v3845
      %v3864 = vpack.c.bf16 %v3854, %v3846
      %v3865 = vpack.c.bf16 %v3855, %v3847
      %v3866 = vpack.c.bf16 %v3856, %v3848
      %v3867 = vpack.c.bf16 %v3857, %v3849
      %v3869 = vsel %vm283, %v3859, 0
      %3871 = vmatpush.bf16.msra.mxu0 0
      %3872 = vmatpush.bf16.msra.mxu0 0
      %3873 = vmatpush.bf16.msra.mxu0 0
      %3874 = vmatpush.bf16.msra.mxu0 0
      %3875 = vmatpush.bf16.msra.mxu0 0
      %3876 = vmatpush.bf16.msra.mxu0 0
      %3877 = vmatpush.bf16.msra.mxu0 0
      %3878 = vmatpush.bf16.msra.mxu0 %v3860
      %3879 = vmatmul.bf16.gmra.mxu0 %v3869
      %v3880 = vpop.f32.mrf.mxu0
      %v3881 = vadd.f32 0.0, %v3880
      %v3882 = vpop.f32.mrf.mxu0
      %3883 = vdwg.mxu0
      %3884 = vmatpush.bf16.msra.mxu0 0
      %3885 = vmatpush.bf16.msra.mxu0 0
      %3886 = vmatpush.bf16.msra.mxu0 0
      %3887 = vmatpush.bf16.msra.mxu0 0
      %3888 = vmatpush.bf16.msra.mxu0 0
      %3889 = vmatpush.bf16.msra.mxu0 0
      %3890 = vmatpush.bf16.msra.mxu0 0
      %3891 = vmatpush.bf16.msra.mxu0 %v3861
      %3892 = vmatmul.bf16.gmra.mxu0 %v3869
      %v3893 = vpop.f32.mrf.mxu0
      %v3894 = vadd.f32 0.0, %v3893
      %v3895 = vpop.f32.mrf.mxu0
      %3896 = vdwg.mxu0
      %3897 = vmatpush.bf16.msra.mxu0 0
      %3898 = vmatpush.bf16.msra.mxu0 0
      %3899 = vmatpush.bf16.msra.mxu0 0
      %3900 = vmatpush.bf16.msra.mxu0 0
      %3901 = vmatpush.bf16.msra.mxu0 0
      %3902 = vmatpush.bf16.msra.mxu0 0
      %3903 = vmatpush.bf16.msra.mxu0 0
      %3904 = vmatpush.bf16.msra.mxu0 %v3862
      %3905 = vmatmul.bf16.gmra.mxu0 %v3869
      %v3906 = vpop.f32.mrf.mxu0
      %v3907 = vadd.f32 0.0, %v3906
      %v3908 = vpop.f32.mrf.mxu0
      %3909 = vdwg.mxu0
      %3910 = vmatpush.bf16.msra.mxu0 0
      %3911 = vmatpush.bf16.msra.mxu0 0
      %3912 = vmatpush.bf16.msra.mxu0 0
      %3913 = vmatpush.bf16.msra.mxu0 0
      %3914 = vmatpush.bf16.msra.mxu0 0
      %3915 = vmatpush.bf16.msra.mxu0 0
      %3916 = vmatpush.bf16.msra.mxu0 0
      %3917 = vmatpush.bf16.msra.mxu0 %v3863
      %3918 = vmatmul.bf16.gmra.mxu0 %v3869
      %v3919 = vpop.f32.mrf.mxu0
      %v3920 = vadd.f32 0.0, %v3919
      %v3921 = vpop.f32.mrf.mxu0
      %3922 = vdwg.mxu0
      %3923 = vmatpush.bf16.msra.mxu0 0
      %3924 = vmatpush.bf16.msra.mxu0 0
      %3925 = vmatpush.bf16.msra.mxu0 0
      %3926 = vmatpush.bf16.msra.mxu0 0
      %3927 = vmatpush.bf16.msra.mxu0 0
      %3928 = vmatpush.bf16.msra.mxu0 0
      %3929 = vmatpush.bf16.msra.mxu0 0
      %3930 = vmatpush.bf16.msra.mxu0 %v3864
      %3931 = vmatmul.bf16.gmra.mxu0 %v3869
      %v3932 = vpop.f32.mrf.mxu0
      %v3933 = vadd.f32 0.0, %v3932
      %v3934 = vpop.f32.mrf.mxu0
      %3935 = vdwg.mxu0
      %3936 = vmatpush.bf16.msra.mxu0 0
      %3937 = vmatpush.bf16.msra.mxu0 0
      %3938 = vmatpush.bf16.msra.mxu0 0
      %3939 = vmatpush.bf16.msra.mxu0 0
      %3940 = vmatpush.bf16.msra.mxu0 0
      %3941 = vmatpush.bf16.msra.mxu0 0
      %3942 = vmatpush.bf16.msra.mxu0 0
      %3943 = vmatpush.bf16.msra.mxu0 %v3865
      %3944 = vmatmul.bf16.gmra.mxu0 %v3869
      %v3945 = vpop.f32.mrf.mxu0
      %v3946 = vadd.f32 0.0, %v3945
      %v3947 = vpop.f32.mrf.mxu0
      %3948 = vdwg.mxu0
      %3949 = vmatpush.bf16.msra.mxu0 0
      %3950 = vmatpush.bf16.msra.mxu0 0
      %3951 = vmatpush.bf16.msra.mxu0 0
      %3952 = vmatpush.bf16.msra.mxu0 0
      %3953 = vmatpush.bf16.msra.mxu0 0
      %3954 = vmatpush.bf16.msra.mxu0 0
      %3955 = vmatpush.bf16.msra.mxu0 0
      %3956 = vmatpush.bf16.msra.mxu0 %v3866
      %3957 = vmatmul.bf16.gmra.mxu0 %v3869
      %v3958 = vpop.f32.mrf.mxu0
      %v3959 = vadd.f32 0.0, %v3958
      %v3960 = vpop.f32.mrf.mxu0
      %3961 = vdwg.mxu0
      %3962 = vmatpush.bf16.msra.mxu0 0
      %3963 = vmatpush.bf16.msra.mxu0 0
      %3964 = vmatpush.bf16.msra.mxu0 0
      %3965 = vmatpush.bf16.msra.mxu0 0
      %3966 = vmatpush.bf16.msra.mxu0 0
      %3967 = vmatpush.bf16.msra.mxu0 0
      %3968 = vmatpush.bf16.msra.mxu0 0
      %3969 = vmatpush.bf16.msra.mxu0 %v3867
      %3970 = vmatmul.bf16.gmra.mxu0 %v3869
      %v3971 = vpop.f32.mrf.mxu0
      %v3972 = vadd.f32 0.0, %v3971
      %v3973 = vpop.f32.mrf.mxu0
      %3974 = vdwg.mxu0
      %v3975 = vadd.f32 %v3765, %v3881
      %v3976 = vadd.f32 %v3766, %v3894
      %v3977 = vadd.f32 %v3767, %v3907
      %v3978 = vadd.f32 %v3768, %v3920
      %v3979 = vadd.f32 %v3769, %v3933
      %v3980 = vadd.f32 %v3770, %v3946
      %v3981 = vadd.f32 %v3771, %v3959
      %v3982 = vadd.f32 %v3772, %v3972
      %3983 = vrot.lane.b32.xlu0 %v182, 28
      %v3984 = vpop.permute.xlu0 %3983
      %3985 = vrot.lane.b32.xlu0 %v183, 28
      %v3986 = vpop.permute.xlu0 %3985
      %3987 = vrot.lane.b32.xlu0 %v184, 28
      %v3988 = vpop.permute.xlu0 %3987
      %3989 = vrot.lane.b32.xlu0 %v185, 28
      %v3990 = vpop.permute.xlu0 %3989
      %3991 = vrot.lane.b32.xlu0 %v186, 28
      %v3992 = vpop.permute.xlu0 %3991
      %3993 = vrot.lane.b32.xlu0 %v187, 28
      %v3994 = vpop.permute.xlu0 %3993
      %3995 = vrot.lane.b32.xlu0 %v188, 28
      %v3996 = vpop.permute.xlu0 %3995
      %3997 = vrot.lane.b32.xlu0 %v189, 28
      %v3998 = vpop.permute.xlu0 %3997
      %3999 = vrot.lane.b32.xlu0 %v190, 28
      %v4000 = vpop.permute.xlu0 %3999
      %4001 = vrot.lane.b32.xlu0 %v192, 28
      %v4002 = vpop.permute.xlu0 %4001
      %4003 = vrot.lane.b32.xlu0 %v193, 28
      %v4004 = vpop.permute.xlu0 %4003
      %4005 = vrot.lane.b32.xlu0 %v194, 28
      %v4006 = vpop.permute.xlu0 %4005
      %4007 = vrot.lane.b32.xlu0 %v195, 28
      %v4008 = vpop.permute.xlu0 %4007
      %4009 = vrot.lane.b32.xlu0 %v196, 28
      %v4010 = vpop.permute.xlu0 %4009
      %4011 = vrot.lane.b32.xlu0 %v197, 28
      %v4012 = vpop.permute.xlu0 %4011
      %4013 = vrot.lane.b32.xlu0 %v198, 28
      %v4014 = vpop.permute.xlu0 %4013
      %4015 = vrot.lane.b32.xlu0 %v199, 28
      %v4016 = vpop.permute.xlu0 %4015
      %4017 = vrot.lane.b32.xlu0 %v200, 28
      %v4018 = vpop.permute.xlu0 %4017
      %vm4019 = vcmask 228352
      %v4020 = vsel %vm4019, %v3984, %v3986
      %v4021 = vsel %vm4019, %v3986, %v3988
      %v4022 = vsel %vm4019, %v3988, %v3990
      %v4023 = vsel %vm4019, %v3990, %v3992
      %v4024 = vsel %vm4019, %v3992, %v3994
      %v4025 = vsel %vm4019, %v3994, %v3996
      %v4026 = vsel %vm4019, %v3996, %v3998
      %v4027 = vsel %vm4019, %v3998, %v4000
      %v4028 = vsel %vm4019, %v4002, %v4004
      %v4029 = vsel %vm4019, %v4004, %v4006
      %v4030 = vsel %vm4019, %v4006, %v4008
      %v4031 = vsel %vm4019, %v4008, %v4010
      %v4032 = vsel %vm4019, %v4010, %v4012
      %v4033 = vsel %vm4019, %v4012, %v4014
      %v4034 = vsel %vm4019, %v4014, %v4016
      %v4035 = vsel %vm4019, %v4016, %v4018
      %v4052 = vsel %vm243, %v4020, 0.0
      %v4053 = vsel %vm244, %v4021, 0.0
      %v4054 = vsel %vm245, %v4022, 0.0
      %v4055 = vsel %vm246, %v4023, 0.0
      %v4056 = vsel %vm247, %v4024, 0.0
      %v4057 = vsel %vm248, %v4025, 0.0
      %v4058 = vsel %vm249, %v4026, 0.0
      %v4059 = vsel %vm250, %v4027, 0.0
      %v4060 = vsel %vm243, %v4028, 0.0
      %v4061 = vsel %vm244, %v4029, 0.0
      %v4062 = vsel %vm245, %v4030, 0.0
      %v4063 = vsel %vm246, %v4031, 0.0
      %v4064 = vsel %vm247, %v4032, 0.0
      %v4065 = vsel %vm248, %v4033, 0.0
      %v4066 = vsel %vm249, %v4034, 0.0
      %v4067 = vsel %vm250, %v4035, 0.0
      %s4068 = scalar_lea.vmem %s1, 38
      %v4069 = vld [vmem:[%s4068] sm:$0x3]
      %v4070 = vpack.c.bf16 %v4060, %v4052
      %v4071 = vpack.c.bf16 %v4061, %v4053
      %v4072 = vpack.c.bf16 %v4062, %v4054
      %v4073 = vpack.c.bf16 %v4063, %v4055
      %v4074 = vpack.c.bf16 %v4064, %v4056
      %v4075 = vpack.c.bf16 %v4065, %v4057
      %v4076 = vpack.c.bf16 %v4066, %v4058
      %v4077 = vpack.c.bf16 %v4067, %v4059
      %v4079 = vsel %vm283, %v4069, 0
      %4081 = vmatpush.bf16.msra.mxu0 0
      %4082 = vmatpush.bf16.msra.mxu0 0
      %4083 = vmatpush.bf16.msra.mxu0 0
      %4084 = vmatpush.bf16.msra.mxu0 0
      %4085 = vmatpush.bf16.msra.mxu0 0
      %4086 = vmatpush.bf16.msra.mxu0 0
      %4087 = vmatpush.bf16.msra.mxu0 0
      %4088 = vmatpush.bf16.msra.mxu0 %v4070
      %4089 = vmatmul.bf16.gmra.mxu0 %v4079
      %v4090 = vpop.f32.mrf.mxu0
      %v4091 = vadd.f32 0.0, %v4090
      %v4092 = vpop.f32.mrf.mxu0
      %4093 = vdwg.mxu0
      %4094 = vmatpush.bf16.msra.mxu0 0
      %4095 = vmatpush.bf16.msra.mxu0 0
      %4096 = vmatpush.bf16.msra.mxu0 0
      %4097 = vmatpush.bf16.msra.mxu0 0
      %4098 = vmatpush.bf16.msra.mxu0 0
      %4099 = vmatpush.bf16.msra.mxu0 0
      %4100 = vmatpush.bf16.msra.mxu0 0
      %4101 = vmatpush.bf16.msra.mxu0 %v4071
      %4102 = vmatmul.bf16.gmra.mxu0 %v4079
      %v4103 = vpop.f32.mrf.mxu0
      %v4104 = vadd.f32 0.0, %v4103
      %v4105 = vpop.f32.mrf.mxu0
      %4106 = vdwg.mxu0
      %4107 = vmatpush.bf16.msra.mxu0 0
      %4108 = vmatpush.bf16.msra.mxu0 0
      %4109 = vmatpush.bf16.msra.mxu0 0
      %4110 = vmatpush.bf16.msra.mxu0 0
      %4111 = vmatpush.bf16.msra.mxu0 0
      %4112 = vmatpush.bf16.msra.mxu0 0
      %4113 = vmatpush.bf16.msra.mxu0 0
      %4114 = vmatpush.bf16.msra.mxu0 %v4072
      %4115 = vmatmul.bf16.gmra.mxu0 %v4079
      %v4116 = vpop.f32.mrf.mxu0
      %v4117 = vadd.f32 0.0, %v4116
      %v4118 = vpop.f32.mrf.mxu0
      %4119 = vdwg.mxu0
      %4120 = vmatpush.bf16.msra.mxu0 0
      %4121 = vmatpush.bf16.msra.mxu0 0
      %4122 = vmatpush.bf16.msra.mxu0 0
      %4123 = vmatpush.bf16.msra.mxu0 0
      %4124 = vmatpush.bf16.msra.mxu0 0
      %4125 = vmatpush.bf16.msra.mxu0 0
      %4126 = vmatpush.bf16.msra.mxu0 0
      %4127 = vmatpush.bf16.msra.mxu0 %v4073
      %4128 = vmatmul.bf16.gmra.mxu0 %v4079
      %v4129 = vpop.f32.mrf.mxu0
      %v4130 = vadd.f32 0.0, %v4129
      %v4131 = vpop.f32.mrf.mxu0
      %4132 = vdwg.mxu0
      %4133 = vmatpush.bf16.msra.mxu0 0
      %4134 = vmatpush.bf16.msra.mxu0 0
      %4135 = vmatpush.bf16.msra.mxu0 0
      %4136 = vmatpush.bf16.msra.mxu0 0
      %4137 = vmatpush.bf16.msra.mxu0 0
      %4138 = vmatpush.bf16.msra.mxu0 0
      %4139 = vmatpush.bf16.msra.mxu0 0
      %4140 = vmatpush.bf16.msra.mxu0 %v4074
      %4141 = vmatmul.bf16.gmra.mxu0 %v4079
      %v4142 = vpop.f32.mrf.mxu0
      %v4143 = vadd.f32 0.0, %v4142
      %v4144 = vpop.f32.mrf.mxu0
      %4145 = vdwg.mxu0
      %4146 = vmatpush.bf16.msra.mxu0 0
      %4147 = vmatpush.bf16.msra.mxu0 0
      %4148 = vmatpush.bf16.msra.mxu0 0
      %4149 = vmatpush.bf16.msra.mxu0 0
      %4150 = vmatpush.bf16.msra.mxu0 0
      %4151 = vmatpush.bf16.msra.mxu0 0
      %4152 = vmatpush.bf16.msra.mxu0 0
      %4153 = vmatpush.bf16.msra.mxu0 %v4075
      %4154 = vmatmul.bf16.gmra.mxu0 %v4079
      %v4155 = vpop.f32.mrf.mxu0
      %v4156 = vadd.f32 0.0, %v4155
      %v4157 = vpop.f32.mrf.mxu0
      %4158 = vdwg.mxu0
      %4159 = vmatpush.bf16.msra.mxu0 0
      %4160 = vmatpush.bf16.msra.mxu0 0
      %4161 = vmatpush.bf16.msra.mxu0 0
      %4162 = vmatpush.bf16.msra.mxu0 0
      %4163 = vmatpush.bf16.msra.mxu0 0
      %4164 = vmatpush.bf16.msra.mxu0 0
      %4165 = vmatpush.bf16.msra.mxu0 0
      %4166 = vmatpush.bf16.msra.mxu0 %v4076
      %4167 = vmatmul.bf16.gmra.mxu0 %v4079
      %v4168 = vpop.f32.mrf.mxu0
      %v4169 = vadd.f32 0.0, %v4168
      %v4170 = vpop.f32.mrf.mxu0
      %4171 = vdwg.mxu0
      %4172 = vmatpush.bf16.msra.mxu0 0
      %4173 = vmatpush.bf16.msra.mxu0 0
      %4174 = vmatpush.bf16.msra.mxu0 0
      %4175 = vmatpush.bf16.msra.mxu0 0
      %4176 = vmatpush.bf16.msra.mxu0 0
      %4177 = vmatpush.bf16.msra.mxu0 0
      %4178 = vmatpush.bf16.msra.mxu0 0
      %4179 = vmatpush.bf16.msra.mxu0 %v4077
      %4180 = vmatmul.bf16.gmra.mxu0 %v4079
      %v4181 = vpop.f32.mrf.mxu0
      %v4182 = vadd.f32 0.0, %v4181
      %v4183 = vpop.f32.mrf.mxu0
      %4184 = vdwg.mxu0
      %v4185 = vadd.f32 %v3975, %v4091
      %v4186 = vadd.f32 %v3976, %v4104
      %v4187 = vadd.f32 %v3977, %v4117
      %v4188 = vadd.f32 %v3978, %v4130
      %v4189 = vadd.f32 %v3979, %v4143
      %v4190 = vadd.f32 %v3980, %v4156
      %v4191 = vadd.f32 %v3981, %v4169
      %v4192 = vadd.f32 %v3982, %v4182
      %v4193 = vsel %vm219, %v183, 0.0
      %v4194 = vsel %vm220, %v184, 0.0
      %v4195 = vsel %vm221, %v185, 0.0
      %v4196 = vsel %vm222, %v186, 0.0
      %v4197 = vsel %vm223, %v187, 0.0
      %v4198 = vsel %vm224, %v188, 0.0
      %v4199 = vsel %vm225, %v189, 0.0
      %v4200 = vsel %vm226, %v190, 0.0
      %v4201 = vsel %vm219, %v193, 0.0
      %v4202 = vsel %vm220, %v194, 0.0
      %v4203 = vsel %vm221, %v195, 0.0
      %v4204 = vsel %vm222, %v196, 0.0
      %v4205 = vsel %vm223, %v197, 0.0
      %v4206 = vsel %vm224, %v198, 0.0
      %v4207 = vsel %vm225, %v199, 0.0
      %v4208 = vsel %vm226, %v200, 0.0
      %s4209 = scalar_lea.vmem %s1, 40
      %v4210 = vld [vmem:[%s4209] sm:$0x3]
      %v4211 = vpack.c.bf16 %v4201, %v4193
      %v4212 = vpack.c.bf16 %v4202, %v4194
      %v4213 = vpack.c.bf16 %v4203, %v4195
      %v4214 = vpack.c.bf16 %v4204, %v4196
      %v4215 = vpack.c.bf16 %v4205, %v4197
      %v4216 = vpack.c.bf16 %v4206, %v4198
      %v4217 = vpack.c.bf16 %v4207, %v4199
      %v4218 = vpack.c.bf16 %v4208, %v4200
      %v4220 = vsel %vm283, %v4210, 0
      %4222 = vmatpush.bf16.msra.mxu0 0
      %4223 = vmatpush.bf16.msra.mxu0 0
      %4224 = vmatpush.bf16.msra.mxu0 0
      %4225 = vmatpush.bf16.msra.mxu0 0
      %4226 = vmatpush.bf16.msra.mxu0 0
      %4227 = vmatpush.bf16.msra.mxu0 0
      %4228 = vmatpush.bf16.msra.mxu0 0
      %4229 = vmatpush.bf16.msra.mxu0 %v4211
      %4230 = vmatmul.bf16.gmra.mxu0 %v4220
      %v4231 = vpop.f32.mrf.mxu0
      %v4232 = vadd.f32 0.0, %v4231
      %v4233 = vpop.f32.mrf.mxu0
      %4234 = vdwg.mxu0
      %4235 = vmatpush.bf16.msra.mxu0 0
      %4236 = vmatpush.bf16.msra.mxu0 0
      %4237 = vmatpush.bf16.msra.mxu0 0
      %4238 = vmatpush.bf16.msra.mxu0 0
      %4239 = vmatpush.bf16.msra.mxu0 0
      %4240 = vmatpush.bf16.msra.mxu0 0
      %4241 = vmatpush.bf16.msra.mxu0 0
      %4242 = vmatpush.bf16.msra.mxu0 %v4212
      %4243 = vmatmul.bf16.gmra.mxu0 %v4220
      %v4244 = vpop.f32.mrf.mxu0
      %v4245 = vadd.f32 0.0, %v4244
      %v4246 = vpop.f32.mrf.mxu0
      %4247 = vdwg.mxu0
      %4248 = vmatpush.bf16.msra.mxu0 0
      %4249 = vmatpush.bf16.msra.mxu0 0
      %4250 = vmatpush.bf16.msra.mxu0 0
      %4251 = vmatpush.bf16.msra.mxu0 0
      %4252 = vmatpush.bf16.msra.mxu0 0
      %4253 = vmatpush.bf16.msra.mxu0 0
      %4254 = vmatpush.bf16.msra.mxu0 0
      %4255 = vmatpush.bf16.msra.mxu0 %v4213
      %4256 = vmatmul.bf16.gmra.mxu0 %v4220
      %v4257 = vpop.f32.mrf.mxu0
      %v4258 = vadd.f32 0.0, %v4257
      %v4259 = vpop.f32.mrf.mxu0
      %4260 = vdwg.mxu0
      %4261 = vmatpush.bf16.msra.mxu0 0
      %4262 = vmatpush.bf16.msra.mxu0 0
      %4263 = vmatpush.bf16.msra.mxu0 0
      %4264 = vmatpush.bf16.msra.mxu0 0
      %4265 = vmatpush.bf16.msra.mxu0 0
      %4266 = vmatpush.bf16.msra.mxu0 0
      %4267 = vmatpush.bf16.msra.mxu0 0
      %4268 = vmatpush.bf16.msra.mxu0 %v4214
      %4269 = vmatmul.bf16.gmra.mxu0 %v4220
      %v4270 = vpop.f32.mrf.mxu0
      %v4271 = vadd.f32 0.0, %v4270
      %v4272 = vpop.f32.mrf.mxu0
      %4273 = vdwg.mxu0
      %4274 = vmatpush.bf16.msra.mxu0 0
      %4275 = vmatpush.bf16.msra.mxu0 0
      %4276 = vmatpush.bf16.msra.mxu0 0
      %4277 = vmatpush.bf16.msra.mxu0 0
      %4278 = vmatpush.bf16.msra.mxu0 0
      %4279 = vmatpush.bf16.msra.mxu0 0
      %4280 = vmatpush.bf16.msra.mxu0 0
      %4281 = vmatpush.bf16.msra.mxu0 %v4215
      %4282 = vmatmul.bf16.gmra.mxu0 %v4220
      %v4283 = vpop.f32.mrf.mxu0
      %v4284 = vadd.f32 0.0, %v4283
      %v4285 = vpop.f32.mrf.mxu0
      %4286 = vdwg.mxu0
      %4287 = vmatpush.bf16.msra.mxu0 0
      %4288 = vmatpush.bf16.msra.mxu0 0
      %4289 = vmatpush.bf16.msra.mxu0 0
      %4290 = vmatpush.bf16.msra.mxu0 0
      %4291 = vmatpush.bf16.msra.mxu0 0
      %4292 = vmatpush.bf16.msra.mxu0 0
      %4293 = vmatpush.bf16.msra.mxu0 0
      %4294 = vmatpush.bf16.msra.mxu0 %v4216
      %4295 = vmatmul.bf16.gmra.mxu0 %v4220
      %v4296 = vpop.f32.mrf.mxu0
      %v4297 = vadd.f32 0.0, %v4296
      %v4298 = vpop.f32.mrf.mxu0
      %4299 = vdwg.mxu0
      %4300 = vmatpush.bf16.msra.mxu0 0
      %4301 = vmatpush.bf16.msra.mxu0 0
      %4302 = vmatpush.bf16.msra.mxu0 0
      %4303 = vmatpush.bf16.msra.mxu0 0
      %4304 = vmatpush.bf16.msra.mxu0 0
      %4305 = vmatpush.bf16.msra.mxu0 0
      %4306 = vmatpush.bf16.msra.mxu0 0
      %4307 = vmatpush.bf16.msra.mxu0 %v4217
      %4308 = vmatmul.bf16.gmra.mxu0 %v4220
      %v4309 = vpop.f32.mrf.mxu0
      %v4310 = vadd.f32 0.0, %v4309
      %v4311 = vpop.f32.mrf.mxu0
      %4312 = vdwg.mxu0
      %4313 = vmatpush.bf16.msra.mxu0 0
      %4314 = vmatpush.bf16.msra.mxu0 0
      %4315 = vmatpush.bf16.msra.mxu0 0
      %4316 = vmatpush.bf16.msra.mxu0 0
      %4317 = vmatpush.bf16.msra.mxu0 0
      %4318 = vmatpush.bf16.msra.mxu0 0
      %4319 = vmatpush.bf16.msra.mxu0 0
      %4320 = vmatpush.bf16.msra.mxu0 %v4218
      %4321 = vmatmul.bf16.gmra.mxu0 %v4220
      %v4322 = vpop.f32.mrf.mxu0
      %v4323 = vadd.f32 0.0, %v4322
      %v4324 = vpop.f32.mrf.mxu0
      %4325 = vdwg.mxu0
      %v4326 = vadd.f32 %v4185, %v4232
      %v4327 = vadd.f32 %v4186, %v4245
      %v4328 = vadd.f32 %v4187, %v4258
      %v4329 = vadd.f32 %v4188, %v4271
      %v4330 = vadd.f32 %v4189, %v4284
      %v4331 = vadd.f32 %v4190, %v4297
      %v4332 = vadd.f32 %v4191, %v4310
      %v4333 = vadd.f32 %v4192, %v4323
      %4336 = vrot.lane.b32.xlu0 %v191, 127
      %v4337 = vpop.permute.xlu0 %4336
      %4338 = vrot.lane.b32.xlu0 %v201, 127
      %v4339 = vpop.permute.xlu0 %4338
      %v4340 = vsel %vm453, %v434, %v4337
      %v4341 = vsel %vm453, %v452, %v4339
      %v4344 = vsel %vm227, %v455, 0.0
      %v4345 = vsel %vm228, %v456, 0.0
      %v4346 = vsel %vm229, %v457, 0.0
      %v4347 = vsel %vm230, %v458, 0.0
      %v4348 = vsel %vm231, %v459, 0.0
      %v4349 = vsel %vm232, %v460, 0.0
      %v4350 = vsel %vm233, %v461, 0.0
      %v4351 = vsel %vm234, %v4340, 0.0
      %v4352 = vsel %vm227, %v463, 0.0
      %v4353 = vsel %vm228, %v464, 0.0
      %v4354 = vsel %vm229, %v465, 0.0
      %v4355 = vsel %vm230, %v466, 0.0
      %v4356 = vsel %vm231, %v467, 0.0
      %v4357 = vsel %vm232, %v468, 0.0
      %v4358 = vsel %vm233, %v469, 0.0
      %v4359 = vsel %vm234, %v4341, 0.0
      %s4360 = scalar_lea.vmem %s1, 42
      %v4361 = vld [vmem:[%s4360] sm:$0x3]
      %v4362 = vpack.c.bf16 %v4352, %v4344
      %v4363 = vpack.c.bf16 %v4353, %v4345
      %v4364 = vpack.c.bf16 %v4354, %v4346
      %v4365 = vpack.c.bf16 %v4355, %v4347
      %v4366 = vpack.c.bf16 %v4356, %v4348
      %v4367 = vpack.c.bf16 %v4357, %v4349
      %v4368 = vpack.c.bf16 %v4358, %v4350
      %v4369 = vpack.c.bf16 %v4359, %v4351
      %v4371 = vsel %vm283, %v4361, 0
      %4373 = vmatpush.bf16.msra.mxu0 0
      %4374 = vmatpush.bf16.msra.mxu0 0
      %4375 = vmatpush.bf16.msra.mxu0 0
      %4376 = vmatpush.bf16.msra.mxu0 0
      %4377 = vmatpush.bf16.msra.mxu0 0
      %4378 = vmatpush.bf16.msra.mxu0 0
      %4379 = vmatpush.bf16.msra.mxu0 0
      %4380 = vmatpush.bf16.msra.mxu0 %v4362
      %4381 = vmatmul.bf16.gmra.mxu0 %v4371
      %v4382 = vpop.f32.mrf.mxu0
      %v4383 = vadd.f32 0.0, %v4382
      %v4384 = vpop.f32.mrf.mxu0
      %4385 = vdwg.mxu0
      %4386 = vmatpush.bf16.msra.mxu0 0
      %4387 = vmatpush.bf16.msra.mxu0 0
      %4388 = vmatpush.bf16.msra.mxu0 0
      %4389 = vmatpush.bf16.msra.mxu0 0
      %4390 = vmatpush.bf16.msra.mxu0 0
      %4391 = vmatpush.bf16.msra.mxu0 0
      %4392 = vmatpush.bf16.msra.mxu0 0
      %4393 = vmatpush.bf16.msra.mxu0 %v4363
      %4394 = vmatmul.bf16.gmra.mxu0 %v4371
      %v4395 = vpop.f32.mrf.mxu0
      %v4396 = vadd.f32 0.0, %v4395
      %v4397 = vpop.f32.mrf.mxu0
      %4398 = vdwg.mxu0
      %4399 = vmatpush.bf16.msra.mxu0 0
      %4400 = vmatpush.bf16.msra.mxu0 0
      %4401 = vmatpush.bf16.msra.mxu0 0
      %4402 = vmatpush.bf16.msra.mxu0 0
      %4403 = vmatpush.bf16.msra.mxu0 0
      %4404 = vmatpush.bf16.msra.mxu0 0
      %4405 = vmatpush.bf16.msra.mxu0 0
      %4406 = vmatpush.bf16.msra.mxu0 %v4364
      %4407 = vmatmul.bf16.gmra.mxu0 %v4371
      %v4408 = vpop.f32.mrf.mxu0
      %v4409 = vadd.f32 0.0, %v4408
      %v4410 = vpop.f32.mrf.mxu0
      %4411 = vdwg.mxu0
      %4412 = vmatpush.bf16.msra.mxu0 0
      %4413 = vmatpush.bf16.msra.mxu0 0
      %4414 = vmatpush.bf16.msra.mxu0 0
      %4415 = vmatpush.bf16.msra.mxu0 0
      %4416 = vmatpush.bf16.msra.mxu0 0
      %4417 = vmatpush.bf16.msra.mxu0 0
      %4418 = vmatpush.bf16.msra.mxu0 0
      %4419 = vmatpush.bf16.msra.mxu0 %v4365
      %4420 = vmatmul.bf16.gmra.mxu0 %v4371
      %v4421 = vpop.f32.mrf.mxu0
      %v4422 = vadd.f32 0.0, %v4421
      %v4423 = vpop.f32.mrf.mxu0
      %4424 = vdwg.mxu0
      %4425 = vmatpush.bf16.msra.mxu0 0
      %4426 = vmatpush.bf16.msra.mxu0 0
      %4427 = vmatpush.bf16.msra.mxu0 0
      %4428 = vmatpush.bf16.msra.mxu0 0
      %4429 = vmatpush.bf16.msra.mxu0 0
      %4430 = vmatpush.bf16.msra.mxu0 0
      %4431 = vmatpush.bf16.msra.mxu0 0
      %4432 = vmatpush.bf16.msra.mxu0 %v4366
      %4433 = vmatmul.bf16.gmra.mxu0 %v4371
      %v4434 = vpop.f32.mrf.mxu0
      %v4435 = vadd.f32 0.0, %v4434
      %v4436 = vpop.f32.mrf.mxu0
      %4437 = vdwg.mxu0
      %4438 = vmatpush.bf16.msra.mxu0 0
      %4439 = vmatpush.bf16.msra.mxu0 0
      %4440 = vmatpush.bf16.msra.mxu0 0
      %4441 = vmatpush.bf16.msra.mxu0 0
      %4442 = vmatpush.bf16.msra.mxu0 0
      %4443 = vmatpush.bf16.msra.mxu0 0
      %4444 = vmatpush.bf16.msra.mxu0 0
      %4445 = vmatpush.bf16.msra.mxu0 %v4367
      %4446 = vmatmul.bf16.gmra.mxu0 %v4371
      %v4447 = vpop.f32.mrf.mxu0
      %v4448 = vadd.f32 0.0, %v4447
      %v4449 = vpop.f32.mrf.mxu0
      %4450 = vdwg.mxu0
      %4451 = vmatpush.bf16.msra.mxu0 0
      %4452 = vmatpush.bf16.msra.mxu0 0
      %4453 = vmatpush.bf16.msra.mxu0 0
      %4454 = vmatpush.bf16.msra.mxu0 0
      %4455 = vmatpush.bf16.msra.mxu0 0
      %4456 = vmatpush.bf16.msra.mxu0 0
      %4457 = vmatpush.bf16.msra.mxu0 0
      %4458 = vmatpush.bf16.msra.mxu0 %v4368
      %4459 = vmatmul.bf16.gmra.mxu0 %v4371
      %v4460 = vpop.f32.mrf.mxu0
      %v4461 = vadd.f32 0.0, %v4460
      %v4462 = vpop.f32.mrf.mxu0
      %4463 = vdwg.mxu0
      %4464 = vmatpush.bf16.msra.mxu0 0
      %4465 = vmatpush.bf16.msra.mxu0 0
      %4466 = vmatpush.bf16.msra.mxu0 0
      %4467 = vmatpush.bf16.msra.mxu0 0
      %4468 = vmatpush.bf16.msra.mxu0 0
      %4469 = vmatpush.bf16.msra.mxu0 0
      %4470 = vmatpush.bf16.msra.mxu0 0
      %4471 = vmatpush.bf16.msra.mxu0 %v4369
      %4472 = vmatmul.bf16.gmra.mxu0 %v4371
      %v4473 = vpop.f32.mrf.mxu0
      %v4474 = vadd.f32 0.0, %v4473
      %v4475 = vpop.f32.mrf.mxu0
      %4476 = vdwg.mxu0
      %v4477 = vadd.f32 %v4326, %v4383
      %v4478 = vadd.f32 %v4327, %v4396
      %v4479 = vadd.f32 %v4328, %v4409
      %v4480 = vadd.f32 %v4329, %v4422
      %v4481 = vadd.f32 %v4330, %v4435
      %v4482 = vadd.f32 %v4331, %v4448
      %v4483 = vadd.f32 %v4332, %v4461
      %v4484 = vadd.f32 %v4333, %v4474
      %s4485 = scalar_lea.vmem %s1, 44
      %v4486 = vld [vmem:[%s4485] sm:$0x3]
      %v4487 = vpack.c.bf16 %v201, %v191
      %4489 = vrot.lane.b32.xlu0 %v4487, 126
      %v4490 = vpop.permute.xlu0 %4489
      %v4491 = vsel %vm665, %v664, %v4490
      %v4494 = vsel %vm283, %v4486, 0
      %4496 = vmatpush.bf16.msra.mxu0 0
      %4497 = vmatpush.bf16.msra.mxu0 0
      %4498 = vmatpush.bf16.msra.mxu0 0
      %4499 = vmatpush.bf16.msra.mxu0 0
      %4500 = vmatpush.bf16.msra.mxu0 0
      %4501 = vmatpush.bf16.msra.mxu0 0
      %4502 = vmatpush.bf16.msra.mxu0 0
      %4503 = vmatpush.bf16.msra.mxu0 %v667
      %4504 = vmatmul.bf16.gmra.mxu0 %v4494
      %v4505 = vpop.f32.mrf.mxu0
      %v4506 = vadd.f32 0.0, %v4505
      %v4507 = vpop.f32.mrf.mxu0
      %4508 = vdwg.mxu0
      %4509 = vmatpush.bf16.msra.mxu0 0
      %4510 = vmatpush.bf16.msra.mxu0 0
      %4511 = vmatpush.bf16.msra.mxu0 0
      %4512 = vmatpush.bf16.msra.mxu0 0
      %4513 = vmatpush.bf16.msra.mxu0 0
      %4514 = vmatpush.bf16.msra.mxu0 0
      %4515 = vmatpush.bf16.msra.mxu0 0
      %4516 = vmatpush.bf16.msra.mxu0 %v668
      %4517 = vmatmul.bf16.gmra.mxu0 %v4494
      %v4518 = vpop.f32.mrf.mxu0
      %v4519 = vadd.f32 0.0, %v4518
      %v4520 = vpop.f32.mrf.mxu0
      %4521 = vdwg.mxu0
      %4522 = vmatpush.bf16.msra.mxu0 0
      %4523 = vmatpush.bf16.msra.mxu0 0
      %4524 = vmatpush.bf16.msra.mxu0 0
      %4525 = vmatpush.bf16.msra.mxu0 0
      %4526 = vmatpush.bf16.msra.mxu0 0
      %4527 = vmatpush.bf16.msra.mxu0 0
      %4528 = vmatpush.bf16.msra.mxu0 0
      %4529 = vmatpush.bf16.msra.mxu0 %v669
      %4530 = vmatmul.bf16.gmra.mxu0 %v4494
      %v4531 = vpop.f32.mrf.mxu0
      %v4532 = vadd.f32 0.0, %v4531
      %v4533 = vpop.f32.mrf.mxu0
      %4534 = vdwg.mxu0
      %4535 = vmatpush.bf16.msra.mxu0 0
      %4536 = vmatpush.bf16.msra.mxu0 0
      %4537 = vmatpush.bf16.msra.mxu0 0
      %4538 = vmatpush.bf16.msra.mxu0 0
      %4539 = vmatpush.bf16.msra.mxu0 0
      %4540 = vmatpush.bf16.msra.mxu0 0
      %4541 = vmatpush.bf16.msra.mxu0 0
      %4542 = vmatpush.bf16.msra.mxu0 %v670
      %4543 = vmatmul.bf16.gmra.mxu0 %v4494
      %v4544 = vpop.f32.mrf.mxu0
      %v4545 = vadd.f32 0.0, %v4544
      %v4546 = vpop.f32.mrf.mxu0
      %4547 = vdwg.mxu0
      %4548 = vmatpush.bf16.msra.mxu0 0
      %4549 = vmatpush.bf16.msra.mxu0 0
      %4550 = vmatpush.bf16.msra.mxu0 0
      %4551 = vmatpush.bf16.msra.mxu0 0
      %4552 = vmatpush.bf16.msra.mxu0 0
      %4553 = vmatpush.bf16.msra.mxu0 0
      %4554 = vmatpush.bf16.msra.mxu0 0
      %4555 = vmatpush.bf16.msra.mxu0 %v671
      %4556 = vmatmul.bf16.gmra.mxu0 %v4494
      %v4557 = vpop.f32.mrf.mxu0
      %v4558 = vadd.f32 0.0, %v4557
      %v4559 = vpop.f32.mrf.mxu0
      %4560 = vdwg.mxu0
      %4561 = vmatpush.bf16.msra.mxu0 0
      %4562 = vmatpush.bf16.msra.mxu0 0
      %4563 = vmatpush.bf16.msra.mxu0 0
      %4564 = vmatpush.bf16.msra.mxu0 0
      %4565 = vmatpush.bf16.msra.mxu0 0
      %4566 = vmatpush.bf16.msra.mxu0 0
      %4567 = vmatpush.bf16.msra.mxu0 0
      %4568 = vmatpush.bf16.msra.mxu0 %v672
      %4569 = vmatmul.bf16.gmra.mxu0 %v4494
      %v4570 = vpop.f32.mrf.mxu0
      %v4571 = vadd.f32 0.0, %v4570
      %v4572 = vpop.f32.mrf.mxu0
      %4573 = vdwg.mxu0
      %4574 = vmatpush.bf16.msra.mxu0 0
      %4575 = vmatpush.bf16.msra.mxu0 0
      %4576 = vmatpush.bf16.msra.mxu0 0
      %4577 = vmatpush.bf16.msra.mxu0 0
      %4578 = vmatpush.bf16.msra.mxu0 0
      %4579 = vmatpush.bf16.msra.mxu0 0
      %4580 = vmatpush.bf16.msra.mxu0 0
      %4581 = vmatpush.bf16.msra.mxu0 %v673
      %4582 = vmatmul.bf16.gmra.mxu0 %v4494
      %v4583 = vpop.f32.mrf.mxu0
      %v4584 = vadd.f32 0.0, %v4583
      %v4585 = vpop.f32.mrf.mxu0
      %4586 = vdwg.mxu0
      %4587 = vmatpush.bf16.msra.mxu0 0
      %4588 = vmatpush.bf16.msra.mxu0 0
      %4589 = vmatpush.bf16.msra.mxu0 0
      %4590 = vmatpush.bf16.msra.mxu0 0
      %4591 = vmatpush.bf16.msra.mxu0 0
      %4592 = vmatpush.bf16.msra.mxu0 0
      %4593 = vmatpush.bf16.msra.mxu0 0
      %4594 = vmatpush.bf16.msra.mxu0 %v4491
      %4595 = vmatmul.bf16.gmra.mxu0 %v4494
      %v4596 = vpop.f32.mrf.mxu0
      %v4597 = vadd.f32 0.0, %v4596
      %v4598 = vpop.f32.mrf.mxu0
      %4599 = vdwg.mxu0
      %v4600 = vadd.f32 %v4477, %v4506
      %v4601 = vadd.f32 %v4478, %v4519
      %v4602 = vadd.f32 %v4479, %v4532
      %v4603 = vadd.f32 %v4480, %v4545
      %v4604 = vadd.f32 %v4481, %v4558
      %v4605 = vadd.f32 %v4482, %v4571
      %v4606 = vadd.f32 %v4483, %v4584
      %v4607 = vadd.f32 %v4484, %v4597
      %4608 = vrot.lane.b32.xlu0 %v191, 125
      %v4609 = vpop.permute.xlu0 %4608
      %4610 = vrot.lane.b32.xlu0 %v201, 125
      %v4611 = vpop.permute.xlu0 %4610
      %v4612 = vsel %vm833, %v814, %v4609
      %v4613 = vsel %vm833, %v832, %v4611
      %v4616 = vsel %vm235, %v835, 0.0
      %v4617 = vsel %vm236, %v836, 0.0
      %v4618 = vsel %vm237, %v837, 0.0
      %v4619 = vsel %vm238, %v838, 0.0
      %v4620 = vsel %vm239, %v839, 0.0
      %v4621 = vsel %vm240, %v840, 0.0
      %v4622 = vsel %vm241, %v841, 0.0
      %v4623 = vsel %vm242, %v4612, 0.0
      %v4624 = vsel %vm235, %v843, 0.0
      %v4625 = vsel %vm236, %v844, 0.0
      %v4626 = vsel %vm237, %v845, 0.0
      %v4627 = vsel %vm238, %v846, 0.0
      %v4628 = vsel %vm239, %v847, 0.0
      %v4629 = vsel %vm240, %v848, 0.0
      %v4630 = vsel %vm241, %v849, 0.0
      %v4631 = vsel %vm242, %v4613, 0.0
      %s4632 = scalar_lea.vmem %s1, 46
      %v4633 = vld [vmem:[%s4632] sm:$0x3]
      %v4634 = vpack.c.bf16 %v4624, %v4616
      %v4635 = vpack.c.bf16 %v4625, %v4617
      %v4636 = vpack.c.bf16 %v4626, %v4618
      %v4637 = vpack.c.bf16 %v4627, %v4619
      %v4638 = vpack.c.bf16 %v4628, %v4620
      %v4639 = vpack.c.bf16 %v4629, %v4621
      %v4640 = vpack.c.bf16 %v4630, %v4622
      %v4641 = vpack.c.bf16 %v4631, %v4623
      %v4643 = vsel %vm283, %v4633, 0
      %4645 = vmatpush.bf16.msra.mxu0 0
      %4646 = vmatpush.bf16.msra.mxu0 0
      %4647 = vmatpush.bf16.msra.mxu0 0
      %4648 = vmatpush.bf16.msra.mxu0 0
      %4649 = vmatpush.bf16.msra.mxu0 0
      %4650 = vmatpush.bf16.msra.mxu0 0
      %4651 = vmatpush.bf16.msra.mxu0 0
      %4652 = vmatpush.bf16.msra.mxu0 %v4634
      %4653 = vmatmul.bf16.gmra.mxu0 %v4643
      %v4654 = vpop.f32.mrf.mxu0
      %v4655 = vadd.f32 0.0, %v4654
      %v4656 = vpop.f32.mrf.mxu0
      %4657 = vdwg.mxu0
      %4658 = vmatpush.bf16.msra.mxu0 0
      %4659 = vmatpush.bf16.msra.mxu0 0
      %4660 = vmatpush.bf16.msra.mxu0 0
      %4661 = vmatpush.bf16.msra.mxu0 0
      %4662 = vmatpush.bf16.msra.mxu0 0
      %4663 = vmatpush.bf16.msra.mxu0 0
      %4664 = vmatpush.bf16.msra.mxu0 0
      %4665 = vmatpush.bf16.msra.mxu0 %v4635
      %4666 = vmatmul.bf16.gmra.mxu0 %v4643
      %v4667 = vpop.f32.mrf.mxu0
      %v4668 = vadd.f32 0.0, %v4667
      %v4669 = vpop.f32.mrf.mxu0
      %4670 = vdwg.mxu0
      %4671 = vmatpush.bf16.msra.mxu0 0
      %4672 = vmatpush.bf16.msra.mxu0 0
      %4673 = vmatpush.bf16.msra.mxu0 0
      %4674 = vmatpush.bf16.msra.mxu0 0
      %4675 = vmatpush.bf16.msra.mxu0 0
      %4676 = vmatpush.bf16.msra.mxu0 0
      %4677 = vmatpush.bf16.msra.mxu0 0
      %4678 = vmatpush.bf16.msra.mxu0 %v4636
      %4679 = vmatmul.bf16.gmra.mxu0 %v4643
      %v4680 = vpop.f32.mrf.mxu0
      %v4681 = vadd.f32 0.0, %v4680
      %v4682 = vpop.f32.mrf.mxu0
      %4683 = vdwg.mxu0
      %4684 = vmatpush.bf16.msra.mxu0 0
      %4685 = vmatpush.bf16.msra.mxu0 0
      %4686 = vmatpush.bf16.msra.mxu0 0
      %4687 = vmatpush.bf16.msra.mxu0 0
      %4688 = vmatpush.bf16.msra.mxu0 0
      %4689 = vmatpush.bf16.msra.mxu0 0
      %4690 = vmatpush.bf16.msra.mxu0 0
      %4691 = vmatpush.bf16.msra.mxu0 %v4637
      %4692 = vmatmul.bf16.gmra.mxu0 %v4643
      %v4693 = vpop.f32.mrf.mxu0
      %v4694 = vadd.f32 0.0, %v4693
      %v4695 = vpop.f32.mrf.mxu0
      %4696 = vdwg.mxu0
      %4697 = vmatpush.bf16.msra.mxu0 0
      %4698 = vmatpush.bf16.msra.mxu0 0
      %4699 = vmatpush.bf16.msra.mxu0 0
      %4700 = vmatpush.bf16.msra.mxu0 0
      %4701 = vmatpush.bf16.msra.mxu0 0
      %4702 = vmatpush.bf16.msra.mxu0 0
      %4703 = vmatpush.bf16.msra.mxu0 0
      %4704 = vmatpush.bf16.msra.mxu0 %v4638
      %4705 = vmatmul.bf16.gmra.mxu0 %v4643
      %v4706 = vpop.f32.mrf.mxu0
      %v4707 = vadd.f32 0.0, %v4706
      %v4708 = vpop.f32.mrf.mxu0
      %4709 = vdwg.mxu0
      %4710 = vmatpush.bf16.msra.mxu0 0
      %4711 = vmatpush.bf16.msra.mxu0 0
      %4712 = vmatpush.bf16.msra.mxu0 0
      %4713 = vmatpush.bf16.msra.mxu0 0
      %4714 = vmatpush.bf16.msra.mxu0 0
      %4715 = vmatpush.bf16.msra.mxu0 0
      %4716 = vmatpush.bf16.msra.mxu0 0
      %4717 = vmatpush.bf16.msra.mxu0 %v4639
      %4718 = vmatmul.bf16.gmra.mxu0 %v4643
      %v4719 = vpop.f32.mrf.mxu0
      %v4720 = vadd.f32 0.0, %v4719
      %v4721 = vpop.f32.mrf.mxu0
      %4722 = vdwg.mxu0
      %4723 = vmatpush.bf16.msra.mxu0 0
      %4724 = vmatpush.bf16.msra.mxu0 0
      %4725 = vmatpush.bf16.msra.mxu0 0
      %4726 = vmatpush.bf16.msra.mxu0 0
      %4727 = vmatpush.bf16.msra.mxu0 0
      %4728 = vmatpush.bf16.msra.mxu0 0
      %4729 = vmatpush.bf16.msra.mxu0 0
      %4730 = vmatpush.bf16.msra.mxu0 %v4640
      %4731 = vmatmul.bf16.gmra.mxu0 %v4643
      %v4732 = vpop.f32.mrf.mxu0
      %v4733 = vadd.f32 0.0, %v4732
      %v4734 = vpop.f32.mrf.mxu0
      %4735 = vdwg.mxu0
      %4736 = vmatpush.bf16.msra.mxu0 0
      %4737 = vmatpush.bf16.msra.mxu0 0
      %4738 = vmatpush.bf16.msra.mxu0 0
      %4739 = vmatpush.bf16.msra.mxu0 0
      %4740 = vmatpush.bf16.msra.mxu0 0
      %4741 = vmatpush.bf16.msra.mxu0 0
      %4742 = vmatpush.bf16.msra.mxu0 0
      %4743 = vmatpush.bf16.msra.mxu0 %v4641
      %4744 = vmatmul.bf16.gmra.mxu0 %v4643
      %v4745 = vpop.f32.mrf.mxu0
      %v4746 = vadd.f32 0.0, %v4745
      %v4747 = vpop.f32.mrf.mxu0
      %4748 = vdwg.mxu0
      %v4749 = vadd.f32 %v4600, %v4655
      %v4750 = vadd.f32 %v4601, %v4668
      %v4751 = vadd.f32 %v4602, %v4681
      %v4752 = vadd.f32 %v4603, %v4694
      %v4753 = vadd.f32 %v4604, %v4707
      %v4754 = vadd.f32 %v4605, %v4720
      %v4755 = vadd.f32 %v4606, %v4733
      %v4756 = vadd.f32 %v4607, %v4746
      %4757 = vrot.lane.b32.xlu0 %v191, 124
      %v4758 = vpop.permute.xlu0 %4757
      %4759 = vrot.lane.b32.xlu0 %v201, 124
      %v4760 = vpop.permute.xlu0 %4759
      %v4761 = vsel %vm1043, %v1024, %v4758
      %v4762 = vsel %vm1043, %v1042, %v4760
      %v4765 = vsel %vm243, %v1045, 0.0
      %v4766 = vsel %vm244, %v1046, 0.0
      %v4767 = vsel %vm245, %v1047, 0.0
      %v4768 = vsel %vm246, %v1048, 0.0
      %v4769 = vsel %vm247, %v1049, 0.0
      %v4770 = vsel %vm248, %v1050, 0.0
      %v4771 = vsel %vm249, %v1051, 0.0
      %v4772 = vsel %vm250, %v4761, 0.0
      %v4773 = vsel %vm243, %v1053, 0.0
      %v4774 = vsel %vm244, %v1054, 0.0
      %v4775 = vsel %vm245, %v1055, 0.0
      %v4776 = vsel %vm246, %v1056, 0.0
      %v4777 = vsel %vm247, %v1057, 0.0
      %v4778 = vsel %vm248, %v1058, 0.0
      %v4779 = vsel %vm249, %v1059, 0.0
      %v4780 = vsel %vm250, %v4762, 0.0
      %s4781 = scalar_lea.vmem %s1, 48
      %v4782 = vld [vmem:[%s4781] sm:$0x3]
      %v4783 = vpack.c.bf16 %v4773, %v4765
      %v4784 = vpack.c.bf16 %v4774, %v4766
      %v4785 = vpack.c.bf16 %v4775, %v4767
      %v4786 = vpack.c.bf16 %v4776, %v4768
      %v4787 = vpack.c.bf16 %v4777, %v4769
      %v4788 = vpack.c.bf16 %v4778, %v4770
      %v4789 = vpack.c.bf16 %v4779, %v4771
      %v4790 = vpack.c.bf16 %v4780, %v4772
      %v4792 = vsel %vm283, %v4782, 0
      %4794 = vmatpush.bf16.msra.mxu0 0
      %4795 = vmatpush.bf16.msra.mxu0 0
      %4796 = vmatpush.bf16.msra.mxu0 0
      %4797 = vmatpush.bf16.msra.mxu0 0
      %4798 = vmatpush.bf16.msra.mxu0 0
      %4799 = vmatpush.bf16.msra.mxu0 0
      %4800 = vmatpush.bf16.msra.mxu0 0
      %4801 = vmatpush.bf16.msra.mxu0 %v4783
      %4802 = vmatmul.bf16.gmra.mxu0 %v4792
      %v4803 = vpop.f32.mrf.mxu0
      %v4804 = vadd.f32 0.0, %v4803
      %v4805 = vpop.f32.mrf.mxu0
      %4806 = vdwg.mxu0
      %4807 = vmatpush.bf16.msra.mxu0 0
      %4808 = vmatpush.bf16.msra.mxu0 0
      %4809 = vmatpush.bf16.msra.mxu0 0
      %4810 = vmatpush.bf16.msra.mxu0 0
      %4811 = vmatpush.bf16.msra.mxu0 0
      %4812 = vmatpush.bf16.msra.mxu0 0
      %4813 = vmatpush.bf16.msra.mxu0 0
      %4814 = vmatpush.bf16.msra.mxu0 %v4784
      %4815 = vmatmul.bf16.gmra.mxu0 %v4792
      %v4816 = vpop.f32.mrf.mxu0
      %v4817 = vadd.f32 0.0, %v4816
      %v4818 = vpop.f32.mrf.mxu0
      %4819 = vdwg.mxu0
      %4820 = vmatpush.bf16.msra.mxu0 0
      %4821 = vmatpush.bf16.msra.mxu0 0
      %4822 = vmatpush.bf16.msra.mxu0 0
      %4823 = vmatpush.bf16.msra.mxu0 0
      %4824 = vmatpush.bf16.msra.mxu0 0
      %4825 = vmatpush.bf16.msra.mxu0 0
      %4826 = vmatpush.bf16.msra.mxu0 0
      %4827 = vmatpush.bf16.msra.mxu0 %v4785
      %4828 = vmatmul.bf16.gmra.mxu0 %v4792
      %v4829 = vpop.f32.mrf.mxu0
      %v4830 = vadd.f32 0.0, %v4829
      %v4831 = vpop.f32.mrf.mxu0
      %4832 = vdwg.mxu0
      %4833 = vmatpush.bf16.msra.mxu0 0
      %4834 = vmatpush.bf16.msra.mxu0 0
      %4835 = vmatpush.bf16.msra.mxu0 0
      %4836 = vmatpush.bf16.msra.mxu0 0
      %4837 = vmatpush.bf16.msra.mxu0 0
      %4838 = vmatpush.bf16.msra.mxu0 0
      %4839 = vmatpush.bf16.msra.mxu0 0
      %4840 = vmatpush.bf16.msra.mxu0 %v4786
      %4841 = vmatmul.bf16.gmra.mxu0 %v4792
      %v4842 = vpop.f32.mrf.mxu0
      %v4843 = vadd.f32 0.0, %v4842
      %v4844 = vpop.f32.mrf.mxu0
      %4845 = vdwg.mxu0
      %4846 = vmatpush.bf16.msra.mxu0 0
      %4847 = vmatpush.bf16.msra.mxu0 0
      %4848 = vmatpush.bf16.msra.mxu0 0
      %4849 = vmatpush.bf16.msra.mxu0 0
      %4850 = vmatpush.bf16.msra.mxu0 0
      %4851 = vmatpush.bf16.msra.mxu0 0
      %4852 = vmatpush.bf16.msra.mxu0 0
      %4853 = vmatpush.bf16.msra.mxu0 %v4787
      %4854 = vmatmul.bf16.gmra.mxu0 %v4792
      %v4855 = vpop.f32.mrf.mxu0
      %v4856 = vadd.f32 0.0, %v4855
      %v4857 = vpop.f32.mrf.mxu0
      %4858 = vdwg.mxu0
      %4859 = vmatpush.bf16.msra.mxu0 0
      %4860 = vmatpush.bf16.msra.mxu0 0
      %4861 = vmatpush.bf16.msra.mxu0 0
      %4862 = vmatpush.bf16.msra.mxu0 0
      %4863 = vmatpush.bf16.msra.mxu0 0
      %4864 = vmatpush.bf16.msra.mxu0 0
      %4865 = vmatpush.bf16.msra.mxu0 0
      %4866 = vmatpush.bf16.msra.mxu0 %v4788
      %4867 = vmatmul.bf16.gmra.mxu0 %v4792
      %v4868 = vpop.f32.mrf.mxu0
      %v4869 = vadd.f32 0.0, %v4868
      %v4870 = vpop.f32.mrf.mxu0
      %4871 = vdwg.mxu0
      %4872 = vmatpush.bf16.msra.mxu0 0
      %4873 = vmatpush.bf16.msra.mxu0 0
      %4874 = vmatpush.bf16.msra.mxu0 0
      %4875 = vmatpush.bf16.msra.mxu0 0
      %4876 = vmatpush.bf16.msra.mxu0 0
      %4877 = vmatpush.bf16.msra.mxu0 0
      %4878 = vmatpush.bf16.msra.mxu0 0
      %4879 = vmatpush.bf16.msra.mxu0 %v4789
      %4880 = vmatmul.bf16.gmra.mxu0 %v4792
      %v4881 = vpop.f32.mrf.mxu0
      %v4882 = vadd.f32 0.0, %v4881
      %v4883 = vpop.f32.mrf.mxu0
      %4884 = vdwg.mxu0
      %4885 = vmatpush.bf16.msra.mxu0 0
      %4886 = vmatpush.bf16.msra.mxu0 0
      %4887 = vmatpush.bf16.msra.mxu0 0
      %4888 = vmatpush.bf16.msra.mxu0 0
      %4889 = vmatpush.bf16.msra.mxu0 0
      %4890 = vmatpush.bf16.msra.mxu0 0
      %4891 = vmatpush.bf16.msra.mxu0 0
      %4892 = vmatpush.bf16.msra.mxu0 %v4790
      %4893 = vmatmul.bf16.gmra.mxu0 %v4792
      %v4894 = vpop.f32.mrf.mxu0
      %v4895 = vadd.f32 0.0, %v4894
      %v4896 = vpop.f32.mrf.mxu0
      %4897 = vdwg.mxu0
      %v4898 = vadd.f32 %v4749, %v4804
      %v4899 = vadd.f32 %v4750, %v4817
      %v4900 = vadd.f32 %v4751, %v4830
      %v4901 = vadd.f32 %v4752, %v4843
      %v4902 = vadd.f32 %v4753, %v4856
      %v4903 = vadd.f32 %v4754, %v4869
      %v4904 = vadd.f32 %v4755, %v4882
      %v4905 = vadd.f32 %v4756, %v4895
      %v4906 = vand.u32 2147483647, %v4898
      %v4907 = vand.u32 2147483647, %v4899
      %v4908 = vand.u32 2147483647, %v4900
      %v4909 = vand.u32 2147483647, %v4901
      %v4910 = vand.u32 2147483647, %v4902
      %v4911 = vand.u32 2147483647, %v4903
      %v4912 = vand.u32 2147483647, %v4904
      %v4913 = vand.u32 2147483647, %v4905
      %v4914 = vsub.f32 0.0, %v4906
      %v4915 = vsub.f32 0.0, %v4907
      %v4916 = vsub.f32 0.0, %v4908
      %v4917 = vsub.f32 0.0, %v4909
      %v4918 = vsub.f32 0.0, %v4910
      %v4919 = vsub.f32 0.0, %v4911
      %v4920 = vsub.f32 0.0, %v4912
      %v4921 = vsub.f32 0.0, %v4913
      %v4922 = vmul.f32 %v4914, 1.442695
      %v4923 = vpow.pop %v4922
      %v4924 = vmul.f32 %v4915, 1.442695
      %v4925 = vpow.pop %v4924
      %v4926 = vmul.f32 %v4916, 1.442695
      %v4927 = vpow.pop %v4926
      %v4928 = vmul.f32 %v4917, 1.442695
      %v4929 = vpow.pop %v4928
      %v4930 = vmul.f32 %v4918, 1.442695
      %v4931 = vpow.pop %v4930
      %v4932 = vmul.f32 %v4919, 1.442695
      %v4933 = vpow.pop %v4932
      %v4934 = vmul.f32 %v4920, 1.442695
      %v4935 = vpow.pop %v4934
      %v4936 = vmul.f32 %v4921, 1.442695
      %v4937 = vpow.pop %v4936
      %v4938 = vadd.f32 %v4923, 1.0
      %v4939 = vadd.f32 %v4925, 1.0
      %v4940 = vadd.f32 %v4927, 1.0
      %v4941 = vadd.f32 %v4929, 1.0
      %v4942 = vadd.f32 %v4931, 1.0
      %v4943 = vadd.f32 %v4933, 1.0
      %v4944 = vadd.f32 %v4935, 1.0
      %v4945 = vadd.f32 %v4937, 1.0
      %v4946 = vrcp.pop %v4938
      %v4947 = vrcp.pop %v4939
      %v4948 = vrcp.pop %v4940
      %v4949 = vrcp.pop %v4941
      %v4950 = vrcp.pop %v4942
      %v4951 = vrcp.pop %v4943
      %v4952 = vrcp.pop %v4944
      %v4953 = vrcp.pop %v4945
      %vm4954 = vcmp.ge.f32.partialorder %v4898, 0.0
      %vm4955 = vcmp.ge.f32.partialorder %v4899, 0.0
      %vm4956 = vcmp.ge.f32.partialorder %v4900, 0.0
      %vm4957 = vcmp.ge.f32.partialorder %v4901, 0.0
      %vm4958 = vcmp.ge.f32.partialorder %v4902, 0.0
      %vm4959 = vcmp.ge.f32.partialorder %v4903, 0.0
      %vm4960 = vcmp.ge.f32.partialorder %v4904, 0.0
      %vm4961 = vcmp.ge.f32.partialorder %v4905, 0.0
      %v4962 = vmul.f32 %v4923, %v4946
      %v4963 = vmul.f32 %v4925, %v4947
      %v4964 = vmul.f32 %v4927, %v4948
      %v4965 = vmul.f32 %v4929, %v4949
      %v4966 = vmul.f32 %v4931, %v4950
      %v4967 = vmul.f32 %v4933, %v4951
      %v4968 = vmul.f32 %v4935, %v4952
      %v4969 = vmul.f32 %v4937, %v4953
      %v4970 = vsel %vm4954, %v4946, %v4962
      %v4971 = vsel %vm4955, %v4947, %v4963
      %v4972 = vsel %vm4956, %v4948, %v4964
      %v4973 = vsel %vm4957, %v4949, %v4965
      %v4974 = vsel %vm4958, %v4950, %v4966
      %v4975 = vsel %vm4959, %v4951, %v4967
      %v4976 = vsel %vm4960, %v4952, %v4968
      %v4977 = vsel %vm4961, %v4953, %v4969
      %v4978 = vmax.f32 %v4970, 0.0
      %v4979 = vmax.f32 %v4971, 0.0
      %v4980 = vmax.f32 %v4972, 0.0
      %v4981 = vmax.f32 %v4973, 0.0
      %v4982 = vmax.f32 %v4974, 0.0
      %v4983 = vmax.f32 %v4975, 0.0
      %v4984 = vmax.f32 %v4976, 0.0
      %v4985 = vmax.f32 %v4977, 0.0
      %v4986 = vmin.f32 %v4978, 1.0
      %v4987 = vmin.f32 %v4979, 1.0
      %v4988 = vmin.f32 %v4980, 1.0
      %v4989 = vmin.f32 %v4981, 1.0
      %v4990 = vmin.f32 %v4982, 1.0
      %v4991 = vmin.f32 %v4983, 1.0
      %v4992 = vmin.f32 %v4984, 1.0
      %v4993 = vmin.f32 %v4985, 1.0
      %v5002 = vrot.slane %v4987, 4
      %v5003 = vrot.slane %v4989, 4
      %v5004 = vrot.slane %v4991, 4
      %v5005 = vrot.slane %v4993, 4
      %vm5006 = vcmask 1043456
      %v5007 = vsel %vm5006, %v4986, %v5002
      %v5008 = vsel %vm5006, %v4988, %v5003
      %v5009 = vsel %vm5006, %v4990, %v5004
      %v5010 = vsel %vm5006, %v4992, %v5005
      %5015 = vst [vmem:[%s170] sm:$0xff] %v5007
      %5016 = vst [vmem:[%s170 + $0x8] sm:$0xff] %v5008
      %5017 = vst [vmem:[%s170 + $0x10] sm:$0xff] %v5009
      %5018 = vst [vmem:[%s170 + $0x18] sm:$0xff] %v5010
      %p5019 = scmp.lt.s32.totalorder %s14, 1
      %s5020 = scalar_select %p5019, %s14, 1
      %s5021 = smul.addr %s5020, 8
      %s5022 = smul.addr %s5021, 4
      %s5023 = scalar_lea.vmem %s3, %s5022
      // Predicated region
      $region33: #{image_decoder.7} parent=31 // pred_check
        %p5024 = pneg %p100
      $region34: #{image_decoder.7} parent=31 // pred_check_branch
        %5026 = sbr.rel (%p5024) target = $region36
      $region35: #{image_decoder.7} parent=31 // pred_region
        _
      $region36: #{image_decoder.7} parent=31 // pred_fallthru
        _
    $region32: #{image_decoder.7} parent=5 // pred_fallthru
      _
    %p5027 = scmp.le.s32.totalorder 2, %s9
    // Predicated region
    $region37: #{image_decoder.7} parent=5 // pred_check
      %p5028 = pneg %p5027
    $region38: #{image_decoder.7} parent=5 // pred_check_branch
      %5030 = sbr.rel (%p5028) target = $region40
    $region39: #{image_decoder.7} parent=5 // pred_region
      %s5031 = ssub.s32 %s9, 2
      // Predicated region
      $region41: #{image_decoder.7} parent=39 // pred_check
        %p5032 = pneg %p106
      $region42: #{image_decoder.7} parent=39 // pred_check_branch
        %5034 = sbr.rel (%p5032) target = $region44
      $region43: #{image_decoder.7} parent=39 // pred_region
        %p5035 = scmp.lt.s32.totalorder %s15, 1
        %s5036 = scalar_select %p5035, %s15, 1
        %s5037 = smul.addr %s5036, 8
        %s5038 = smul.addr %s5037, 4
        %s5039 = scalar_lea.vmem %s3, %s5038
      $region44: #{image_decoder.7} parent=39 // pred_fallthru
        _
    $region40: #{image_decoder.7} parent=5 // pred_fallthru
      _
  $region6: #{image_decoder.7} parent=0 // loop_footer
    %s13 = sadd.s32 1, %s9
  $region7: #{image_decoder.7} parent=0 // loop_footer_branch
    %8 = sbr.rel target = $region3
  $region8: #{image_decoder.7} parent=0 // loop_exit
    _

</llo_original>
